<compile_context>
chip_gen: v7x
topology: tpu7x:2x2x1
jax: 0.10.0
libtpu: 0.0.40
codegen_flags: <defaults>
</compile_context>

<pallas_src>
import functools
import math

import jax
import jax.numpy as jnp
from jax import lax
from jax.experimental import pallas as pl
from jax.experimental.pallas import tpu as pltpu


def _sigmoid(x):
    return 1.0 / (1.0 + jnp.exp(-x))


def _l2_normalize(x, axis):
    # F.normalize semantics: x / max(||x||_2, eps), eps = 1e-12.
    n = jnp.sqrt(jnp.sum(x * x, axis=axis, keepdims=True))
    return x / jnp.maximum(n, 1e-12)


def _round_up(x, m):
    return ((x + m - 1) // m) * m


# --------------------------------------------------------------------------
# Kernel 1: scaled, margin-adjusted logits (pure matmul + scatter epilogue).
# --------------------------------------------------------------------------
def _logits_kernel(enorm_ref, lab_ref, ft_ref, knorm_ref, out_ref, *, scale):
    c = pl.program_id(1)
    tb, tc = out_ref.shape

    # (tb, D) bf16 @ (D, tc) bf16 -> f32 on the MXU.
    cos_theta = jnp.dot(enorm_ref[...], knorm_ref[...],
                        preferred_element_type=jnp.float32)
    cos_theta = jnp.clip(cos_theta, -1.0, 1.0)

    class_ids = lax.broadcasted_iota(jnp.int32, (tb, tc), 1) + c * tc
    onehot = class_ids == lab_ref[...]                     # (tb, tc)

    # Rows whose label lies outside this class tile have an all-False onehot
    # row and pass through unchanged.
    out_ref[...] = (jnp.where(onehot, ft_ref[...], cos_theta) * scale
                    ).astype(out_ref.dtype)


# --------------------------------------------------------------------------
# Kernel 2: streamed, symmetry-exploiting diversity regularizer.
#   For each upper-triangular block pair (i <= j) compute one (tc, tc) block
#   of K^T K, mask the self entries (sim.int() != 1  <=>  not 1 <= sim < 2),
#   and fold its row-max into classes of block i and its column-max into
#   classes of block j (K^T K is symmetric).  kdiv is applied on the last step.
# --------------------------------------------------------------------------
def _div_kernel(ii_ref, jj_ref, ki_ref, kj_ref, marg_ref, out_ref, *,
                tile_c, num_classes, has_pad):
    t = pl.program_id(0)

    @pl.when(t == 0)
    def _():
        out_ref[...] = jnp.full(out_ref.shape, -jnp.inf, out_ref.dtype)

    i = ii_ref[t]
    j = jj_ref[t]

    # (D, tc_i)^T (D, tc_j) -> (tc_i, tc_j) block, transposed-LHS contraction
    # (no transposed copy of the kernel in HBM), f32 MXU accumulation.
    sim = lax.dot_general(ki_ref[...], kj_ref[...],
                          dimension_numbers=(((0,), (0,)), ((), ())),
                          preferred_element_type=jnp.float32)
    # sim.int() != 1  <=>  not (1.0 <= sim < 2.0): compare-only, no f32->i32.
    non_self = (sim < 1.0) | (sim >= 2.0)
    masked = jnp.where(non_self, sim, 0.0)

    if has_pad:
        # Keep padded classes out of the reductions so a real class whose
        # masked similarities are all negative still reports its true max.
        col_ids = lax.broadcasted_iota(jnp.int32, masked.shape, 1) + j * tile_c
        row_ids = lax.broadcasted_iota(jnp.int32, masked.shape, 0) + i * tile_c
        masked_r = jnp.where(col_ids < num_classes, masked, -jnp.inf)
        masked_c = jnp.where(row_ids < num_classes, masked, -jnp.inf)
    else:
        masked_r = masked
        masked_c = masked

    row_fold = jnp.max(masked_r, axis=1)                   # (tc,) -> block i
    col_fold = jnp.max(masked_c, axis=0)                   # (tc,) -> block j
    out_ref[i, :] = jnp.maximum(out_ref[i, :], row_fold)
    out_ref[j, :] = jnp.maximum(out_ref[j, :], col_fold)   # idempotent if i==j

    @pl.when(t == pl.num_programs(0) - 1)
    def _():
        marg_c = jnp.clip(marg_ref[...], 0.0, 1.0)
        kdiv = 2.0 - _sigmoid((marg_c - 0.5) * 10.0)
        out_ref[...] = out_ref[...] * kdiv


# --------------------------------------------------------------------------
# Wrapper
# --------------------------------------------------------------------------
def adaptive_margin_logits(embeddings, labels, kernel, margins, *,
                           scale=64.0, tile_b=256, tile_c=512, tile_c_div=1024,
                           out_dtype=jnp.float32):
    """Returns (scale * margin-adjusted cos_theta (B, C), scalar regularizer)."""
    embeddings = embeddings.astype(jnp.float32)
    kernel = kernel.astype(jnp.float32)
    margins = margins.astype(jnp.float32)
    labels = labels.astype(jnp.int32)

    B, D = embeddings.shape
    Dk, C = kernel.shape
    assert Dk == D and margins.shape == (1, C) and labels.shape == (B,)

    # ---- batch-invariant / O(B)+O(C) work hoisted out of the kernels ------
    knorm_bf = _l2_normalize(kernel, axis=0).astype(jnp.bfloat16)    # (D, C)
    enorm_bf = _l2_normalize(embeddings, axis=1).astype(jnp.bfloat16)  # (B, D)
    kern_bf = kernel.astype(jnp.bfloat16)                            # raw, Gram

    marg_clip = jnp.clip(margins, 0.0, 1.0)                          # clamp_(0,1)
    m_row = marg_clip[0, labels][:, None]                            # (B, 1)

    # Per-row target logit at the label column, with the same bf16 x bf16 ->
    # f32 precision as the in-kernel MXU matmul.
    knorm_lab_bf = jnp.take(knorm_bf, labels, axis=1)                # (D, B)
    target = jnp.einsum("bd,db->b", enorm_bf, knorm_lab_bf,
                        preferred_element_type=jnp.float32)[:, None]
    target = jnp.clip(target, -1.0, 1.0)

    cos_m = jnp.cos(m_row)
    sin_m = jnp.sin(m_row)
    threshold = -cos_m                                               # cos(pi-m)
    sin_theta = jnp.sqrt(1.0 - target * target)
    cos_theta_m = target * cos_m - sin_theta * sin_m - 0.2
    final_target = jnp.where(target > threshold, cos_theta_m,
                             target - sin_m * m_row)                 # (B, 1)

    ada = _sigmoid(-jnp.mean(m_row))                                 # ada-margin loss

    # ---- kernel 1: logits --------------------------------------------------
    tb = _round_up(min(tile_b, _round_up(B, 8)), 8)
    tc = _round_up(min(tile_c, _round_up(C, 128)), 128)
    B_pad = _round_up(B, tb)
    C_pad = _round_up(C, tc)
    nb, nc = B_pad // tb, C_pad // tc

    enorm_p = jnp.pad(enorm_bf, ((0, B_pad - B), (0, 0)))
    lab_p = jnp.pad(labels, (0, B_pad - B)).reshape(B_pad, 1)
    ft_p = jnp.pad(final_target, ((0, B_pad - B), (0, 0)))
    knorm_p = jnp.pad(knorm_bf, ((0, 0), (0, C_pad - C)))

    out_bytes = jnp.dtype(out_dtype).itemsize
    vmem1 = 2 * (tb * D * 2 + tb * 4 + tb * 4 + D * tc * 2 + tb * tc * out_bytes)
    cparams1 = pltpu.CompilerParams(
        dimension_semantics=("parallel", "parallel"),
        vmem_limit_bytes=int(min(64 << 20, max(32 << 20, 2 * vmem1))))

    out_p = pl.pallas_call(
        functools.partial(_logits_kernel, scale=float(scale)),
        grid=(nb, nc),
        in_specs=[
            pl.BlockSpec((tb, D), lambda b, c: (b, 0)),   # normalized emb (bf16)
            pl.BlockSpec((tb, 1), lambda b, c: (b, 0)),   # labels
            pl.BlockSpec((tb, 1), lambda b, c: (b, 0)),   # final_target
            pl.BlockSpec((D, tc), lambda b, c: (0, c)),   # normalized kernel (bf16)
        ],
        out_specs=pl.BlockSpec((tb, tc), lambda b, c: (b, c)),
        out_shape=jax.ShapeDtypeStruct((B_pad, C_pad), out_dtype),
        compiler_params=cparams1,
        cost_estimate=pl.CostEstimate(
            flops=2 * B_pad * D * C_pad,
            transcendentals=0,
            bytes_accessed=(2 * B_pad * D + 8 * B_pad
                            + 2 * D * C_pad * nb + out_bytes * B_pad * C_pad)),
    )(enorm_p, lab_p, ft_p, knorm_p)
    out = out_p[:B, :C]

    # ---- kernel 2: diversity regularizer (symmetric Gram streaming) --------
    tcd = _round_up(min(tile_c_div, _round_up(C, 128)), 128)
    C_pad2 = _round_up(C, tcd)
    nc2 = C_pad2 // tcd
    has_pad = C_pad2 != C

    kern_p2 = jnp.pad(kern_bf, ((0, 0), (0, C_pad2 - C)))
    marg_p2 = jnp.pad(margins, ((0, 0), (0, C_pad2 - C))).reshape(nc2, tcd)

    pairs = [(i, j) for i in range(nc2) for j in range(i, nc2)]
    ii = jnp.asarray([p[0] for p in pairs], dtype=jnp.int32)
    jj = jnp.asarray([p[1] for p in pairs], dtype=jnp.int32)
    n_pairs = len(pairs)

    vmem2 = 2 * (2 * D * tcd * 2) + 2 * nc2 * tcd * 4 + 4 * tcd * tcd
    cparams2 = pltpu.CompilerParams(
        dimension_semantics=("arbitrary",),
        vmem_limit_bytes=int(min(64 << 20, max(32 << 20, 2 * vmem2))))

    colmax_kdiv = pl.pallas_call(
        functools.partial(_div_kernel, tile_c=tcd, num_classes=C, has_pad=has_pad),
        grid_spec=pltpu.PrefetchScalarGridSpec(
            num_scalar_prefetch=2,
            grid=(n_pairs,),
            in_specs=[
                pl.BlockSpec((D, tcd), lambda t, si, sj: (0, si[t])),   # K block i
                pl.BlockSpec((D, tcd), lambda t, si, sj: (0, sj[t])),   # K block j
                pl.BlockSpec((nc2, tcd), lambda t, si, sj: (0, 0)),     # margins
            ],
            out_specs=pl.BlockSpec((nc2, tcd), lambda t, si, sj: (0, 0)),
        ),
        out_shape=jax.ShapeDtypeStruct((nc2, tcd), jnp.float32),
        compiler_params=cparams2,
        cost_estimate=pl.CostEstimate(
            flops=2 * D * tcd * tcd * n_pairs,
            transcendentals=C_pad2,
            bytes_accessed=2 * 2 * D * tcd * n_pairs + 2 * 4 * nc2 * tcd),
    )(ii, jj, kern_p2, kern_p2, marg_p2)

    # Padded classes are sliced off before the sum (their entries may be -inf).
    div = jnp.sum(colmax_kdiv.reshape(-1)[:C]) / C
    loss = 8.0 * (div + ada)
    return out, loss


# --------------------------------------------------------------------------
# Pure-JAX reference mirroring the PyTorch module (bf16 MXU operands to match
# the kernel's matmul precision).
# --------------------------------------------------------------------------
def _reference(embeddings, labels, kernel, margins, *, scale=64.0):
    B, _ = embeddings.shape
    C = kernel.shape[1]
    knorm = _l2_normalize(kernel, axis=0)
    enorm = _l2_normalize(embeddings, axis=1)
    cos_theta = jnp.dot(enorm.astype(jnp.bfloat16), knorm.astype(jnp.bfloat16),
                        preferred_element_type=jnp.float32)
    cos_theta = jnp.clip(cos_theta, -1.0, 1.0)

    rows = jnp.arange(B)
    target = cos_theta[rows, labels][:, None]
    marg_c = jnp.clip(margins, 0.0, 1.0)
    m = marg_c[0, labels][:, None]
    cos_m, sin_m = jnp.cos(m), jnp.sin(m)
    threshold = jnp.cos(math.pi - m)
    sin_theta = jnp.sqrt(1.0 - target * target)
    cos_theta_m = target * cos_m - sin_theta * sin_m - 0.2
    final_target = jnp.where(target > threshold, cos_theta_m, target - sin_m * m)
    out = cos_theta.at[rows, labels].set(final_target[:, 0]) * scale

    ada = _sigmoid(-jnp.mean(m))
    kdiv = 2.0 - _sigmoid((marg_c - 0.5) * 10.0)
    kbf = kernel.astype(jnp.bfloat16)
    sim = jnp.dot(kbf.T, kbf, preferred_element_type=jnp.float32)
    non_self = sim.astype(jnp.int32) != 1
    row_max = jnp.max(sim * non_self, axis=1)
    div = jnp.sum(row_max * kdiv[0]) / C
    return out, 8.0 * (div + ada)


if __name__ == "__main__":
    key = jax.random.PRNGKey(0)
    k1, k2, k3, k4 = jax.random.split(key, 4)

    # Small but tiling-exercising shapes: batch=16, feat_dim=64, num_classes=1024
    # -> logits grid (2, 2), diversity triangular grid of 3 block pairs (nc2=2).
    B, D, C = 16, 64, 1024

    embeddings = jax.random.normal(k1, (B, D), jnp.float32)
    labels = jax.random.randint(k2, (B,), 0, C, jnp.int32)
    # Class kernel: near-unit-norm columns (matching the uniform_/renorm_/mul_
    # init), scaled so the K^T K diagonal sits robustly inside the reference's
    # int-truncation self-mask window [1, 2).
    u = jax.random.uniform(k3, (D, C), jnp.float32, minval=-1.0, maxval=1.0)
    kernel = 1.2 * u / jnp.linalg.norm(u, axis=0, keepdims=True)
    margins = jax.random.uniform(k4, (1, C), jnp.float32, minval=0.2, maxval=0.8)

    run = jax.jit(functools.partial(adaptive_margin_logits,
                                    tile_b=8, tile_c=512, tile_c_div=512))
    out, loss = run(embeddings, labels, kernel, margins)
    jax.block_until_ready((out, loss))

    ref_out, ref_loss = _reference(embeddings, labels, kernel, margins)

    assert out.shape == (B, C) and out.dtype == jnp.float32
    assert loss.shape == () and bool(jnp.isfinite(loss))
    assert jnp.allclose(out, ref_out, rtol=1e-3, atol=0.5), \
        float(jnp.max(jnp.abs(out - ref_out)))
    assert jnp.allclose(loss, ref_loss, rtol=1e-3, atol=5e-2), \
        (float(loss), float(ref_loss))
    print("KERNEL_OK")
</pallas_src>

<mosaic_0001>
module attributes {stable_mosaic.version = 11 : i64} {
  func.func @_div_kernel(%arg0: i32, %arg1: memref<3xi32, #tpu.memory_space<smem>>, %arg2: memref<3xi32, #tpu.memory_space<smem>>, %arg3: memref<64x512xbf16, #tpu.memory_space<vmem>>, %arg4: memref<64x512xbf16, #tpu.memory_space<vmem>>, %arg5: memref<2x512xf32, #tpu.memory_space<vmem>>, %arg6: memref<2x512xf32, #tpu.memory_space<vmem>>) attributes {dimension_semantics = [#tpu.dimension_semantics<arbitrary>], iteration_bounds = array<i64: 3>, scalar_prefetch = 2 : i64, scratch_operands = 0 : i64, tpu.core_type = #tpu.core_type<tc>, window_params = [{transform_indices = @transform_0, window_bounds = array<i64: 64, 512>}, {transform_indices = @transform_1, window_bounds = array<i64: 64, 512>}, {pipeline_mode = #tpu.pipeline_mode<synchronous>, transform_indices = @transform_2, window_bounds = array<i64: 2, 512>}, {pipeline_mode = #tpu.pipeline_mode<synchronous>, transform_indices = @transform_3, window_bounds = array<i64: 2, 512>}]} {
    %c0_i32 = arith.constant 0 : i32
    %0 = arith.cmpi eq, %arg0, %c0_i32 : i32
    %1 = arith.extui %0 : i1 to i32
    %c0_i32_0 = arith.constant 0 : i32
    %2 = arith.cmpi ne, %1, %c0_i32_0 : i32
    scf.if %2 {
      %cst_14 = arith.constant 0xFF800000 : f32
      %38 = vector.broadcast %cst_14 : f32 to vector<2x512xf32>
      %c0_15 = arith.constant 0 : index
      %c0_16 = arith.constant 0 : index
      %39 = vector.load %arg6[%c0_15, %c0_16] : memref<2x512xf32, #tpu.memory_space<vmem>>, vector<2x512xf32>
      tpu.vector_store %arg6[%c0_15, %c0_16], %38 {strides = array<i32>} : memref<2x512xf32, #tpu.memory_space<vmem>>, vector<2x512xf32>,
    } else {
    }
    %3 = arith.index_cast %arg0 : i32 to index
    %4 = memref.load %arg1[%3] : memref<3xi32, #tpu.memory_space<smem>>
    %5 = arith.index_cast %arg0 : i32 to index
    %6 = memref.load %arg2[%5] : memref<3xi32, #tpu.memory_space<smem>>
    %c0 = arith.constant 0 : index
    %c0_1 = arith.constant 0 : index
    %7 = vector.load %arg3[%c0, %c0_1] : memref<64x512xbf16, #tpu.memory_space<vmem>>, vector<64x512xbf16>
    %c0_2 = arith.constant 0 : index
    %c0_3 = arith.constant 0 : index
    %8 = vector.load %arg4[%c0_2, %c0_3] : memref<64x512xbf16, #tpu.memory_space<vmem>>, vector<64x512xbf16>
    %cst = arith.constant dense<0.000000e+00> : vector<512x512xf32>
    %9 = tpu.matmul %7, %8, %cst {dimension_numbers = #tpu.dot_dimension_numbers<[0], [0], [1], [1], [0, 1, 1, 1], [], []>} : vector<64x512xbf16>, vector<64x512xbf16>, vector<512x512xf32> -> vector<512x512xf32>
    %cst_4 = arith.constant 1.000000e+00 : f32
    %10 = vector.broadcast %cst_4 : f32 to vector<512x512xf32>
    %11 = arith.cmpf olt, %9, %10 : vector<512x512xf32>
    %cst_5 = arith.constant 2.000000e+00 : f32
    %12 = vector.broadcast %cst_5 : f32 to vector<512x512xf32>
    %13 = arith.cmpf oge, %9, %12 : vector<512x512xf32>
    %14 = arith.ori %11, %13 : vector<512x512xi1>
    %cst_6 = arith.constant 0.000000e+00 : f32
    %15 = vector.broadcast %cst_6 : f32 to vector<512x512xf32>
    %16 = arith.select %14, %9, %15 : vector<512x512xi1>, vector<512x512xf32>
    %cst_7 = arith.constant dense<0xFF800000> : vector<512xf32>
    %17 = vector.multi_reduction <maximumf>, %16, %cst_7 [1] : vector<512x512xf32> to vector<512xf32>
    %cst_8 = arith.constant dense<0xFF800000> : vector<512xf32>
    %18 = vector.multi_reduction <maximumf>, %16, %cst_8 [0] : vector<512x512xf32> to vector<512xf32>
    %19 = arith.index_cast %4 : i32 to index
    %c0_9 = arith.constant 0 : index
    %20 = vector.load %arg6[%19, %c0_9] : memref<2x512xf32, #tpu.memory_space<vmem>>, vector<1x512xf32>
    %21 = vector.shape_cast %20 : vector<1x512xf32> to vector<512xf32>
    %22 = arith.maximumf %21, %17 : vector<512xf32>
    %23 = arith.index_cast %4 : i32 to index
    %c0_10 = arith.constant 0 : index
    %24 = vector.load %arg6[%23, %c0_10] : memref<2x512xf32, #tpu.memory_space<vmem>>, vector<1x512xf32>
    %25 = vector.shape_cast %24 : vector<1x512xf32> to vector<512xf32>
    %26 = vector.shape_cast %22 : vector<512xf32> to vector<1x512xf32>
    tpu.vector_store %arg6[%23, %c0_10], %26 {strides = array<i32>} : memref<2x512xf32, #tpu.memory_space<vmem>>, vector<1x512xf32>,
    %27 = arith.index_cast %6 : i32 to index
    %c0_11 = arith.constant 0 : index
    %28 = vector.load %arg6[%27, %c0_11] : memref<2x512xf32, #tpu.memory_space<vmem>>, vector<1x512xf32>
    %29 = vector.shape_cast %28 : vector<1x512xf32> to vector<512xf32>
    %30 = arith.maximumf %29, %18 : vector<512xf32>
    %31 = arith.index_cast %6 : i32 to index
    %c0_12 = arith.constant 0 : index
    %32 = vector.load %arg6[%31, %c0_12] : memref<2x512xf32, #tpu.memory_space<vmem>>, vector<1x512xf32>
    %33 = vector.shape_cast %32 : vector<1x512xf32> to vector<512xf32>
    %34 = vector.shape_cast %30 : vector<512xf32> to vector<1x512xf32>
    tpu.vector_store %arg6[%31, %c0_12], %34 {strides = array<i32>} : memref<2x512xf32, #tpu.memory_space<vmem>>, vector<1x512xf32>,
    %c2_i32 = arith.constant 2 : i32
    %35 = arith.cmpi eq, %arg0, %c2_i32 : i32
    %36 = arith.extui %35 : i1 to i32
    %c0_i32_13 = arith.constant 0 : i32
    %37 = arith.cmpi ne, %36, %c0_i32_13 : i32
    scf.if %37 {
      %c0_14 = arith.constant 0 : index
      %c0_15 = arith.constant 0 : index
      %38 = vector.load %arg5[%c0_14, %c0_15] : memref<2x512xf32, #tpu.memory_space<vmem>>, vector<2x512xf32>
      %cst_16 = arith.constant 0.000000e+00 : f32
      %cst_17 = arith.constant 1.000000e+00 : f32
      %39 = vector.broadcast %cst_16 : f32 to vector<2x512xf32>
      %40 = arith.maximumf %39, %38 : vector<2x512xf32>
      %41 = vector.broadcast %cst_17 : f32 to vector<2x512xf32>
      %42 = arith.minimumf %41, %40 : vector<2x512xf32>
      %cst_18 = arith.constant 5.000000e-01 : f32
      %43 = vector.broadcast %cst_18 : f32 to vector<2x512xf32>
      %44 = arith.subf %42, %43 : vector<2x512xf32>
      %cst_19 = arith.constant 1.000000e+01 : f32
      %45 = vector.broadcast %cst_19 : f32 to vector<2x512xf32>
      %46 = arith.mulf %44, %45 : vector<2x512xf32>
      %cst_20 = arith.constant 0.000000e+00 : f32
      %47 = vector.broadcast %cst_20 : f32 to vector<2x512xf32>
      %48 = arith.subf %47, %46 : vector<2x512xf32>
      %49 = math.exp %48 : vector<2x512xf32>
      %cst_21 = arith.constant 1.000000e+00 : f32
      %50 = vector.broadcast %cst_21 : f32 to vector<2x512xf32>
      %51 = arith.addf %50, %49 : vector<2x512xf32>
      %cst_22 = arith.constant 1.000000e+00 : f32
      %52 = vector.broadcast %cst_22 : f32 to vector<2x512xf32>
      %53 = arith.divf %52, %51 : vector<2x512xf32>
      %cst_23 = arith.constant 2.000000e+00 : f32
      %54 = vector.broadcast %cst_23 : f32 to vector<2x512xf32>
      %55 = arith.subf %54, %53 : vector<2x512xf32>
      %c0_24 = arith.constant 0 : index
      %c0_25 = arith.constant 0 : index
      %56 = vector.load %arg6[%c0_24, %c0_25] : memref<2x512xf32, #tpu.memory_space<vmem>>, vector<2x512xf32>
      %57 = arith.mulf %56, %55 : vector<2x512xf32>
      %c0_26 = arith.constant 0 : index
      %c0_27 = arith.constant 0 : index
      %58 = vector.load %arg6[%c0_26, %c0_27] : memref<2x512xf32, #tpu.memory_space<vmem>>, vector<2x512xf32>
      tpu.vector_store %arg6[%c0_26, %c0_27], %57 {strides = array<i32>} : memref<2x512xf32, #tpu.memory_space<vmem>>, vector<2x512xf32>,
    } else {
    }
    return
  }
  func.func @transform_0(%arg0: i32, %arg1: memref<3xi32, #tpu.memory_space<smem>>, %arg2: memref<3xi32, #tpu.memory_space<smem>>) -> (i32, i32) {
    %0 = arith.index_cast %arg0 : i32 to index
    %1 = memref.load %arg1[%0] : memref<3xi32, #tpu.memory_space<smem>>
    %c0_i32 = arith.constant 0 : i32
    %c0_i32_0 = arith.constant 0 : i32
    return %c0_i32, %1 : i32, i32
  }
  func.func @transform_1(%arg0: i32, %arg1: memref<3xi32, #tpu.memory_space<smem>>, %arg2: memref<3xi32, #tpu.memory_space<smem>>) -> (i32, i32) {
    %0 = arith.index_cast %arg0 : i32 to index
    %1 = memref.load %arg2[%0] : memref<3xi32, #tpu.memory_space<smem>>
    %c0_i32 = arith.constant 0 : i32
    %c0_i32_0 = arith.constant 0 : i32
    return %c0_i32, %1 : i32, i32
  }
  func.func @transform_2(%arg0: i32, %arg1: memref<3xi32, #tpu.memory_space<smem>>, %arg2: memref<3xi32, #tpu.memory_space<smem>>) -> (i32, i32) {
    %c0_i32 = arith.constant 0 : i32
    %c0_i32_0 = arith.constant 0 : i32
    %c0_i32_1 = arith.constant 0 : i32
    return %c0_i32, %c0_i32_0 : i32, i32
  }
  func.func @transform_3(%arg0: i32, %arg1: memref<3xi32, #tpu.memory_space<smem>>, %arg2: memref<3xi32, #tpu.memory_space<smem>>) -> (i32, i32) {
    %c0_i32 = arith.constant 0 : i32
    %c0_i32_0 = arith.constant 0 : i32
    %c0_i32_1 = arith.constant 0 : i32
    return %c0_i32, %c0_i32_0 : i32, i32
  }
}

module attributes {stable_mosaic.version = 11 : i64} {
  func.func @_logits_kernel(%arg0: i32, %arg1: i32, %arg2: memref<8x64xbf16, #tpu.memory_space<vmem>>, %arg3: memref<8x1xi32, #tpu.memory_space<vmem>>, %arg4: memref<8x1xf32, #tpu.memory_space<vmem>>, %arg5: memref<64x512xbf16, #tpu.memory_space<vmem>>, %arg6: memref<8x512xf32, #tpu.memory_space<vmem>>) attributes {dimension_semantics = [#tpu.dimension_semantics<parallel>, #tpu.dimension_semantics<parallel>], iteration_bounds = array<i64: 2, 2>, scalar_prefetch = 0 : i64, scratch_operands = 0 : i64, tpu.core_type = #tpu.core_type<tc>, window_params = [{transform_indices = @transform_0, window_bounds = array<i64: 8, 64>}, {transform_indices = @transform_1, window_bounds = array<i64: 8, 1>}, {transform_indices = @transform_2, window_bounds = array<i64: 8, 1>}, {transform_indices = @transform_3, window_bounds = array<i64: 64, 512>}, {transform_indices = @transform_4, window_bounds = array<i64: 8, 512>}]} {
    %c0 = arith.constant 0 : index
    %c0_0 = arith.constant 0 : index
    %0 = vector.load %arg2[%c0, %c0_0] : memref<8x64xbf16, #tpu.memory_space<vmem>>, vector<8x64xbf16>
    %c0_1 = arith.constant 0 : index
    %c0_2 = arith.constant 0 : index
    %1 = vector.load %arg5[%c0_1, %c0_2] : memref<64x512xbf16, #tpu.memory_space<vmem>>, vector<64x512xbf16>
    %cst = arith.constant dense<0.000000e+00> : vector<8x512xf32>
    %2 = tpu.matmul %0, %1, %cst {dimension_numbers = #tpu.dot_dimension_numbers<[1], [0], [0], [1], [0, 0, 1, 1], [], []>} : vector<8x64xbf16>, vector<64x512xbf16>, vector<8x512xf32> -> vector<8x512xf32>
    %cst_3 = arith.constant -1.000000e+00 : f32
    %cst_4 = arith.constant 1.000000e+00 : f32
    %3 = vector.broadcast %cst_3 : f32 to vector<8x512xf32>
    %4 = arith.maximumf %3, %2 : vector<8x512xf32>
    %5 = vector.broadcast %cst_4 : f32 to vector<8x512xf32>
    %6 = arith.minimumf %5, %4 : vector<8x512xf32>
    %7 = tpu.iota {dimensions = array<i32: 1>} : vector<8x512xi32>
    %c512_i32 = arith.constant 512 : i32
    %8 = arith.muli %arg1, %c512_i32 : i32
    %9 = vector.broadcast %8 : i32 to vector<8x512xi32>
    %10 = arith.addi %7, %9 : vector<8x512xi32>
    %c0_5 = arith.constant 0 : index
    %c0_6 = arith.constant 0 : index
    %11 = vector.load %arg3[%c0_5, %c0_6] : memref<8x1xi32, #tpu.memory_space<vmem>>, vector<8x1xi32>
    %12 = vector.broadcast %11 : vector<8x1xi32> to vector<8x512xi32>
    %13 = arith.cmpi eq, %10, %12 : vector<8x512xi32>
    %c0_7 = arith.constant 0 : index
    %c0_8 = arith.constant 0 : index
    %14 = vector.load %arg4[%c0_7, %c0_8] : memref<8x1xf32, #tpu.memory_space<vmem>>, vector<8x1xf32>
    %15 = vector.shape_cast %14 : vector<8x1xf32> to vector<8x1xf32>
    %16 = vector.broadcast %15 : vector<8x1xf32> to vector<8x512xf32>
    %17 = arith.select %13, %16, %6 : vector<8x512xi1>, vector<8x512xf32>
    %cst_9 = arith.constant 6.400000e+01 : f32
    %18 = vector.broadcast %cst_9 : f32 to vector<8x512xf32>
    %19 = arith.mulf %17, %18 : vector<8x512xf32>
    %c0_10 = arith.constant 0 : index
    %c0_11 = arith.constant 0 : index
    %20 = vector.load %arg6[%c0_10, %c0_11] : memref<8x512xf32, #tpu.memory_space<vmem>>, vector<8x512xf32>
    tpu.vector_store %arg6[%c0_10, %c0_11], %19 {strides = array<i32>} : memref<8x512xf32, #tpu.memory_space<vmem>>, vector<8x512xf32>,
    return
  }
  func.func @transform_0(%arg0: i32, %arg1: i32) -> (i32, i32) {
    %c0_i32 = arith.constant 0 : i32
    %c0_i32_0 = arith.constant 0 : i32
    return %arg0, %c0_i32 : i32, i32
  }
  func.func @transform_1(%arg0: i32, %arg1: i32) -> (i32, i32) {
    %c0_i32 = arith.constant 0 : i32
    %c0_i32_0 = arith.constant 0 : i32
    return %arg0, %c0_i32 : i32, i32
  }
  func.func @transform_2(%arg0: i32, %arg1: i32) -> (i32, i32) {
    %c0_i32 = arith.constant 0 : i32
    %c0_i32_0 = arith.constant 0 : i32
    return %arg0, %c0_i32 : i32, i32
  }
  func.func @transform_3(%arg0: i32, %arg1: i32) -> (i32, i32) {
    %c0_i32 = arith.constant 0 : i32
    %c0_i32_0 = arith.constant 0 : i32
    return %c0_i32, %arg1 : i32, i32
  }
  func.func @transform_4(%arg0: i32, %arg1: i32) -> (i32, i32) {
    %c0_i32 = arith.constant 0 : i32
    return %arg0, %arg1 : i32, i32
  }
}

</mosaic_0001>

<llo_original>
// kernel: adaptive_margin_logits.2
$region0: #{adaptive_margin_logits.2}
  #allocation0 [shape = 'u32[]', space=smem, size = 0x4, offset = 0x4, fixed_abs, tag = 'smem constant byte address 0x4 - core index']
  #allocation1 [shape = 'u32[144,128]{1,0:T(1,128)}', space=vmem, size = 0x12000, scoped, tag = 'internal scratch']
  %s0 = inlined_call_operand.vmem [shape: bf16[16,64], index: 0, kind: input, shape index: {}]
  %s1 = inlined_call_operand.vmem [shape: s32[16,1], index: 1, kind: input, shape index: {}]
  %s2 = inlined_call_operand.vmem [shape: f32[16,1], index: 2, kind: input, shape index: {}]
  %s3 = inlined_call_operand.vmem [shape: bf16[64,1024], index: 3, kind: input, shape index: {}]
  %s4 = inlined_call_operand.hbm [shape: f32[16,1024], index: 4, kind: output, shape index: {}]
  %s5 = sld [smem:[#allocation0]]
  $region72: #{adaptive_margin_logits.2} parent=0
    _
  %s7 = ssub.s32 1, %s5
  %s8 = scalar_select 0, %s7, %s5
  $region1: #{adaptive_margin_logits.2} parent=0
    #allocation2 [shape = 'u8[131072]{0}', space=vmem, size = 0x20000, scoped, tag = 'input window, operand 3']
    #allocation3 [shape = 'u8[32768]{0}', space=vmem, size = 0x8000, scoped, tag = 'output window, operand 0']
    #allocation4 [shape = 's32[2]{0}', space=sflag, size = 0x8, scoped, tag = 'scoped memory for adaptive_margin_logits.2']
    %9 = vsyncpa [#allocation4], 0
    %s10 = scalar_lea.sflag [#allocation4], 1
    %11 = vsyncpa %s10, 0
    loop: start=0, step=1, limit=6
    $region2: #{adaptive_margin_logits.2} parent=1 // loop_pre_header
      _
    $region3: #{adaptive_margin_logits.2} parent=1 // loop_header
      %s13 = sphi 0, %s17
      %p14 = scmp.ge.s32.totalorder %s13, 6
      %s20 = sphi 0, %s32
      %s21 = sphi 0, %s28
      %s22 = sphi 0, %s20
      %s23 = sphi 0, %s21
      %s24 = sphi 0, %s22
      %s25 = sphi 0, %s23
      %s35 = sphi 0, %s37
      %s38 = sphi 0, %s35
      %s39 = sphi 0, %s38
      %s55 = sphi 0, %s39
      %s61 = sphi 0, %s63
      %s64 = sphi 0, %s61
      %s65 = sphi 0, %s64
      %s81 = sphi 0, %s65
      %s87 = sphi 0, %s89
      %s90 = sphi 0, %s87
      %s91 = sphi 0, %s90
      %s107 = sphi 0, %s91
      %s113 = sphi 0, %s115
      %s116 = sphi 0, %s113
      %s117 = sphi 0, %s116
      %s133 = sphi 0, %s117
      %s141 = sphi 0, %s143
      %s144 = sphi 0, %s141
      %s145 = sphi 0, %s144
      %s161 = sphi 0, %s145
    $region4: #{adaptive_margin_logits.2} parent=1 // loop_header_branch
      %16 = sbr.rel (%p14) target = $region8
    $region5: #{adaptive_margin_logits.2} parent=1 // loop_body
      %s18 = ssub.s32 %s13, 1
      %s19 = ssub.s32 %s13, 2
      %s26 = sadd.s32 1, %s21
      %p27 = scmp.ge.s32.totalorder %s26, 2
      %s28 = scalar_select %p27, 0, %s26
      %s29 = sadd.s32 1, %s20
      %s30 = scalar_select %p27, %s29, %s20
      %p31 = scmp.ge.s32.totalorder %s30, 2
      %s32 = scalar_select %p31, 0, %s30
      %s33 = ssub.s32 %s20, %s32
      %p34 = scmp.eq.s32.totalorder %s33, 0
      %s36 = sadd.s32 %s35, 1
      %s37 = scalar_select %p34, %s35, %s36
      %p40 = pneg %p34
      %p41 = scmp.eq.s32.totalorder %s13, 3
      %p42 = por %p40, %p41
      %p43 = scmp.ne.s32.totalorder %s35, %s38
      %p44 = scmp.eq.s32.totalorder %s13, 0
      %p45 = por %p43, %p44
      %p46 = scmp.ne.s32.totalorder %s35, %s38
      %p47 = scmp.eq.s32.totalorder %s18, 3
      %p48 = por %p46, %p47
      %p49 = scmp.ne.s32.totalorder %s38, %s39
      %p50 = scmp.eq.s32.totalorder %s18, 0
      %p51 = por %p49, %p50
      %p52 = scmp.ne.s32.totalorder %s38, %s39
      %p53 = scmp.eq.s32.totalorder %s19, 3
      %p54 = por %p52, %p53
      %p56 = scmp.ne.s32.totalorder %s39, %s55
      %p57 = scmp.eq.s32.totalorder %s19, 0
      %p58 = por %p56, %p57
      %s59 = ssub.s32 %s20, %s32
      %p60 = scmp.eq.s32.totalorder %s59, 0
      %s62 = sadd.s32 %s61, 1
      %s63 = scalar_select %p60, %s61, %s62
      %p66 = pneg %p60
      %p67 = scmp.eq.s32.totalorder %s13, 3
      %p68 = por %p66, %p67
      %p69 = scmp.ne.s32.totalorder %s61, %s64
      %p70 = scmp.eq.s32.totalorder %s13, 0
      %p71 = por %p69, %p70
      %p72 = scmp.ne.s32.totalorder %s61, %s64
      %p73 = scmp.eq.s32.totalorder %s18, 3
      %p74 = por %p72, %p73
      %p75 = scmp.ne.s32.totalorder %s64, %s65
      %p76 = scmp.eq.s32.totalorder %s18, 0
      %p77 = por %p75, %p76
      %p78 = scmp.ne.s32.totalorder %s64, %s65
      %p79 = scmp.eq.s32.totalorder %s19, 3
      %p80 = por %p78, %p79
      %p82 = scmp.ne.s32.totalorder %s65, %s81
      %p83 = scmp.eq.s32.totalorder %s19, 0
      %p84 = por %p82, %p83
      %s85 = ssub.s32 %s20, %s32
      %p86 = scmp.eq.s32.totalorder %s85, 0
      %s88 = sadd.s32 %s87, 1
      %s89 = scalar_select %p86, %s87, %s88
      %p92 = pneg %p86
      %p93 = scmp.eq.s32.totalorder %s13, 3
      %p94 = por %p92, %p93
      %p95 = scmp.ne.s32.totalorder %s87, %s90
      %p96 = scmp.eq.s32.totalorder %s13, 0
      %p97 = por %p95, %p96
      %p98 = scmp.ne.s32.totalorder %s87, %s90
      %p99 = scmp.eq.s32.totalorder %s18, 3
      %p100 = por %p98, %p99
      %p101 = scmp.ne.s32.totalorder %s90, %s91
      %p102 = scmp.eq.s32.totalorder %s18, 0
      %p103 = por %p101, %p102
      %p104 = scmp.ne.s32.totalorder %s90, %s91
      %p105 = scmp.eq.s32.totalorder %s19, 3
      %p106 = por %p104, %p105
      %p108 = scmp.ne.s32.totalorder %s91, %s107
      %p109 = scmp.eq.s32.totalorder %s19, 0
      %p110 = por %p108, %p109
      %s111 = ssub.s32 %s21, %s28
      %p112 = scmp.eq.s32.totalorder %s111, 0
      %s114 = sadd.s32 %s113, 1
      %s115 = scalar_select %p112, %s113, %s114
      %p118 = pneg %p112
      %p119 = scmp.eq.s32.totalorder %s13, 3
      %p120 = por %p118, %p119
      %p121 = scmp.ne.s32.totalorder %s113, %s116
      %p122 = scmp.eq.s32.totalorder %s13, 0
      %p123 = por %p121, %p122
      %p124 = scmp.ne.s32.totalorder %s113, %s116
      %p125 = scmp.eq.s32.totalorder %s18, 3
      %p126 = por %p124, %p125
      %p127 = scmp.ne.s32.totalorder %s116, %s117
      %p128 = scmp.eq.s32.totalorder %s18, 0
      %p129 = por %p127, %p128
      %p130 = scmp.ne.s32.totalorder %s116, %s117
      %p131 = scmp.eq.s32.totalorder %s19, 3
      %p132 = por %p130, %p131
      %p134 = scmp.ne.s32.totalorder %s117, %s133
      %p135 = scmp.eq.s32.totalorder %s19, 0
      %p136 = por %p134, %p135
      %s137 = ssub.s32 %s20, %s32
      %s138 = ssub.s32 %s21, %s28
      %s139 = sor.u32 %s137, %s138
      %p140 = scmp.eq.s32.totalorder %s139, 0
      %s142 = sadd.s32 %s141, 1
      %s143 = scalar_select %p140, %s141, %s142
      %p146 = pneg %p140
      %p147 = scmp.eq.s32.totalorder %s13, 3
      %p148 = por %p146, %p147
      %p149 = scmp.ne.s32.totalorder %s141, %s144
      %p150 = scmp.eq.s32.totalorder %s13, 0
      %p151 = por %p149, %p150
      %p152 = scmp.ne.s32.totalorder %s141, %s144
      %p153 = scmp.eq.s32.totalorder %s18, 3
      %p154 = por %p152, %p153
      %p155 = scmp.ne.s32.totalorder %s144, %s145
      %p156 = scmp.eq.s32.totalorder %s18, 0
      %p157 = por %p155, %p156
      %p158 = scmp.ne.s32.totalorder %s144, %s145
      %p159 = scmp.eq.s32.totalorder %s19, 3
      %p160 = por %p158, %p159
      %p162 = scmp.ne.s32.totalorder %s145, %s161
      %p163 = scmp.eq.s32.totalorder %s19, 0
      %p164 = por %p162, %p163
      %p165 = scmp.le.s32.totalorder 1, %s13
      %p166 = scmp.lt.s32.totalorder %s13, 5
      %p167 = pnand %p165, %p166
      %p168 = pneg %p167
      // Predicated region
      $region9: #{adaptive_margin_logits.2} parent=5 // pred_check
        _
      $region10: #{adaptive_margin_logits.2} parent=5 // pred_check_branch
        %170 = sbr.rel (%p167) target = $region12
      $region11: #{adaptive_margin_logits.2} parent=5 // pred_region
        %s171 = ssub.s32 %s13, 1
      $region12: #{adaptive_margin_logits.2} parent=5 // pred_fallthru
        _
      %p172 = scmp.lt.s32.totalorder %s13, 4
      // Predicated region
      $region13: #{adaptive_margin_logits.2} parent=5 // pred_check
        %p173 = pneg %p172
      $region14: #{adaptive_margin_logits.2} parent=5 // pred_check_branch
        %175 = sbr.rel (%p173) target = $region16
      $region15: #{adaptive_margin_logits.2} parent=5 // pred_region
        // Predicated region
        $region17: #{adaptive_margin_logits.2} parent=15 // pred_check
          %p176 = pneg %p45
        $region18: #{adaptive_margin_logits.2} parent=15 // pred_check_branch
          %178 = sbr.rel (%p176) target = $region20
        $region19: #{adaptive_margin_logits.2} parent=15 // pred_region
          %p179 = scmp.lt.s32.totalorder %s20, 1
          %s180 = scalar_select %p179, %s20, 1
          %s181 = smul.addr %s180, 4
          %s182 = scalar_lea.vmem %s0, %s181
        $region20: #{adaptive_margin_logits.2} parent=15 // pred_fallthru
          _
        // Predicated region
        $region21: #{adaptive_margin_logits.2} parent=15 // pred_check
          %p183 = pneg %p71
        $region22: #{adaptive_margin_logits.2} parent=15 // pred_check_branch
          %185 = sbr.rel (%p183) target = $region24
        $region23: #{adaptive_margin_logits.2} parent=15 // pred_region
          %p186 = scmp.lt.s32.totalorder %s20, 1
          %s187 = scalar_select %p186, %s20, 1
          %s188 = smul.addr %s187, 8
          %s189 = scalar_lea.vmem %s1, %s188
        $region24: #{adaptive_margin_logits.2} parent=15 // pred_fallthru
          _
        // Predicated region
        $region25: #{adaptive_margin_logits.2} parent=15 // pred_check
          %p190 = pneg %p97
        $region26: #{adaptive_margin_logits.2} parent=15 // pred_check_branch
          %192 = sbr.rel (%p190) target = $region28
        $region27: #{adaptive_margin_logits.2} parent=15 // pred_region
          %p193 = scmp.lt.s32.totalorder %s20, 1
          %s194 = scalar_select %p193, %s20, 1
          %s195 = smul.addr %s194, 8
          %s196 = scalar_lea.vmem %s2, %s195
        $region28: #{adaptive_margin_logits.2} parent=15 // pred_fallthru
          _
        // Predicated region
        $region29: #{adaptive_margin_logits.2} parent=15 // pred_check
          %p197 = pneg %p123
        $region30: #{adaptive_margin_logits.2} parent=15 // pred_check_branch
          %199 = sbr.rel (%p197) target = $region32
        $region31: #{adaptive_margin_logits.2} parent=15 // pred_region
          %s200 = sand.u32 %s113, 1
          %s201 = sand.u32 %s113, 1
          %s202 = smul.addr %s201, 128
          %s203 = scalar_lea.vmem [#allocation2], %s202
          %s204 = smul.u32 4, %s21
          %s205 = smul.addr %s204, 4
          %s206 = scalar_lea.vmem %s3, %s205
          // Predicated region
          $region33: #{adaptive_margin_logits.2} parent=31 // pred_check
            _
          $region34: #{adaptive_margin_logits.2} parent=31 // pred_check_branch
            %208 = sbr.rel (0) target = $region36
          $region35: #{adaptive_margin_logits.2} parent=31 // pred_region
            // Predicated region
            $region37: #{adaptive_margin_logits.2} parent=35 // pred_check
              _
            $region38: #{adaptive_margin_logits.2} parent=35 // pred_check_branch
              %210 = sbr.rel (0) target = $region40
            $region39: #{adaptive_margin_logits.2} parent=35 // pred_region
              loop: start=0, step=1, limit=1
              $region41: #{adaptive_margin_logits.2} parent=39 // loop_pre_header
                _
              $region42: #{adaptive_margin_logits.2} parent=39 // loop_header
                %s212 = sphi 0, %s216
                %p213 = scmp.ge.s32.totalorder %s212, 1
                %s217 = sphi %s206, %s206
                %s218 = sphi %s203, %s203
              $region43: #{adaptive_margin_logits.2} parent=39 // loop_header_branch
                %215 = sbr.rel (%p213) target = $region47
              $region44: #{adaptive_margin_logits.2} parent=39 // loop_body
                %v219 = vld [vmem:[%s217] sm:$0xff]
                %220 = vst [vmem:[%s218] sm:$0xff] %v219
                %v221 = vld [vmem:[%s217 + $0x8] sm:$0xff]
                %222 = vst [vmem:[%s218 + $0x8] sm:$0xff] %v221
                %v223 = vld [vmem:[%s217 + $0x20] sm:$0xff]
                %224 = vst [vmem:[%s218 + $0x10] sm:$0xff] %v223
                %v225 = vld [vmem:[%s217 + $0x28] sm:$0xff]
                %226 = vst [vmem:[%s218 + $0x18] sm:$0xff] %v225
                %v227 = vld [vmem:[%s217 + $0x40] sm:$0xff]
                %228 = vst [vmem:[%s218 + $0x20] sm:$0xff] %v227
                %v229 = vld [vmem:[%s217 + $0x48] sm:$0xff]
                %230 = vst [vmem:[%s218 + $0x28] sm:$0xff] %v229
                %v231 = vld [vmem:[%s217 + $0x60] sm:$0xff]
                %232 = vst [vmem:[%s218 + $0x30] sm:$0xff] %v231
                %v233 = vld [vmem:[%s217 + $0x68] sm:$0xff]
                %234 = vst [vmem:[%s218 + $0x38] sm:$0xff] %v233
                %v235 = vld [vmem:[%s217 + $0x80] sm:$0xff]
                %236 = vst [vmem:[%s218 + $0x40] sm:$0xff] %v235
                %v237 = vld [vmem:[%s217 + $0x88] sm:$0xff]
                %238 = vst [vmem:[%s218 + $0x48] sm:$0xff] %v237
                %v239 = vld [vmem:[%s217 + $0xa0] sm:$0xff]
                %240 = vst [vmem:[%s218 + $0x50] sm:$0xff] %v239
                %v241 = vld [vmem:[%s217 + $0xa8] sm:$0xff]
                %242 = vst [vmem:[%s218 + $0x58] sm:$0xff] %v241
                %v243 = vld [vmem:[%s217 + $0xc0] sm:$0xff]
                %244 = vst [vmem:[%s218 + $0x60] sm:$0xff] %v243
                %v245 = vld [vmem:[%s217 + $0xc8] sm:$0xff]
                %246 = vst [vmem:[%s218 + $0x68] sm:$0xff] %v245
                %v247 = vld [vmem:[%s217 + $0xe0] sm:$0xff]
                %248 = vst [vmem:[%s218 + $0x70] sm:$0xff] %v247
                %v249 = vld [vmem:[%s217 + $0xe8] sm:$0xff]
                %250 = vst [vmem:[%s218 + $0x78] sm:$0xff] %v249
              $region45: #{adaptive_margin_logits.2} parent=39 // loop_footer
                %s216 = sadd.s32 1, %s212
              $region46: #{adaptive_margin_logits.2} parent=39 // loop_footer_branch
                %211 = sbr.rel target = $region42
              $region47: #{adaptive_margin_logits.2} parent=39 // loop_exit
                _
            $region40: #{adaptive_margin_logits.2} parent=35 // pred_fallthru
              _
            // Predicated region
            $region48: #{adaptive_margin_logits.2} parent=35 // pred_check
              _
            $region49: #{adaptive_margin_logits.2} parent=35 // pred_check_branch
              %252 = sbr.rel target = $region51
            $region50: #{adaptive_margin_logits.2} parent=35 // pred_region
              _
            $region51: #{adaptive_margin_logits.2} parent=35 // pred_fallthru
              _
          $region36: #{adaptive_margin_logits.2} parent=31 // pred_fallthru
            _
          %253 = vnop
        $region32: #{adaptive_margin_logits.2} parent=15 // pred_fallthru
          _
      $region16: #{adaptive_margin_logits.2} parent=5 // pred_fallthru
        _
      %p254 = scmp.le.s32.totalorder 1, %s13
      %p255 = scmp.lt.s32.totalorder %s13, 5
      %p256 = pnand %p254, %p255
      %p257 = pneg %p256
      // Predicated region
      $region52: #{adaptive_margin_logits.2} parent=5 // pred_check
        _
      $region53: #{adaptive_margin_logits.2} parent=5 // pred_check_branch
        %259 = sbr.rel (%p256) target = $region55
      $region54: #{adaptive_margin_logits.2} parent=5 // pred_region
        %s260 = ssub.s32 %s13, 1
        %s261 = sand.u32 %s116, 1
        %s262 = sand.u32 %s116, 1
        %s263 = smul.addr %s262, 128
        %s264 = scalar_lea.vmem [#allocation2], %s263
        // Predicated region
        $region56: #{adaptive_margin_logits.2} parent=54 // pred_check
          %p265 = pneg %p129
        $region57: #{adaptive_margin_logits.2} parent=54 // pred_check_branch
          %267 = sbr.rel (%p265) target = $region59
        $region58: #{adaptive_margin_logits.2} parent=54 // pred_region
          _
        $region59: #{adaptive_margin_logits.2} parent=54 // pred_fallthru
          _
        %p268 = scmp.lt.s32.totalorder %s22, 1
        %s269 = scalar_select %p268, %s22, 1
        %s270 = smul.addr %s269, 4
        %s271 = scalar_lea.vmem %s0, %s270
        %p272 = pneg %p51
        %p273 = pneg %p48
        %p274 = scmp.lt.s32.totalorder %s22, 1
        %s275 = scalar_select %p274, %s22, 1
        %s276 = smul.addr %s275, 8
        %s277 = scalar_lea.vmem %s1, %s276
        %p278 = pneg %p77
        %p279 = pneg %p74
        %p280 = scmp.lt.s32.totalorder %s22, 1
        %s281 = scalar_select %p280, %s22, 1
        %s282 = smul.addr %s281, 8
        %s283 = scalar_lea.vmem %s2, %s282
        %p284 = pneg %p103
        %p285 = pneg %p100
        %s286 = sand.u32 %s116, 1
        %s287 = sand.u32 %s116, 1
        %s288 = smul.addr %s287, 128
        %s289 = scalar_lea.vmem [#allocation2], %s288
        %p290 = pneg %p129
        %p291 = pneg %p126
        %p292 = pneg %p157
        %p293 = pneg %p154
        %s294 = sand.u32 %s144, 1
        %s295 = scalar_lea.sflag [#allocation4], %s294
        %s296 = sand.u32 %s144, 1
        %s297 = smul.addr %s296, 32
        %s298 = scalar_lea.vmem [#allocation3], %s297
        %p299 = scmp.lt.s32.totalorder %s22, 1
        %s300 = scalar_select %p299, %s22, 1
        %s301 = smul.addr %s300, 4
        %s302 = scalar_lea.vmem %s0, %s301
        %p303 = scmp.lt.s32.totalorder %s22, 1
        %s304 = scalar_select %p303, %s22, 1
        %s305 = smul.addr %s304, 8
        %s306 = scalar_lea.vmem %s1, %s305
        %p307 = scmp.lt.s32.totalorder %s22, 1
        %s308 = scalar_select %p307, %s22, 1
        %s309 = smul.addr %s308, 8
        %s310 = scalar_lea.vmem %s2, %s309
        %s311 = smul.u32 4, %s23
        %s312 = smul.u32 4, %s23
        %v314 = vld [vmem:[%s302] sm:$0xf]
        %v315 = vld [vmem:[%s264] sm:$0xff]
        %v316 = vld [vmem:[%s264 + $0x8] sm:$0xff]
        %v317 = vld [vmem:[%s264 + $0x10] sm:$0xff]
        %v318 = vld [vmem:[%s264 + $0x18] sm:$0xff]
        %v319 = vld [vmem:[%s264 + $0x20] sm:$0xff]
        %v320 = vld [vmem:[%s264 + $0x28] sm:$0xff]
        %v321 = vld [vmem:[%s264 + $0x30] sm:$0xff]
        %v322 = vld [vmem:[%s264 + $0x38] sm:$0xff]
        %v323 = vld [vmem:[%s264 + $0x40] sm:$0xff]
        %v324 = vld [vmem:[%s264 + $0x48] sm:$0xff]
        %v325 = vld [vmem:[%s264 + $0x50] sm:$0xff]
        %v326 = vld [vmem:[%s264 + $0x58] sm:$0xff]
        %v327 = vld [vmem:[%s264 + $0x60] sm:$0xff]
        %v328 = vld [vmem:[%s264 + $0x68] sm:$0xff]
        %v329 = vld [vmem:[%s264 + $0x70] sm:$0xff]
        %v330 = vld [vmem:[%s264 + $0x78] sm:$0xff]
        %v347 = vunpack.c.l.b16 %v315
        %v348 = vunpack.c.h.b16 %v315
        %v349 = vunpack.c.l.b16 %v316
        %v350 = vunpack.c.h.b16 %v316
        %v351 = vunpack.c.l.b16 %v317
        %v352 = vunpack.c.h.b16 %v317
        %v353 = vunpack.c.l.b16 %v318
        %v354 = vunpack.c.h.b16 %v318
        %v355 = vunpack.c.l.b16 %v319
        %v356 = vunpack.c.h.b16 %v319
        %v357 = vunpack.c.l.b16 %v320
        %v358 = vunpack.c.h.b16 %v320
        %v359 = vunpack.c.l.b16 %v321
        %v360 = vunpack.c.h.b16 %v321
        %v361 = vunpack.c.l.b16 %v322
        %v362 = vunpack.c.h.b16 %v322
        %v363 = vunpack.c.l.b16 %v323
        %v364 = vunpack.c.h.b16 %v323
        %v365 = vunpack.c.l.b16 %v324
        %v366 = vunpack.c.h.b16 %v324
        %v367 = vunpack.c.l.b16 %v325
        %v368 = vunpack.c.h.b16 %v325
        %v369 = vunpack.c.l.b16 %v326
        %v370 = vunpack.c.h.b16 %v326
        %v371 = vunpack.c.l.b16 %v327
        %v372 = vunpack.c.h.b16 %v327
        %v373 = vunpack.c.l.b16 %v328
        %v374 = vunpack.c.h.b16 %v328
        %v375 = vunpack.c.l.b16 %v329
        %v376 = vunpack.c.h.b16 %v329
        %v377 = vunpack.c.l.b16 %v330
        %v378 = vunpack.c.h.b16 %v330
        %v379 = vpack.c.b16 %v351, %v347
        %v380 = vpack.c.b16 %v352, %v348
        %v381 = vpack.c.b16 %v353, %v349
        %v382 = vpack.c.b16 %v354, %v350
        %v383 = vpack.c.b16 %v359, %v355
        %v384 = vpack.c.b16 %v360, %v356
        %v385 = vpack.c.b16 %v361, %v357
        %v386 = vpack.c.b16 %v362, %v358
        %v387 = vpack.c.b16 %v367, %v363
        %v388 = vpack.c.b16 %v368, %v364
        %v389 = vpack.c.b16 %v369, %v365
        %v390 = vpack.c.b16 %v370, %v366
        %v391 = vpack.c.b16 %v375, %v371
        %v392 = vpack.c.b16 %v376, %v372
        %v393 = vpack.c.b16 %v377, %v373
        %v394 = vpack.c.b16 %v378, %v374
        %vm411 = vcmask 523264
        %v413 = vsel %vm411, %v314, 0
        %415 = vmatprep.subr.bf16.mxu0 %v380
        %416 = vmatpush1.bf16.msra.mxu0 %v379
        %417 = vmatprep.subr.bf16.mxu0 %v384
        %418 = vmatpush1.bf16.msra.mxu0 %v383
        %419 = vmatprep.subr.bf16.mxu0 %v388
        %420 = vmatpush1.bf16.msra.mxu0 %v387
        %421 = vmatprep.subr.bf16.mxu0 %v392
        %422 = vmatpush1.bf16.msra.mxu0 %v391
        %423 = vmatprep.subr.bf16.mxu0 0
        %424 = vmatpush1.bf16.msra.mxu0 0
        %425 = vmatprep.subr.bf16.mxu0 0
        %426 = vmatpush1.bf16.msra.mxu0 0
        %427 = vmatprep.subr.bf16.mxu0 0
        %428 = vmatpush1.bf16.msra.mxu0 0
        %429 = vmatprep.subr.bf16.mxu0 0
        %430 = vmatpush1.bf16.msra.mxu0 0
        %431 = vmatprep.subr.bf16.mxu0 0
        %432 = vmatpush1.bf16.msra.mxu0 0
        %433 = vmatprep.subr.bf16.mxu0 0
        %434 = vmatpush1.bf16.msra.mxu0 0
        %435 = vmatprep.subr.bf16.mxu0 0
        %436 = vmatpush1.bf16.msra.mxu0 0
        %437 = vmatprep.subr.bf16.mxu0 0
        %438 = vmatpush1.bf16.msra.mxu0 0
        %439 = vmatprep.subr.bf16.mxu0 0
        %440 = vmatpush1.bf16.msra.mxu0 0
        %441 = vmatprep.subr.bf16.mxu0 0
        %442 = vmatpush1.bf16.msra.mxu0 0
        %443 = vmatprep.subr.bf16.mxu0 0
        %444 = vmatpush1.bf16.msra.mxu0 0
        %445 = vmatprep.subr.bf16.mxu0 0
        %446 = vmatpush1.bf16.msra.mxu0 0
        %447 = vmatprep.mubr.bf16.mxu0 0
        %448 = vmatmul.mubr.bf16.gmra.mrb[0].mxu0 %v413
        %v449 = vpop.f32.mrb[0].mxu0
        %v450 = vadd.f32 0.0, %v449
        %v451 = vpop.f32.mrb[0].mxu0
        %v452 = vadd.f32 0.0, %v451
        %v453 = vpop.f32.mrb[0].mxu0
        %v454 = vpop.f32.mrb[0].mxu0
        %455 = vdwg.mxu0
        %456 = vmatprep.subr.bf16.mxu0 %v382
        %457 = vmatpush1.bf16.msra.mxu0 %v381
        %458 = vmatprep.subr.bf16.mxu0 %v386
        %459 = vmatpush1.bf16.msra.mxu0 %v385
        %460 = vmatprep.subr.bf16.mxu0 %v390
        %461 = vmatpush1.bf16.msra.mxu0 %v389
        %462 = vmatprep.subr.bf16.mxu0 %v394
        %463 = vmatpush1.bf16.msra.mxu0 %v393
        %464 = vmatprep.subr.bf16.mxu0 0
        %465 = vmatpush1.bf16.msra.mxu0 0
        %466 = vmatprep.subr.bf16.mxu0 0
        %467 = vmatpush1.bf16.msra.mxu0 0
        %468 = vmatprep.subr.bf16.mxu0 0
        %469 = vmatpush1.bf16.msra.mxu0 0
        %470 = vmatprep.subr.bf16.mxu0 0
        %471 = vmatpush1.bf16.msra.mxu0 0
        %472 = vmatprep.subr.bf16.mxu0 0
        %473 = vmatpush1.bf16.msra.mxu0 0
        %474 = vmatprep.subr.bf16.mxu0 0
        %475 = vmatpush1.bf16.msra.mxu0 0
        %476 = vmatprep.subr.bf16.mxu0 0
        %477 = vmatpush1.bf16.msra.mxu0 0
        %478 = vmatprep.subr.bf16.mxu0 0
        %479 = vmatpush1.bf16.msra.mxu0 0
        %480 = vmatprep.subr.bf16.mxu0 0
        %481 = vmatpush1.bf16.msra.mxu0 0
        %482 = vmatprep.subr.bf16.mxu0 0
        %483 = vmatpush1.bf16.msra.mxu0 0
        %484 = vmatprep.subr.bf16.mxu0 0
        %485 = vmatpush1.bf16.msra.mxu0 0
        %486 = vmatprep.subr.bf16.mxu0 0
        %487 = vmatpush1.bf16.msra.mxu0 0
        %488 = vmatprep.mubr.bf16.mxu0 0
        %489 = vmatmul.mubr.bf16.gmra.mrb[0].mxu0 %v413
        %v490 = vpop.f32.mrb[0].mxu0
        %v491 = vadd.f32 0.0, %v490
        %v492 = vpop.f32.mrb[0].mxu0
        %v493 = vadd.f32 0.0, %v492
        %v494 = vpop.f32.mrb[0].mxu0
        %v495 = vpop.f32.mrb[0].mxu0
        %496 = vdwg.mxu0
        %v497 = vmax.f32 %v450, -1.0
        %v498 = vmax.f32 %v452, -1.0
        %v499 = vmax.f32 %v491, -1.0
        %v500 = vmax.f32 %v493, -1.0
        %v501 = vmin.f32 %v497, 1.0
        %v502 = vmin.f32 %v498, 1.0
        %v503 = vmin.f32 %v499, 1.0
        %v504 = vmin.f32 %v500, 1.0
        %v505 = vlaneseq
        %v506 = vand.u32 %v505, 127
        %v507 = vadd.s32 %v506, 128
        %v508 = vadd.s32 %v506, 256
        %v509 = vadd.s32 %v506, 384
        %s510 = smul.u32 %s23, 512
        %v511 = vstv %s510
        %v512 = vadd.s32 %v506, %v511
        %v513 = vadd.s32 %v507, %v511
        %v514 = vadd.s32 %v508, %v511
        %v515 = vadd.s32 %v509, %v511
        %v516 = vld [vmem:[%s306] sm:$0xff]
        %517 = vset.pattern.permute.xlu0 0
        %518 = vperm.xlu0 %517, %v516
        %v519 = vpop.permute.xlu0 %518
        %vm520 = vcmp.eq.s32.totalorder %v512, %v519
        %vm521 = vcmp.eq.s32.totalorder %v513, %v519
        %vm522 = vcmp.eq.s32.totalorder %v514, %v519
        %vm523 = vcmp.eq.s32.totalorder %v515, %v519
        %v524 = vld [vmem:[%s310] sm:$0xff]
        %526 = vset.pattern.permute.xlu0 0
        %527 = vperm.xlu0 %526, %v524
        %v528 = vpop.permute.xlu0 %527
        %v530 = vsel %vm520, %v528, %v501
        %v531 = vsel %vm521, %v528, %v502
        %v532 = vsel %vm522, %v528, %v503
        %v533 = vsel %vm523, %v528, %v504
        %v534 = vmul.f32 %v530, 64.0
        %v535 = vmul.f32 %v531, 64.0
        %v536 = vmul.f32 %v532, 64.0
        %v537 = vmul.f32 %v533, 64.0
        %538 = vst [vmem:[%s298] sm:$0xff] %v534
        %539 = vst [vmem:[%s298 + $0x8] sm:$0xff] %v535
        %540 = vst [vmem:[%s298 + $0x10] sm:$0xff] %v536
        %541 = vst [vmem:[%s298 + $0x18] sm:$0xff] %v537
        %s542 = sand.u32 %s144, 1
        %s543 = scalar_lea.sflag [#allocation4], %s542
        %s544 = sand.u32 %s144, 1
        %s545 = smul.addr %s544, 32
        %s546 = scalar_lea.vmem [#allocation3], %s545
        // Predicated region
        $region60: #{adaptive_margin_logits.2} parent=54 // pred_check
          %p547 = pneg %p154
        $region61: #{adaptive_margin_logits.2} parent=54 // pred_check_branch
          %549 = sbr.rel (%p547) target = $region63
        $region62: #{adaptive_margin_logits.2} parent=54 // pred_region
          %s550 = smul.u32 4, %s23
          %s552 = ssub.s32 512, 512
          %553 = vsyncadd %s543, %s552
          %s554 = smul.addr %s22, 8
          %s555 = sadd.s32 %s550, %s554
          %s556 = smul.addr %s555, 128
          %s557 = scalar_lea.hbm %s4, %s556
          %s559 = sshll.u32 %s546, 4
          %s560 = int_to_ptr.vmem [resolvable:$true] %s559
          %562 = dma.vmem_to_hbm [thread:$0]  %s560, 512, %s557, %s543
        $region63: #{adaptive_margin_logits.2} parent=54 // pred_fallthru
          _
      $region55: #{adaptive_margin_logits.2} parent=5 // pred_fallthru
        _
      %p563 = scmp.le.s32.totalorder 2, %s13
      // Predicated region
      $region64: #{adaptive_margin_logits.2} parent=5 // pred_check
        %p564 = pneg %p563
      $region65: #{adaptive_margin_logits.2} parent=5 // pred_check_branch
        %566 = sbr.rel (%p564) target = $region67
      $region66: #{adaptive_margin_logits.2} parent=5 // pred_region
        %s567 = ssub.s32 %s13, 2
        // Predicated region
        $region68: #{adaptive_margin_logits.2} parent=66 // pred_check
          %p568 = pneg %p160
        $region69: #{adaptive_margin_logits.2} parent=66 // pred_check_branch
          %570 = sbr.rel (%p568) target = $region71
        $region70: #{adaptive_margin_logits.2} parent=66 // pred_region
          %s571 = sand.u32 %s145, 1
          %s572 = scalar_lea.sflag [#allocation4], %s571
          %s573 = sand.u32 %s145, 1
          %s574 = smul.addr %s573, 32
          %s575 = scalar_lea.vmem [#allocation3], %s574
          %576 = dma.done %s572, 512
        $region71: #{adaptive_margin_logits.2} parent=66 // pred_fallthru
          _
      $region67: #{adaptive_margin_logits.2} parent=5 // pred_fallthru
        _
    $region6: #{adaptive_margin_logits.2} parent=1 // loop_footer
      %s17 = sadd.s32 1, %s13
    $region7: #{adaptive_margin_logits.2} parent=1 // loop_footer_branch
      %12 = sbr.rel target = $region3
    $region8: #{adaptive_margin_logits.2} parent=1 // loop_exit
      _
    %577 = vsyncpa [#allocation4], 1
    %s578 = scalar_lea.sflag [#allocation4], 1
    %579 = vsyncpa %s578, 1

// kernel: adaptive_margin_logits.3
$region0: #{adaptive_margin_logits.3}
  #allocation0 [shape = 'u32[]', space=smem, size = 0x4, offset = 0x4, fixed_abs, tag = 'smem constant byte address 0x4 - core index']
  #allocation1 [shape = 'u32[144,128]{1,0:T(1,128)}', space=vmem, size = 0x12000, scoped, tag = 'internal scratch']
  #allocation2 [shape = 's32[1]{0}', space=sflag, size = 0x4, scoped, tag = 'scoped memory for adaptive_margin_logits.3']
  #allocation3 [shape = 'u8[512]{0}', space=smem, size = 0x200, scoped, tag = 'prefetched SMEM operand 0']
  #allocation4 [shape = 'u8[512]{0}', space=smem, size = 0x200, scoped, tag = 'prefetched SMEM operand 1']
  %s0 = inlined_call_operand.vmem [shape: s32[3], index: 0, kind: input, shape index: {}]
  %s1 = inlined_call_operand.vmem [shape: s32[3], index: 1, kind: input, shape index: {}]
  %s2 = inlined_call_operand.vmem [shape: bf16[64,1024], index: 2, kind: input, shape index: {}, may-alias: {2,3}]
  %s3 = inlined_call_operand.vmem [shape: bf16[64,1024], index: 3, kind: input, shape index: {}, may-alias: {2,3}]
  %s4 = inlined_call_operand.vmem [shape: f32[2,512], index: 4, kind: input, shape index: {}]
  %s5 = inlined_call_operand.vmem [shape: f32[2,512], index: 5, kind: output, shape index: {}]
  %s6 = sld [smem:[#allocation0]]
  $region99: #{adaptive_margin_logits.3} parent=0
    _
  %s8 = ssub.s32 1, %s6
  %s9 = scalar_select 0, %s8, %s6
  %s10 = sshll.u32 %s0, 4
  %s11 = int_to_ptr.vmem [resolvable:$true] %s10
  %13 = dma.vmem_to_smem %s11, 16, [#allocation3], [#allocation2]
  %s14 = sshll.u32 %s1, 4
  %s15 = int_to_ptr.vmem [resolvable:$true] %s14
  %17 = dma.vmem_to_smem %s15, 16, [#allocation4], [#allocation2]
  %18 = dma.done [#allocation2], 32
  %19 = sfence
  $region1: #{adaptive_margin_logits.3} parent=0
    #allocation5 [shape = 'u8[131072]{0}', space=vmem, size = 0x20000, scoped, tag = 'input window, operand 2']
    #allocation6 [shape = 'u8[131072]{0}', space=vmem, size = 0x20000, scoped, tag = 'input window, operand 3']
    loop: start=0, step=1, limit=5
    $region2: #{adaptive_margin_logits.3} parent=1 // loop_pre_header
      _
    $region3: #{adaptive_margin_logits.3} parent=1 // loop_header
      %s21 = sphi 0, %s25
      %p22 = scmp.ge.s32.totalorder %s21, 5
      %s33 = sphi 0, %s35
      %s36 = sphi 0, %s33
      %s37 = sphi 0, %s36
      %s53 = sphi 0, %s37
      %s61 = sphi 0, %s63
      %s64 = sphi 0, %s61
      %s65 = sphi 0, %s64
      %s81 = sphi 0, %s65
      %s85 = sphi 0, %s85
      %s87 = sphi 0, %s85
      %s88 = sphi 0, %s87
      %s102 = sphi 0, %s88
      %s106 = sphi 0, %s106
      %s108 = sphi 0, %s106
      %s109 = sphi 0, %s108
      %s123 = sphi 0, %s109
    $region4: #{adaptive_margin_logits.3} parent=1 // loop_header_branch
      %24 = sbr.rel (%p22) target = $region8
    $region5: #{adaptive_margin_logits.3} parent=1 // loop_body
      %s26 = ssub.s32 %s21, 1
      %s27 = ssub.s32 %s21, 2
      %s28 = sadd.s32 %s21, 1
      %s29 = sld [smem:[#allocation3 + %s21]]
      %s30 = sld [smem:[#allocation3 + %s28]]
      %s31 = ssub.s32 %s29, %s30
      %p32 = scmp.eq.s32.totalorder %s31, 0
      %s34 = sadd.s32 %s33, 1
      %s35 = scalar_select %p32, %s33, %s34
      %p38 = pneg %p32
      %p39 = scmp.eq.s32.totalorder %s21, 2
      %p40 = por %p38, %p39
      %p41 = scmp.ne.s32.totalorder %s33, %s36
      %p42 = scmp.eq.s32.totalorder %s21, 0
      %p43 = por %p41, %p42
      %p44 = scmp.ne.s32.totalorder %s33, %s36
      %p45 = scmp.eq.s32.totalorder %s26, 2
      %p46 = por %p44, %p45
      %p47 = scmp.ne.s32.totalorder %s36, %s37
      %p48 = scmp.eq.s32.totalorder %s26, 0
      %p49 = por %p47, %p48
      %p50 = scmp.ne.s32.totalorder %s36, %s37
      %p51 = scmp.eq.s32.totalorder %s27, 2
      %p52 = por %p50, %p51
      %p54 = scmp.ne.s32.totalorder %s37, %s53
      %p55 = scmp.eq.s32.totalorder %s27, 0
      %p56 = por %p54, %p55
      %s57 = sld [smem:[#allocation4 + %s21]]
      %s58 = sld [smem:[#allocation4 + %s28]]
      %s59 = ssub.s32 %s57, %s58
      %p60 = scmp.eq.s32.totalorder %s59, 0
      %s62 = sadd.s32 %s61, 1
      %s63 = scalar_select %p60, %s61, %s62
      %p66 = pneg %p60
      %p67 = scmp.eq.s32.totalorder %s21, 2
      %p68 = por %p66, %p67
      %p69 = scmp.ne.s32.totalorder %s61, %s64
      %p70 = scmp.eq.s32.totalorder %s21, 0
      %p71 = por %p69, %p70
      %p72 = scmp.ne.s32.totalorder %s61, %s64
      %p73 = scmp.eq.s32.totalorder %s26, 2
      %p74 = por %p72, %p73
      %p75 = scmp.ne.s32.totalorder %s64, %s65
      %p76 = scmp.eq.s32.totalorder %s26, 0
      %p77 = por %p75, %p76
      %p78 = scmp.ne.s32.totalorder %s64, %s65
      %p79 = scmp.eq.s32.totalorder %s27, 2
      %p80 = por %p78, %p79
      %p82 = scmp.ne.s32.totalorder %s65, %s81
      %p83 = scmp.eq.s32.totalorder %s27, 0
      %p84 = por %p82, %p83
      %s86 = sadd.s32 %s85, 1
      %p89 = scmp.eq.s32.totalorder %s21, 2
      %p90 = scmp.ne.s32.totalorder %s85, %s87
      %p91 = scmp.eq.s32.totalorder %s21, 0
      %p92 = por %p90, %p91
      %p93 = scmp.ne.s32.totalorder %s85, %s87
      %p94 = scmp.eq.s32.totalorder %s26, 2
      %p95 = por %p93, %p94
      %p96 = scmp.ne.s32.totalorder %s87, %s88
      %p97 = scmp.eq.s32.totalorder %s26, 0
      %p98 = por %p96, %p97
      %p99 = scmp.ne.s32.totalorder %s87, %s88
      %p100 = scmp.eq.s32.totalorder %s27, 2
      %p101 = por %p99, %p100
      %p103 = scmp.ne.s32.totalorder %s88, %s102
      %p104 = scmp.eq.s32.totalorder %s27, 0
      %p105 = por %p103, %p104
      %s107 = sadd.s32 %s106, 1
      %p110 = scmp.eq.s32.totalorder %s21, 2
      %p111 = scmp.ne.s32.totalorder %s106, %s108
      %p112 = scmp.eq.s32.totalorder %s21, 0
      %p113 = por %p111, %p112
      %p114 = scmp.ne.s32.totalorder %s106, %s108
      %p115 = scmp.eq.s32.totalorder %s26, 2
      %p116 = por %p114, %p115
      %p117 = scmp.ne.s32.totalorder %s108, %s109
      %p118 = scmp.eq.s32.totalorder %s26, 0
      %p119 = por %p117, %p118
      %p120 = scmp.ne.s32.totalorder %s108, %s109
      %p121 = scmp.eq.s32.totalorder %s27, 2
      %p122 = por %p120, %p121
      %p124 = scmp.ne.s32.totalorder %s109, %s123
      %p125 = scmp.eq.s32.totalorder %s27, 0
      %p126 = por %p124, %p125
      %p127 = scmp.le.s32.totalorder 1, %s21
      %p128 = scmp.lt.s32.totalorder %s21, 4
      %p129 = pnand %p127, %p128
      %p130 = pneg %p129
      // Predicated region
      $region9: #{adaptive_margin_logits.3} parent=5 // pred_check
        _
      $region10: #{adaptive_margin_logits.3} parent=5 // pred_check_branch
        %132 = sbr.rel (%p129) target = $region12
      $region11: #{adaptive_margin_logits.3} parent=5 // pred_region
        %s133 = ssub.s32 %s21, 1
        // Predicated region
        $region13: #{adaptive_margin_logits.3} parent=11 // pred_check
          %p134 = pneg %p98
        $region14: #{adaptive_margin_logits.3} parent=11 // pred_check_branch
          %136 = sbr.rel (%p134) target = $region16
        $region15: #{adaptive_margin_logits.3} parent=11 // pred_region
          _
        $region16: #{adaptive_margin_logits.3} parent=11 // pred_fallthru
          _
      $region12: #{adaptive_margin_logits.3} parent=5 // pred_fallthru
        _
      %p137 = scmp.lt.s32.totalorder %s21, 3
      // Predicated region
      $region17: #{adaptive_margin_logits.3} parent=5 // pred_check
        %p138 = pneg %p137
      $region18: #{adaptive_margin_logits.3} parent=5 // pred_check_branch
        %140 = sbr.rel (%p138) target = $region20
      $region19: #{adaptive_margin_logits.3} parent=5 // pred_region
        // Predicated region
        $region21: #{adaptive_margin_logits.3} parent=19 // pred_check
          %p141 = pneg %p43
        $region22: #{adaptive_margin_logits.3} parent=19 // pred_check_branch
          %143 = sbr.rel (%p141) target = $region24
        $region23: #{adaptive_margin_logits.3} parent=19 // pred_region
          %s144 = sand.u32 %s33, 1
          %s145 = sand.u32 %s33, 1
          %s146 = smul.addr %s145, 128
          %s147 = scalar_lea.vmem [#allocation5], %s146
          %s148 = sld [smem:[#allocation3 + %s21]]
          %s149 = smul.u32 4, %s148
          %s150 = smul.addr %s149, 4
          %s151 = scalar_lea.vmem %s2, %s150
          // Predicated region
          $region25: #{adaptive_margin_logits.3} parent=23 // pred_check
            _
          $region26: #{adaptive_margin_logits.3} parent=23 // pred_check_branch
            %153 = sbr.rel (0) target = $region28
          $region27: #{adaptive_margin_logits.3} parent=23 // pred_region
            // Predicated region
            $region29: #{adaptive_margin_logits.3} parent=27 // pred_check
              _
            $region30: #{adaptive_margin_logits.3} parent=27 // pred_check_branch
              %155 = sbr.rel (0) target = $region32
            $region31: #{adaptive_margin_logits.3} parent=27 // pred_region
              loop: start=0, step=1, limit=1
              $region33: #{adaptive_margin_logits.3} parent=31 // loop_pre_header
                _
              $region34: #{adaptive_margin_logits.3} parent=31 // loop_header
                %s157 = sphi 0, %s161
                %p158 = scmp.ge.s32.totalorder %s157, 1
                %s162 = sphi %s151, %s151
                %s163 = sphi %s147, %s147
              $region35: #{adaptive_margin_logits.3} parent=31 // loop_header_branch
                %160 = sbr.rel (%p158) target = $region39
              $region36: #{adaptive_margin_logits.3} parent=31 // loop_body
                %v164 = vld [vmem:[%s162] sm:$0xff]
                %165 = vst [vmem:[%s163] sm:$0xff] %v164
                %v166 = vld [vmem:[%s162 + $0x8] sm:$0xff]
                %167 = vst [vmem:[%s163 + $0x8] sm:$0xff] %v166
                %v168 = vld [vmem:[%s162 + $0x20] sm:$0xff]
                %169 = vst [vmem:[%s163 + $0x10] sm:$0xff] %v168
                %v170 = vld [vmem:[%s162 + $0x28] sm:$0xff]
                %171 = vst [vmem:[%s163 + $0x18] sm:$0xff] %v170
                %v172 = vld [vmem:[%s162 + $0x40] sm:$0xff]
                %173 = vst [vmem:[%s163 + $0x20] sm:$0xff] %v172
                %v174 = vld [vmem:[%s162 + $0x48] sm:$0xff]
                %175 = vst [vmem:[%s163 + $0x28] sm:$0xff] %v174
                %v176 = vld [vmem:[%s162 + $0x60] sm:$0xff]
                %177 = vst [vmem:[%s163 + $0x30] sm:$0xff] %v176
                %v178 = vld [vmem:[%s162 + $0x68] sm:$0xff]
                %179 = vst [vmem:[%s163 + $0x38] sm:$0xff] %v178
                %v180 = vld [vmem:[%s162 + $0x80] sm:$0xff]
                %181 = vst [vmem:[%s163 + $0x40] sm:$0xff] %v180
                %v182 = vld [vmem:[%s162 + $0x88] sm:$0xff]
                %183 = vst [vmem:[%s163 + $0x48] sm:$0xff] %v182
                %v184 = vld [vmem:[%s162 + $0xa0] sm:$0xff]
                %185 = vst [vmem:[%s163 + $0x50] sm:$0xff] %v184
                %v186 = vld [vmem:[%s162 + $0xa8] sm:$0xff]
                %187 = vst [vmem:[%s163 + $0x58] sm:$0xff] %v186
                %v188 = vld [vmem:[%s162 + $0xc0] sm:$0xff]
                %189 = vst [vmem:[%s163 + $0x60] sm:$0xff] %v188
                %v190 = vld [vmem:[%s162 + $0xc8] sm:$0xff]
                %191 = vst [vmem:[%s163 + $0x68] sm:$0xff] %v190
                %v192 = vld [vmem:[%s162 + $0xe0] sm:$0xff]
                %193 = vst [vmem:[%s163 + $0x70] sm:$0xff] %v192
                %v194 = vld [vmem:[%s162 + $0xe8] sm:$0xff]
                %195 = vst [vmem:[%s163 + $0x78] sm:$0xff] %v194
              $region37: #{adaptive_margin_logits.3} parent=31 // loop_footer
                %s161 = sadd.s32 1, %s157
              $region38: #{adaptive_margin_logits.3} parent=31 // loop_footer_branch
                %156 = sbr.rel target = $region34
              $region39: #{adaptive_margin_logits.3} parent=31 // loop_exit
                _
            $region32: #{adaptive_margin_logits.3} parent=27 // pred_fallthru
              _
            // Predicated region
            $region40: #{adaptive_margin_logits.3} parent=27 // pred_check
              _
            $region41: #{adaptive_margin_logits.3} parent=27 // pred_check_branch
              %197 = sbr.rel target = $region43
            $region42: #{adaptive_margin_logits.3} parent=27 // pred_region
              _
            $region43: #{adaptive_margin_logits.3} parent=27 // pred_fallthru
              _
          $region28: #{adaptive_margin_logits.3} parent=23 // pred_fallthru
            _
          %198 = vnop
        $region24: #{adaptive_margin_logits.3} parent=19 // pred_fallthru
          _
        // Predicated region
        $region44: #{adaptive_margin_logits.3} parent=19 // pred_check
          %p199 = pneg %p71
        $region45: #{adaptive_margin_logits.3} parent=19 // pred_check_branch
          %201 = sbr.rel (%p199) target = $region47
        $region46: #{adaptive_margin_logits.3} parent=19 // pred_region
          %s202 = sand.u32 %s61, 1
          %s203 = sand.u32 %s61, 1
          %s204 = smul.addr %s203, 128
          %s205 = scalar_lea.vmem [#allocation6], %s204
          %s206 = sld [smem:[#allocation4 + %s21]]
          %s207 = smul.u32 4, %s206
          %s208 = smul.addr %s207, 4
          %s209 = scalar_lea.vmem %s3, %s208
          // Predicated region
          $region48: #{adaptive_margin_logits.3} parent=46 // pred_check
            _
          $region49: #{adaptive_margin_logits.3} parent=46 // pred_check_branch
            %211 = sbr.rel (0) target = $region51
          $region50: #{adaptive_margin_logits.3} parent=46 // pred_region
            // Predicated region
            $region52: #{adaptive_margin_logits.3} parent=50 // pred_check
              _
            $region53: #{adaptive_margin_logits.3} parent=50 // pred_check_branch
              %213 = sbr.rel (0) target = $region55
            $region54: #{adaptive_margin_logits.3} parent=50 // pred_region
              loop: start=0, step=1, limit=1
              $region56: #{adaptive_margin_logits.3} parent=54 // loop_pre_header
                _
              $region57: #{adaptive_margin_logits.3} parent=54 // loop_header
                %s215 = sphi 0, %s219
                %p216 = scmp.ge.s32.totalorder %s215, 1
                %s220 = sphi %s209, %s209
                %s221 = sphi %s205, %s205
              $region58: #{adaptive_margin_logits.3} parent=54 // loop_header_branch
                %218 = sbr.rel (%p216) target = $region62
              $region59: #{adaptive_margin_logits.3} parent=54 // loop_body
                %v222 = vld [vmem:[%s220] sm:$0xff]
                %223 = vst [vmem:[%s221] sm:$0xff] %v222
                %v224 = vld [vmem:[%s220 + $0x8] sm:$0xff]
                %225 = vst [vmem:[%s221 + $0x8] sm:$0xff] %v224
                %v226 = vld [vmem:[%s220 + $0x20] sm:$0xff]
                %227 = vst [vmem:[%s221 + $0x10] sm:$0xff] %v226
                %v228 = vld [vmem:[%s220 + $0x28] sm:$0xff]
                %229 = vst [vmem:[%s221 + $0x18] sm:$0xff] %v228
                %v230 = vld [vmem:[%s220 + $0x40] sm:$0xff]
                %231 = vst [vmem:[%s221 + $0x20] sm:$0xff] %v230
                %v232 = vld [vmem:[%s220 + $0x48] sm:$0xff]
                %233 = vst [vmem:[%s221 + $0x28] sm:$0xff] %v232
                %v234 = vld [vmem:[%s220 + $0x60] sm:$0xff]
                %235 = vst [vmem:[%s221 + $0x30] sm:$0xff] %v234
                %v236 = vld [vmem:[%s220 + $0x68] sm:$0xff]
                %237 = vst [vmem:[%s221 + $0x38] sm:$0xff] %v236
                %v238 = vld [vmem:[%s220 + $0x80] sm:$0xff]
                %239 = vst [vmem:[%s221 + $0x40] sm:$0xff] %v238
                %v240 = vld [vmem:[%s220 + $0x88] sm:$0xff]
                %241 = vst [vmem:[%s221 + $0x48] sm:$0xff] %v240
                %v242 = vld [vmem:[%s220 + $0xa0] sm:$0xff]
                %243 = vst [vmem:[%s221 + $0x50] sm:$0xff] %v242
                %v244 = vld [vmem:[%s220 + $0xa8] sm:$0xff]
                %245 = vst [vmem:[%s221 + $0x58] sm:$0xff] %v244
                %v246 = vld [vmem:[%s220 + $0xc0] sm:$0xff]
                %247 = vst [vmem:[%s221 + $0x60] sm:$0xff] %v246
                %v248 = vld [vmem:[%s220 + $0xc8] sm:$0xff]
                %249 = vst [vmem:[%s221 + $0x68] sm:$0xff] %v248
                %v250 = vld [vmem:[%s220 + $0xe0] sm:$0xff]
                %251 = vst [vmem:[%s221 + $0x70] sm:$0xff] %v250
                %v252 = vld [vmem:[%s220 + $0xe8] sm:$0xff]
                %253 = vst [vmem:[%s221 + $0x78] sm:$0xff] %v252
              $region60: #{adaptive_margin_logits.3} parent=54 // loop_footer
                %s219 = sadd.s32 1, %s215
              $region61: #{adaptive_margin_logits.3} parent=54 // loop_footer_branch
                %214 = sbr.rel target = $region57
              $region62: #{adaptive_margin_logits.3} parent=54 // loop_exit
                _
            $region55: #{adaptive_margin_logits.3} parent=50 // pred_fallthru
              _
            // Predicated region
            $region63: #{adaptive_margin_logits.3} parent=50 // pred_check
              _
            $region64: #{adaptive_margin_logits.3} parent=50 // pred_check_branch
              %255 = sbr.rel target = $region66
            $region65: #{adaptive_margin_logits.3} parent=50 // pred_region
              _
            $region66: #{adaptive_margin_logits.3} parent=50 // pred_fallthru
              _
          $region51: #{adaptive_margin_logits.3} parent=46 // pred_fallthru
            _
          %256 = vnop
        $region47: #{adaptive_margin_logits.3} parent=19 // pred_fallthru
          _
      $region20: #{adaptive_margin_logits.3} parent=5 // pred_fallthru
        _
      %p257 = scmp.le.s32.totalorder 1, %s21
      %p258 = scmp.lt.s32.totalorder %s21, 4
      %p259 = pnand %p257, %p258
      %p260 = pneg %p259
      // Predicated region
      $region67: #{adaptive_margin_logits.3} parent=5 // pred_check
        _
      $region68: #{adaptive_margin_logits.3} parent=5 // pred_check_branch
        %262 = sbr.rel (%p259) target = $region70
      $region69: #{adaptive_margin_logits.3} parent=5 // pred_region
        %s263 = ssub.s32 %s21, 1
        %s264 = sand.u32 %s36, 1
        %s265 = sand.u32 %s36, 1
        %s266 = smul.addr %s265, 128
        %s267 = scalar_lea.vmem [#allocation5], %s266
        // Predicated region
        $region71: #{adaptive_margin_logits.3} parent=69 // pred_check
          %p268 = pneg %p49
        $region72: #{adaptive_margin_logits.3} parent=69 // pred_check_branch
          %270 = sbr.rel (%p268) target = $region74
        $region73: #{adaptive_margin_logits.3} parent=69 // pred_region
          _
        $region74: #{adaptive_margin_logits.3} parent=69 // pred_fallthru
          _
        %s271 = sand.u32 %s64, 1
        %s272 = sand.u32 %s64, 1
        %s273 = smul.addr %s272, 128
        %s274 = scalar_lea.vmem [#allocation6], %s273
        // Predicated region
        $region75: #{adaptive_margin_logits.3} parent=69 // pred_check
          %p275 = pneg %p77
        $region76: #{adaptive_margin_logits.3} parent=69 // pred_check_branch
          %277 = sbr.rel (%p275) target = $region78
        $region77: #{adaptive_margin_logits.3} parent=69 // pred_region
          _
        $region78: #{adaptive_margin_logits.3} parent=69 // pred_fallthru
          _
        %s278 = sand.u32 %s36, 1
        %s279 = sand.u32 %s36, 1
        %s280 = smul.addr %s279, 128
        %s281 = scalar_lea.vmem [#allocation5], %s280
        %p282 = pneg %p49
        %p283 = pneg %p46
        %s284 = sand.u32 %s64, 1
        %s285 = sand.u32 %s64, 1
        %s286 = smul.addr %s285, 128
        %s287 = scalar_lea.vmem [#allocation6], %s286
        %p288 = pneg %p77
        %p289 = pneg %p74
        %p290 = pneg %p98
        %p291 = pneg %p95
        %p292 = pneg %p119
        %p293 = pneg %p116
        %s294 = sld [smem:[#allocation3 + %s26]]
        %s295 = smul.u32 4, %s294
        %s296 = sld [smem:[#allocation4 + %s26]]
        %s297 = smul.u32 4, %s296
        %p299 = scmp.eq.s32.totalorder %s26, 0
        // Predicated region
        $region79: #{adaptive_margin_logits.3} parent=69 // pred_check
          %p300 = pneg %p299
        $region80: #{adaptive_margin_logits.3} parent=69 // pred_check_branch
          %302 = sbr.rel (%p300) target = $region82
        $region81: #{adaptive_margin_logits.3} parent=69 // pred_region
          %303 = vst [vmem:[%s5] sm:$0xff] -inf
        $region82: #{adaptive_margin_logits.3} parent=69 // pred_fallthru
          _
        %s304 = sld [smem:[#allocation3 + %s26]]
        %s305 = sld [smem:[#allocation4 + %s26]]
        %v306 = vld [vmem:[%s267] sm:$0xff]
        %v307 = vld [vmem:[%s267 + $0x8] sm:$0xff]
        %v308 = vld [vmem:[%s267 + $0x10] sm:$0xff]
        %v309 = vld [vmem:[%s267 + $0x18] sm:$0xff]
        %v310 = vld [vmem:[%s267 + $0x20] sm:$0xff]
        %v311 = vld [vmem:[%s267 + $0x28] sm:$0xff]
        %v312 = vld [vmem:[%s267 + $0x30] sm:$0xff]
        %v313 = vld [vmem:[%s267 + $0x38] sm:$0xff]
        %v314 = vld [vmem:[%s267 + $0x40] sm:$0xff]
        %v315 = vld [vmem:[%s267 + $0x48] sm:$0xff]
        %v316 = vld [vmem:[%s267 + $0x50] sm:$0xff]
        %v317 = vld [vmem:[%s267 + $0x58] sm:$0xff]
        %v318 = vld [vmem:[%s267 + $0x60] sm:$0xff]
        %v319 = vld [vmem:[%s267 + $0x68] sm:$0xff]
        %v320 = vld [vmem:[%s267 + $0x70] sm:$0xff]
        %v321 = vld [vmem:[%s267 + $0x78] sm:$0xff]
        %v322 = vld [vmem:[%s274] sm:$0xff]
        %v323 = vld [vmem:[%s274 + $0x8] sm:$0xff]
        %v324 = vld [vmem:[%s274 + $0x10] sm:$0xff]
        %v325 = vld [vmem:[%s274 + $0x18] sm:$0xff]
        %v326 = vld [vmem:[%s274 + $0x20] sm:$0xff]
        %v327 = vld [vmem:[%s274 + $0x28] sm:$0xff]
        %v328 = vld [vmem:[%s274 + $0x30] sm:$0xff]
        %v329 = vld [vmem:[%s274 + $0x38] sm:$0xff]
        %v330 = vld [vmem:[%s274 + $0x40] sm:$0xff]
        %v331 = vld [vmem:[%s274 + $0x48] sm:$0xff]
        %v332 = vld [vmem:[%s274 + $0x50] sm:$0xff]
        %v333 = vld [vmem:[%s274 + $0x58] sm:$0xff]
        %v334 = vld [vmem:[%s274 + $0x60] sm:$0xff]
        %v335 = vld [vmem:[%s274 + $0x68] sm:$0xff]
        %v336 = vld [vmem:[%s274 + $0x70] sm:$0xff]
        %v337 = vld [vmem:[%s274 + $0x78] sm:$0xff]
        %v354 = vunpack.c.l.b16 %v306
        %v355 = vunpack.c.h.b16 %v306
        %v356 = vunpack.c.l.b16 %v307
        %v357 = vunpack.c.h.b16 %v307
        %v358 = vunpack.c.l.b16 %v308
        %v359 = vunpack.c.h.b16 %v308
        %v360 = vunpack.c.l.b16 %v309
        %v361 = vunpack.c.h.b16 %v309
        %v362 = vunpack.c.l.b16 %v310
        %v363 = vunpack.c.h.b16 %v310
        %v364 = vunpack.c.l.b16 %v311
        %v365 = vunpack.c.h.b16 %v311
        %v366 = vunpack.c.l.b16 %v312
        %v367 = vunpack.c.h.b16 %v312
        %v368 = vunpack.c.l.b16 %v313
        %v369 = vunpack.c.h.b16 %v313
        %v370 = vunpack.c.l.b16 %v314
        %v371 = vunpack.c.h.b16 %v314
        %v372 = vunpack.c.l.b16 %v315
        %v373 = vunpack.c.h.b16 %v315
        %v374 = vunpack.c.l.b16 %v316
        %v375 = vunpack.c.h.b16 %v316
        %v376 = vunpack.c.l.b16 %v317
        %v377 = vunpack.c.h.b16 %v317
        %v378 = vunpack.c.l.b16 %v318
        %v379 = vunpack.c.h.b16 %v318
        %v380 = vunpack.c.l.b16 %v319
        %v381 = vunpack.c.h.b16 %v319
        %v382 = vunpack.c.l.b16 %v320
        %v383 = vunpack.c.h.b16 %v320
        %v384 = vunpack.c.l.b16 %v321
        %v385 = vunpack.c.h.b16 %v321
        %v386 = vpack.c.b16 %v358, %v354
        %v387 = vpack.c.b16 %v359, %v355
        %v388 = vpack.c.b16 %v360, %v356
        %v389 = vpack.c.b16 %v361, %v357
        %v390 = vpack.c.b16 %v366, %v362
        %v391 = vpack.c.b16 %v367, %v363
        %v392 = vpack.c.b16 %v368, %v364
        %v393 = vpack.c.b16 %v369, %v365
        %v394 = vpack.c.b16 %v374, %v370
        %v395 = vpack.c.b16 %v375, %v371
        %v396 = vpack.c.b16 %v376, %v372
        %v397 = vpack.c.b16 %v377, %v373
        %v398 = vpack.c.b16 %v382, %v378
        %v399 = vpack.c.b16 %v383, %v379
        %v400 = vpack.c.b16 %v384, %v380
        %v401 = vpack.c.b16 %v385, %v381
        %418 = vxpose.xlu0.c.b16.start [1/8] %v386, 128
        %419 = vxpose.xlu0.c.b16.cont [2/8] %v390, 128
        %420 = vxpose.xlu0.c.b16.cont [3/8] %v394, 128
        %421 = vxpose.xlu0.c.b16.cont [4/8] %v398, 128
        %422 = vxpose.xlu0.c.b16.cont [5/8] 0, 128
        %423 = vxpose.xlu0.c.b16.cont [6/8] 0, 128
        %424 = vxpose.xlu0.c.b16.cont [7/8] 0, 128
        %425 = vxpose.xlu0.c.b16.end [8/8] 0, 128
        %v426 = vpop.trf.xlu0
        %v427 = vpop.trf.xlu0
        %v428 = vpop.trf.xlu0
        %v429 = vpop.trf.xlu0
        %v430 = vpop.trf.xlu0
        %v431 = vpop.trf.xlu0
        %v432 = vpop.trf.xlu0
        %v433 = vpop.trf.xlu0
        %434 = vxpose.xlu0.c.b16.start [1/8] %v387, 128
        %435 = vxpose.xlu0.c.b16.cont [2/8] %v391, 128
        %436 = vxpose.xlu0.c.b16.cont [3/8] %v395, 128
        %437 = vxpose.xlu0.c.b16.cont [4/8] %v399, 128
        %438 = vxpose.xlu0.c.b16.cont [5/8] 0, 128
        %439 = vxpose.xlu0.c.b16.cont [6/8] 0, 128
        %440 = vxpose.xlu0.c.b16.cont [7/8] 0, 128
        %441 = vxpose.xlu0.c.b16.end [8/8] 0, 128
        %v442 = vpop.trf.xlu0
        %v443 = vpop.trf.xlu0
        %v444 = vpop.trf.xlu0
        %v445 = vpop.trf.xlu0
        %v446 = vpop.trf.xlu0
        %v447 = vpop.trf.xlu0
        %v448 = vpop.trf.xlu0
        %v449 = vpop.trf.xlu0
        %450 = vxpose.xlu0.c.b16.start [1/8] %v388, 128
        %451 = vxpose.xlu0.c.b16.cont [2/8] %v392, 128
        %452 = vxpose.xlu0.c.b16.cont [3/8] %v396, 128
        %453 = vxpose.xlu0.c.b16.cont [4/8] %v400, 128
        %454 = vxpose.xlu0.c.b16.cont [5/8] 0, 128
        %455 = vxpose.xlu0.c.b16.cont [6/8] 0, 128
        %456 = vxpose.xlu0.c.b16.cont [7/8] 0, 128
        %457 = vxpose.xlu0.c.b16.end [8/8] 0, 128
        %v458 = vpop.trf.xlu0
        %v459 = vpop.trf.xlu0
        %v460 = vpop.trf.xlu0
        %v461 = vpop.trf.xlu0
        %v462 = vpop.trf.xlu0
        %v463 = vpop.trf.xlu0
        %v464 = vpop.trf.xlu0
        %v465 = vpop.trf.xlu0
        %466 = vxpose.xlu0.c.b16.start [1/8] %v389, 128
        %467 = vxpose.xlu0.c.b16.cont [2/8] %v393, 128
        %468 = vxpose.xlu0.c.b16.cont [3/8] %v397, 128
        %469 = vxpose.xlu0.c.b16.cont [4/8] %v401, 128
        %470 = vxpose.xlu0.c.b16.cont [5/8] 0, 128
        %471 = vxpose.xlu0.c.b16.cont [6/8] 0, 128
        %472 = vxpose.xlu0.c.b16.cont [7/8] 0, 128
        %473 = vxpose.xlu0.c.b16.end [8/8] 0, 128
        %v474 = vpop.trf.xlu0
        %v475 = vpop.trf.xlu0
        %v476 = vpop.trf.xlu0
        %v477 = vpop.trf.xlu0
        %v478 = vpop.trf.xlu0
        %v479 = vpop.trf.xlu0
        %v480 = vpop.trf.xlu0
        %v481 = vpop.trf.xlu0
        %v498 = vunpack.c.l.b16 %v322
        %v499 = vunpack.c.h.b16 %v322
        %v500 = vunpack.c.l.b16 %v323
        %v501 = vunpack.c.h.b16 %v323
        %v502 = vunpack.c.l.b16 %v324
        %v503 = vunpack.c.h.b16 %v324
        %v504 = vunpack.c.l.b16 %v325
        %v505 = vunpack.c.h.b16 %v325
        %v506 = vunpack.c.l.b16 %v326
        %v507 = vunpack.c.h.b16 %v326
        %v508 = vunpack.c.l.b16 %v327
        %v509 = vunpack.c.h.b16 %v327
        %v510 = vunpack.c.l.b16 %v328
        %v511 = vunpack.c.h.b16 %v328
        %v512 = vunpack.c.l.b16 %v329
        %v513 = vunpack.c.h.b16 %v329
        %v514 = vunpack.c.l.b16 %v330
        %v515 = vunpack.c.h.b16 %v330
        %v516 = vunpack.c.l.b16 %v331
        %v517 = vunpack.c.h.b16 %v331
        %v518 = vunpack.c.l.b16 %v332
        %v519 = vunpack.c.h.b16 %v332
        %v520 = vunpack.c.l.b16 %v333
        %v521 = vunpack.c.h.b16 %v333
        %v522 = vunpack.c.l.b16 %v334
        %v523 = vunpack.c.h.b16 %v334
        %v524 = vunpack.c.l.b16 %v335
        %v525 = vunpack.c.h.b16 %v335
        %v526 = vunpack.c.l.b16 %v336
        %v527 = vunpack.c.h.b16 %v336
        %v528 = vunpack.c.l.b16 %v337
        %v529 = vunpack.c.h.b16 %v337
        %v530 = vpack.c.b16 %v502, %v498
        %v531 = vpack.c.b16 %v503, %v499
        %v532 = vpack.c.b16 %v504, %v500
        %v533 = vpack.c.b16 %v505, %v501
        %v534 = vpack.c.b16 %v510, %v506
        %v535 = vpack.c.b16 %v511, %v507
        %v536 = vpack.c.b16 %v512, %v508
        %v537 = vpack.c.b16 %v513, %v509
        %v538 = vpack.c.b16 %v518, %v514
        %v539 = vpack.c.b16 %v519, %v515
        %v540 = vpack.c.b16 %v520, %v516
        %v541 = vpack.c.b16 %v521, %v517
        %v542 = vpack.c.b16 %v526, %v522
        %v543 = vpack.c.b16 %v527, %v523
        %v544 = vpack.c.b16 %v528, %v524
        %v545 = vpack.c.b16 %v529, %v525
        %vm562 = vcmask 523264
        %v564 = vsel %vm562, %v426, 0
        %v567 = vsel %vm562, %v427, 0
        %v570 = vsel %vm562, %v428, 0
        %v573 = vsel %vm562, %v429, 0
        %v576 = vsel %vm562, %v430, 0
        %v579 = vsel %vm562, %v431, 0
        %v582 = vsel %vm562, %v432, 0
        %v585 = vsel %vm562, %v433, 0
        %v588 = vsel %vm562, %v442, 0
        %v591 = vsel %vm562, %v443, 0
        %v594 = vsel %vm562, %v444, 0
        %v597 = vsel %vm562, %v445, 0
        %v600 = vsel %vm562, %v446, 0
        %v603 = vsel %vm562, %v447, 0
        %v606 = vsel %vm562, %v448, 0
        %v609 = vsel %vm562, %v449, 0
        %v612 = vsel %vm562, %v458, 0
        %v615 = vsel %vm562, %v459, 0
        %v618 = vsel %vm562, %v460, 0
        %v621 = vsel %vm562, %v461, 0
        %v624 = vsel %vm562, %v462, 0
        %v627 = vsel %vm562, %v463, 0
        %v630 = vsel %vm562, %v464, 0
        %v633 = vsel %vm562, %v465, 0
        %v636 = vsel %vm562, %v474, 0
        %v639 = vsel %vm562, %v475, 0
        %v642 = vsel %vm562, %v476, 0
        %v645 = vsel %vm562, %v477, 0
        %v648 = vsel %vm562, %v478, 0
        %v651 = vsel %vm562, %v479, 0
        %v654 = vsel %vm562, %v480, 0
        %v657 = vsel %vm562, %v481, 0
        %659 = vmatprep.subr.bf16.mxu0 %v531
        %660 = vmatpush1.bf16.msra.mxu0 %v530
        %661 = vmatprep.subr.bf16.mxu0 %v535
        %662 = vmatpush1.bf16.msra.mxu0 %v534
        %663 = vmatprep.subr.bf16.mxu0 %v539
        %664 = vmatpush1.bf16.msra.mxu0 %v538
        %665 = vmatprep.subr.bf16.mxu0 %v543
        %666 = vmatpush1.bf16.msra.mxu0 %v542
        %667 = vmatprep.subr.bf16.mxu0 0
        %668 = vmatpush1.bf16.msra.mxu0 0
        %669 = vmatprep.subr.bf16.mxu0 0
        %670 = vmatpush1.bf16.msra.mxu0 0
        %671 = vmatprep.subr.bf16.mxu0 0
        %672 = vmatpush1.bf16.msra.mxu0 0
        %673 = vmatprep.subr.bf16.mxu0 0
        %674 = vmatpush1.bf16.msra.mxu0 0
        %675 = vmatprep.subr.bf16.mxu0 0
        %676 = vmatpush1.bf16.msra.mxu0 0
        %677 = vmatprep.subr.bf16.mxu0 0
        %678 = vmatpush1.bf16.msra.mxu0 0
        %679 = vmatprep.subr.bf16.mxu0 0
        %680 = vmatpush1.bf16.msra.mxu0 0
        %681 = vmatprep.subr.bf16.mxu0 0
        %682 = vmatpush1.bf16.msra.mxu0 0
        %683 = vmatprep.subr.bf16.mxu0 0
        %684 = vmatpush1.bf16.msra.mxu0 0
        %685 = vmatprep.subr.bf16.mxu0 0
        %686 = vmatpush1.bf16.msra.mxu0 0
        %687 = vmatprep.subr.bf16.mxu0 0
        %688 = vmatpush1.bf16.msra.mxu0 0
        %689 = vmatprep.subr.bf16.mxu0 0
        %690 = vmatpush1.bf16.msra.mxu0 0
        %691 = vmatprep.mubr.bf16.mxu0 0
        %692 = vmatmul.mubr.bf16.gmra.mrb[0].mxu0 %v564
        %v693 = vpop.f32.mrb[0].mxu0
        %v694 = vadd.f32 0.0, %v693
        %v695 = vpop.f32.mrb[0].mxu0
        %v696 = vadd.f32 0.0, %v695
        %v697 = vpop.f32.mrb[0].mxu0
        %v698 = vadd.f32 0.0, %v697
        %v699 = vpop.f32.mrb[0].mxu0
        %v700 = vadd.f32 0.0, %v699
        %701 = vmatprep.mubr.bf16.mxu0 0
        %702 = vmatmul.mubr.bf16.gmra.mrb[0].mxu0 %v567
        %v703 = vpop.f32.mrb[0].mxu0
        %v704 = vadd.f32 0.0, %v703
        %v705 = vpop.f32.mrb[0].mxu0
        %v706 = vadd.f32 0.0, %v705
        %v707 = vpop.f32.mrb[0].mxu0
        %v708 = vadd.f32 0.0, %v707
        %v709 = vpop.f32.mrb[0].mxu0
        %v710 = vadd.f32 0.0, %v709
        %711 = vmatprep.mubr.bf16.mxu0 0
        %712 = vmatmul.mubr.bf16.gmra.mrb[0].mxu0 %v570
        %v713 = vpop.f32.mrb[0].mxu0
        %v714 = vadd.f32 0.0, %v713
        %v715 = vpop.f32.mrb[0].mxu0
        %v716 = vadd.f32 0.0, %v715
        %v717 = vpop.f32.mrb[0].mxu0
        %v718 = vadd.f32 0.0, %v717
        %v719 = vpop.f32.mrb[0].mxu0
        %v720 = vadd.f32 0.0, %v719
        %721 = vmatprep.mubr.bf16.mxu0 0
        %722 = vmatmul.mubr.bf16.gmra.mrb[0].mxu0 %v573
        %v723 = vpop.f32.mrb[0].mxu0
        %v724 = vadd.f32 0.0, %v723
        %v725 = vpop.f32.mrb[0].mxu0
        %v726 = vadd.f32 0.0, %v725
        %v727 = vpop.f32.mrb[0].mxu0
        %v728 = vadd.f32 0.0, %v727
        %v729 = vpop.f32.mrb[0].mxu0
        %v730 = vadd.f32 0.0, %v729
        %731 = vmatprep.mubr.bf16.mxu0 0
        %732 = vmatmul.mubr.bf16.gmra.mrb[0].mxu0 %v576
        %v733 = vpop.f32.mrb[0].mxu0
        %v734 = vadd.f32 0.0, %v733
        %v735 = vpop.f32.mrb[0].mxu0
        %v736 = vadd.f32 0.0, %v735
        %v737 = vpop.f32.mrb[0].mxu0
        %v738 = vadd.f32 0.0, %v737
        %v739 = vpop.f32.mrb[0].mxu0
        %v740 = vadd.f32 0.0, %v739
        %741 = vmatprep.mubr.bf16.mxu0 0
        %742 = vmatmul.mubr.bf16.gmra.mrb[0].mxu0 %v579
        %v743 = vpop.f32.mrb[0].mxu0
        %v744 = vadd.f32 0.0, %v743
        %v745 = vpop.f32.mrb[0].mxu0
        %v746 = vadd.f32 0.0, %v745
        %v747 = vpop.f32.mrb[0].mxu0
        %v748 = vadd.f32 0.0, %v747
        %v749 = vpop.f32.mrb[0].mxu0
        %v750 = vadd.f32 0.0, %v749
        %751 = vmatprep.mubr.bf16.mxu0 0
        %752 = vmatmul.mubr.bf16.gmra.mrb[0].mxu0 %v582
        %v753 = vpop.f32.mrb[0].mxu0
        %v754 = vadd.f32 0.0, %v753
        %v755 = vpop.f32.mrb[0].mxu0
        %v756 = vadd.f32 0.0, %v755
        %v757 = vpop.f32.mrb[0].mxu0
        %v758 = vadd.f32 0.0, %v757
        %v759 = vpop.f32.mrb[0].mxu0
        %v760 = vadd.f32 0.0, %v759
        %761 = vmatprep.mubr.bf16.mxu0 0
        %762 = vmatmul.mubr.bf16.gmra.mrb[0].mxu0 %v585
        %v763 = vpop.f32.mrb[0].mxu0
        %v764 = vadd.f32 0.0, %v763
        %v765 = vpop.f32.mrb[0].mxu0
        %v766 = vadd.f32 0.0, %v765
        %v767 = vpop.f32.mrb[0].mxu0
        %v768 = vadd.f32 0.0, %v767
        %v769 = vpop.f32.mrb[0].mxu0
        %v770 = vadd.f32 0.0, %v769
        %771 = vmatprep.mubr.bf16.mxu0 0
        %772 = vmatmul.mubr.bf16.gmra.mrb[0].mxu0 %v588
        %v773 = vpop.f32.mrb[0].mxu0
        %v774 = vadd.f32 0.0, %v773
        %v775 = vpop.f32.mrb[0].mxu0
        %v776 = vadd.f32 0.0, %v775
        %v777 = vpop.f32.mrb[0].mxu0
        %v778 = vadd.f32 0.0, %v777
        %v779 = vpop.f32.mrb[0].mxu0
        %v780 = vadd.f32 0.0, %v779
        %781 = vmatprep.mubr.bf16.mxu0 0
        %782 = vmatmul.mubr.bf16.gmra.mrb[0].mxu0 %v591
        %v783 = vpop.f32.mrb[0].mxu0
        %v784 = vadd.f32 0.0, %v783
        %v785 = vpop.f32.mrb[0].mxu0
        %v786 = vadd.f32 0.0, %v785
        %v787 = vpop.f32.mrb[0].mxu0
        %v788 = vadd.f32 0.0, %v787
        %v789 = vpop.f32.mrb[0].mxu0
        %v790 = vadd.f32 0.0, %v789
        %791 = vmatprep.mubr.bf16.mxu0 0
        %792 = vmatmul.mubr.bf16.gmra.mrb[0].mxu0 %v594
        %v793 = vpop.f32.mrb[0].mxu0
        %v794 = vadd.f32 0.0, %v793
        %v795 = vpop.f32.mrb[0].mxu0
        %v796 = vadd.f32 0.0, %v795
        %v797 = vpop.f32.mrb[0].mxu0
        %v798 = vadd.f32 0.0, %v797
        %v799 = vpop.f32.mrb[0].mxu0
        %v800 = vadd.f32 0.0, %v799
        %801 = vmatprep.mubr.bf16.mxu0 0
        %802 = vmatmul.mubr.bf16.gmra.mrb[0].mxu0 %v597
        %v803 = vpop.f32.mrb[0].mxu0
        %v804 = vadd.f32 0.0, %v803
        %v805 = vpop.f32.mrb[0].mxu0
        %v806 = vadd.f32 0.0, %v805
        %v807 = vpop.f32.mrb[0].mxu0
        %v808 = vadd.f32 0.0, %v807
        %v809 = vpop.f32.mrb[0].mxu0
        %v810 = vadd.f32 0.0, %v809
        %811 = vmatprep.mubr.bf16.mxu0 0
        %812 = vmatmul.mubr.bf16.gmra.mrb[0].mxu0 %v600
        %v813 = vpop.f32.mrb[0].mxu0
        %v814 = vadd.f32 0.0, %v813
        %v815 = vpop.f32.mrb[0].mxu0
        %v816 = vadd.f32 0.0, %v815
        %v817 = vpop.f32.mrb[0].mxu0
        %v818 = vadd.f32 0.0, %v817
        %v819 = vpop.f32.mrb[0].mxu0
        %v820 = vadd.f32 0.0, %v819
        %821 = vmatprep.mubr.bf16.mxu0 0
        %822 = vmatmul.mubr.bf16.gmra.mrb[0].mxu0 %v603
        %v823 = vpop.f32.mrb[0].mxu0
        %v824 = vadd.f32 0.0, %v823
        %v825 = vpop.f32.mrb[0].mxu0
        %v826 = vadd.f32 0.0, %v825
        %v827 = vpop.f32.mrb[0].mxu0
        %v828 = vadd.f32 0.0, %v827
        %v829 = vpop.f32.mrb[0].mxu0
        %v830 = vadd.f32 0.0, %v829
        %831 = vmatprep.mubr.bf16.mxu0 0
        %832 = vmatmul.mubr.bf16.gmra.mrb[0].mxu0 %v606
        %v833 = vpop.f32.mrb[0].mxu0
        %v834 = vadd.f32 0.0, %v833
        %v835 = vpop.f32.mrb[0].mxu0
        %v836 = vadd.f32 0.0, %v835
        %v837 = vpop.f32.mrb[0].mxu0
        %v838 = vadd.f32 0.0, %v837
        %v839 = vpop.f32.mrb[0].mxu0
        %v840 = vadd.f32 0.0, %v839
        %841 = vmatprep.mubr.bf16.mxu0 0
        %842 = vmatmul.mubr.bf16.gmra.mrb[0].mxu0 %v609
        %v843 = vpop.f32.mrb[0].mxu0
        %v844 = vadd.f32 0.0, %v843
        %v845 = vpop.f32.mrb[0].mxu0
        %v846 = vadd.f32 0.0, %v845
        %v847 = vpop.f32.mrb[0].mxu0
        %v848 = vadd.f32 0.0, %v847
        %v849 = vpop.f32.mrb[0].mxu0
        %v850 = vadd.f32 0.0, %v849
        %851 = vmatprep.mubr.bf16.mxu0 0
        %852 = vmatmul.mubr.bf16.gmra.mrb[0].mxu0 %v612
        %v853 = vpop.f32.mrb[0].mxu0
        %v854 = vadd.f32 0.0, %v853
        %v855 = vpop.f32.mrb[0].mxu0
        %v856 = vadd.f32 0.0, %v855
        %v857 = vpop.f32.mrb[0].mxu0
        %v858 = vadd.f32 0.0, %v857
        %v859 = vpop.f32.mrb[0].mxu0
        %v860 = vadd.f32 0.0, %v859
        %861 = vmatprep.mubr.bf16.mxu0 0
        %862 = vmatmul.mubr.bf16.gmra.mrb[0].mxu0 %v615
        %v863 = vpop.f32.mrb[0].mxu0
        %v864 = vadd.f32 0.0, %v863
        %v865 = vpop.f32.mrb[0].mxu0
        %v866 = vadd.f32 0.0, %v865
        %v867 = vpop.f32.mrb[0].mxu0
        %v868 = vadd.f32 0.0, %v867
        %v869 = vpop.f32.mrb[0].mxu0
        %v870 = vadd.f32 0.0, %v869
        %871 = vmatprep.mubr.bf16.mxu0 0
        %872 = vmatmul.mubr.bf16.gmra.mrb[0].mxu0 %v618
        %v873 = vpop.f32.mrb[0].mxu0
        %v874 = vadd.f32 0.0, %v873
        %v875 = vpop.f32.mrb[0].mxu0
        %v876 = vadd.f32 0.0, %v875
        %v877 = vpop.f32.mrb[0].mxu0
        %v878 = vadd.f32 0.0, %v877
        %v879 = vpop.f32.mrb[0].mxu0
        %v880 = vadd.f32 0.0, %v879
        %881 = vmatprep.mubr.bf16.mxu0 0
        %882 = vmatmul.mubr.bf16.gmra.mrb[0].mxu0 %v621
        %v883 = vpop.f32.mrb[0].mxu0
        %v884 = vadd.f32 0.0, %v883
        %v885 = vpop.f32.mrb[0].mxu0
        %v886 = vadd.f32 0.0, %v885
        %v887 = vpop.f32.mrb[0].mxu0
        %v888 = vadd.f32 0.0, %v887
        %v889 = vpop.f32.mrb[0].mxu0
        %v890 = vadd.f32 0.0, %v889
        %891 = vmatprep.mubr.bf16.mxu0 0
        %892 = vmatmul.mubr.bf16.gmra.mrb[0].mxu0 %v624
        %v893 = vpop.f32.mrb[0].mxu0
        %v894 = vadd.f32 0.0, %v893
        %v895 = vpop.f32.mrb[0].mxu0
        %v896 = vadd.f32 0.0, %v895
        %v897 = vpop.f32.mrb[0].mxu0
        %v898 = vadd.f32 0.0, %v897
        %v899 = vpop.f32.mrb[0].mxu0
        %v900 = vadd.f32 0.0, %v899
        %901 = vmatprep.mubr.bf16.mxu0 0
        %902 = vmatmul.mubr.bf16.gmra.mrb[0].mxu0 %v627
        %v903 = vpop.f32.mrb[0].mxu0
        %v904 = vadd.f32 0.0, %v903
        %v905 = vpop.f32.mrb[0].mxu0
        %v906 = vadd.f32 0.0, %v905
        %v907 = vpop.f32.mrb[0].mxu0
        %v908 = vadd.f32 0.0, %v907
        %v909 = vpop.f32.mrb[0].mxu0
        %v910 = vadd.f32 0.0, %v909
        %911 = vmatprep.mubr.bf16.mxu0 0
        %912 = vmatmul.mubr.bf16.gmra.mrb[0].mxu0 %v630
        %v913 = vpop.f32.mrb[0].mxu0
        %v914 = vadd.f32 0.0, %v913
        %v915 = vpop.f32.mrb[0].mxu0
        %v916 = vadd.f32 0.0, %v915
        %v917 = vpop.f32.mrb[0].mxu0
        %v918 = vadd.f32 0.0, %v917
        %v919 = vpop.f32.mrb[0].mxu0
        %v920 = vadd.f32 0.0, %v919
        %921 = vmatprep.mubr.bf16.mxu0 0
        %922 = vmatmul.mubr.bf16.gmra.mrb[0].mxu0 %v633
        %v923 = vpop.f32.mrb[0].mxu0
        %v924 = vadd.f32 0.0, %v923
        %v925 = vpop.f32.mrb[0].mxu0
        %v926 = vadd.f32 0.0, %v925
        %v927 = vpop.f32.mrb[0].mxu0
        %v928 = vadd.f32 0.0, %v927
        %v929 = vpop.f32.mrb[0].mxu0
        %v930 = vadd.f32 0.0, %v929
        %931 = vmatprep.mubr.bf16.mxu0 0
        %932 = vmatmul.mubr.bf16.gmra.mrb[0].mxu0 %v636
        %v933 = vpop.f32.mrb[0].mxu0
        %v934 = vadd.f32 0.0, %v933
        %v935 = vpop.f32.mrb[0].mxu0
        %v936 = vadd.f32 0.0, %v935
        %v937 = vpop.f32.mrb[0].mxu0
        %v938 = vadd.f32 0.0, %v937
        %v939 = vpop.f32.mrb[0].mxu0
        %v940 = vadd.f32 0.0, %v939
        %941 = vmatprep.mubr.bf16.mxu0 0
        %942 = vmatmul.mubr.bf16.gmra.mrb[0].mxu0 %v639
        %v943 = vpop.f32.mrb[0].mxu0
        %v944 = vadd.f32 0.0, %v943
        %v945 = vpop.f32.mrb[0].mxu0
        %v946 = vadd.f32 0.0, %v945
        %v947 = vpop.f32.mrb[0].mxu0
        %v948 = vadd.f32 0.0, %v947
        %v949 = vpop.f32.mrb[0].mxu0
        %v950 = vadd.f32 0.0, %v949
        %951 = vmatprep.mubr.bf16.mxu0 0
        %952 = vmatmul.mubr.bf16.gmra.mrb[0].mxu0 %v642
        %v953 = vpop.f32.mrb[0].mxu0
        %v954 = vadd.f32 0.0, %v953
        %v955 = vpop.f32.mrb[0].mxu0
        %v956 = vadd.f32 0.0, %v955
        %v957 = vpop.f32.mrb[0].mxu0
        %v958 = vadd.f32 0.0, %v957
        %v959 = vpop.f32.mrb[0].mxu0
        %v960 = vadd.f32 0.0, %v959
        %961 = vmatprep.mubr.bf16.mxu0 0
        %962 = vmatmul.mubr.bf16.gmra.mrb[0].mxu0 %v645
        %v963 = vpop.f32.mrb[0].mxu0
        %v964 = vadd.f32 0.0, %v963
        %v965 = vpop.f32.mrb[0].mxu0
        %v966 = vadd.f32 0.0, %v965
        %v967 = vpop.f32.mrb[0].mxu0
        %v968 = vadd.f32 0.0, %v967
        %v969 = vpop.f32.mrb[0].mxu0
        %v970 = vadd.f32 0.0, %v969
        %971 = vmatprep.mubr.bf16.mxu0 0
        %972 = vmatmul.mubr.bf16.gmra.mrb[0].mxu0 %v648
        %v973 = vpop.f32.mrb[0].mxu0
        %v974 = vadd.f32 0.0, %v973
        %v975 = vpop.f32.mrb[0].mxu0
        %v976 = vadd.f32 0.0, %v975
        %v977 = vpop.f32.mrb[0].mxu0
        %v978 = vadd.f32 0.0, %v977
        %v979 = vpop.f32.mrb[0].mxu0
        %v980 = vadd.f32 0.0, %v979
        %981 = vmatprep.mubr.bf16.mxu0 0
        %982 = vmatmul.mubr.bf16.gmra.mrb[0].mxu0 %v651
        %v983 = vpop.f32.mrb[0].mxu0
        %v984 = vadd.f32 0.0, %v983
        %v985 = vpop.f32.mrb[0].mxu0
        %v986 = vadd.f32 0.0, %v985
        %v987 = vpop.f32.mrb[0].mxu0
        %v988 = vadd.f32 0.0, %v987
        %v989 = vpop.f32.mrb[0].mxu0
        %v990 = vadd.f32 0.0, %v989
        %991 = vmatprep.mubr.bf16.mxu0 0
        %992 = vmatmul.mubr.bf16.gmra.mrb[0].mxu0 %v654
        %v993 = vpop.f32.mrb[0].mxu0
        %v994 = vadd.f32 0.0, %v993
        %v995 = vpop.f32.mrb[0].mxu0
        %v996 = vadd.f32 0.0, %v995
        %v997 = vpop.f32.mrb[0].mxu0
        %v998 = vadd.f32 0.0, %v997
        %v999 = vpop.f32.mrb[0].mxu0
        %v1000 = vadd.f32 0.0, %v999
        %1001 = vmatprep.mubr.bf16.mxu0 0
        %1002 = vmatmul.mubr.bf16.gmra.mrb[0].mxu0 %v657
        %v1003 = vpop.f32.mrb[0].mxu0
        %v1004 = vadd.f32 0.0, %v1003
        %v1005 = vpop.f32.mrb[0].mxu0
        %v1006 = vadd.f32 0.0, %v1005
        %v1007 = vpop.f32.mrb[0].mxu0
        %v1008 = vadd.f32 0.0, %v1007
        %v1009 = vpop.f32.mrb[0].mxu0
        %v1010 = vadd.f32 0.0, %v1009
        %1011 = vdwg.mxu0
        %1012 = vmatprep.subr.bf16.mxu0 %v533
        %1013 = vmatpush1.bf16.msra.mxu0 %v532
        %1014 = vmatprep.subr.bf16.mxu0 %v537
        %1015 = vmatpush1.bf16.msra.mxu0 %v536
        %1016 = vmatprep.subr.bf16.mxu0 %v541
        %1017 = vmatpush1.bf16.msra.mxu0 %v540
        %1018 = vmatprep.subr.bf16.mxu0 %v545
        %1019 = vmatpush1.bf16.msra.mxu0 %v544
        %1020 = vmatprep.subr.bf16.mxu0 0
        %1021 = vmatpush1.bf16.msra.mxu0 0
        %1022 = vmatprep.subr.bf16.mxu0 0
        %1023 = vmatpush1.bf16.msra.mxu0 0
        %1024 = vmatprep.subr.bf16.mxu0 0
        %1025 = vmatpush1.bf16.msra.mxu0 0
        %1026 = vmatprep.subr.bf16.mxu0 0
        %1027 = vmatpush1.bf16.msra.mxu0 0
        %1028 = vmatprep.subr.bf16.mxu0 0
        %1029 = vmatpush1.bf16.msra.mxu0 0
        %1030 = vmatprep.subr.bf16.mxu0 0
        %1031 = vmatpush1.bf16.msra.mxu0 0
        %1032 = vmatprep.subr.bf16.mxu0 0
        %1033 = vmatpush1.bf16.msra.mxu0 0
        %1034 = vmatprep.subr.bf16.mxu0 0
        %1035 = vmatpush1.bf16.msra.mxu0 0
        %1036 = vmatprep.subr.bf16.mxu0 0
        %1037 = vmatpush1.bf16.msra.mxu0 0
        %1038 = vmatprep.subr.bf16.mxu0 0
        %1039 = vmatpush1.bf16.msra.mxu0 0
        %1040 = vmatprep.subr.bf16.mxu0 0
        %1041 = vmatpush1.bf16.msra.mxu0 0
        %1042 = vmatprep.subr.bf16.mxu0 0
        %1043 = vmatpush1.bf16.msra.mxu0 0
        %1044 = vmatprep.mubr.bf16.mxu0 0
        %1045 = vmatmul.mubr.bf16.gmra.mrb[0].mxu0 %v564
        %v1046 = vpop.f32.mrb[0].mxu0
        %v1047 = vadd.f32 0.0, %v1046
        %v1048 = vpop.f32.mrb[0].mxu0
        %v1049 = vadd.f32 0.0, %v1048
        %v1050 = vpop.f32.mrb[0].mxu0
        %v1051 = vadd.f32 0.0, %v1050
        %v1052 = vpop.f32.mrb[0].mxu0
        %v1053 = vadd.f32 0.0, %v1052
        %1054 = vmatprep.mubr.bf16.mxu0 0
        %1055 = vmatmul.mubr.bf16.gmra.mrb[0].mxu0 %v567
        %v1056 = vpop.f32.mrb[0].mxu0
        %v1057 = vadd.f32 0.0, %v1056
        %v1058 = vpop.f32.mrb[0].mxu0
        %v1059 = vadd.f32 0.0, %v1058
        %v1060 = vpop.f32.mrb[0].mxu0
        %v1061 = vadd.f32 0.0, %v1060
        %v1062 = vpop.f32.mrb[0].mxu0
        %v1063 = vadd.f32 0.0, %v1062
        %1064 = vmatprep.mubr.bf16.mxu0 0
        %1065 = vmatmul.mubr.bf16.gmra.mrb[0].mxu0 %v570
        %v1066 = vpop.f32.mrb[0].mxu0
        %v1067 = vadd.f32 0.0, %v1066
        %v1068 = vpop.f32.mrb[0].mxu0
        %v1069 = vadd.f32 0.0, %v1068
        %v1070 = vpop.f32.mrb[0].mxu0
        %v1071 = vadd.f32 0.0, %v1070
        %v1072 = vpop.f32.mrb[0].mxu0
        %v1073 = vadd.f32 0.0, %v1072
        %1074 = vmatprep.mubr.bf16.mxu0 0
        %1075 = vmatmul.mubr.bf16.gmra.mrb[0].mxu0 %v573
        %v1076 = vpop.f32.mrb[0].mxu0
        %v1077 = vadd.f32 0.0, %v1076
        %v1078 = vpop.f32.mrb[0].mxu0
        %v1079 = vadd.f32 0.0, %v1078
        %v1080 = vpop.f32.mrb[0].mxu0
        %v1081 = vadd.f32 0.0, %v1080
        %v1082 = vpop.f32.mrb[0].mxu0
        %v1083 = vadd.f32 0.0, %v1082
        %1084 = vmatprep.mubr.bf16.mxu0 0
        %1085 = vmatmul.mubr.bf16.gmra.mrb[0].mxu0 %v576
        %v1086 = vpop.f32.mrb[0].mxu0
        %v1087 = vadd.f32 0.0, %v1086
        %v1088 = vpop.f32.mrb[0].mxu0
        %v1089 = vadd.f32 0.0, %v1088
        %v1090 = vpop.f32.mrb[0].mxu0
        %v1091 = vadd.f32 0.0, %v1090
        %v1092 = vpop.f32.mrb[0].mxu0
        %v1093 = vadd.f32 0.0, %v1092
        %1094 = vmatprep.mubr.bf16.mxu0 0
        %1095 = vmatmul.mubr.bf16.gmra.mrb[0].mxu0 %v579
        %v1096 = vpop.f32.mrb[0].mxu0
        %v1097 = vadd.f32 0.0, %v1096
        %v1098 = vpop.f32.mrb[0].mxu0
        %v1099 = vadd.f32 0.0, %v1098
        %v1100 = vpop.f32.mrb[0].mxu0
        %v1101 = vadd.f32 0.0, %v1100
        %v1102 = vpop.f32.mrb[0].mxu0
        %v1103 = vadd.f32 0.0, %v1102
        %1104 = vmatprep.mubr.bf16.mxu0 0
        %1105 = vmatmul.mubr.bf16.gmra.mrb[0].mxu0 %v582
        %v1106 = vpop.f32.mrb[0].mxu0
        %v1107 = vadd.f32 0.0, %v1106
        %v1108 = vpop.f32.mrb[0].mxu0
        %v1109 = vadd.f32 0.0, %v1108
        %v1110 = vpop.f32.mrb[0].mxu0
        %v1111 = vadd.f32 0.0, %v1110
        %v1112 = vpop.f32.mrb[0].mxu0
        %v1113 = vadd.f32 0.0, %v1112
        %1114 = vmatprep.mubr.bf16.mxu0 0
        %1115 = vmatmul.mubr.bf16.gmra.mrb[0].mxu0 %v585
        %v1116 = vpop.f32.mrb[0].mxu0
        %v1117 = vadd.f32 0.0, %v1116
        %v1118 = vpop.f32.mrb[0].mxu0
        %v1119 = vadd.f32 0.0, %v1118
        %v1120 = vpop.f32.mrb[0].mxu0
        %v1121 = vadd.f32 0.0, %v1120
        %v1122 = vpop.f32.mrb[0].mxu0
        %v1123 = vadd.f32 0.0, %v1122
        %1124 = vmatprep.mubr.bf16.mxu0 0
        %1125 = vmatmul.mubr.bf16.gmra.mrb[0].mxu0 %v588
        %v1126 = vpop.f32.mrb[0].mxu0
        %v1127 = vadd.f32 0.0, %v1126
        %v1128 = vpop.f32.mrb[0].mxu0
        %v1129 = vadd.f32 0.0, %v1128
        %v1130 = vpop.f32.mrb[0].mxu0
        %v1131 = vadd.f32 0.0, %v1130
        %v1132 = vpop.f32.mrb[0].mxu0
        %v1133 = vadd.f32 0.0, %v1132
        %1134 = vmatprep.mubr.bf16.mxu0 0
        %1135 = vmatmul.mubr.bf16.gmra.mrb[0].mxu0 %v591
        %v1136 = vpop.f32.mrb[0].mxu0
        %v1137 = vadd.f32 0.0, %v1136
        %v1138 = vpop.f32.mrb[0].mxu0
        %v1139 = vadd.f32 0.0, %v1138
        %v1140 = vpop.f32.mrb[0].mxu0
        %v1141 = vadd.f32 0.0, %v1140
        %v1142 = vpop.f32.mrb[0].mxu0
        %v1143 = vadd.f32 0.0, %v1142
        %1144 = vmatprep.mubr.bf16.mxu0 0
        %1145 = vmatmul.mubr.bf16.gmra.mrb[0].mxu0 %v594
        %v1146 = vpop.f32.mrb[0].mxu0
        %v1147 = vadd.f32 0.0, %v1146
        %v1148 = vpop.f32.mrb[0].mxu0
        %v1149 = vadd.f32 0.0, %v1148
        %v1150 = vpop.f32.mrb[0].mxu0
        %v1151 = vadd.f32 0.0, %v1150
        %v1152 = vpop.f32.mrb[0].mxu0
        %v1153 = vadd.f32 0.0, %v1152
        %1154 = vmatprep.mubr.bf16.mxu0 0
        %1155 = vmatmul.mubr.bf16.gmra.mrb[0].mxu0 %v597
        %v1156 = vpop.f32.mrb[0].mxu0
        %v1157 = vadd.f32 0.0, %v1156
        %v1158 = vpop.f32.mrb[0].mxu0
        %v1159 = vadd.f32 0.0, %v1158
        %v1160 = vpop.f32.mrb[0].mxu0
        %v1161 = vadd.f32 0.0, %v1160
        %v1162 = vpop.f32.mrb[0].mxu0
        %v1163 = vadd.f32 0.0, %v1162
        %1164 = vmatprep.mubr.bf16.mxu0 0
        %1165 = vmatmul.mubr.bf16.gmra.mrb[0].mxu0 %v600
        %v1166 = vpop.f32.mrb[0].mxu0
        %v1167 = vadd.f32 0.0, %v1166
        %v1168 = vpop.f32.mrb[0].mxu0
        %v1169 = vadd.f32 0.0, %v1168
        %v1170 = vpop.f32.mrb[0].mxu0
        %v1171 = vadd.f32 0.0, %v1170
        %v1172 = vpop.f32.mrb[0].mxu0
        %v1173 = vadd.f32 0.0, %v1172
        %1174 = vmatprep.mubr.bf16.mxu0 0
        %1175 = vmatmul.mubr.bf16.gmra.mrb[0].mxu0 %v603
        %v1176 = vpop.f32.mrb[0].mxu0
        %v1177 = vadd.f32 0.0, %v1176
        %v1178 = vpop.f32.mrb[0].mxu0
        %v1179 = vadd.f32 0.0, %v1178
        %v1180 = vpop.f32.mrb[0].mxu0
        %v1181 = vadd.f32 0.0, %v1180
        %v1182 = vpop.f32.mrb[0].mxu0
        %v1183 = vadd.f32 0.0, %v1182
        %1184 = vmatprep.mubr.bf16.mxu0 0
        %1185 = vmatmul.mubr.bf16.gmra.mrb[0].mxu0 %v606
        %v1186 = vpop.f32.mrb[0].mxu0
        %v1187 = vadd.f32 0.0, %v1186
        %v1188 = vpop.f32.mrb[0].mxu0
        %v1189 = vadd.f32 0.0, %v1188
        %v1190 = vpop.f32.mrb[0].mxu0
        %v1191 = vadd.f32 0.0, %v1190
        %v1192 = vpop.f32.mrb[0].mxu0
        %v1193 = vadd.f32 0.0, %v1192
        %1194 = vmatprep.mubr.bf16.mxu0 0
        %1195 = vmatmul.mubr.bf16.gmra.mrb[0].mxu0 %v609
        %v1196 = vpop.f32.mrb[0].mxu0
        %v1197 = vadd.f32 0.0, %v1196
        %v1198 = vpop.f32.mrb[0].mxu0
        %v1199 = vadd.f32 0.0, %v1198
        %v1200 = vpop.f32.mrb[0].mxu0
        %v1201 = vadd.f32 0.0, %v1200
        %v1202 = vpop.f32.mrb[0].mxu0
        %v1203 = vadd.f32 0.0, %v1202
        %1204 = vmatprep.mubr.bf16.mxu0 0
        %1205 = vmatmul.mubr.bf16.gmra.mrb[0].mxu0 %v612
        %v1206 = vpop.f32.mrb[0].mxu0
        %v1207 = vadd.f32 0.0, %v1206
        %v1208 = vpop.f32.mrb[0].mxu0
        %v1209 = vadd.f32 0.0, %v1208
        %v1210 = vpop.f32.mrb[0].mxu0
        %v1211 = vadd.f32 0.0, %v1210
        %v1212 = vpop.f32.mrb[0].mxu0
        %v1213 = vadd.f32 0.0, %v1212
        %1214 = vmatprep.mubr.bf16.mxu0 0
        %1215 = vmatmul.mubr.bf16.gmra.mrb[0].mxu0 %v615
        %v1216 = vpop.f32.mrb[0].mxu0
        %v1217 = vadd.f32 0.0, %v1216
        %v1218 = vpop.f32.mrb[0].mxu0
        %v1219 = vadd.f32 0.0, %v1218
        %v1220 = vpop.f32.mrb[0].mxu0
        %v1221 = vadd.f32 0.0, %v1220
        %v1222 = vpop.f32.mrb[0].mxu0
        %v1223 = vadd.f32 0.0, %v1222
        %1224 = vmatprep.mubr.bf16.mxu0 0
        %1225 = vmatmul.mubr.bf16.gmra.mrb[0].mxu0 %v618
        %v1226 = vpop.f32.mrb[0].mxu0
        %v1227 = vadd.f32 0.0, %v1226
        %v1228 = vpop.f32.mrb[0].mxu0
        %v1229 = vadd.f32 0.0, %v1228
        %v1230 = vpop.f32.mrb[0].mxu0
        %v1231 = vadd.f32 0.0, %v1230
        %v1232 = vpop.f32.mrb[0].mxu0
        %v1233 = vadd.f32 0.0, %v1232
        %1234 = vmatprep.mubr.bf16.mxu0 0
        %1235 = vmatmul.mubr.bf16.gmra.mrb[0].mxu0 %v621
        %v1236 = vpop.f32.mrb[0].mxu0
        %v1237 = vadd.f32 0.0, %v1236
        %v1238 = vpop.f32.mrb[0].mxu0
        %v1239 = vadd.f32 0.0, %v1238
        %v1240 = vpop.f32.mrb[0].mxu0
        %v1241 = vadd.f32 0.0, %v1240
        %v1242 = vpop.f32.mrb[0].mxu0
        %v1243 = vadd.f32 0.0, %v1242
        %1244 = vmatprep.mubr.bf16.mxu0 0
        %1245 = vmatmul.mubr.bf16.gmra.mrb[0].mxu0 %v624
        %v1246 = vpop.f32.mrb[0].mxu0
        %v1247 = vadd.f32 0.0, %v1246
        %v1248 = vpop.f32.mrb[0].mxu0
        %v1249 = vadd.f32 0.0, %v1248
        %v1250 = vpop.f32.mrb[0].mxu0
        %v1251 = vadd.f32 0.0, %v1250
        %v1252 = vpop.f32.mrb[0].mxu0
        %v1253 = vadd.f32 0.0, %v1252
        %1254 = vmatprep.mubr.bf16.mxu0 0
        %1255 = vmatmul.mubr.bf16.gmra.mrb[0].mxu0 %v627
        %v1256 = vpop.f32.mrb[0].mxu0
        %v1257 = vadd.f32 0.0, %v1256
        %v1258 = vpop.f32.mrb[0].mxu0
        %v1259 = vadd.f32 0.0, %v1258
        %v1260 = vpop.f32.mrb[0].mxu0
        %v1261 = vadd.f32 0.0, %v1260
        %v1262 = vpop.f32.mrb[0].mxu0
        %v1263 = vadd.f32 0.0, %v1262
        %1264 = vmatprep.mubr.bf16.mxu0 0
        %1265 = vmatmul.mubr.bf16.gmra.mrb[0].mxu0 %v630
        %v1266 = vpop.f32.mrb[0].mxu0
        %v1267 = vadd.f32 0.0, %v1266
        %v1268 = vpop.f32.mrb[0].mxu0
        %v1269 = vadd.f32 0.0, %v1268
        %v1270 = vpop.f32.mrb[0].mxu0
        %v1271 = vadd.f32 0.0, %v1270
        %v1272 = vpop.f32.mrb[0].mxu0
        %v1273 = vadd.f32 0.0, %v1272
        %1274 = vmatprep.mubr.bf16.mxu0 0
        %1275 = vmatmul.mubr.bf16.gmra.mrb[0].mxu0 %v633
        %v1276 = vpop.f32.mrb[0].mxu0
        %v1277 = vadd.f32 0.0, %v1276
        %v1278 = vpop.f32.mrb[0].mxu0
        %v1279 = vadd.f32 0.0, %v1278
        %v1280 = vpop.f32.mrb[0].mxu0
        %v1281 = vadd.f32 0.0, %v1280
        %v1282 = vpop.f32.mrb[0].mxu0
        %v1283 = vadd.f32 0.0, %v1282
        %1284 = vmatprep.mubr.bf16.mxu0 0
        %1285 = vmatmul.mubr.bf16.gmra.mrb[0].mxu0 %v636
        %v1286 = vpop.f32.mrb[0].mxu0
        %v1287 = vadd.f32 0.0, %v1286
        %v1288 = vpop.f32.mrb[0].mxu0
        %v1289 = vadd.f32 0.0, %v1288
        %v1290 = vpop.f32.mrb[0].mxu0
        %v1291 = vadd.f32 0.0, %v1290
        %v1292 = vpop.f32.mrb[0].mxu0
        %v1293 = vadd.f32 0.0, %v1292
        %1294 = vmatprep.mubr.bf16.mxu0 0
        %1295 = vmatmul.mubr.bf16.gmra.mrb[0].mxu0 %v639
        %v1296 = vpop.f32.mrb[0].mxu0
        %v1297 = vadd.f32 0.0, %v1296
        %v1298 = vpop.f32.mrb[0].mxu0
        %v1299 = vadd.f32 0.0, %v1298
        %v1300 = vpop.f32.mrb[0].mxu0
        %v1301 = vadd.f32 0.0, %v1300
        %v1302 = vpop.f32.mrb[0].mxu0
        %v1303 = vadd.f32 0.0, %v1302
        %1304 = vmatprep.mubr.bf16.mxu0 0
        %1305 = vmatmul.mubr.bf16.gmra.mrb[0].mxu0 %v642
        %v1306 = vpop.f32.mrb[0].mxu0
        %v1307 = vadd.f32 0.0, %v1306
        %v1308 = vpop.f32.mrb[0].mxu0
        %v1309 = vadd.f32 0.0, %v1308
        %v1310 = vpop.f32.mrb[0].mxu0
        %v1311 = vadd.f32 0.0, %v1310
        %v1312 = vpop.f32.mrb[0].mxu0
        %v1313 = vadd.f32 0.0, %v1312
        %1314 = vmatprep.mubr.bf16.mxu0 0
        %1315 = vmatmul.mubr.bf16.gmra.mrb[0].mxu0 %v645
        %v1316 = vpop.f32.mrb[0].mxu0
        %v1317 = vadd.f32 0.0, %v1316
        %v1318 = vpop.f32.mrb[0].mxu0
        %v1319 = vadd.f32 0.0, %v1318
        %v1320 = vpop.f32.mrb[0].mxu0
        %v1321 = vadd.f32 0.0, %v1320
        %v1322 = vpop.f32.mrb[0].mxu0
        %v1323 = vadd.f32 0.0, %v1322
        %1324 = vmatprep.mubr.bf16.mxu0 0
        %1325 = vmatmul.mubr.bf16.gmra.mrb[0].mxu0 %v648
        %v1326 = vpop.f32.mrb[0].mxu0
        %v1327 = vadd.f32 0.0, %v1326
        %v1328 = vpop.f32.mrb[0].mxu0
        %v1329 = vadd.f32 0.0, %v1328
        %v1330 = vpop.f32.mrb[0].mxu0
        %v1331 = vadd.f32 0.0, %v1330
        %v1332 = vpop.f32.mrb[0].mxu0
        %v1333 = vadd.f32 0.0, %v1332
        %1334 = vmatprep.mubr.bf16.mxu0 0
        %1335 = vmatmul.mubr.bf16.gmra.mrb[0].mxu0 %v651
        %v1336 = vpop.f32.mrb[0].mxu0
        %v1337 = vadd.f32 0.0, %v1336
        %v1338 = vpop.f32.mrb[0].mxu0
        %v1339 = vadd.f32 0.0, %v1338
        %v1340 = vpop.f32.mrb[0].mxu0
        %v1341 = vadd.f32 0.0, %v1340
        %v1342 = vpop.f32.mrb[0].mxu0
        %v1343 = vadd.f32 0.0, %v1342
        %1344 = vmatprep.mubr.bf16.mxu0 0
        %1345 = vmatmul.mubr.bf16.gmra.mrb[0].mxu0 %v654
        %v1346 = vpop.f32.mrb[0].mxu0
        %v1347 = vadd.f32 0.0, %v1346
        %v1348 = vpop.f32.mrb[0].mxu0
        %v1349 = vadd.f32 0.0, %v1348
        %v1350 = vpop.f32.mrb[0].mxu0
        %v1351 = vadd.f32 0.0, %v1350
        %v1352 = vpop.f32.mrb[0].mxu0
        %v1353 = vadd.f32 0.0, %v1352
        %1354 = vmatprep.mubr.bf16.mxu0 0
        %1355 = vmatmul.mubr.bf16.gmra.mrb[0].mxu0 %v657
        %v1356 = vpop.f32.mrb[0].mxu0
        %v1357 = vadd.f32 0.0, %v1356
        %v1358 = vpop.f32.mrb[0].mxu0
        %v1359 = vadd.f32 0.0, %v1358
        %v1360 = vpop.f32.mrb[0].mxu0
        %v1361 = vadd.f32 0.0, %v1360
        %v1362 = vpop.f32.mrb[0].mxu0
        %v1363 = vadd.f32 0.0, %v1362
        %1364 = vdwg.mxu0
        %vm1365 = vcmp.lt.f32.partialorder %v694, 1.0
        %vm1366 = vcmp.lt.f32.partialorder %v696, 1.0
        %vm1367 = vcmp.lt.f32.partialorder %v1047, 1.0
        %vm1368 = vcmp.lt.f32.partialorder %v1049, 1.0
        %vm1369 = vcmp.lt.f32.partialorder %v698, 1.0
        %vm1370 = vcmp.lt.f32.partialorder %v700, 1.0
        %vm1371 = vcmp.lt.f32.partialorder %v1051, 1.0
        %vm1372 = vcmp.lt.f32.partialorder %v1053, 1.0
        %vm1373 = vcmp.lt.f32.partialorder %v704, 1.0
        %vm1374 = vcmp.lt.f32.partialorder %v706, 1.0
        %vm1375 = vcmp.lt.f32.partialorder %v1057, 1.0
        %vm1376 = vcmp.lt.f32.partialorder %v1059, 1.0
        %vm1377 = vcmp.lt.f32.partialorder %v708, 1.0
        %vm1378 = vcmp.lt.f32.partialorder %v710, 1.0
        %vm1379 = vcmp.lt.f32.partialorder %v1061, 1.0
        %vm1380 = vcmp.lt.f32.partialorder %v1063, 1.0
        %vm1381 = vcmp.lt.f32.partialorder %v714, 1.0
        %vm1382 = vcmp.lt.f32.partialorder %v716, 1.0
        %vm1383 = vcmp.lt.f32.partialorder %v1067, 1.0
        %vm1384 = vcmp.lt.f32.partialorder %v1069, 1.0
        %vm1385 = vcmp.lt.f32.partialorder %v718, 1.0
        %vm1386 = vcmp.lt.f32.partialorder %v720, 1.0
        %vm1387 = vcmp.lt.f32.partialorder %v1071, 1.0
        %vm1388 = vcmp.lt.f32.partialorder %v1073, 1.0
        %vm1389 = vcmp.lt.f32.partialorder %v724, 1.0
        %vm1390 = vcmp.lt.f32.partialorder %v726, 1.0
        %vm1391 = vcmp.lt.f32.partialorder %v1077, 1.0
        %vm1392 = vcmp.lt.f32.partialorder %v1079, 1.0
        %vm1393 = vcmp.lt.f32.partialorder %v728, 1.0
        %vm1394 = vcmp.lt.f32.partialorder %v730, 1.0
        %vm1395 = vcmp.lt.f32.partialorder %v1081, 1.0
        %vm1396 = vcmp.lt.f32.partialorder %v1083, 1.0
        %vm1397 = vcmp.lt.f32.partialorder %v734, 1.0
        %vm1398 = vcmp.lt.f32.partialorder %v736, 1.0
        %vm1399 = vcmp.lt.f32.partialorder %v1087, 1.0
        %vm1400 = vcmp.lt.f32.partialorder %v1089, 1.0
        %vm1401 = vcmp.lt.f32.partialorder %v738, 1.0
        %vm1402 = vcmp.lt.f32.partialorder %v740, 1.0
        %vm1403 = vcmp.lt.f32.partialorder %v1091, 1.0
        %vm1404 = vcmp.lt.f32.partialorder %v1093, 1.0
        %vm1405 = vcmp.lt.f32.partialorder %v744, 1.0
        %vm1406 = vcmp.lt.f32.partialorder %v746, 1.0
        %vm1407 = vcmp.lt.f32.partialorder %v1097, 1.0
        %vm1408 = vcmp.lt.f32.partialorder %v1099, 1.0
        %vm1409 = vcmp.lt.f32.partialorder %v748, 1.0
        %vm1410 = vcmp.lt.f32.partialorder %v750, 1.0
        %vm1411 = vcmp.lt.f32.partialorder %v1101, 1.0
        %vm1412 = vcmp.lt.f32.partialorder %v1103, 1.0
        %vm1413 = vcmp.lt.f32.partialorder %v754, 1.0
        %vm1414 = vcmp.lt.f32.partialorder %v756, 1.0
        %vm1415 = vcmp.lt.f32.partialorder %v1107, 1.0
        %vm1416 = vcmp.lt.f32.partialorder %v1109, 1.0
        %vm1417 = vcmp.lt.f32.partialorder %v758, 1.0
        %vm1418 = vcmp.lt.f32.partialorder %v760, 1.0
        %vm1419 = vcmp.lt.f32.partialorder %v1111, 1.0
        %vm1420 = vcmp.lt.f32.partialorder %v1113, 1.0
        %vm1421 = vcmp.lt.f32.partialorder %v764, 1.0
        %vm1422 = vcmp.lt.f32.partialorder %v766, 1.0
        %vm1423 = vcmp.lt.f32.partialorder %v1117, 1.0
        %vm1424 = vcmp.lt.f32.partialorder %v1119, 1.0
        %vm1425 = vcmp.lt.f32.partialorder %v768, 1.0
        %vm1426 = vcmp.lt.f32.partialorder %v770, 1.0
        %vm1427 = vcmp.lt.f32.partialorder %v1121, 1.0
        %vm1428 = vcmp.lt.f32.partialorder %v1123, 1.0
        %vm1429 = vcmp.lt.f32.partialorder %v774, 1.0
        %vm1430 = vcmp.lt.f32.partialorder %v776, 1.0
        %vm1431 = vcmp.lt.f32.partialorder %v1127, 1.0
        %vm1432 = vcmp.lt.f32.partialorder %v1129, 1.0
        %vm1433 = vcmp.lt.f32.partialorder %v778, 1.0
        %vm1434 = vcmp.lt.f32.partialorder %v780, 1.0
        %vm1435 = vcmp.lt.f32.partialorder %v1131, 1.0
        %vm1436 = vcmp.lt.f32.partialorder %v1133, 1.0
        %vm1437 = vcmp.lt.f32.partialorder %v784, 1.0
        %vm1438 = vcmp.lt.f32.partialorder %v786, 1.0
        %vm1439 = vcmp.lt.f32.partialorder %v1137, 1.0
        %vm1440 = vcmp.lt.f32.partialorder %v1139, 1.0
        %vm1441 = vcmp.lt.f32.partialorder %v788, 1.0
        %vm1442 = vcmp.lt.f32.partialorder %v790, 1.0
        %vm1443 = vcmp.lt.f32.partialorder %v1141, 1.0
        %vm1444 = vcmp.lt.f32.partialorder %v1143, 1.0
        %vm1445 = vcmp.lt.f32.partialorder %v794, 1.0
        %vm1446 = vcmp.lt.f32.partialorder %v796, 1.0
        %vm1447 = vcmp.lt.f32.partialorder %v1147, 1.0
        %vm1448 = vcmp.lt.f32.partialorder %v1149, 1.0
        %vm1449 = vcmp.lt.f32.partialorder %v798, 1.0
        %vm1450 = vcmp.lt.f32.partialorder %v800, 1.0
        %vm1451 = vcmp.lt.f32.partialorder %v1151, 1.0
        %vm1452 = vcmp.lt.f32.partialorder %v1153, 1.0
        %vm1453 = vcmp.lt.f32.partialorder %v804, 1.0
        %vm1454 = vcmp.lt.f32.partialorder %v806, 1.0
        %vm1455 = vcmp.lt.f32.partialorder %v1157, 1.0
        %vm1456 = vcmp.lt.f32.partialorder %v1159, 1.0
        %vm1457 = vcmp.lt.f32.partialorder %v808, 1.0
        %vm1458 = vcmp.lt.f32.partialorder %v810, 1.0
        %vm1459 = vcmp.lt.f32.partialorder %v1161, 1.0
        %vm1460 = vcmp.lt.f32.partialorder %v1163, 1.0
        %vm1461 = vcmp.lt.f32.partialorder %v814, 1.0
        %vm1462 = vcmp.lt.f32.partialorder %v816, 1.0
        %vm1463 = vcmp.lt.f32.partialorder %v1167, 1.0
        %vm1464 = vcmp.lt.f32.partialorder %v1169, 1.0
        %vm1465 = vcmp.lt.f32.partialorder %v818, 1.0
        %vm1466 = vcmp.lt.f32.partialorder %v820, 1.0
        %vm1467 = vcmp.lt.f32.partialorder %v1171, 1.0
        %vm1468 = vcmp.lt.f32.partialorder %v1173, 1.0
        %vm1469 = vcmp.lt.f32.partialorder %v824, 1.0
        %vm1470 = vcmp.lt.f32.partialorder %v826, 1.0
        %vm1471 = vcmp.lt.f32.partialorder %v1177, 1.0
        %vm1472 = vcmp.lt.f32.partialorder %v1179, 1.0
        %vm1473 = vcmp.lt.f32.partialorder %v828, 1.0
        %vm1474 = vcmp.lt.f32.partialorder %v830, 1.0
        %vm1475 = vcmp.lt.f32.partialorder %v1181, 1.0
        %vm1476 = vcmp.lt.f32.partialorder %v1183, 1.0
        %vm1477 = vcmp.lt.f32.partialorder %v834, 1.0
        %vm1478 = vcmp.lt.f32.partialorder %v836, 1.0
        %vm1479 = vcmp.lt.f32.partialorder %v1187, 1.0
        %vm1480 = vcmp.lt.f32.partialorder %v1189, 1.0
        %vm1481 = vcmp.lt.f32.partialorder %v838, 1.0
        %vm1482 = vcmp.lt.f32.partialorder %v840, 1.0
        %vm1483 = vcmp.lt.f32.partialorder %v1191, 1.0
        %vm1484 = vcmp.lt.f32.partialorder %v1193, 1.0
        %vm1485 = vcmp.lt.f32.partialorder %v844, 1.0
        %vm1486 = vcmp.lt.f32.partialorder %v846, 1.0
        %vm1487 = vcmp.lt.f32.partialorder %v1197, 1.0
        %vm1488 = vcmp.lt.f32.partialorder %v1199, 1.0
        %vm1489 = vcmp.lt.f32.partialorder %v848, 1.0
        %vm1490 = vcmp.lt.f32.partialorder %v850, 1.0
        %vm1491 = vcmp.lt.f32.partialorder %v1201, 1.0
        %vm1492 = vcmp.lt.f32.partialorder %v1203, 1.0
        %vm1493 = vcmp.lt.f32.partialorder %v854, 1.0
        %vm1494 = vcmp.lt.f32.partialorder %v856, 1.0
        %vm1495 = vcmp.lt.f32.partialorder %v1207, 1.0
        %vm1496 = vcmp.lt.f32.partialorder %v1209, 1.0
        %vm1497 = vcmp.lt.f32.partialorder %v858, 1.0
        %vm1498 = vcmp.lt.f32.partialorder %v860, 1.0
        %vm1499 = vcmp.lt.f32.partialorder %v1211, 1.0
        %vm1500 = vcmp.lt.f32.partialorder %v1213, 1.0
        %vm1501 = vcmp.lt.f32.partialorder %v864, 1.0
        %vm1502 = vcmp.lt.f32.partialorder %v866, 1.0
        %vm1503 = vcmp.lt.f32.partialorder %v1217, 1.0
        %vm1504 = vcmp.lt.f32.partialorder %v1219, 1.0
        %vm1505 = vcmp.lt.f32.partialorder %v868, 1.0
        %vm1506 = vcmp.lt.f32.partialorder %v870, 1.0
        %vm1507 = vcmp.lt.f32.partialorder %v1221, 1.0
        %vm1508 = vcmp.lt.f32.partialorder %v1223, 1.0
        %vm1509 = vcmp.lt.f32.partialorder %v874, 1.0
        %vm1510 = vcmp.lt.f32.partialorder %v876, 1.0
        %vm1511 = vcmp.lt.f32.partialorder %v1227, 1.0
        %vm1512 = vcmp.lt.f32.partialorder %v1229, 1.0
        %vm1513 = vcmp.lt.f32.partialorder %v878, 1.0
        %vm1514 = vcmp.lt.f32.partialorder %v880, 1.0
        %vm1515 = vcmp.lt.f32.partialorder %v1231, 1.0
        %vm1516 = vcmp.lt.f32.partialorder %v1233, 1.0
        %vm1517 = vcmp.lt.f32.partialorder %v884, 1.0
        %vm1518 = vcmp.lt.f32.partialorder %v886, 1.0
        %vm1519 = vcmp.lt.f32.partialorder %v1237, 1.0
        %vm1520 = vcmp.lt.f32.partialorder %v1239, 1.0
        %vm1521 = vcmp.lt.f32.partialorder %v888, 1.0
        %vm1522 = vcmp.lt.f32.partialorder %v890, 1.0
        %vm1523 = vcmp.lt.f32.partialorder %v1241, 1.0
        %vm1524 = vcmp.lt.f32.partialorder %v1243, 1.0
        %vm1525 = vcmp.lt.f32.partialorder %v894, 1.0
        %vm1526 = vcmp.lt.f32.partialorder %v896, 1.0
        %vm1527 = vcmp.lt.f32.partialorder %v1247, 1.0
        %vm1528 = vcmp.lt.f32.partialorder %v1249, 1.0
        %vm1529 = vcmp.lt.f32.partialorder %v898, 1.0
        %vm1530 = vcmp.lt.f32.partialorder %v900, 1.0
        %vm1531 = vcmp.lt.f32.partialorder %v1251, 1.0
        %vm1532 = vcmp.lt.f32.partialorder %v1253, 1.0
        %vm1533 = vcmp.lt.f32.partialorder %v904, 1.0
        %vm1534 = vcmp.lt.f32.partialorder %v906, 1.0
        %vm1535 = vcmp.lt.f32.partialorder %v1257, 1.0
        %vm1536 = vcmp.lt.f32.partialorder %v1259, 1.0
        %vm1537 = vcmp.lt.f32.partialorder %v908, 1.0
        %vm1538 = vcmp.lt.f32.partialorder %v910, 1.0
        %vm1539 = vcmp.lt.f32.partialorder %v1261, 1.0
        %vm1540 = vcmp.lt.f32.partialorder %v1263, 1.0
        %vm1541 = vcmp.lt.f32.partialorder %v914, 1.0
        %vm1542 = vcmp.lt.f32.partialorder %v916, 1.0
        %vm1543 = vcmp.lt.f32.partialorder %v1267, 1.0
        %vm1544 = vcmp.lt.f32.partialorder %v1269, 1.0
        %vm1545 = vcmp.lt.f32.partialorder %v918, 1.0
        %vm1546 = vcmp.lt.f32.partialorder %v920, 1.0
        %vm1547 = vcmp.lt.f32.partialorder %v1271, 1.0
        %vm1548 = vcmp.lt.f32.partialorder %v1273, 1.0
        %vm1549 = vcmp.lt.f32.partialorder %v924, 1.0
        %vm1550 = vcmp.lt.f32.partialorder %v926, 1.0
        %vm1551 = vcmp.lt.f32.partialorder %v1277, 1.0
        %vm1552 = vcmp.lt.f32.partialorder %v1279, 1.0
        %vm1553 = vcmp.lt.f32.partialorder %v928, 1.0
        %vm1554 = vcmp.lt.f32.partialorder %v930, 1.0
        %vm1555 = vcmp.lt.f32.partialorder %v1281, 1.0
        %vm1556 = vcmp.lt.f32.partialorder %v1283, 1.0
        %vm1557 = vcmp.lt.f32.partialorder %v934, 1.0
        %vm1558 = vcmp.lt.f32.partialorder %v936, 1.0
        %vm1559 = vcmp.lt.f32.partialorder %v1287, 1.0
        %vm1560 = vcmp.lt.f32.partialorder %v1289, 1.0
        %vm1561 = vcmp.lt.f32.partialorder %v938, 1.0
        %vm1562 = vcmp.lt.f32.partialorder %v940, 1.0
        %vm1563 = vcmp.lt.f32.partialorder %v1291, 1.0
        %vm1564 = vcmp.lt.f32.partialorder %v1293, 1.0
        %vm1565 = vcmp.lt.f32.partialorder %v944, 1.0
        %vm1566 = vcmp.lt.f32.partialorder %v946, 1.0
        %vm1567 = vcmp.lt.f32.partialorder %v1297, 1.0
        %vm1568 = vcmp.lt.f32.partialorder %v1299, 1.0
        %vm1569 = vcmp.lt.f32.partialorder %v948, 1.0
        %vm1570 = vcmp.lt.f32.partialorder %v950, 1.0
        %vm1571 = vcmp.lt.f32.partialorder %v1301, 1.0
        %vm1572 = vcmp.lt.f32.partialorder %v1303, 1.0
        %vm1573 = vcmp.lt.f32.partialorder %v954, 1.0
        %vm1574 = vcmp.lt.f32.partialorder %v956, 1.0
        %vm1575 = vcmp.lt.f32.partialorder %v1307, 1.0
        %vm1576 = vcmp.lt.f32.partialorder %v1309, 1.0
        %vm1577 = vcmp.lt.f32.partialorder %v958, 1.0
        %vm1578 = vcmp.lt.f32.partialorder %v960, 1.0
        %vm1579 = vcmp.lt.f32.partialorder %v1311, 1.0
        %vm1580 = vcmp.lt.f32.partialorder %v1313, 1.0
        %vm1581 = vcmp.lt.f32.partialorder %v964, 1.0
        %vm1582 = vcmp.lt.f32.partialorder %v966, 1.0
        %vm1583 = vcmp.lt.f32.partialorder %v1317, 1.0
        %vm1584 = vcmp.lt.f32.partialorder %v1319, 1.0
        %vm1585 = vcmp.lt.f32.partialorder %v968, 1.0
        %vm1586 = vcmp.lt.f32.partialorder %v970, 1.0
        %vm1587 = vcmp.lt.f32.partialorder %v1321, 1.0
        %vm1588 = vcmp.lt.f32.partialorder %v1323, 1.0
        %vm1589 = vcmp.lt.f32.partialorder %v974, 1.0
        %vm1590 = vcmp.lt.f32.partialorder %v976, 1.0
        %vm1591 = vcmp.lt.f32.partialorder %v1327, 1.0
        %vm1592 = vcmp.lt.f32.partialorder %v1329, 1.0
        %vm1593 = vcmp.lt.f32.partialorder %v978, 1.0
        %vm1594 = vcmp.lt.f32.partialorder %v980, 1.0
        %vm1595 = vcmp.lt.f32.partialorder %v1331, 1.0
        %vm1596 = vcmp.lt.f32.partialorder %v1333, 1.0
        %vm1597 = vcmp.lt.f32.partialorder %v984, 1.0
        %vm1598 = vcmp.lt.f32.partialorder %v986, 1.0
        %vm1599 = vcmp.lt.f32.partialorder %v1337, 1.0
        %vm1600 = vcmp.lt.f32.partialorder %v1339, 1.0
        %vm1601 = vcmp.lt.f32.partialorder %v988, 1.0
        %vm1602 = vcmp.lt.f32.partialorder %v990, 1.0
        %vm1603 = vcmp.lt.f32.partialorder %v1341, 1.0
        %vm1604 = vcmp.lt.f32.partialorder %v1343, 1.0
        %vm1605 = vcmp.lt.f32.partialorder %v994, 1.0
        %vm1606 = vcmp.lt.f32.partialorder %v996, 1.0
        %vm1607 = vcmp.lt.f32.partialorder %v1347, 1.0
        %vm1608 = vcmp.lt.f32.partialorder %v1349, 1.0
        %vm1609 = vcmp.lt.f32.partialorder %v998, 1.0
        %vm1610 = vcmp.lt.f32.partialorder %v1000, 1.0
        %vm1611 = vcmp.lt.f32.partialorder %v1351, 1.0
        %vm1612 = vcmp.lt.f32.partialorder %v1353, 1.0
        %vm1613 = vcmp.lt.f32.partialorder %v1004, 1.0
        %vm1614 = vcmp.lt.f32.partialorder %v1006, 1.0
        %vm1615 = vcmp.lt.f32.partialorder %v1357, 1.0
        %vm1616 = vcmp.lt.f32.partialorder %v1359, 1.0
        %vm1617 = vcmp.lt.f32.partialorder %v1008, 1.0
        %vm1618 = vcmp.lt.f32.partialorder %v1010, 1.0
        %vm1619 = vcmp.lt.f32.partialorder %v1361, 1.0
        %vm1620 = vcmp.lt.f32.partialorder %v1363, 1.0
        %vm1621 = vcmp.ge.f32.partialorder %v694, 2.0
        %vm1622 = vcmp.ge.f32.partialorder %v696, 2.0
        %vm1623 = vcmp.ge.f32.partialorder %v1047, 2.0
        %vm1624 = vcmp.ge.f32.partialorder %v1049, 2.0
        %vm1625 = vcmp.ge.f32.partialorder %v698, 2.0
        %vm1626 = vcmp.ge.f32.partialorder %v700, 2.0
        %vm1627 = vcmp.ge.f32.partialorder %v1051, 2.0
        %vm1628 = vcmp.ge.f32.partialorder %v1053, 2.0
        %vm1629 = vcmp.ge.f32.partialorder %v704, 2.0
        %vm1630 = vcmp.ge.f32.partialorder %v706, 2.0
        %vm1631 = vcmp.ge.f32.partialorder %v1057, 2.0
        %vm1632 = vcmp.ge.f32.partialorder %v1059, 2.0
        %vm1633 = vcmp.ge.f32.partialorder %v708, 2.0
        %vm1634 = vcmp.ge.f32.partialorder %v710, 2.0
        %vm1635 = vcmp.ge.f32.partialorder %v1061, 2.0
        %vm1636 = vcmp.ge.f32.partialorder %v1063, 2.0
        %vm1637 = vcmp.ge.f32.partialorder %v714, 2.0
        %vm1638 = vcmp.ge.f32.partialorder %v716, 2.0
        %vm1639 = vcmp.ge.f32.partialorder %v1067, 2.0
        %vm1640 = vcmp.ge.f32.partialorder %v1069, 2.0
        %vm1641 = vcmp.ge.f32.partialorder %v718, 2.0
        %vm1642 = vcmp.ge.f32.partialorder %v720, 2.0
        %vm1643 = vcmp.ge.f32.partialorder %v1071, 2.0
        %vm1644 = vcmp.ge.f32.partialorder %v1073, 2.0
        %vm1645 = vcmp.ge.f32.partialorder %v724, 2.0
        %vm1646 = vcmp.ge.f32.partialorder %v726, 2.0
        %vm1647 = vcmp.ge.f32.partialorder %v1077, 2.0
        %vm1648 = vcmp.ge.f32.partialorder %v1079, 2.0
        %vm1649 = vcmp.ge.f32.partialorder %v728, 2.0
        %vm1650 = vcmp.ge.f32.partialorder %v730, 2.0
        %vm1651 = vcmp.ge.f32.partialorder %v1081, 2.0
        %vm1652 = vcmp.ge.f32.partialorder %v1083, 2.0
        %vm1653 = vcmp.ge.f32.partialorder %v734, 2.0
        %vm1654 = vcmp.ge.f32.partialorder %v736, 2.0
        %vm1655 = vcmp.ge.f32.partialorder %v1087, 2.0
        %vm1656 = vcmp.ge.f32.partialorder %v1089, 2.0
        %vm1657 = vcmp.ge.f32.partialorder %v738, 2.0
        %vm1658 = vcmp.ge.f32.partialorder %v740, 2.0
        %vm1659 = vcmp.ge.f32.partialorder %v1091, 2.0
        %vm1660 = vcmp.ge.f32.partialorder %v1093, 2.0
        %vm1661 = vcmp.ge.f32.partialorder %v744, 2.0
        %vm1662 = vcmp.ge.f32.partialorder %v746, 2.0
        %vm1663 = vcmp.ge.f32.partialorder %v1097, 2.0
        %vm1664 = vcmp.ge.f32.partialorder %v1099, 2.0
        %vm1665 = vcmp.ge.f32.partialorder %v748, 2.0
        %vm1666 = vcmp.ge.f32.partialorder %v750, 2.0
        %vm1667 = vcmp.ge.f32.partialorder %v1101, 2.0
        %vm1668 = vcmp.ge.f32.partialorder %v1103, 2.0
        %vm1669 = vcmp.ge.f32.partialorder %v754, 2.0
        %vm1670 = vcmp.ge.f32.partialorder %v756, 2.0
        %vm1671 = vcmp.ge.f32.partialorder %v1107, 2.0
        %vm1672 = vcmp.ge.f32.partialorder %v1109, 2.0
        %vm1673 = vcmp.ge.f32.partialorder %v758, 2.0
        %vm1674 = vcmp.ge.f32.partialorder %v760, 2.0
        %vm1675 = vcmp.ge.f32.partialorder %v1111, 2.0
        %vm1676 = vcmp.ge.f32.partialorder %v1113, 2.0
        %vm1677 = vcmp.ge.f32.partialorder %v764, 2.0
        %vm1678 = vcmp.ge.f32.partialorder %v766, 2.0
        %vm1679 = vcmp.ge.f32.partialorder %v1117, 2.0
        %vm1680 = vcmp.ge.f32.partialorder %v1119, 2.0
        %vm1681 = vcmp.ge.f32.partialorder %v768, 2.0
        %vm1682 = vcmp.ge.f32.partialorder %v770, 2.0
        %vm1683 = vcmp.ge.f32.partialorder %v1121, 2.0
        %vm1684 = vcmp.ge.f32.partialorder %v1123, 2.0
        %vm1685 = vcmp.ge.f32.partialorder %v774, 2.0
        %vm1686 = vcmp.ge.f32.partialorder %v776, 2.0
        %vm1687 = vcmp.ge.f32.partialorder %v1127, 2.0
        %vm1688 = vcmp.ge.f32.partialorder %v1129, 2.0
        %vm1689 = vcmp.ge.f32.partialorder %v778, 2.0
        %vm1690 = vcmp.ge.f32.partialorder %v780, 2.0
        %vm1691 = vcmp.ge.f32.partialorder %v1131, 2.0
        %vm1692 = vcmp.ge.f32.partialorder %v1133, 2.0
        %vm1693 = vcmp.ge.f32.partialorder %v784, 2.0
        %vm1694 = vcmp.ge.f32.partialorder %v786, 2.0
        %vm1695 = vcmp.ge.f32.partialorder %v1137, 2.0
        %vm1696 = vcmp.ge.f32.partialorder %v1139, 2.0
        %vm1697 = vcmp.ge.f32.partialorder %v788, 2.0
        %vm1698 = vcmp.ge.f32.partialorder %v790, 2.0
        %vm1699 = vcmp.ge.f32.partialorder %v1141, 2.0
        %vm1700 = vcmp.ge.f32.partialorder %v1143, 2.0
        %vm1701 = vcmp.ge.f32.partialorder %v794, 2.0
        %vm1702 = vcmp.ge.f32.partialorder %v796, 2.0
        %vm1703 = vcmp.ge.f32.partialorder %v1147, 2.0
        %vm1704 = vcmp.ge.f32.partialorder %v1149, 2.0
        %vm1705 = vcmp.ge.f32.partialorder %v798, 2.0
        %vm1706 = vcmp.ge.f32.partialorder %v800, 2.0
        %vm1707 = vcmp.ge.f32.partialorder %v1151, 2.0
        %vm1708 = vcmp.ge.f32.partialorder %v1153, 2.0
        %vm1709 = vcmp.ge.f32.partialorder %v804, 2.0
        %vm1710 = vcmp.ge.f32.partialorder %v806, 2.0
        %vm1711 = vcmp.ge.f32.partialorder %v1157, 2.0
        %vm1712 = vcmp.ge.f32.partialorder %v1159, 2.0
        %vm1713 = vcmp.ge.f32.partialorder %v808, 2.0
        %vm1714 = vcmp.ge.f32.partialorder %v810, 2.0
        %vm1715 = vcmp.ge.f32.partialorder %v1161, 2.0
        %vm1716 = vcmp.ge.f32.partialorder %v1163, 2.0
        %vm1717 = vcmp.ge.f32.partialorder %v814, 2.0
        %vm1718 = vcmp.ge.f32.partialorder %v816, 2.0
        %vm1719 = vcmp.ge.f32.partialorder %v1167, 2.0
        %vm1720 = vcmp.ge.f32.partialorder %v1169, 2.0
        %vm1721 = vcmp.ge.f32.partialorder %v818, 2.0
        %vm1722 = vcmp.ge.f32.partialorder %v820, 2.0
        %vm1723 = vcmp.ge.f32.partialorder %v1171, 2.0
        %vm1724 = vcmp.ge.f32.partialorder %v1173, 2.0
        %vm1725 = vcmp.ge.f32.partialorder %v824, 2.0
        %vm1726 = vcmp.ge.f32.partialorder %v826, 2.0
        %vm1727 = vcmp.ge.f32.partialorder %v1177, 2.0
        %vm1728 = vcmp.ge.f32.partialorder %v1179, 2.0
        %vm1729 = vcmp.ge.f32.partialorder %v828, 2.0
        %vm1730 = vcmp.ge.f32.partialorder %v830, 2.0
        %vm1731 = vcmp.ge.f32.partialorder %v1181, 2.0
        %vm1732 = vcmp.ge.f32.partialorder %v1183, 2.0
        %vm1733 = vcmp.ge.f32.partialorder %v834, 2.0
        %vm1734 = vcmp.ge.f32.partialorder %v836, 2.0
        %vm1735 = vcmp.ge.f32.partialorder %v1187, 2.0
        %vm1736 = vcmp.ge.f32.partialorder %v1189, 2.0
        %vm1737 = vcmp.ge.f32.partialorder %v838, 2.0
        %vm1738 = vcmp.ge.f32.partialorder %v840, 2.0
        %vm1739 = vcmp.ge.f32.partialorder %v1191, 2.0
        %vm1740 = vcmp.ge.f32.partialorder %v1193, 2.0
        %vm1741 = vcmp.ge.f32.partialorder %v844, 2.0
        %vm1742 = vcmp.ge.f32.partialorder %v846, 2.0
        %vm1743 = vcmp.ge.f32.partialorder %v1197, 2.0
        %vm1744 = vcmp.ge.f32.partialorder %v1199, 2.0
        %vm1745 = vcmp.ge.f32.partialorder %v848, 2.0
        %vm1746 = vcmp.ge.f32.partialorder %v850, 2.0
        %vm1747 = vcmp.ge.f32.partialorder %v1201, 2.0
        %vm1748 = vcmp.ge.f32.partialorder %v1203, 2.0
        %vm1749 = vcmp.ge.f32.partialorder %v854, 2.0
        %vm1750 = vcmp.ge.f32.partialorder %v856, 2.0
        %vm1751 = vcmp.ge.f32.partialorder %v1207, 2.0
        %vm1752 = vcmp.ge.f32.partialorder %v1209, 2.0
        %vm1753 = vcmp.ge.f32.partialorder %v858, 2.0
        %vm1754 = vcmp.ge.f32.partialorder %v860, 2.0
        %vm1755 = vcmp.ge.f32.partialorder %v1211, 2.0
        %vm1756 = vcmp.ge.f32.partialorder %v1213, 2.0
        %vm1757 = vcmp.ge.f32.partialorder %v864, 2.0
        %vm1758 = vcmp.ge.f32.partialorder %v866, 2.0
        %vm1759 = vcmp.ge.f32.partialorder %v1217, 2.0
        %vm1760 = vcmp.ge.f32.partialorder %v1219, 2.0
        %vm1761 = vcmp.ge.f32.partialorder %v868, 2.0
        %vm1762 = vcmp.ge.f32.partialorder %v870, 2.0
        %vm1763 = vcmp.ge.f32.partialorder %v1221, 2.0
        %vm1764 = vcmp.ge.f32.partialorder %v1223, 2.0
        %vm1765 = vcmp.ge.f32.partialorder %v874, 2.0
        %vm1766 = vcmp.ge.f32.partialorder %v876, 2.0
        %vm1767 = vcmp.ge.f32.partialorder %v1227, 2.0
        %vm1768 = vcmp.ge.f32.partialorder %v1229, 2.0
        %vm1769 = vcmp.ge.f32.partialorder %v878, 2.0
        %vm1770 = vcmp.ge.f32.partialorder %v880, 2.0
        %vm1771 = vcmp.ge.f32.partialorder %v1231, 2.0
        %vm1772 = vcmp.ge.f32.partialorder %v1233, 2.0
        %vm1773 = vcmp.ge.f32.partialorder %v884, 2.0
        %vm1774 = vcmp.ge.f32.partialorder %v886, 2.0
        %vm1775 = vcmp.ge.f32.partialorder %v1237, 2.0
        %vm1776 = vcmp.ge.f32.partialorder %v1239, 2.0
        %vm1777 = vcmp.ge.f32.partialorder %v888, 2.0
        %vm1778 = vcmp.ge.f32.partialorder %v890, 2.0
        %vm1779 = vcmp.ge.f32.partialorder %v1241, 2.0
        %vm1780 = vcmp.ge.f32.partialorder %v1243, 2.0
        %vm1781 = vcmp.ge.f32.partialorder %v894, 2.0
        %vm1782 = vcmp.ge.f32.partialorder %v896, 2.0
        %vm1783 = vcmp.ge.f32.partialorder %v1247, 2.0
        %vm1784 = vcmp.ge.f32.partialorder %v1249, 2.0
        %vm1785 = vcmp.ge.f32.partialorder %v898, 2.0
        %vm1786 = vcmp.ge.f32.partialorder %v900, 2.0
        %vm1787 = vcmp.ge.f32.partialorder %v1251, 2.0
        %vm1788 = vcmp.ge.f32.partialorder %v1253, 2.0
        %vm1789 = vcmp.ge.f32.partialorder %v904, 2.0
        %vm1790 = vcmp.ge.f32.partialorder %v906, 2.0
        %vm1791 = vcmp.ge.f32.partialorder %v1257, 2.0
        %vm1792 = vcmp.ge.f32.partialorder %v1259, 2.0
        %vm1793 = vcmp.ge.f32.partialorder %v908, 2.0
        %vm1794 = vcmp.ge.f32.partialorder %v910, 2.0
        %vm1795 = vcmp.ge.f32.partialorder %v1261, 2.0
        %vm1796 = vcmp.ge.f32.partialorder %v1263, 2.0
        %vm1797 = vcmp.ge.f32.partialorder %v914, 2.0
        %vm1798 = vcmp.ge.f32.partialorder %v916, 2.0
        %vm1799 = vcmp.ge.f32.partialorder %v1267, 2.0
        %vm1800 = vcmp.ge.f32.partialorder %v1269, 2.0
        %vm1801 = vcmp.ge.f32.partialorder %v918, 2.0
        %vm1802 = vcmp.ge.f32.partialorder %v920, 2.0
        %vm1803 = vcmp.ge.f32.partialorder %v1271, 2.0
        %vm1804 = vcmp.ge.f32.partialorder %v1273, 2.0
        %vm1805 = vcmp.ge.f32.partialorder %v924, 2.0
        %vm1806 = vcmp.ge.f32.partialorder %v926, 2.0
        %vm1807 = vcmp.ge.f32.partialorder %v1277, 2.0
        %vm1808 = vcmp.ge.f32.partialorder %v1279, 2.0
        %vm1809 = vcmp.ge.f32.partialorder %v928, 2.0
        %vm1810 = vcmp.ge.f32.partialorder %v930, 2.0
        %vm1811 = vcmp.ge.f32.partialorder %v1281, 2.0
        %vm1812 = vcmp.ge.f32.partialorder %v1283, 2.0
        %vm1813 = vcmp.ge.f32.partialorder %v934, 2.0
        %vm1814 = vcmp.ge.f32.partialorder %v936, 2.0
        %vm1815 = vcmp.ge.f32.partialorder %v1287, 2.0
        %vm1816 = vcmp.ge.f32.partialorder %v1289, 2.0
        %vm1817 = vcmp.ge.f32.partialorder %v938, 2.0
        %vm1818 = vcmp.ge.f32.partialorder %v940, 2.0
        %vm1819 = vcmp.ge.f32.partialorder %v1291, 2.0
        %vm1820 = vcmp.ge.f32.partialorder %v1293, 2.0
        %vm1821 = vcmp.ge.f32.partialorder %v944, 2.0
        %vm1822 = vcmp.ge.f32.partialorder %v946, 2.0
        %vm1823 = vcmp.ge.f32.partialorder %v1297, 2.0
        %vm1824 = vcmp.ge.f32.partialorder %v1299, 2.0
        %vm1825 = vcmp.ge.f32.partialorder %v948, 2.0
        %vm1826 = vcmp.ge.f32.partialorder %v950, 2.0
        %vm1827 = vcmp.ge.f32.partialorder %v1301, 2.0
        %vm1828 = vcmp.ge.f32.partialorder %v1303, 2.0
        %vm1829 = vcmp.ge.f32.partialorder %v954, 2.0
        %vm1830 = vcmp.ge.f32.partialorder %v956, 2.0
        %vm1831 = vcmp.ge.f32.partialorder %v1307, 2.0
        %vm1832 = vcmp.ge.f32.partialorder %v1309, 2.0
        %vm1833 = vcmp.ge.f32.partialorder %v958, 2.0
        %vm1834 = vcmp.ge.f32.partialorder %v960, 2.0
        %vm1835 = vcmp.ge.f32.partialorder %v1311, 2.0
        %vm1836 = vcmp.ge.f32.partialorder %v1313, 2.0
        %vm1837 = vcmp.ge.f32.partialorder %v964, 2.0
        %vm1838 = vcmp.ge.f32.partialorder %v966, 2.0
        %vm1839 = vcmp.ge.f32.partialorder %v1317, 2.0
        %vm1840 = vcmp.ge.f32.partialorder %v1319, 2.0
        %vm1841 = vcmp.ge.f32.partialorder %v968, 2.0
        %vm1842 = vcmp.ge.f32.partialorder %v970, 2.0
        %vm1843 = vcmp.ge.f32.partialorder %v1321, 2.0
        %vm1844 = vcmp.ge.f32.partialorder %v1323, 2.0
        %vm1845 = vcmp.ge.f32.partialorder %v974, 2.0
        %vm1846 = vcmp.ge.f32.partialorder %v976, 2.0
        %vm1847 = vcmp.ge.f32.partialorder %v1327, 2.0
        %vm1848 = vcmp.ge.f32.partialorder %v1329, 2.0
        %vm1849 = vcmp.ge.f32.partialorder %v978, 2.0
        %vm1850 = vcmp.ge.f32.partialorder %v980, 2.0
        %vm1851 = vcmp.ge.f32.partialorder %v1331, 2.0
        %vm1852 = vcmp.ge.f32.partialorder %v1333, 2.0
        %vm1853 = vcmp.ge.f32.partialorder %v984, 2.0
        %vm1854 = vcmp.ge.f32.partialorder %v986, 2.0
        %vm1855 = vcmp.ge.f32.partialorder %v1337, 2.0
        %vm1856 = vcmp.ge.f32.partialorder %v1339, 2.0
        %vm1857 = vcmp.ge.f32.partialorder %v988, 2.0
        %vm1858 = vcmp.ge.f32.partialorder %v990, 2.0
        %vm1859 = vcmp.ge.f32.partialorder %v1341, 2.0
        %vm1860 = vcmp.ge.f32.partialorder %v1343, 2.0
        %vm1861 = vcmp.ge.f32.partialorder %v994, 2.0
        %vm1862 = vcmp.ge.f32.partialorder %v996, 2.0
        %vm1863 = vcmp.ge.f32.partialorder %v1347, 2.0
        %vm1864 = vcmp.ge.f32.partialorder %v1349, 2.0
        %vm1865 = vcmp.ge.f32.partialorder %v998, 2.0
        %vm1866 = vcmp.ge.f32.partialorder %v1000, 2.0
        %vm1867 = vcmp.ge.f32.partialorder %v1351, 2.0
        %vm1868 = vcmp.ge.f32.partialorder %v1353, 2.0
        %vm1869 = vcmp.ge.f32.partialorder %v1004, 2.0
        %vm1870 = vcmp.ge.f32.partialorder %v1006, 2.0
        %vm1871 = vcmp.ge.f32.partialorder %v1357, 2.0
        %vm1872 = vcmp.ge.f32.partialorder %v1359, 2.0
        %vm1873 = vcmp.ge.f32.partialorder %v1008, 2.0
        %vm1874 = vcmp.ge.f32.partialorder %v1010, 2.0
        %vm1875 = vcmp.ge.f32.partialorder %v1361, 2.0
        %vm1876 = vcmp.ge.f32.partialorder %v1363, 2.0
        %vm1877 = vmor %vm1365, %vm1621
        %vm1878 = vmor %vm1366, %vm1622
        %vm1879 = vmor %vm1367, %vm1623
        %vm1880 = vmor %vm1368, %vm1624
        %vm1881 = vmor %vm1369, %vm1625
        %vm1882 = vmor %vm1370, %vm1626
        %vm1883 = vmor %vm1371, %vm1627
        %vm1884 = vmor %vm1372, %vm1628
        %vm1885 = vmor %vm1373, %vm1629
        %vm1886 = vmor %vm1374, %vm1630
        %vm1887 = vmor %vm1375, %vm1631
        %vm1888 = vmor %vm1376, %vm1632
        %vm1889 = vmor %vm1377, %vm1633
        %vm1890 = vmor %vm1378, %vm1634
        %vm1891 = vmor %vm1379, %vm1635
        %vm1892 = vmor %vm1380, %vm1636
        %vm1893 = vmor %vm1381, %vm1637
        %vm1894 = vmor %vm1382, %vm1638
        %vm1895 = vmor %vm1383, %vm1639
        %vm1896 = vmor %vm1384, %vm1640
        %vm1897 = vmor %vm1385, %vm1641
        %vm1898 = vmor %vm1386, %vm1642
        %vm1899 = vmor %vm1387, %vm1643
        %vm1900 = vmor %vm1388, %vm1644
        %vm1901 = vmor %vm1389, %vm1645
        %vm1902 = vmor %vm1390, %vm1646
        %vm1903 = vmor %vm1391, %vm1647
        %vm1904 = vmor %vm1392, %vm1648
        %vm1905 = vmor %vm1393, %vm1649
        %vm1906 = vmor %vm1394, %vm1650
        %vm1907 = vmor %vm1395, %vm1651
        %vm1908 = vmor %vm1396, %vm1652
        %vm1909 = vmor %vm1397, %vm1653
        %vm1910 = vmor %vm1398, %vm1654
        %vm1911 = vmor %vm1399, %vm1655
        %vm1912 = vmor %vm1400, %vm1656
        %vm1913 = vmor %vm1401, %vm1657
        %vm1914 = vmor %vm1402, %vm1658
        %vm1915 = vmor %vm1403, %vm1659
        %vm1916 = vmor %vm1404, %vm1660
        %vm1917 = vmor %vm1405, %vm1661
        %vm1918 = vmor %vm1406, %vm1662
        %vm1919 = vmor %vm1407, %vm1663
        %vm1920 = vmor %vm1408, %vm1664
        %vm1921 = vmor %vm1409, %vm1665
        %vm1922 = vmor %vm1410, %vm1666
        %vm1923 = vmor %vm1411, %vm1667
        %vm1924 = vmor %vm1412, %vm1668
        %vm1925 = vmor %vm1413, %vm1669
        %vm1926 = vmor %vm1414, %vm1670
        %vm1927 = vmor %vm1415, %vm1671
        %vm1928 = vmor %vm1416, %vm1672
        %vm1929 = vmor %vm1417, %vm1673
        %vm1930 = vmor %vm1418, %vm1674
        %vm1931 = vmor %vm1419, %vm1675
        %vm1932 = vmor %vm1420, %vm1676
        %vm1933 = vmor %vm1421, %vm1677
        %vm1934 = vmor %vm1422, %vm1678
        %vm1935 = vmor %vm1423, %vm1679
        %vm1936 = vmor %vm1424, %vm1680
        %vm1937 = vmor %vm1425, %vm1681
        %vm1938 = vmor %vm1426, %vm1682
        %vm1939 = vmor %vm1427, %vm1683
        %vm1940 = vmor %vm1428, %vm1684
        %vm1941 = vmor %vm1429, %vm1685
        %vm1942 = vmor %vm1430, %vm1686
        %vm1943 = vmor %vm1431, %vm1687
        %vm1944 = vmor %vm1432, %vm1688
        %vm1945 = vmor %vm1433, %vm1689
        %vm1946 = vmor %vm1434, %vm1690
        %vm1947 = vmor %vm1435, %vm1691
        %vm1948 = vmor %vm1436, %vm1692
        %vm1949 = vmor %vm1437, %vm1693
        %vm1950 = vmor %vm1438, %vm1694
        %vm1951 = vmor %vm1439, %vm1695
        %vm1952 = vmor %vm1440, %vm1696
        %vm1953 = vmor %vm1441, %vm1697
        %vm1954 = vmor %vm1442, %vm1698
        %vm1955 = vmor %vm1443, %vm1699
        %vm1956 = vmor %vm1444, %vm1700
        %vm1957 = vmor %vm1445, %vm1701
        %vm1958 = vmor %vm1446, %vm1702
        %vm1959 = vmor %vm1447, %vm1703
        %vm1960 = vmor %vm1448, %vm1704
        %vm1961 = vmor %vm1449, %vm1705
        %vm1962 = vmor %vm1450, %vm1706
        %vm1963 = vmor %vm1451, %vm1707
        %vm1964 = vmor %vm1452, %vm1708
        %vm1965 = vmor %vm1453, %vm1709
        %vm1966 = vmor %vm1454, %vm1710
        %vm1967 = vmor %vm1455, %vm1711
        %vm1968 = vmor %vm1456, %vm1712
        %vm1969 = vmor %vm1457, %vm1713
        %vm1970 = vmor %vm1458, %vm1714
        %vm1971 = vmor %vm1459, %vm1715
        %vm1972 = vmor %vm1460, %vm1716
        %vm1973 = vmor %vm1461, %vm1717
        %vm1974 = vmor %vm1462, %vm1718
        %vm1975 = vmor %vm1463, %vm1719
        %vm1976 = vmor %vm1464, %vm1720
        %vm1977 = vmor %vm1465, %vm1721
        %vm1978 = vmor %vm1466, %vm1722
        %vm1979 = vmor %vm1467, %vm1723
        %vm1980 = vmor %vm1468, %vm1724
        %vm1981 = vmor %vm1469, %vm1725
        %vm1982 = vmor %vm1470, %vm1726
        %vm1983 = vmor %vm1471, %vm1727
        %vm1984 = vmor %vm1472, %vm1728
        %vm1985 = vmor %vm1473, %vm1729
        %vm1986 = vmor %vm1474, %vm1730
        %vm1987 = vmor %vm1475, %vm1731
        %vm1988 = vmor %vm1476, %vm1732
        %vm1989 = vmor %vm1477, %vm1733
        %vm1990 = vmor %vm1478, %vm1734
        %vm1991 = vmor %vm1479, %vm1735
        %vm1992 = vmor %vm1480, %vm1736
        %vm1993 = vmor %vm1481, %vm1737
        %vm1994 = vmor %vm1482, %vm1738
        %vm1995 = vmor %vm1483, %vm1739
        %vm1996 = vmor %vm1484, %vm1740
        %vm1997 = vmor %vm1485, %vm1741
        %vm1998 = vmor %vm1486, %vm1742
        %vm1999 = vmor %vm1487, %vm1743
        %vm2000 = vmor %vm1488, %vm1744
        %vm2001 = vmor %vm1489, %vm1745
        %vm2002 = vmor %vm1490, %vm1746
        %vm2003 = vmor %vm1491, %vm1747
        %vm2004 = vmor %vm1492, %vm1748
        %vm2005 = vmor %vm1493, %vm1749
        %vm2006 = vmor %vm1494, %vm1750
        %vm2007 = vmor %vm1495, %vm1751
        %vm2008 = vmor %vm1496, %vm1752
        %vm2009 = vmor %vm1497, %vm1753
        %vm2010 = vmor %vm1498, %vm1754
        %vm2011 = vmor %vm1499, %vm1755
        %vm2012 = vmor %vm1500, %vm1756
        %vm2013 = vmor %vm1501, %vm1757
        %vm2014 = vmor %vm1502, %vm1758
        %vm2015 = vmor %vm1503, %vm1759
        %vm2016 = vmor %vm1504, %vm1760
        %vm2017 = vmor %vm1505, %vm1761
        %vm2018 = vmor %vm1506, %vm1762
        %vm2019 = vmor %vm1507, %vm1763
        %vm2020 = vmor %vm1508, %vm1764
        %vm2021 = vmor %vm1509, %vm1765
        %vm2022 = vmor %vm1510, %vm1766
        %vm2023 = vmor %vm1511, %vm1767
        %vm2024 = vmor %vm1512, %vm1768
        %vm2025 = vmor %vm1513, %vm1769
        %vm2026 = vmor %vm1514, %vm1770
        %vm2027 = vmor %vm1515, %vm1771
        %vm2028 = vmor %vm1516, %vm1772
        %vm2029 = vmor %vm1517, %vm1773
        %vm2030 = vmor %vm1518, %vm1774
        %vm2031 = vmor %vm1519, %vm1775
        %vm2032 = vmor %vm1520, %vm1776
        %vm2033 = vmor %vm1521, %vm1777
        %vm2034 = vmor %vm1522, %vm1778
        %vm2035 = vmor %vm1523, %vm1779
        %vm2036 = vmor %vm1524, %vm1780
        %vm2037 = vmor %vm1525, %vm1781
        %vm2038 = vmor %vm1526, %vm1782
        %vm2039 = vmor %vm1527, %vm1783
        %vm2040 = vmor %vm1528, %vm1784
        %vm2041 = vmor %vm1529, %vm1785
        %vm2042 = vmor %vm1530, %vm1786
        %vm2043 = vmor %vm1531, %vm1787
        %vm2044 = vmor %vm1532, %vm1788
        %vm2045 = vmor %vm1533, %vm1789
        %vm2046 = vmor %vm1534, %vm1790
        %vm2047 = vmor %vm1535, %vm1791
        %vm2048 = vmor %vm1536, %vm1792
        %vm2049 = vmor %vm1537, %vm1793
        %vm2050 = vmor %vm1538, %vm1794
        %vm2051 = vmor %vm1539, %vm1795
        %vm2052 = vmor %vm1540, %vm1796
        %vm2053 = vmor %vm1541, %vm1797
        %vm2054 = vmor %vm1542, %vm1798
        %vm2055 = vmor %vm1543, %vm1799
        %vm2056 = vmor %vm1544, %vm1800
        %vm2057 = vmor %vm1545, %vm1801
        %vm2058 = vmor %vm1546, %vm1802
        %vm2059 = vmor %vm1547, %vm1803
        %vm2060 = vmor %vm1548, %vm1804
        %vm2061 = vmor %vm1549, %vm1805
        %vm2062 = vmor %vm1550, %vm1806
        %vm2063 = vmor %vm1551, %vm1807
        %vm2064 = vmor %vm1552, %vm1808
        %vm2065 = vmor %vm1553, %vm1809
        %vm2066 = vmor %vm1554, %vm1810
        %vm2067 = vmor %vm1555, %vm1811
        %vm2068 = vmor %vm1556, %vm1812
        %vm2069 = vmor %vm1557, %vm1813
        %vm2070 = vmor %vm1558, %vm1814
        %vm2071 = vmor %vm1559, %vm1815
        %vm2072 = vmor %vm1560, %vm1816
        %vm2073 = vmor %vm1561, %vm1817
        %vm2074 = vmor %vm1562, %vm1818
        %vm2075 = vmor %vm1563, %vm1819
        %vm2076 = vmor %vm1564, %vm1820
        %vm2077 = vmor %vm1565, %vm1821
        %vm2078 = vmor %vm1566, %vm1822
        %vm2079 = vmor %vm1567, %vm1823
        %vm2080 = vmor %vm1568, %vm1824
        %vm2081 = vmor %vm1569, %vm1825
        %vm2082 = vmor %vm1570, %vm1826
        %vm2083 = vmor %vm1571, %vm1827
        %vm2084 = vmor %vm1572, %vm1828
        %vm2085 = vmor %vm1573, %vm1829
        %vm2086 = vmor %vm1574, %vm1830
        %vm2087 = vmor %vm1575, %vm1831
        %vm2088 = vmor %vm1576, %vm1832
        %vm2089 = vmor %vm1577, %vm1833
        %vm2090 = vmor %vm1578, %vm1834
        %vm2091 = vmor %vm1579, %vm1835
        %vm2092 = vmor %vm1580, %vm1836
        %vm2093 = vmor %vm1581, %vm1837
        %vm2094 = vmor %vm1582, %vm1838
        %vm2095 = vmor %vm1583, %vm1839
        %vm2096 = vmor %vm1584, %vm1840
        %vm2097 = vmor %vm1585, %vm1841
        %vm2098 = vmor %vm1586, %vm1842
        %vm2099 = vmor %vm1587, %vm1843
        %vm2100 = vmor %vm1588, %vm1844
        %vm2101 = vmor %vm1589, %vm1845
        %vm2102 = vmor %vm1590, %vm1846
        %vm2103 = vmor %vm1591, %vm1847
        %vm2104 = vmor %vm1592, %vm1848
        %vm2105 = vmor %vm1593, %vm1849
        %vm2106 = vmor %vm1594, %vm1850
        %vm2107 = vmor %vm1595, %vm1851
        %vm2108 = vmor %vm1596, %vm1852
        %vm2109 = vmor %vm1597, %vm1853
        %vm2110 = vmor %vm1598, %vm1854
        %vm2111 = vmor %vm1599, %vm1855
        %vm2112 = vmor %vm1600, %vm1856
        %vm2113 = vmor %vm1601, %vm1857
        %vm2114 = vmor %vm1602, %vm1858
        %vm2115 = vmor %vm1603, %vm1859
        %vm2116 = vmor %vm1604, %vm1860
        %vm2117 = vmor %vm1605, %vm1861
        %vm2118 = vmor %vm1606, %vm1862
        %vm2119 = vmor %vm1607, %vm1863
        %vm2120 = vmor %vm1608, %vm1864
        %vm2121 = vmor %vm1609, %vm1865
        %vm2122 = vmor %vm1610, %vm1866
        %vm2123 = vmor %vm1611, %vm1867
        %vm2124 = vmor %vm1612, %vm1868
        %vm2125 = vmor %vm1613, %vm1869
        %vm2126 = vmor %vm1614, %vm1870
        %vm2127 = vmor %vm1615, %vm1871
        %vm2128 = vmor %vm1616, %vm1872
        %vm2129 = vmor %vm1617, %vm1873
        %vm2130 = vmor %vm1618, %vm1874
        %vm2131 = vmor %vm1619, %vm1875
        %vm2132 = vmor %vm1620, %vm1876
        %v2133 = vsel %vm1877, %v694, 0.0
        %v2134 = vsel %vm1878, %v696, 0.0
        %v2135 = vsel %vm1879, %v1047, 0.0
        %v2136 = vsel %vm1880, %v1049, 0.0
        %v2137 = vsel %vm1881, %v698, 0.0
        %v2138 = vsel %vm1882, %v700, 0.0
        %v2139 = vsel %vm1883, %v1051, 0.0
        %v2140 = vsel %vm1884, %v1053, 0.0
        %v2141 = vsel %vm1885, %v704, 0.0
        %v2142 = vsel %vm1886, %v706, 0.0
        %v2143 = vsel %vm1887, %v1057, 0.0
        %v2144 = vsel %vm1888, %v1059, 0.0
        %v2145 = vsel %vm1889, %v708, 0.0
        %v2146 = vsel %vm1890, %v710, 0.0
        %v2147 = vsel %vm1891, %v1061, 0.0
        %v2148 = vsel %vm1892, %v1063, 0.0
        %v2149 = vsel %vm1893, %v714, 0.0
        %v2150 = vsel %vm1894, %v716, 0.0
        %v2151 = vsel %vm1895, %v1067, 0.0
        %v2152 = vsel %vm1896, %v1069, 0.0
        %v2153 = vsel %vm1897, %v718, 0.0
        %v2154 = vsel %vm1898, %v720, 0.0
        %v2155 = vsel %vm1899, %v1071, 0.0
        %v2156 = vsel %vm1900, %v1073, 0.0
        %v2157 = vsel %vm1901, %v724, 0.0
        %v2158 = vsel %vm1902, %v726, 0.0
        %v2159 = vsel %vm1903, %v1077, 0.0
        %v2160 = vsel %vm1904, %v1079, 0.0
        %v2161 = vsel %vm1905, %v728, 0.0
        %v2162 = vsel %vm1906, %v730, 0.0
        %v2163 = vsel %vm1907, %v1081, 0.0
        %v2164 = vsel %vm1908, %v1083, 0.0
        %v2165 = vsel %vm1909, %v734, 0.0
        %v2166 = vsel %vm1910, %v736, 0.0
        %v2167 = vsel %vm1911, %v1087, 0.0
        %v2168 = vsel %vm1912, %v1089, 0.0
        %v2169 = vsel %vm1913, %v738, 0.0
        %v2170 = vsel %vm1914, %v740, 0.0
        %v2171 = vsel %vm1915, %v1091, 0.0
        %v2172 = vsel %vm1916, %v1093, 0.0
        %v2173 = vsel %vm1917, %v744, 0.0
        %v2174 = vsel %vm1918, %v746, 0.0
        %v2175 = vsel %vm1919, %v1097, 0.0
        %v2176 = vsel %vm1920, %v1099, 0.0
        %v2177 = vsel %vm1921, %v748, 0.0
        %v2178 = vsel %vm1922, %v750, 0.0
        %v2179 = vsel %vm1923, %v1101, 0.0
        %v2180 = vsel %vm1924, %v1103, 0.0
        %v2181 = vsel %vm1925, %v754, 0.0
        %v2182 = vsel %vm1926, %v756, 0.0
        %v2183 = vsel %vm1927, %v1107, 0.0
        %v2184 = vsel %vm1928, %v1109, 0.0
        %v2185 = vsel %vm1929, %v758, 0.0
        %v2186 = vsel %vm1930, %v760, 0.0
        %v2187 = vsel %vm1931, %v1111, 0.0
        %v2188 = vsel %vm1932, %v1113, 0.0
        %v2189 = vsel %vm1933, %v764, 0.0
        %v2190 = vsel %vm1934, %v766, 0.0
        %v2191 = vsel %vm1935, %v1117, 0.0
        %v2192 = vsel %vm1936, %v1119, 0.0
        %v2193 = vsel %vm1937, %v768, 0.0
        %v2194 = vsel %vm1938, %v770, 0.0
        %v2195 = vsel %vm1939, %v1121, 0.0
        %v2196 = vsel %vm1940, %v1123, 0.0
        %v2197 = vsel %vm1941, %v774, 0.0
        %v2198 = vsel %vm1942, %v776, 0.0
        %v2199 = vsel %vm1943, %v1127, 0.0
        %v2200 = vsel %vm1944, %v1129, 0.0
        %v2201 = vsel %vm1945, %v778, 0.0
        %v2202 = vsel %vm1946, %v780, 0.0
        %v2203 = vsel %vm1947, %v1131, 0.0
        %v2204 = vsel %vm1948, %v1133, 0.0
        %v2205 = vsel %vm1949, %v784, 0.0
        %v2206 = vsel %vm1950, %v786, 0.0
        %v2207 = vsel %vm1951, %v1137, 0.0
        %v2208 = vsel %vm1952, %v1139, 0.0
        %v2209 = vsel %vm1953, %v788, 0.0
        %v2210 = vsel %vm1954, %v790, 0.0
        %v2211 = vsel %vm1955, %v1141, 0.0
        %v2212 = vsel %vm1956, %v1143, 0.0
        %v2213 = vsel %vm1957, %v794, 0.0
        %v2214 = vsel %vm1958, %v796, 0.0
        %v2215 = vsel %vm1959, %v1147, 0.0
        %v2216 = vsel %vm1960, %v1149, 0.0
        %v2217 = vsel %vm1961, %v798, 0.0
        %v2218 = vsel %vm1962, %v800, 0.0
        %v2219 = vsel %vm1963, %v1151, 0.0
        %v2220 = vsel %vm1964, %v1153, 0.0
        %v2221 = vsel %vm1965, %v804, 0.0
        %v2222 = vsel %vm1966, %v806, 0.0
        %v2223 = vsel %vm1967, %v1157, 0.0
        %v2224 = vsel %vm1968, %v1159, 0.0
        %v2225 = vsel %vm1969, %v808, 0.0
        %v2226 = vsel %vm1970, %v810, 0.0
        %v2227 = vsel %vm1971, %v1161, 0.0
        %v2228 = vsel %vm1972, %v1163, 0.0
        %v2229 = vsel %vm1973, %v814, 0.0
        %v2230 = vsel %vm1974, %v816, 0.0
        %v2231 = vsel %vm1975, %v1167, 0.0
        %v2232 = vsel %vm1976, %v1169, 0.0
        %v2233 = vsel %vm1977, %v818, 0.0
        %v2234 = vsel %vm1978, %v820, 0.0
        %v2235 = vsel %vm1979, %v1171, 0.0
        %v2236 = vsel %vm1980, %v1173, 0.0
        %v2237 = vsel %vm1981, %v824, 0.0
        %v2238 = vsel %vm1982, %v826, 0.0
        %v2239 = vsel %vm1983, %v1177, 0.0
        %v2240 = vsel %vm1984, %v1179, 0.0
        %v2241 = vsel %vm1985, %v828, 0.0
        %v2242 = vsel %vm1986, %v830, 0.0
        %v2243 = vsel %vm1987, %v1181, 0.0
        %v2244 = vsel %vm1988, %v1183, 0.0
        %v2245 = vsel %vm1989, %v834, 0.0
        %v2246 = vsel %vm1990, %v836, 0.0
        %v2247 = vsel %vm1991, %v1187, 0.0
        %v2248 = vsel %vm1992, %v1189, 0.0
        %v2249 = vsel %vm1993, %v838, 0.0
        %v2250 = vsel %vm1994, %v840, 0.0
        %v2251 = vsel %vm1995, %v1191, 0.0
        %v2252 = vsel %vm1996, %v1193, 0.0
        %v2253 = vsel %vm1997, %v844, 0.0
        %v2254 = vsel %vm1998, %v846, 0.0
        %v2255 = vsel %vm1999, %v1197, 0.0
        %v2256 = vsel %vm2000, %v1199, 0.0
        %v2257 = vsel %vm2001, %v848, 0.0
        %v2258 = vsel %vm2002, %v850, 0.0
        %v2259 = vsel %vm2003, %v1201, 0.0
        %v2260 = vsel %vm2004, %v1203, 0.0
        %v2261 = vsel %vm2005, %v854, 0.0
        %v2262 = vsel %vm2006, %v856, 0.0
        %v2263 = vsel %vm2007, %v1207, 0.0
        %v2264 = vsel %vm2008, %v1209, 0.0
        %v2265 = vsel %vm2009, %v858, 0.0
        %v2266 = vsel %vm2010, %v860, 0.0
        %v2267 = vsel %vm2011, %v1211, 0.0
        %v2268 = vsel %vm2012, %v1213, 0.0
        %v2269 = vsel %vm2013, %v864, 0.0
        %v2270 = vsel %vm2014, %v866, 0.0
        %v2271 = vsel %vm2015, %v1217, 0.0
        %v2272 = vsel %vm2016, %v1219, 0.0
        %v2273 = vsel %vm2017, %v868, 0.0
        %v2274 = vsel %vm2018, %v870, 0.0
        %v2275 = vsel %vm2019, %v1221, 0.0
        %v2276 = vsel %vm2020, %v1223, 0.0
        %v2277 = vsel %vm2021, %v874, 0.0
        %v2278 = vsel %vm2022, %v876, 0.0
        %v2279 = vsel %vm2023, %v1227, 0.0
        %v2280 = vsel %vm2024, %v1229, 0.0
        %v2281 = vsel %vm2025, %v878, 0.0
        %v2282 = vsel %vm2026, %v880, 0.0
        %v2283 = vsel %vm2027, %v1231, 0.0
        %v2284 = vsel %vm2028, %v1233, 0.0
        %v2285 = vsel %vm2029, %v884, 0.0
        %v2286 = vsel %vm2030, %v886, 0.0
        %v2287 = vsel %vm2031, %v1237, 0.0
        %v2288 = vsel %vm2032, %v1239, 0.0
        %v2289 = vsel %vm2033, %v888, 0.0
        %v2290 = vsel %vm2034, %v890, 0.0
        %v2291 = vsel %vm2035, %v1241, 0.0
        %v2292 = vsel %vm2036, %v1243, 0.0
        %v2293 = vsel %vm2037, %v894, 0.0
        %v2294 = vsel %vm2038, %v896, 0.0
        %v2295 = vsel %vm2039, %v1247, 0.0
        %v2296 = vsel %vm2040, %v1249, 0.0
        %v2297 = vsel %vm2041, %v898, 0.0
        %v2298 = vsel %vm2042, %v900, 0.0
        %v2299 = vsel %vm2043, %v1251, 0.0
        %v2300 = vsel %vm2044, %v1253, 0.0
        %v2301 = vsel %vm2045, %v904, 0.0
        %v2302 = vsel %vm2046, %v906, 0.0
        %v2303 = vsel %vm2047, %v1257, 0.0
        %v2304 = vsel %vm2048, %v1259, 0.0
        %v2305 = vsel %vm2049, %v908, 0.0
        %v2306 = vsel %vm2050, %v910, 0.0
        %v2307 = vsel %vm2051, %v1261, 0.0
        %v2308 = vsel %vm2052, %v1263, 0.0
        %v2309 = vsel %vm2053, %v914, 0.0
        %v2310 = vsel %vm2054, %v916, 0.0
        %v2311 = vsel %vm2055, %v1267, 0.0
        %v2312 = vsel %vm2056, %v1269, 0.0
        %v2313 = vsel %vm2057, %v918, 0.0
        %v2314 = vsel %vm2058, %v920, 0.0
        %v2315 = vsel %vm2059, %v1271, 0.0
        %v2316 = vsel %vm2060, %v1273, 0.0
        %v2317 = vsel %vm2061, %v924, 0.0
        %v2318 = vsel %vm2062, %v926, 0.0
        %v2319 = vsel %vm2063, %v1277, 0.0
        %v2320 = vsel %vm2064, %v1279, 0.0
        %v2321 = vsel %vm2065, %v928, 0.0
        %v2322 = vsel %vm2066, %v930, 0.0
        %v2323 = vsel %vm2067, %v1281, 0.0
        %v2324 = vsel %vm2068, %v1283, 0.0
        %v2325 = vsel %vm2069, %v934, 0.0
        %v2326 = vsel %vm2070, %v936, 0.0
        %v2327 = vsel %vm2071, %v1287, 0.0
        %v2328 = vsel %vm2072, %v1289, 0.0
        %v2329 = vsel %vm2073, %v938, 0.0
        %v2330 = vsel %vm2074, %v940, 0.0
        %v2331 = vsel %vm2075, %v1291, 0.0
        %v2332 = vsel %vm2076, %v1293, 0.0
        %v2333 = vsel %vm2077, %v944, 0.0
        %v2334 = vsel %vm2078, %v946, 0.0
        %v2335 = vsel %vm2079, %v1297, 0.0
        %v2336 = vsel %vm2080, %v1299, 0.0
        %v2337 = vsel %vm2081, %v948, 0.0
        %v2338 = vsel %vm2082, %v950, 0.0
        %v2339 = vsel %vm2083, %v1301, 0.0
        %v2340 = vsel %vm2084, %v1303, 0.0
        %v2341 = vsel %vm2085, %v954, 0.0
        %v2342 = vsel %vm2086, %v956, 0.0
        %v2343 = vsel %vm2087, %v1307, 0.0
        %v2344 = vsel %vm2088, %v1309, 0.0
        %v2345 = vsel %vm2089, %v958, 0.0
        %v2346 = vsel %vm2090, %v960, 0.0
        %v2347 = vsel %vm2091, %v1311, 0.0
        %v2348 = vsel %vm2092, %v1313, 0.0
        %v2349 = vsel %vm2093, %v964, 0.0
        %v2350 = vsel %vm2094, %v966, 0.0
        %v2351 = vsel %vm2095, %v1317, 0.0
        %v2352 = vsel %vm2096, %v1319, 0.0
        %v2353 = vsel %vm2097, %v968, 0.0
        %v2354 = vsel %vm2098, %v970, 0.0
        %v2355 = vsel %vm2099, %v1321, 0.0
        %v2356 = vsel %vm2100, %v1323, 0.0
        %v2357 = vsel %vm2101, %v974, 0.0
        %v2358 = vsel %vm2102, %v976, 0.0
        %v2359 = vsel %vm2103, %v1327, 0.0
        %v2360 = vsel %vm2104, %v1329, 0.0
        %v2361 = vsel %vm2105, %v978, 0.0
        %v2362 = vsel %vm2106, %v980, 0.0
        %v2363 = vsel %vm2107, %v1331, 0.0
        %v2364 = vsel %vm2108, %v1333, 0.0
        %v2365 = vsel %vm2109, %v984, 0.0
        %v2366 = vsel %vm2110, %v986, 0.0
        %v2367 = vsel %vm2111, %v1337, 0.0
        %v2368 = vsel %vm2112, %v1339, 0.0
        %v2369 = vsel %vm2113, %v988, 0.0
        %v2370 = vsel %vm2114, %v990, 0.0
        %v2371 = vsel %vm2115, %v1341, 0.0
        %v2372 = vsel %vm2116, %v1343, 0.0
        %v2373 = vsel %vm2117, %v994, 0.0
        %v2374 = vsel %vm2118, %v996, 0.0
        %v2375 = vsel %vm2119, %v1347, 0.0
        %v2376 = vsel %vm2120, %v1349, 0.0
        %v2377 = vsel %vm2121, %v998, 0.0
        %v2378 = vsel %vm2122, %v1000, 0.0
        %v2379 = vsel %vm2123, %v1351, 0.0
        %v2380 = vsel %vm2124, %v1353, 0.0
        %v2381 = vsel %vm2125, %v1004, 0.0
        %v2382 = vsel %vm2126, %v1006, 0.0
        %v2383 = vsel %vm2127, %v1357, 0.0
        %v2384 = vsel %vm2128, %v1359, 0.0
        %v2385 = vsel %vm2129, %v1008, 0.0
        %v2386 = vsel %vm2130, %v1010, 0.0
        %v2387 = vsel %vm2131, %v1361, 0.0
        %v2388 = vsel %vm2132, %v1363, 0.0
        %v2389 = vmax.f32 %v2133, %v2134
        %v2390 = vmax.f32 %v2389, %v2135
        %v2391 = vmax.f32 %v2390, %v2136
        %2392 = vmax.xlane.f32.xlu0 %v2391
        %v2393 = vpop.xlane.xlu0 %2392
        %v2394 = vmax.f32 %v2137, %v2138
        %v2395 = vmax.f32 %v2394, %v2139
        %v2396 = vmax.f32 %v2395, %v2140
        %2397 = vmax.xlane.f32.xlu0 %v2396
        %v2398 = vpop.xlane.xlu0 %2397
        %v2399 = vmax.f32 %v2141, %v2142
        %v2400 = vmax.f32 %v2399, %v2143
        %v2401 = vmax.f32 %v2400, %v2144
        %2402 = vmax.xlane.f32.xlu0 %v2401
        %v2403 = vpop.xlane.xlu0 %2402
        %v2404 = vmax.f32 %v2145, %v2146
        %v2405 = vmax.f32 %v2404, %v2147
        %v2406 = vmax.f32 %v2405, %v2148
        %2407 = vmax.xlane.f32.xlu0 %v2406
        %v2408 = vpop.xlane.xlu0 %2407
        %v2409 = vmax.f32 %v2149, %v2150
        %v2410 = vmax.f32 %v2409, %v2151
        %v2411 = vmax.f32 %v2410, %v2152
        %2412 = vmax.xlane.f32.xlu0 %v2411
        %v2413 = vpop.xlane.xlu0 %2412
        %v2414 = vmax.f32 %v2153, %v2154
        %v2415 = vmax.f32 %v2414, %v2155
        %v2416 = vmax.f32 %v2415, %v2156
        %2417 = vmax.xlane.f32.xlu0 %v2416
        %v2418 = vpop.xlane.xlu0 %2417
        %v2419 = vmax.f32 %v2157, %v2158
        %v2420 = vmax.f32 %v2419, %v2159
        %v2421 = vmax.f32 %v2420, %v2160
        %2422 = vmax.xlane.f32.xlu0 %v2421
        %v2423 = vpop.xlane.xlu0 %2422
        %v2424 = vmax.f32 %v2161, %v2162
        %v2425 = vmax.f32 %v2424, %v2163
        %v2426 = vmax.f32 %v2425, %v2164
        %2427 = vmax.xlane.f32.xlu0 %v2426
        %v2428 = vpop.xlane.xlu0 %2427
        %v2429 = vmax.f32 %v2165, %v2166
        %v2430 = vmax.f32 %v2429, %v2167
        %v2431 = vmax.f32 %v2430, %v2168
        %2432 = vmax.xlane.f32.xlu0 %v2431
        %v2433 = vpop.xlane.xlu0 %2432
        %v2434 = vmax.f32 %v2169, %v2170
        %v2435 = vmax.f32 %v2434, %v2171
        %v2436 = vmax.f32 %v2435, %v2172
        %2437 = vmax.xlane.f32.xlu0 %v2436
        %v2438 = vpop.xlane.xlu0 %2437
        %v2439 = vmax.f32 %v2173, %v2174
        %v2440 = vmax.f32 %v2439, %v2175
        %v2441 = vmax.f32 %v2440, %v2176
        %2442 = vmax.xlane.f32.xlu0 %v2441
        %v2443 = vpop.xlane.xlu0 %2442
        %v2444 = vmax.f32 %v2177, %v2178
        %v2445 = vmax.f32 %v2444, %v2179
        %v2446 = vmax.f32 %v2445, %v2180
        %2447 = vmax.xlane.f32.xlu0 %v2446
        %v2448 = vpop.xlane.xlu0 %2447
        %v2449 = vmax.f32 %v2181, %v2182
        %v2450 = vmax.f32 %v2449, %v2183
        %v2451 = vmax.f32 %v2450, %v2184
        %2452 = vmax.xlane.f32.xlu0 %v2451
        %v2453 = vpop.xlane.xlu0 %2452
        %v2454 = vmax.f32 %v2185, %v2186
        %v2455 = vmax.f32 %v2454, %v2187
        %v2456 = vmax.f32 %v2455, %v2188
        %2457 = vmax.xlane.f32.xlu0 %v2456
        %v2458 = vpop.xlane.xlu0 %2457
        %v2459 = vmax.f32 %v2189, %v2190
        %v2460 = vmax.f32 %v2459, %v2191
        %v2461 = vmax.f32 %v2460, %v2192
        %2462 = vmax.xlane.f32.xlu0 %v2461
        %v2463 = vpop.xlane.xlu0 %2462
        %v2464 = vmax.f32 %v2193, %v2194
        %v2465 = vmax.f32 %v2464, %v2195
        %v2466 = vmax.f32 %v2465, %v2196
        %2467 = vmax.xlane.f32.xlu0 %v2466
        %v2468 = vpop.xlane.xlu0 %2467
        %v2469 = vmax.f32 %v2197, %v2198
        %v2470 = vmax.f32 %v2469, %v2199
        %v2471 = vmax.f32 %v2470, %v2200
        %2472 = vmax.xlane.f32.xlu0 %v2471
        %v2473 = vpop.xlane.xlu0 %2472
        %v2474 = vmax.f32 %v2201, %v2202
        %v2475 = vmax.f32 %v2474, %v2203
        %v2476 = vmax.f32 %v2475, %v2204
        %2477 = vmax.xlane.f32.xlu0 %v2476
        %v2478 = vpop.xlane.xlu0 %2477
        %v2479 = vmax.f32 %v2205, %v2206
        %v2480 = vmax.f32 %v2479, %v2207
        %v2481 = vmax.f32 %v2480, %v2208
        %2482 = vmax.xlane.f32.xlu0 %v2481
        %v2483 = vpop.xlane.xlu0 %2482
        %v2484 = vmax.f32 %v2209, %v2210
        %v2485 = vmax.f32 %v2484, %v2211
        %v2486 = vmax.f32 %v2485, %v2212
        %2487 = vmax.xlane.f32.xlu0 %v2486
        %v2488 = vpop.xlane.xlu0 %2487
        %v2489 = vmax.f32 %v2213, %v2214
        %v2490 = vmax.f32 %v2489, %v2215
        %v2491 = vmax.f32 %v2490, %v2216
        %2492 = vmax.xlane.f32.xlu0 %v2491
        %v2493 = vpop.xlane.xlu0 %2492
        %v2494 = vmax.f32 %v2217, %v2218
        %v2495 = vmax.f32 %v2494, %v2219
        %v2496 = vmax.f32 %v2495, %v2220
        %2497 = vmax.xlane.f32.xlu0 %v2496
        %v2498 = vpop.xlane.xlu0 %2497
        %v2499 = vmax.f32 %v2221, %v2222
        %v2500 = vmax.f32 %v2499, %v2223
        %v2501 = vmax.f32 %v2500, %v2224
        %2502 = vmax.xlane.f32.xlu0 %v2501
        %v2503 = vpop.xlane.xlu0 %2502
        %v2504 = vmax.f32 %v2225, %v2226
        %v2505 = vmax.f32 %v2504, %v2227
        %v2506 = vmax.f32 %v2505, %v2228
        %2507 = vmax.xlane.f32.xlu0 %v2506
        %v2508 = vpop.xlane.xlu0 %2507
        %v2509 = vmax.f32 %v2229, %v2230
        %v2510 = vmax.f32 %v2509, %v2231
        %v2511 = vmax.f32 %v2510, %v2232
        %2512 = vmax.xlane.f32.xlu0 %v2511
        %v2513 = vpop.xlane.xlu0 %2512
        %v2514 = vmax.f32 %v2233, %v2234
        %v2515 = vmax.f32 %v2514, %v2235
        %v2516 = vmax.f32 %v2515, %v2236
        %2517 = vmax.xlane.f32.xlu0 %v2516
        %v2518 = vpop.xlane.xlu0 %2517
        %v2519 = vmax.f32 %v2237, %v2238
        %v2520 = vmax.f32 %v2519, %v2239
        %v2521 = vmax.f32 %v2520, %v2240
        %2522 = vmax.xlane.f32.xlu0 %v2521
        %v2523 = vpop.xlane.xlu0 %2522
        %v2524 = vmax.f32 %v2241, %v2242
        %v2525 = vmax.f32 %v2524, %v2243
        %v2526 = vmax.f32 %v2525, %v2244
        %2527 = vmax.xlane.f32.xlu0 %v2526
        %v2528 = vpop.xlane.xlu0 %2527
        %v2529 = vmax.f32 %v2245, %v2246
        %v2530 = vmax.f32 %v2529, %v2247
        %v2531 = vmax.f32 %v2530, %v2248
        %2532 = vmax.xlane.f32.xlu0 %v2531
        %v2533 = vpop.xlane.xlu0 %2532
        %v2534 = vmax.f32 %v2249, %v2250
        %v2535 = vmax.f32 %v2534, %v2251
        %v2536 = vmax.f32 %v2535, %v2252
        %2537 = vmax.xlane.f32.xlu0 %v2536
        %v2538 = vpop.xlane.xlu0 %2537
        %v2539 = vmax.f32 %v2253, %v2254
        %v2540 = vmax.f32 %v2539, %v2255
        %v2541 = vmax.f32 %v2540, %v2256
        %2542 = vmax.xlane.f32.xlu0 %v2541
        %v2543 = vpop.xlane.xlu0 %2542
        %v2544 = vmax.f32 %v2257, %v2258
        %v2545 = vmax.f32 %v2544, %v2259
        %v2546 = vmax.f32 %v2545, %v2260
        %2547 = vmax.xlane.f32.xlu0 %v2546
        %v2548 = vpop.xlane.xlu0 %2547
        %v2549 = vmax.f32 %v2261, %v2262
        %v2550 = vmax.f32 %v2549, %v2263
        %v2551 = vmax.f32 %v2550, %v2264
        %2552 = vmax.xlane.f32.xlu0 %v2551
        %v2553 = vpop.xlane.xlu0 %2552
        %v2554 = vmax.f32 %v2265, %v2266
        %v2555 = vmax.f32 %v2554, %v2267
        %v2556 = vmax.f32 %v2555, %v2268
        %2557 = vmax.xlane.f32.xlu0 %v2556
        %v2558 = vpop.xlane.xlu0 %2557
        %v2559 = vmax.f32 %v2269, %v2270
        %v2560 = vmax.f32 %v2559, %v2271
        %v2561 = vmax.f32 %v2560, %v2272
        %2562 = vmax.xlane.f32.xlu0 %v2561
        %v2563 = vpop.xlane.xlu0 %2562
        %v2564 = vmax.f32 %v2273, %v2274
        %v2565 = vmax.f32 %v2564, %v2275
        %v2566 = vmax.f32 %v2565, %v2276
        %2567 = vmax.xlane.f32.xlu0 %v2566
        %v2568 = vpop.xlane.xlu0 %2567
        %v2569 = vmax.f32 %v2277, %v2278
        %v2570 = vmax.f32 %v2569, %v2279
        %v2571 = vmax.f32 %v2570, %v2280
        %2572 = vmax.xlane.f32.xlu0 %v2571
        %v2573 = vpop.xlane.xlu0 %2572
        %v2574 = vmax.f32 %v2281, %v2282
        %v2575 = vmax.f32 %v2574, %v2283
        %v2576 = vmax.f32 %v2575, %v2284
        %2577 = vmax.xlane.f32.xlu0 %v2576
        %v2578 = vpop.xlane.xlu0 %2577
        %v2579 = vmax.f32 %v2285, %v2286
        %v2580 = vmax.f32 %v2579, %v2287
        %v2581 = vmax.f32 %v2580, %v2288
        %2582 = vmax.xlane.f32.xlu0 %v2581
        %v2583 = vpop.xlane.xlu0 %2582
        %v2584 = vmax.f32 %v2289, %v2290
        %v2585 = vmax.f32 %v2584, %v2291
        %v2586 = vmax.f32 %v2585, %v2292
        %2587 = vmax.xlane.f32.xlu0 %v2586
        %v2588 = vpop.xlane.xlu0 %2587
        %v2589 = vmax.f32 %v2293, %v2294
        %v2590 = vmax.f32 %v2589, %v2295
        %v2591 = vmax.f32 %v2590, %v2296
        %2592 = vmax.xlane.f32.xlu0 %v2591
        %v2593 = vpop.xlane.xlu0 %2592
        %v2594 = vmax.f32 %v2297, %v2298
        %v2595 = vmax.f32 %v2594, %v2299
        %v2596 = vmax.f32 %v2595, %v2300
        %2597 = vmax.xlane.f32.xlu0 %v2596
        %v2598 = vpop.xlane.xlu0 %2597
        %v2599 = vmax.f32 %v2301, %v2302
        %v2600 = vmax.f32 %v2599, %v2303
        %v2601 = vmax.f32 %v2600, %v2304
        %2602 = vmax.xlane.f32.xlu0 %v2601
        %v2603 = vpop.xlane.xlu0 %2602
        %v2604 = vmax.f32 %v2305, %v2306
        %v2605 = vmax.f32 %v2604, %v2307
        %v2606 = vmax.f32 %v2605, %v2308
        %2607 = vmax.xlane.f32.xlu0 %v2606
        %v2608 = vpop.xlane.xlu0 %2607
        %v2609 = vmax.f32 %v2309, %v2310
        %v2610 = vmax.f32 %v2609, %v2311
        %v2611 = vmax.f32 %v2610, %v2312
        %2612 = vmax.xlane.f32.xlu0 %v2611
        %v2613 = vpop.xlane.xlu0 %2612
        %v2614 = vmax.f32 %v2313, %v2314
        %v2615 = vmax.f32 %v2614, %v2315
        %v2616 = vmax.f32 %v2615, %v2316
        %2617 = vmax.xlane.f32.xlu0 %v2616
        %v2618 = vpop.xlane.xlu0 %2617
        %v2619 = vmax.f32 %v2317, %v2318
        %v2620 = vmax.f32 %v2619, %v2319
        %v2621 = vmax.f32 %v2620, %v2320
        %2622 = vmax.xlane.f32.xlu0 %v2621
        %v2623 = vpop.xlane.xlu0 %2622
        %v2624 = vmax.f32 %v2321, %v2322
        %v2625 = vmax.f32 %v2624, %v2323
        %v2626 = vmax.f32 %v2625, %v2324
        %2627 = vmax.xlane.f32.xlu0 %v2626
        %v2628 = vpop.xlane.xlu0 %2627
        %v2629 = vmax.f32 %v2325, %v2326
        %v2630 = vmax.f32 %v2629, %v2327
        %v2631 = vmax.f32 %v2630, %v2328
        %2632 = vmax.xlane.f32.xlu0 %v2631
        %v2633 = vpop.xlane.xlu0 %2632
        %v2634 = vmax.f32 %v2329, %v2330
        %v2635 = vmax.f32 %v2634, %v2331
        %v2636 = vmax.f32 %v2635, %v2332
        %2637 = vmax.xlane.f32.xlu0 %v2636
        %v2638 = vpop.xlane.xlu0 %2637
        %v2639 = vmax.f32 %v2333, %v2334
        %v2640 = vmax.f32 %v2639, %v2335
        %v2641 = vmax.f32 %v2640, %v2336
        %2642 = vmax.xlane.f32.xlu0 %v2641
        %v2643 = vpop.xlane.xlu0 %2642
        %v2644 = vmax.f32 %v2337, %v2338
        %v2645 = vmax.f32 %v2644, %v2339
        %v2646 = vmax.f32 %v2645, %v2340
        %2647 = vmax.xlane.f32.xlu0 %v2646
        %v2648 = vpop.xlane.xlu0 %2647
        %v2649 = vmax.f32 %v2341, %v2342
        %v2650 = vmax.f32 %v2649, %v2343
        %v2651 = vmax.f32 %v2650, %v2344
        %2652 = vmax.xlane.f32.xlu0 %v2651
        %v2653 = vpop.xlane.xlu0 %2652
        %v2654 = vmax.f32 %v2345, %v2346
        %v2655 = vmax.f32 %v2654, %v2347
        %v2656 = vmax.f32 %v2655, %v2348
        %2657 = vmax.xlane.f32.xlu0 %v2656
        %v2658 = vpop.xlane.xlu0 %2657
        %v2659 = vmax.f32 %v2349, %v2350
        %v2660 = vmax.f32 %v2659, %v2351
        %v2661 = vmax.f32 %v2660, %v2352
        %2662 = vmax.xlane.f32.xlu0 %v2661
        %v2663 = vpop.xlane.xlu0 %2662
        %v2664 = vmax.f32 %v2353, %v2354
        %v2665 = vmax.f32 %v2664, %v2355
        %v2666 = vmax.f32 %v2665, %v2356
        %2667 = vmax.xlane.f32.xlu0 %v2666
        %v2668 = vpop.xlane.xlu0 %2667
        %v2669 = vmax.f32 %v2357, %v2358
        %v2670 = vmax.f32 %v2669, %v2359
        %v2671 = vmax.f32 %v2670, %v2360
        %2672 = vmax.xlane.f32.xlu0 %v2671
        %v2673 = vpop.xlane.xlu0 %2672
        %v2674 = vmax.f32 %v2361, %v2362
        %v2675 = vmax.f32 %v2674, %v2363
        %v2676 = vmax.f32 %v2675, %v2364
        %2677 = vmax.xlane.f32.xlu0 %v2676
        %v2678 = vpop.xlane.xlu0 %2677
        %v2679 = vmax.f32 %v2365, %v2366
        %v2680 = vmax.f32 %v2679, %v2367
        %v2681 = vmax.f32 %v2680, %v2368
        %2682 = vmax.xlane.f32.xlu0 %v2681
        %v2683 = vpop.xlane.xlu0 %2682
        %v2684 = vmax.f32 %v2369, %v2370
        %v2685 = vmax.f32 %v2684, %v2371
        %v2686 = vmax.f32 %v2685, %v2372
        %2687 = vmax.xlane.f32.xlu0 %v2686
        %v2688 = vpop.xlane.xlu0 %2687
        %v2689 = vmax.f32 %v2373, %v2374
        %v2690 = vmax.f32 %v2689, %v2375
        %v2691 = vmax.f32 %v2690, %v2376
        %2692 = vmax.xlane.f32.xlu0 %v2691
        %v2693 = vpop.xlane.xlu0 %2692
        %v2694 = vmax.f32 %v2377, %v2378
        %v2695 = vmax.f32 %v2694, %v2379
        %v2696 = vmax.f32 %v2695, %v2380
        %2697 = vmax.xlane.f32.xlu0 %v2696
        %v2698 = vpop.xlane.xlu0 %2697
        %v2699 = vmax.f32 %v2381, %v2382
        %v2700 = vmax.f32 %v2699, %v2383
        %v2701 = vmax.f32 %v2700, %v2384
        %2702 = vmax.xlane.f32.xlu0 %v2701
        %v2703 = vpop.xlane.xlu0 %2702
        %v2704 = vmax.f32 %v2385, %v2386
        %v2705 = vmax.f32 %v2704, %v2387
        %v2706 = vmax.f32 %v2705, %v2388
        %2707 = vmax.xlane.f32.xlu0 %v2706
        %v2708 = vpop.xlane.xlu0 %2707
        %v2709 = vmax.f32 %v2133, %v2137
        %v2710 = vmax.f32 %v2709, %v2141
        %v2711 = vmax.f32 %v2710, %v2145
        %v2712 = vmax.f32 %v2711, %v2149
        %v2713 = vmax.f32 %v2712, %v2153
        %v2714 = vmax.f32 %v2713, %v2157
        %v2715 = vmax.f32 %v2714, %v2161
        %v2716 = vmax.f32 %v2715, %v2165
        %v2717 = vmax.f32 %v2716, %v2169
        %v2718 = vmax.f32 %v2717, %v2173
        %v2719 = vmax.f32 %v2718, %v2177
        %v2720 = vmax.f32 %v2719, %v2181
        %v2721 = vmax.f32 %v2720, %v2185
        %v2722 = vmax.f32 %v2721, %v2189
        %v2723 = vmax.f32 %v2722, %v2193
        %v2724 = vmax.f32 %v2723, %v2197
        %v2725 = vmax.f32 %v2724, %v2201
        %v2726 = vmax.f32 %v2725, %v2205
        %v2727 = vmax.f32 %v2726, %v2209
        %v2728 = vmax.f32 %v2727, %v2213
        %v2729 = vmax.f32 %v2728, %v2217
        %v2730 = vmax.f32 %v2729, %v2221
        %v2731 = vmax.f32 %v2730, %v2225
        %v2732 = vmax.f32 %v2731, %v2229
        %v2733 = vmax.f32 %v2732, %v2233
        %v2734 = vmax.f32 %v2733, %v2237
        %v2735 = vmax.f32 %v2734, %v2241
        %v2736 = vmax.f32 %v2735, %v2245
        %v2737 = vmax.f32 %v2736, %v2249
        %v2738 = vmax.f32 %v2737, %v2253
        %v2739 = vmax.f32 %v2738, %v2257
        %v2740 = vmax.f32 %v2739, %v2261
        %v2741 = vmax.f32 %v2740, %v2265
        %v2742 = vmax.f32 %v2741, %v2269
        %v2743 = vmax.f32 %v2742, %v2273
        %v2744 = vmax.f32 %v2743, %v2277
        %v2745 = vmax.f32 %v2744, %v2281
        %v2746 = vmax.f32 %v2745, %v2285
        %v2747 = vmax.f32 %v2746, %v2289
        %v2748 = vmax.f32 %v2747, %v2293
        %v2749 = vmax.f32 %v2748, %v2297
        %v2750 = vmax.f32 %v2749, %v2301
        %v2751 = vmax.f32 %v2750, %v2305
        %v2752 = vmax.f32 %v2751, %v2309
        %v2753 = vmax.f32 %v2752, %v2313
        %v2754 = vmax.f32 %v2753, %v2317
        %v2755 = vmax.f32 %v2754, %v2321
        %v2756 = vmax.f32 %v2755, %v2325
        %v2757 = vmax.f32 %v2756, %v2329
        %v2758 = vmax.f32 %v2757, %v2333
        %v2759 = vmax.f32 %v2758, %v2337
        %v2760 = vmax.f32 %v2759, %v2341
        %v2761 = vmax.f32 %v2760, %v2345
        %v2762 = vmax.f32 %v2761, %v2349
        %v2763 = vmax.f32 %v2762, %v2353
        %v2764 = vmax.f32 %v2763, %v2357
        %v2765 = vmax.f32 %v2764, %v2361
        %v2766 = vmax.f32 %v2765, %v2365
        %v2767 = vmax.f32 %v2766, %v2369
        %v2768 = vmax.f32 %v2767, %v2373
        %v2769 = vmax.f32 %v2768, %v2377
        %v2770 = vmax.f32 %v2769, %v2381
        %v2771 = vmax.f32 %v2770, %v2385
        %v2772 = vrot.slane %v2771, 4
        %v2773 = vmax.f32 %v2771, %v2772
        %v2774 = vrot.slane %v2773, 2
        %v2775 = vmax.f32 %v2773, %v2774
        %v2776 = vrot.slane %v2775, 1
        %v2777 = vmax.f32 %v2775, %v2776
        %v2778 = vmax.f32 %v2134, %v2138
        %v2779 = vmax.f32 %v2778, %v2142
        %v2780 = vmax.f32 %v2779, %v2146
        %v2781 = vmax.f32 %v2780, %v2150
        %v2782 = vmax.f32 %v2781, %v2154
        %v2783 = vmax.f32 %v2782, %v2158
        %v2784 = vmax.f32 %v2783, %v2162
        %v2785 = vmax.f32 %v2784, %v2166
        %v2786 = vmax.f32 %v2785, %v2170
        %v2787 = vmax.f32 %v2786, %v2174
        %v2788 = vmax.f32 %v2787, %v2178
        %v2789 = vmax.f32 %v2788, %v2182
        %v2790 = vmax.f32 %v2789, %v2186
        %v2791 = vmax.f32 %v2790, %v2190
        %v2792 = vmax.f32 %v2791, %v2194
        %v2793 = vmax.f32 %v2792, %v2198
        %v2794 = vmax.f32 %v2793, %v2202
        %v2795 = vmax.f32 %v2794, %v2206
        %v2796 = vmax.f32 %v2795, %v2210
        %v2797 = vmax.f32 %v2796, %v2214
        %v2798 = vmax.f32 %v2797, %v2218
        %v2799 = vmax.f32 %v2798, %v2222
        %v2800 = vmax.f32 %v2799, %v2226
        %v2801 = vmax.f32 %v2800, %v2230
        %v2802 = vmax.f32 %v2801, %v2234
        %v2803 = vmax.f32 %v2802, %v2238
        %v2804 = vmax.f32 %v2803, %v2242
        %v2805 = vmax.f32 %v2804, %v2246
        %v2806 = vmax.f32 %v2805, %v2250
        %v2807 = vmax.f32 %v2806, %v2254
        %v2808 = vmax.f32 %v2807, %v2258
        %v2809 = vmax.f32 %v2808, %v2262
        %v2810 = vmax.f32 %v2809, %v2266
        %v2811 = vmax.f32 %v2810, %v2270
        %v2812 = vmax.f32 %v2811, %v2274
        %v2813 = vmax.f32 %v2812, %v2278
        %v2814 = vmax.f32 %v2813, %v2282
        %v2815 = vmax.f32 %v2814, %v2286
        %v2816 = vmax.f32 %v2815, %v2290
        %v2817 = vmax.f32 %v2816, %v2294
        %v2818 = vmax.f32 %v2817, %v2298
        %v2819 = vmax.f32 %v2818, %v2302
        %v2820 = vmax.f32 %v2819, %v2306
        %v2821 = vmax.f32 %v2820, %v2310
        %v2822 = vmax.f32 %v2821, %v2314
        %v2823 = vmax.f32 %v2822, %v2318
        %v2824 = vmax.f32 %v2823, %v2322
        %v2825 = vmax.f32 %v2824, %v2326
        %v2826 = vmax.f32 %v2825, %v2330
        %v2827 = vmax.f32 %v2826, %v2334
        %v2828 = vmax.f32 %v2827, %v2338
        %v2829 = vmax.f32 %v2828, %v2342
        %v2830 = vmax.f32 %v2829, %v2346
        %v2831 = vmax.f32 %v2830, %v2350
        %v2832 = vmax.f32 %v2831, %v2354
        %v2833 = vmax.f32 %v2832, %v2358
        %v2834 = vmax.f32 %v2833, %v2362
        %v2835 = vmax.f32 %v2834, %v2366
        %v2836 = vmax.f32 %v2835, %v2370
        %v2837 = vmax.f32 %v2836, %v2374
        %v2838 = vmax.f32 %v2837, %v2378
        %v2839 = vmax.f32 %v2838, %v2382
        %v2840 = vmax.f32 %v2839, %v2386
        %v2841 = vrot.slane %v2840, 4
        %v2842 = vmax.f32 %v2840, %v2841
        %v2843 = vrot.slane %v2842, 2
        %v2844 = vmax.f32 %v2842, %v2843
        %v2845 = vrot.slane %v2844, 1
        %v2846 = vmax.f32 %v2844, %v2845
        %v2847 = vmax.f32 %v2135, %v2139
        %v2848 = vmax.f32 %v2847, %v2143
        %v2849 = vmax.f32 %v2848, %v2147
        %v2850 = vmax.f32 %v2849, %v2151
        %v2851 = vmax.f32 %v2850, %v2155
        %v2852 = vmax.f32 %v2851, %v2159
        %v2853 = vmax.f32 %v2852, %v2163
        %v2854 = vmax.f32 %v2853, %v2167
        %v2855 = vmax.f32 %v2854, %v2171
        %v2856 = vmax.f32 %v2855, %v2175
        %v2857 = vmax.f32 %v2856, %v2179
        %v2858 = vmax.f32 %v2857, %v2183
        %v2859 = vmax.f32 %v2858, %v2187
        %v2860 = vmax.f32 %v2859, %v2191
        %v2861 = vmax.f32 %v2860, %v2195
        %v2862 = vmax.f32 %v2861, %v2199
        %v2863 = vmax.f32 %v2862, %v2203
        %v2864 = vmax.f32 %v2863, %v2207
        %v2865 = vmax.f32 %v2864, %v2211
        %v2866 = vmax.f32 %v2865, %v2215
        %v2867 = vmax.f32 %v2866, %v2219
        %v2868 = vmax.f32 %v2867, %v2223
        %v2869 = vmax.f32 %v2868, %v2227
        %v2870 = vmax.f32 %v2869, %v2231
        %v2871 = vmax.f32 %v2870, %v2235
        %v2872 = vmax.f32 %v2871, %v2239
        %v2873 = vmax.f32 %v2872, %v2243
        %v2874 = vmax.f32 %v2873, %v2247
        %v2875 = vmax.f32 %v2874, %v2251
        %v2876 = vmax.f32 %v2875, %v2255
        %v2877 = vmax.f32 %v2876, %v2259
        %v2878 = vmax.f32 %v2877, %v2263
        %v2879 = vmax.f32 %v2878, %v2267
        %v2880 = vmax.f32 %v2879, %v2271
        %v2881 = vmax.f32 %v2880, %v2275
        %v2882 = vmax.f32 %v2881, %v2279
        %v2883 = vmax.f32 %v2882, %v2283
        %v2884 = vmax.f32 %v2883, %v2287
        %v2885 = vmax.f32 %v2884, %v2291
        %v2886 = vmax.f32 %v2885, %v2295
        %v2887 = vmax.f32 %v2886, %v2299
        %v2888 = vmax.f32 %v2887, %v2303
        %v2889 = vmax.f32 %v2888, %v2307
        %v2890 = vmax.f32 %v2889, %v2311
        %v2891 = vmax.f32 %v2890, %v2315
        %v2892 = vmax.f32 %v2891, %v2319
        %v2893 = vmax.f32 %v2892, %v2323
        %v2894 = vmax.f32 %v2893, %v2327
        %v2895 = vmax.f32 %v2894, %v2331
        %v2896 = vmax.f32 %v2895, %v2335
        %v2897 = vmax.f32 %v2896, %v2339
        %v2898 = vmax.f32 %v2897, %v2343
        %v2899 = vmax.f32 %v2898, %v2347
        %v2900 = vmax.f32 %v2899, %v2351
        %v2901 = vmax.f32 %v2900, %v2355
        %v2902 = vmax.f32 %v2901, %v2359
        %v2903 = vmax.f32 %v2902, %v2363
        %v2904 = vmax.f32 %v2903, %v2367
        %v2905 = vmax.f32 %v2904, %v2371
        %v2906 = vmax.f32 %v2905, %v2375
        %v2907 = vmax.f32 %v2906, %v2379
        %v2908 = vmax.f32 %v2907, %v2383
        %v2909 = vmax.f32 %v2908, %v2387
        %v2910 = vrot.slane %v2909, 4
        %v2911 = vmax.f32 %v2909, %v2910
        %v2912 = vrot.slane %v2911, 2
        %v2913 = vmax.f32 %v2911, %v2912
        %v2914 = vrot.slane %v2913, 1
        %v2915 = vmax.f32 %v2913, %v2914
        %v2916 = vmax.f32 %v2136, %v2140
        %v2917 = vmax.f32 %v2916, %v2144
        %v2918 = vmax.f32 %v2917, %v2148
        %v2919 = vmax.f32 %v2918, %v2152
        %v2920 = vmax.f32 %v2919, %v2156
        %v2921 = vmax.f32 %v2920, %v2160
        %v2922 = vmax.f32 %v2921, %v2164
        %v2923 = vmax.f32 %v2922, %v2168
        %v2924 = vmax.f32 %v2923, %v2172
        %v2925 = vmax.f32 %v2924, %v2176
        %v2926 = vmax.f32 %v2925, %v2180
        %v2927 = vmax.f32 %v2926, %v2184
        %v2928 = vmax.f32 %v2927, %v2188
        %v2929 = vmax.f32 %v2928, %v2192
        %v2930 = vmax.f32 %v2929, %v2196
        %v2931 = vmax.f32 %v2930, %v2200
        %v2932 = vmax.f32 %v2931, %v2204
        %v2933 = vmax.f32 %v2932, %v2208
        %v2934 = vmax.f32 %v2933, %v2212
        %v2935 = vmax.f32 %v2934, %v2216
        %v2936 = vmax.f32 %v2935, %v2220
        %v2937 = vmax.f32 %v2936, %v2224
        %v2938 = vmax.f32 %v2937, %v2228
        %v2939 = vmax.f32 %v2938, %v2232
        %v2940 = vmax.f32 %v2939, %v2236
        %v2941 = vmax.f32 %v2940, %v2240
        %v2942 = vmax.f32 %v2941, %v2244
        %v2943 = vmax.f32 %v2942, %v2248
        %v2944 = vmax.f32 %v2943, %v2252
        %v2945 = vmax.f32 %v2944, %v2256
        %v2946 = vmax.f32 %v2945, %v2260
        %v2947 = vmax.f32 %v2946, %v2264
        %v2948 = vmax.f32 %v2947, %v2268
        %v2949 = vmax.f32 %v2948, %v2272
        %v2950 = vmax.f32 %v2949, %v2276
        %v2951 = vmax.f32 %v2950, %v2280
        %v2952 = vmax.f32 %v2951, %v2284
        %v2953 = vmax.f32 %v2952, %v2288
        %v2954 = vmax.f32 %v2953, %v2292
        %v2955 = vmax.f32 %v2954, %v2296
        %v2956 = vmax.f32 %v2955, %v2300
        %v2957 = vmax.f32 %v2956, %v2304
        %v2958 = vmax.f32 %v2957, %v2308
        %v2959 = vmax.f32 %v2958, %v2312
        %v2960 = vmax.f32 %v2959, %v2316
        %v2961 = vmax.f32 %v2960, %v2320
        %v2962 = vmax.f32 %v2961, %v2324
        %v2963 = vmax.f32 %v2962, %v2328
        %v2964 = vmax.f32 %v2963, %v2332
        %v2965 = vmax.f32 %v2964, %v2336
        %v2966 = vmax.f32 %v2965, %v2340
        %v2967 = vmax.f32 %v2966, %v2344
        %v2968 = vmax.f32 %v2967, %v2348
        %v2969 = vmax.f32 %v2968, %v2352
        %v2970 = vmax.f32 %v2969, %v2356
        %v2971 = vmax.f32 %v2970, %v2360
        %v2972 = vmax.f32 %v2971, %v2364
        %v2973 = vmax.f32 %v2972, %v2368
        %v2974 = vmax.f32 %v2973, %v2372
        %v2975 = vmax.f32 %v2974, %v2376
        %v2976 = vmax.f32 %v2975, %v2380
        %v2977 = vmax.f32 %v2976, %v2384
        %v2978 = vmax.f32 %v2977, %v2388
        %v2979 = vrot.slane %v2978, 4
        %v2980 = vmax.f32 %v2978, %v2979
        %v2981 = vrot.slane %v2980, 2
        %v2982 = vmax.f32 %v2980, %v2981
        %v2983 = vrot.slane %v2982, 1
        %v2984 = vmax.f32 %v2982, %v2983
        %s2985 = sshra.s32 %s304, 1
        %s2986 = sand.u32 %s304, 1
        %s2987 = sshra.s32 %s304, 1
        %s2988 = sand.u32 %s304, 1
        %s2989 = smul.u32 %s2985, 4
        %s2990 = smul.u32 %s2989, 2
        %s2991 = sadd.s32 %s2990, %s2988
        %s2992 = scalar_lea.vmem %s5, %s2991
        %v2993 = vld [vmem:[%s2992] ss:$2 sm:$0xf]
        %v3058 = vlaneseq
        %v3059 = vshrl.u32 %v3058, 7
        %v3060 = vsub.s32 0, %v3059
        %v3061 = vrot.slane %v2393, %v3060
        %v3062 = vlaneseq
        %v3063 = vshrl.u32 %v3062, 7
        %v3064 = vsub.s32 1, %v3063
        %v3065 = vrot.slane %v2393, %v3064
        %v3066 = vlaneseq
        %v3067 = vshrl.u32 %v3066, 7
        %v3068 = vsub.s32 2, %v3067
        %v3069 = vrot.slane %v2393, %v3068
        %v3070 = vlaneseq
        %v3071 = vshrl.u32 %v3070, 7
        %v3072 = vsub.s32 3, %v3071
        %v3073 = vrot.slane %v2393, %v3072
        %v3074 = vlaneseq
        %v3075 = vshrl.u32 %v3074, 7
        %v3076 = vsub.s32 4, %v3075
        %v3077 = vrot.slane %v2393, %v3076
        %v3078 = vlaneseq
        %v3079 = vshrl.u32 %v3078, 7
        %v3080 = vsub.s32 5, %v3079
        %v3081 = vrot.slane %v2393, %v3080
        %v3082 = vlaneseq
        %v3083 = vshrl.u32 %v3082, 7
        %v3084 = vsub.s32 6, %v3083
        %v3085 = vrot.slane %v2393, %v3084
        %v3086 = vlaneseq
        %v3087 = vshrl.u32 %v3086, 7
        %v3088 = vsub.s32 7, %v3087
        %v3089 = vrot.slane %v2393, %v3088
        %v3090 = vlaneseq
        %v3091 = vshrl.u32 %v3090, 7
        %v3092 = vsub.s32 0, %v3091
        %v3093 = vrot.slane %v2398, %v3092
        %v3094 = vlaneseq
        %v3095 = vshrl.u32 %v3094, 7
        %v3096 = vsub.s32 1, %v3095
        %v3097 = vrot.slane %v2398, %v3096
        %v3098 = vlaneseq
        %v3099 = vshrl.u32 %v3098, 7
        %v3100 = vsub.s32 2, %v3099
        %v3101 = vrot.slane %v2398, %v3100
        %v3102 = vlaneseq
        %v3103 = vshrl.u32 %v3102, 7
        %v3104 = vsub.s32 3, %v3103
        %v3105 = vrot.slane %v2398, %v3104
        %v3106 = vlaneseq
        %v3107 = vshrl.u32 %v3106, 7
        %v3108 = vsub.s32 4, %v3107
        %v3109 = vrot.slane %v2398, %v3108
        %v3110 = vlaneseq
        %v3111 = vshrl.u32 %v3110, 7
        %v3112 = vsub.s32 5, %v3111
        %v3113 = vrot.slane %v2398, %v3112
        %v3114 = vlaneseq
        %v3115 = vshrl.u32 %v3114, 7
        %v3116 = vsub.s32 6, %v3115
        %v3117 = vrot.slane %v2398, %v3116
        %v3118 = vlaneseq
        %v3119 = vshrl.u32 %v3118, 7
        %v3120 = vsub.s32 7, %v3119
        %v3121 = vrot.slane %v2398, %v3120
        %v3122 = vlaneseq
        %v3123 = vshrl.u32 %v3122, 7
        %v3124 = vsub.s32 0, %v3123
        %v3125 = vrot.slane %v2403, %v3124
        %v3126 = vlaneseq
        %v3127 = vshrl.u32 %v3126, 7
        %v3128 = vsub.s32 1, %v3127
        %v3129 = vrot.slane %v2403, %v3128
        %v3130 = vlaneseq
        %v3131 = vshrl.u32 %v3130, 7
        %v3132 = vsub.s32 2, %v3131
        %v3133 = vrot.slane %v2403, %v3132
        %v3134 = vlaneseq
        %v3135 = vshrl.u32 %v3134, 7
        %v3136 = vsub.s32 3, %v3135
        %v3137 = vrot.slane %v2403, %v3136
        %v3138 = vlaneseq
        %v3139 = vshrl.u32 %v3138, 7
        %v3140 = vsub.s32 4, %v3139
        %v3141 = vrot.slane %v2403, %v3140
        %v3142 = vlaneseq
        %v3143 = vshrl.u32 %v3142, 7
        %v3144 = vsub.s32 5, %v3143
        %v3145 = vrot.slane %v2403, %v3144
        %v3146 = vlaneseq
        %v3147 = vshrl.u32 %v3146, 7
        %v3148 = vsub.s32 6, %v3147
        %v3149 = vrot.slane %v2403, %v3148
        %v3150 = vlaneseq
        %v3151 = vshrl.u32 %v3150, 7
        %v3152 = vsub.s32 7, %v3151
        %v3153 = vrot.slane %v2403, %v3152
        %v3154 = vlaneseq
        %v3155 = vshrl.u32 %v3154, 7
        %v3156 = vsub.s32 0, %v3155
        %v3157 = vrot.slane %v2408, %v3156
        %v3158 = vlaneseq
        %v3159 = vshrl.u32 %v3158, 7
        %v3160 = vsub.s32 1, %v3159
        %v3161 = vrot.slane %v2408, %v3160
        %v3162 = vlaneseq
        %v3163 = vshrl.u32 %v3162, 7
        %v3164 = vsub.s32 2, %v3163
        %v3165 = vrot.slane %v2408, %v3164
        %v3166 = vlaneseq
        %v3167 = vshrl.u32 %v3166, 7
        %v3168 = vsub.s32 3, %v3167
        %v3169 = vrot.slane %v2408, %v3168
        %v3170 = vlaneseq
        %v3171 = vshrl.u32 %v3170, 7
        %v3172 = vsub.s32 4, %v3171
        %v3173 = vrot.slane %v2408, %v3172
        %v3174 = vlaneseq
        %v3175 = vshrl.u32 %v3174, 7
        %v3176 = vsub.s32 5, %v3175
        %v3177 = vrot.slane %v2408, %v3176
        %v3178 = vlaneseq
        %v3179 = vshrl.u32 %v3178, 7
        %v3180 = vsub.s32 6, %v3179
        %v3181 = vrot.slane %v2408, %v3180
        %v3182 = vlaneseq
        %v3183 = vshrl.u32 %v3182, 7
        %v3184 = vsub.s32 7, %v3183
        %v3185 = vrot.slane %v2408, %v3184
        %v3186 = vlaneseq
        %v3187 = vshrl.u32 %v3186, 7
        %v3188 = vsub.s32 0, %v3187
        %v3189 = vrot.slane %v2413, %v3188
        %v3190 = vlaneseq
        %v3191 = vshrl.u32 %v3190, 7
        %v3192 = vsub.s32 1, %v3191
        %v3193 = vrot.slane %v2413, %v3192
        %v3194 = vlaneseq
        %v3195 = vshrl.u32 %v3194, 7
        %v3196 = vsub.s32 2, %v3195
        %v3197 = vrot.slane %v2413, %v3196
        %v3198 = vlaneseq
        %v3199 = vshrl.u32 %v3198, 7
        %v3200 = vsub.s32 3, %v3199
        %v3201 = vrot.slane %v2413, %v3200
        %v3202 = vlaneseq
        %v3203 = vshrl.u32 %v3202, 7
        %v3204 = vsub.s32 4, %v3203
        %v3205 = vrot.slane %v2413, %v3204
        %v3206 = vlaneseq
        %v3207 = vshrl.u32 %v3206, 7
        %v3208 = vsub.s32 5, %v3207
        %v3209 = vrot.slane %v2413, %v3208
        %v3210 = vlaneseq
        %v3211 = vshrl.u32 %v3210, 7
        %v3212 = vsub.s32 6, %v3211
        %v3213 = vrot.slane %v2413, %v3212
        %v3214 = vlaneseq
        %v3215 = vshrl.u32 %v3214, 7
        %v3216 = vsub.s32 7, %v3215
        %v3217 = vrot.slane %v2413, %v3216
        %v3218 = vlaneseq
        %v3219 = vshrl.u32 %v3218, 7
        %v3220 = vsub.s32 0, %v3219
        %v3221 = vrot.slane %v2418, %v3220
        %v3222 = vlaneseq
        %v3223 = vshrl.u32 %v3222, 7
        %v3224 = vsub.s32 1, %v3223
        %v3225 = vrot.slane %v2418, %v3224
        %v3226 = vlaneseq
        %v3227 = vshrl.u32 %v3226, 7
        %v3228 = vsub.s32 2, %v3227
        %v3229 = vrot.slane %v2418, %v3228
        %v3230 = vlaneseq
        %v3231 = vshrl.u32 %v3230, 7
        %v3232 = vsub.s32 3, %v3231
        %v3233 = vrot.slane %v2418, %v3232
        %v3234 = vlaneseq
        %v3235 = vshrl.u32 %v3234, 7
        %v3236 = vsub.s32 4, %v3235
        %v3237 = vrot.slane %v2418, %v3236
        %v3238 = vlaneseq
        %v3239 = vshrl.u32 %v3238, 7
        %v3240 = vsub.s32 5, %v3239
        %v3241 = vrot.slane %v2418, %v3240
        %v3242 = vlaneseq
        %v3243 = vshrl.u32 %v3242, 7
        %v3244 = vsub.s32 6, %v3243
        %v3245 = vrot.slane %v2418, %v3244
        %v3246 = vlaneseq
        %v3247 = vshrl.u32 %v3246, 7
        %v3248 = vsub.s32 7, %v3247
        %v3249 = vrot.slane %v2418, %v3248
        %v3250 = vlaneseq
        %v3251 = vshrl.u32 %v3250, 7
        %v3252 = vsub.s32 0, %v3251
        %v3253 = vrot.slane %v2423, %v3252
        %v3254 = vlaneseq
        %v3255 = vshrl.u32 %v3254, 7
        %v3256 = vsub.s32 1, %v3255
        %v3257 = vrot.slane %v2423, %v3256
        %v3258 = vlaneseq
        %v3259 = vshrl.u32 %v3258, 7
        %v3260 = vsub.s32 2, %v3259
        %v3261 = vrot.slane %v2423, %v3260
        %v3262 = vlaneseq
        %v3263 = vshrl.u32 %v3262, 7
        %v3264 = vsub.s32 3, %v3263
        %v3265 = vrot.slane %v2423, %v3264
        %v3266 = vlaneseq
        %v3267 = vshrl.u32 %v3266, 7
        %v3268 = vsub.s32 4, %v3267
        %v3269 = vrot.slane %v2423, %v3268
        %v3270 = vlaneseq
        %v3271 = vshrl.u32 %v3270, 7
        %v3272 = vsub.s32 5, %v3271
        %v3273 = vrot.slane %v2423, %v3272
        %v3274 = vlaneseq
        %v3275 = vshrl.u32 %v3274, 7
        %v3276 = vsub.s32 6, %v3275
        %v3277 = vrot.slane %v2423, %v3276
        %v3278 = vlaneseq
        %v3279 = vshrl.u32 %v3278, 7
        %v3280 = vsub.s32 7, %v3279
        %v3281 = vrot.slane %v2423, %v3280
        %v3282 = vlaneseq
        %v3283 = vshrl.u32 %v3282, 7
        %v3284 = vsub.s32 0, %v3283
        %v3285 = vrot.slane %v2428, %v3284
        %v3286 = vlaneseq
        %v3287 = vshrl.u32 %v3286, 7
        %v3288 = vsub.s32 1, %v3287
        %v3289 = vrot.slane %v2428, %v3288
        %v3290 = vlaneseq
        %v3291 = vshrl.u32 %v3290, 7
        %v3292 = vsub.s32 2, %v3291
        %v3293 = vrot.slane %v2428, %v3292
        %v3294 = vlaneseq
        %v3295 = vshrl.u32 %v3294, 7
        %v3296 = vsub.s32 3, %v3295
        %v3297 = vrot.slane %v2428, %v3296
        %v3298 = vlaneseq
        %v3299 = vshrl.u32 %v3298, 7
        %v3300 = vsub.s32 4, %v3299
        %v3301 = vrot.slane %v2428, %v3300
        %v3302 = vlaneseq
        %v3303 = vshrl.u32 %v3302, 7
        %v3304 = vsub.s32 5, %v3303
        %v3305 = vrot.slane %v2428, %v3304
        %v3306 = vlaneseq
        %v3307 = vshrl.u32 %v3306, 7
        %v3308 = vsub.s32 6, %v3307
        %v3309 = vrot.slane %v2428, %v3308
        %v3310 = vlaneseq
        %v3311 = vshrl.u32 %v3310, 7
        %v3312 = vsub.s32 7, %v3311
        %v3313 = vrot.slane %v2428, %v3312
        %v3314 = vlaneseq
        %v3315 = vshrl.u32 %v3314, 7
        %v3316 = vsub.s32 0, %v3315
        %v3317 = vrot.slane %v2433, %v3316
        %v3318 = vlaneseq
        %v3319 = vshrl.u32 %v3318, 7
        %v3320 = vsub.s32 1, %v3319
        %v3321 = vrot.slane %v2433, %v3320
        %v3322 = vlaneseq
        %v3323 = vshrl.u32 %v3322, 7
        %v3324 = vsub.s32 2, %v3323
        %v3325 = vrot.slane %v2433, %v3324
        %v3326 = vlaneseq
        %v3327 = vshrl.u32 %v3326, 7
        %v3328 = vsub.s32 3, %v3327
        %v3329 = vrot.slane %v2433, %v3328
        %v3330 = vlaneseq
        %v3331 = vshrl.u32 %v3330, 7
        %v3332 = vsub.s32 4, %v3331
        %v3333 = vrot.slane %v2433, %v3332
        %v3334 = vlaneseq
        %v3335 = vshrl.u32 %v3334, 7
        %v3336 = vsub.s32 5, %v3335
        %v3337 = vrot.slane %v2433, %v3336
        %v3338 = vlaneseq
        %v3339 = vshrl.u32 %v3338, 7
        %v3340 = vsub.s32 6, %v3339
        %v3341 = vrot.slane %v2433, %v3340
        %v3342 = vlaneseq
        %v3343 = vshrl.u32 %v3342, 7
        %v3344 = vsub.s32 7, %v3343
        %v3345 = vrot.slane %v2433, %v3344
        %v3346 = vlaneseq
        %v3347 = vshrl.u32 %v3346, 7
        %v3348 = vsub.s32 0, %v3347
        %v3349 = vrot.slane %v2438, %v3348
        %v3350 = vlaneseq
        %v3351 = vshrl.u32 %v3350, 7
        %v3352 = vsub.s32 1, %v3351
        %v3353 = vrot.slane %v2438, %v3352
        %v3354 = vlaneseq
        %v3355 = vshrl.u32 %v3354, 7
        %v3356 = vsub.s32 2, %v3355
        %v3357 = vrot.slane %v2438, %v3356
        %v3358 = vlaneseq
        %v3359 = vshrl.u32 %v3358, 7
        %v3360 = vsub.s32 3, %v3359
        %v3361 = vrot.slane %v2438, %v3360
        %v3362 = vlaneseq
        %v3363 = vshrl.u32 %v3362, 7
        %v3364 = vsub.s32 4, %v3363
        %v3365 = vrot.slane %v2438, %v3364
        %v3366 = vlaneseq
        %v3367 = vshrl.u32 %v3366, 7
        %v3368 = vsub.s32 5, %v3367
        %v3369 = vrot.slane %v2438, %v3368
        %v3370 = vlaneseq
        %v3371 = vshrl.u32 %v3370, 7
        %v3372 = vsub.s32 6, %v3371
        %v3373 = vrot.slane %v2438, %v3372
        %v3374 = vlaneseq
        %v3375 = vshrl.u32 %v3374, 7
        %v3376 = vsub.s32 7, %v3375
        %v3377 = vrot.slane %v2438, %v3376
        %v3378 = vlaneseq
        %v3379 = vshrl.u32 %v3378, 7
        %v3380 = vsub.s32 0, %v3379
        %v3381 = vrot.slane %v2443, %v3380
        %v3382 = vlaneseq
        %v3383 = vshrl.u32 %v3382, 7
        %v3384 = vsub.s32 1, %v3383
        %v3385 = vrot.slane %v2443, %v3384
        %v3386 = vlaneseq
        %v3387 = vshrl.u32 %v3386, 7
        %v3388 = vsub.s32 2, %v3387
        %v3389 = vrot.slane %v2443, %v3388
        %v3390 = vlaneseq
        %v3391 = vshrl.u32 %v3390, 7
        %v3392 = vsub.s32 3, %v3391
        %v3393 = vrot.slane %v2443, %v3392
        %v3394 = vlaneseq
        %v3395 = vshrl.u32 %v3394, 7
        %v3396 = vsub.s32 4, %v3395
        %v3397 = vrot.slane %v2443, %v3396
        %v3398 = vlaneseq
        %v3399 = vshrl.u32 %v3398, 7
        %v3400 = vsub.s32 5, %v3399
        %v3401 = vrot.slane %v2443, %v3400
        %v3402 = vlaneseq
        %v3403 = vshrl.u32 %v3402, 7
        %v3404 = vsub.s32 6, %v3403
        %v3405 = vrot.slane %v2443, %v3404
        %v3406 = vlaneseq
        %v3407 = vshrl.u32 %v3406, 7
        %v3408 = vsub.s32 7, %v3407
        %v3409 = vrot.slane %v2443, %v3408
        %v3410 = vlaneseq
        %v3411 = vshrl.u32 %v3410, 7
        %v3412 = vsub.s32 0, %v3411
        %v3413 = vrot.slane %v2448, %v3412
        %v3414 = vlaneseq
        %v3415 = vshrl.u32 %v3414, 7
        %v3416 = vsub.s32 1, %v3415
        %v3417 = vrot.slane %v2448, %v3416
        %v3418 = vlaneseq
        %v3419 = vshrl.u32 %v3418, 7
        %v3420 = vsub.s32 2, %v3419
        %v3421 = vrot.slane %v2448, %v3420
        %v3422 = vlaneseq
        %v3423 = vshrl.u32 %v3422, 7
        %v3424 = vsub.s32 3, %v3423
        %v3425 = vrot.slane %v2448, %v3424
        %v3426 = vlaneseq
        %v3427 = vshrl.u32 %v3426, 7
        %v3428 = vsub.s32 4, %v3427
        %v3429 = vrot.slane %v2448, %v3428
        %v3430 = vlaneseq
        %v3431 = vshrl.u32 %v3430, 7
        %v3432 = vsub.s32 5, %v3431
        %v3433 = vrot.slane %v2448, %v3432
        %v3434 = vlaneseq
        %v3435 = vshrl.u32 %v3434, 7
        %v3436 = vsub.s32 6, %v3435
        %v3437 = vrot.slane %v2448, %v3436
        %v3438 = vlaneseq
        %v3439 = vshrl.u32 %v3438, 7
        %v3440 = vsub.s32 7, %v3439
        %v3441 = vrot.slane %v2448, %v3440
        %v3442 = vlaneseq
        %v3443 = vshrl.u32 %v3442, 7
        %v3444 = vsub.s32 0, %v3443
        %v3445 = vrot.slane %v2453, %v3444
        %v3446 = vlaneseq
        %v3447 = vshrl.u32 %v3446, 7
        %v3448 = vsub.s32 1, %v3447
        %v3449 = vrot.slane %v2453, %v3448
        %v3450 = vlaneseq
        %v3451 = vshrl.u32 %v3450, 7
        %v3452 = vsub.s32 2, %v3451
        %v3453 = vrot.slane %v2453, %v3452
        %v3454 = vlaneseq
        %v3455 = vshrl.u32 %v3454, 7
        %v3456 = vsub.s32 3, %v3455
        %v3457 = vrot.slane %v2453, %v3456
        %v3458 = vlaneseq
        %v3459 = vshrl.u32 %v3458, 7
        %v3460 = vsub.s32 4, %v3459
        %v3461 = vrot.slane %v2453, %v3460
        %v3462 = vlaneseq
        %v3463 = vshrl.u32 %v3462, 7
        %v3464 = vsub.s32 5, %v3463
        %v3465 = vrot.slane %v2453, %v3464
        %v3466 = vlaneseq
        %v3467 = vshrl.u32 %v3466, 7
        %v3468 = vsub.s32 6, %v3467
        %v3469 = vrot.slane %v2453, %v3468
        %v3470 = vlaneseq
        %v3471 = vshrl.u32 %v3470, 7
        %v3472 = vsub.s32 7, %v3471
        %v3473 = vrot.slane %v2453, %v3472
        %v3474 = vlaneseq
        %v3475 = vshrl.u32 %v3474, 7
        %v3476 = vsub.s32 0, %v3475
        %v3477 = vrot.slane %v2458, %v3476
        %v3478 = vlaneseq
        %v3479 = vshrl.u32 %v3478, 7
        %v3480 = vsub.s32 1, %v3479
        %v3481 = vrot.slane %v2458, %v3480
        %v3482 = vlaneseq
        %v3483 = vshrl.u32 %v3482, 7
        %v3484 = vsub.s32 2, %v3483
        %v3485 = vrot.slane %v2458, %v3484
        %v3486 = vlaneseq
        %v3487 = vshrl.u32 %v3486, 7
        %v3488 = vsub.s32 3, %v3487
        %v3489 = vrot.slane %v2458, %v3488
        %v3490 = vlaneseq
        %v3491 = vshrl.u32 %v3490, 7
        %v3492 = vsub.s32 4, %v3491
        %v3493 = vrot.slane %v2458, %v3492
        %v3494 = vlaneseq
        %v3495 = vshrl.u32 %v3494, 7
        %v3496 = vsub.s32 5, %v3495
        %v3497 = vrot.slane %v2458, %v3496
        %v3498 = vlaneseq
        %v3499 = vshrl.u32 %v3498, 7
        %v3500 = vsub.s32 6, %v3499
        %v3501 = vrot.slane %v2458, %v3500
        %v3502 = vlaneseq
        %v3503 = vshrl.u32 %v3502, 7
        %v3504 = vsub.s32 7, %v3503
        %v3505 = vrot.slane %v2458, %v3504
        %v3506 = vlaneseq
        %v3507 = vshrl.u32 %v3506, 7
        %v3508 = vsub.s32 0, %v3507
        %v3509 = vrot.slane %v2463, %v3508
        %v3510 = vlaneseq
        %v3511 = vshrl.u32 %v3510, 7
        %v3512 = vsub.s32 1, %v3511
        %v3513 = vrot.slane %v2463, %v3512
        %v3514 = vlaneseq
        %v3515 = vshrl.u32 %v3514, 7
        %v3516 = vsub.s32 2, %v3515
        %v3517 = vrot.slane %v2463, %v3516
        %v3518 = vlaneseq
        %v3519 = vshrl.u32 %v3518, 7
        %v3520 = vsub.s32 3, %v3519
        %v3521 = vrot.slane %v2463, %v3520
        %v3522 = vlaneseq
        %v3523 = vshrl.u32 %v3522, 7
        %v3524 = vsub.s32 4, %v3523
        %v3525 = vrot.slane %v2463, %v3524
        %v3526 = vlaneseq
        %v3527 = vshrl.u32 %v3526, 7
        %v3528 = vsub.s32 5, %v3527
        %v3529 = vrot.slane %v2463, %v3528
        %v3530 = vlaneseq
        %v3531 = vshrl.u32 %v3530, 7
        %v3532 = vsub.s32 6, %v3531
        %v3533 = vrot.slane %v2463, %v3532
        %v3534 = vlaneseq
        %v3535 = vshrl.u32 %v3534, 7
        %v3536 = vsub.s32 7, %v3535
        %v3537 = vrot.slane %v2463, %v3536
        %v3538 = vlaneseq
        %v3539 = vshrl.u32 %v3538, 7
        %v3540 = vsub.s32 0, %v3539
        %v3541 = vrot.slane %v2468, %v3540
        %v3542 = vlaneseq
        %v3543 = vshrl.u32 %v3542, 7
        %v3544 = vsub.s32 1, %v3543
        %v3545 = vrot.slane %v2468, %v3544
        %v3546 = vlaneseq
        %v3547 = vshrl.u32 %v3546, 7
        %v3548 = vsub.s32 2, %v3547
        %v3549 = vrot.slane %v2468, %v3548
        %v3550 = vlaneseq
        %v3551 = vshrl.u32 %v3550, 7
        %v3552 = vsub.s32 3, %v3551
        %v3553 = vrot.slane %v2468, %v3552
        %v3554 = vlaneseq
        %v3555 = vshrl.u32 %v3554, 7
        %v3556 = vsub.s32 4, %v3555
        %v3557 = vrot.slane %v2468, %v3556
        %v3558 = vlaneseq
        %v3559 = vshrl.u32 %v3558, 7
        %v3560 = vsub.s32 5, %v3559
        %v3561 = vrot.slane %v2468, %v3560
        %v3562 = vlaneseq
        %v3563 = vshrl.u32 %v3562, 7
        %v3564 = vsub.s32 6, %v3563
        %v3565 = vrot.slane %v2468, %v3564
        %v3566 = vlaneseq
        %v3567 = vshrl.u32 %v3566, 7
        %v3568 = vsub.s32 7, %v3567
        %v3569 = vrot.slane %v2468, %v3568
        %v3570 = vlaneseq
        %v3571 = vshrl.u32 %v3570, 7
        %v3572 = vsub.s32 0, %v3571
        %v3573 = vrot.slane %v2473, %v3572
        %v3574 = vlaneseq
        %v3575 = vshrl.u32 %v3574, 7
        %v3576 = vsub.s32 1, %v3575
        %v3577 = vrot.slane %v2473, %v3576
        %v3578 = vlaneseq
        %v3579 = vshrl.u32 %v3578, 7
        %v3580 = vsub.s32 2, %v3579
        %v3581 = vrot.slane %v2473, %v3580
        %v3582 = vlaneseq
        %v3583 = vshrl.u32 %v3582, 7
        %v3584 = vsub.s32 3, %v3583
        %v3585 = vrot.slane %v2473, %v3584
        %v3586 = vlaneseq
        %v3587 = vshrl.u32 %v3586, 7
        %v3588 = vsub.s32 4, %v3587
        %v3589 = vrot.slane %v2473, %v3588
        %v3590 = vlaneseq
        %v3591 = vshrl.u32 %v3590, 7
        %v3592 = vsub.s32 5, %v3591
        %v3593 = vrot.slane %v2473, %v3592
        %v3594 = vlaneseq
        %v3595 = vshrl.u32 %v3594, 7
        %v3596 = vsub.s32 6, %v3595
        %v3597 = vrot.slane %v2473, %v3596
        %v3598 = vlaneseq
        %v3599 = vshrl.u32 %v3598, 7
        %v3600 = vsub.s32 7, %v3599
        %v3601 = vrot.slane %v2473, %v3600
        %v3602 = vlaneseq
        %v3603 = vshrl.u32 %v3602, 7
        %v3604 = vsub.s32 0, %v3603
        %v3605 = vrot.slane %v2478, %v3604
        %v3606 = vlaneseq
        %v3607 = vshrl.u32 %v3606, 7
        %v3608 = vsub.s32 1, %v3607
        %v3609 = vrot.slane %v2478, %v3608
        %v3610 = vlaneseq
        %v3611 = vshrl.u32 %v3610, 7
        %v3612 = vsub.s32 2, %v3611
        %v3613 = vrot.slane %v2478, %v3612
        %v3614 = vlaneseq
        %v3615 = vshrl.u32 %v3614, 7
        %v3616 = vsub.s32 3, %v3615
        %v3617 = vrot.slane %v2478, %v3616
        %v3618 = vlaneseq
        %v3619 = vshrl.u32 %v3618, 7
        %v3620 = vsub.s32 4, %v3619
        %v3621 = vrot.slane %v2478, %v3620
        %v3622 = vlaneseq
        %v3623 = vshrl.u32 %v3622, 7
        %v3624 = vsub.s32 5, %v3623
        %v3625 = vrot.slane %v2478, %v3624
        %v3626 = vlaneseq
        %v3627 = vshrl.u32 %v3626, 7
        %v3628 = vsub.s32 6, %v3627
        %v3629 = vrot.slane %v2478, %v3628
        %v3630 = vlaneseq
        %v3631 = vshrl.u32 %v3630, 7
        %v3632 = vsub.s32 7, %v3631
        %v3633 = vrot.slane %v2478, %v3632
        %v3634 = vlaneseq
        %v3635 = vshrl.u32 %v3634, 7
        %v3636 = vsub.s32 0, %v3635
        %v3637 = vrot.slane %v2483, %v3636
        %v3638 = vlaneseq
        %v3639 = vshrl.u32 %v3638, 7
        %v3640 = vsub.s32 1, %v3639
        %v3641 = vrot.slane %v2483, %v3640
        %v3642 = vlaneseq
        %v3643 = vshrl.u32 %v3642, 7
        %v3644 = vsub.s32 2, %v3643
        %v3645 = vrot.slane %v2483, %v3644
        %v3646 = vlaneseq
        %v3647 = vshrl.u32 %v3646, 7
        %v3648 = vsub.s32 3, %v3647
        %v3649 = vrot.slane %v2483, %v3648
        %v3650 = vlaneseq
        %v3651 = vshrl.u32 %v3650, 7
        %v3652 = vsub.s32 4, %v3651
        %v3653 = vrot.slane %v2483, %v3652
        %v3654 = vlaneseq
        %v3655 = vshrl.u32 %v3654, 7
        %v3656 = vsub.s32 5, %v3655
        %v3657 = vrot.slane %v2483, %v3656
        %v3658 = vlaneseq
        %v3659 = vshrl.u32 %v3658, 7
        %v3660 = vsub.s32 6, %v3659
        %v3661 = vrot.slane %v2483, %v3660
        %v3662 = vlaneseq
        %v3663 = vshrl.u32 %v3662, 7
        %v3664 = vsub.s32 7, %v3663
        %v3665 = vrot.slane %v2483, %v3664
        %v3666 = vlaneseq
        %v3667 = vshrl.u32 %v3666, 7
        %v3668 = vsub.s32 0, %v3667
        %v3669 = vrot.slane %v2488, %v3668
        %v3670 = vlaneseq
        %v3671 = vshrl.u32 %v3670, 7
        %v3672 = vsub.s32 1, %v3671
        %v3673 = vrot.slane %v2488, %v3672
        %v3674 = vlaneseq
        %v3675 = vshrl.u32 %v3674, 7
        %v3676 = vsub.s32 2, %v3675
        %v3677 = vrot.slane %v2488, %v3676
        %v3678 = vlaneseq
        %v3679 = vshrl.u32 %v3678, 7
        %v3680 = vsub.s32 3, %v3679
        %v3681 = vrot.slane %v2488, %v3680
        %v3682 = vlaneseq
        %v3683 = vshrl.u32 %v3682, 7
        %v3684 = vsub.s32 4, %v3683
        %v3685 = vrot.slane %v2488, %v3684
        %v3686 = vlaneseq
        %v3687 = vshrl.u32 %v3686, 7
        %v3688 = vsub.s32 5, %v3687
        %v3689 = vrot.slane %v2488, %v3688
        %v3690 = vlaneseq
        %v3691 = vshrl.u32 %v3690, 7
        %v3692 = vsub.s32 6, %v3691
        %v3693 = vrot.slane %v2488, %v3692
        %v3694 = vlaneseq
        %v3695 = vshrl.u32 %v3694, 7
        %v3696 = vsub.s32 7, %v3695
        %v3697 = vrot.slane %v2488, %v3696
        %v3698 = vlaneseq
        %v3699 = vshrl.u32 %v3698, 7
        %v3700 = vsub.s32 0, %v3699
        %v3701 = vrot.slane %v2493, %v3700
        %v3702 = vlaneseq
        %v3703 = vshrl.u32 %v3702, 7
        %v3704 = vsub.s32 1, %v3703
        %v3705 = vrot.slane %v2493, %v3704
        %v3706 = vlaneseq
        %v3707 = vshrl.u32 %v3706, 7
        %v3708 = vsub.s32 2, %v3707
        %v3709 = vrot.slane %v2493, %v3708
        %v3710 = vlaneseq
        %v3711 = vshrl.u32 %v3710, 7
        %v3712 = vsub.s32 3, %v3711
        %v3713 = vrot.slane %v2493, %v3712
        %v3714 = vlaneseq
        %v3715 = vshrl.u32 %v3714, 7
        %v3716 = vsub.s32 4, %v3715
        %v3717 = vrot.slane %v2493, %v3716
        %v3718 = vlaneseq
        %v3719 = vshrl.u32 %v3718, 7
        %v3720 = vsub.s32 5, %v3719
        %v3721 = vrot.slane %v2493, %v3720
        %v3722 = vlaneseq
        %v3723 = vshrl.u32 %v3722, 7
        %v3724 = vsub.s32 6, %v3723
        %v3725 = vrot.slane %v2493, %v3724
        %v3726 = vlaneseq
        %v3727 = vshrl.u32 %v3726, 7
        %v3728 = vsub.s32 7, %v3727
        %v3729 = vrot.slane %v2493, %v3728
        %v3730 = vlaneseq
        %v3731 = vshrl.u32 %v3730, 7
        %v3732 = vsub.s32 0, %v3731
        %v3733 = vrot.slane %v2498, %v3732
        %v3734 = vlaneseq
        %v3735 = vshrl.u32 %v3734, 7
        %v3736 = vsub.s32 1, %v3735
        %v3737 = vrot.slane %v2498, %v3736
        %v3738 = vlaneseq
        %v3739 = vshrl.u32 %v3738, 7
        %v3740 = vsub.s32 2, %v3739
        %v3741 = vrot.slane %v2498, %v3740
        %v3742 = vlaneseq
        %v3743 = vshrl.u32 %v3742, 7
        %v3744 = vsub.s32 3, %v3743
        %v3745 = vrot.slane %v2498, %v3744
        %v3746 = vlaneseq
        %v3747 = vshrl.u32 %v3746, 7
        %v3748 = vsub.s32 4, %v3747
        %v3749 = vrot.slane %v2498, %v3748
        %v3750 = vlaneseq
        %v3751 = vshrl.u32 %v3750, 7
        %v3752 = vsub.s32 5, %v3751
        %v3753 = vrot.slane %v2498, %v3752
        %v3754 = vlaneseq
        %v3755 = vshrl.u32 %v3754, 7
        %v3756 = vsub.s32 6, %v3755
        %v3757 = vrot.slane %v2498, %v3756
        %v3758 = vlaneseq
        %v3759 = vshrl.u32 %v3758, 7
        %v3760 = vsub.s32 7, %v3759
        %v3761 = vrot.slane %v2498, %v3760
        %v3762 = vlaneseq
        %v3763 = vshrl.u32 %v3762, 7
        %v3764 = vsub.s32 0, %v3763
        %v3765 = vrot.slane %v2503, %v3764
        %v3766 = vlaneseq
        %v3767 = vshrl.u32 %v3766, 7
        %v3768 = vsub.s32 1, %v3767
        %v3769 = vrot.slane %v2503, %v3768
        %v3770 = vlaneseq
        %v3771 = vshrl.u32 %v3770, 7
        %v3772 = vsub.s32 2, %v3771
        %v3773 = vrot.slane %v2503, %v3772
        %v3774 = vlaneseq
        %v3775 = vshrl.u32 %v3774, 7
        %v3776 = vsub.s32 3, %v3775
        %v3777 = vrot.slane %v2503, %v3776
        %v3778 = vlaneseq
        %v3779 = vshrl.u32 %v3778, 7
        %v3780 = vsub.s32 4, %v3779
        %v3781 = vrot.slane %v2503, %v3780
        %v3782 = vlaneseq
        %v3783 = vshrl.u32 %v3782, 7
        %v3784 = vsub.s32 5, %v3783
        %v3785 = vrot.slane %v2503, %v3784
        %v3786 = vlaneseq
        %v3787 = vshrl.u32 %v3786, 7
        %v3788 = vsub.s32 6, %v3787
        %v3789 = vrot.slane %v2503, %v3788
        %v3790 = vlaneseq
        %v3791 = vshrl.u32 %v3790, 7
        %v3792 = vsub.s32 7, %v3791
        %v3793 = vrot.slane %v2503, %v3792
        %v3794 = vlaneseq
        %v3795 = vshrl.u32 %v3794, 7
        %v3796 = vsub.s32 0, %v3795
        %v3797 = vrot.slane %v2508, %v3796
        %v3798 = vlaneseq
        %v3799 = vshrl.u32 %v3798, 7
        %v3800 = vsub.s32 1, %v3799
        %v3801 = vrot.slane %v2508, %v3800
        %v3802 = vlaneseq
        %v3803 = vshrl.u32 %v3802, 7
        %v3804 = vsub.s32 2, %v3803
        %v3805 = vrot.slane %v2508, %v3804
        %v3806 = vlaneseq
        %v3807 = vshrl.u32 %v3806, 7
        %v3808 = vsub.s32 3, %v3807
        %v3809 = vrot.slane %v2508, %v3808
        %v3810 = vlaneseq
        %v3811 = vshrl.u32 %v3810, 7
        %v3812 = vsub.s32 4, %v3811
        %v3813 = vrot.slane %v2508, %v3812
        %v3814 = vlaneseq
        %v3815 = vshrl.u32 %v3814, 7
        %v3816 = vsub.s32 5, %v3815
        %v3817 = vrot.slane %v2508, %v3816
        %v3818 = vlaneseq
        %v3819 = vshrl.u32 %v3818, 7
        %v3820 = vsub.s32 6, %v3819
        %v3821 = vrot.slane %v2508, %v3820
        %v3822 = vlaneseq
        %v3823 = vshrl.u32 %v3822, 7
        %v3824 = vsub.s32 7, %v3823
        %v3825 = vrot.slane %v2508, %v3824
        %v3826 = vlaneseq
        %v3827 = vshrl.u32 %v3826, 7
        %v3828 = vsub.s32 0, %v3827
        %v3829 = vrot.slane %v2513, %v3828
        %v3830 = vlaneseq
        %v3831 = vshrl.u32 %v3830, 7
        %v3832 = vsub.s32 1, %v3831
        %v3833 = vrot.slane %v2513, %v3832
        %v3834 = vlaneseq
        %v3835 = vshrl.u32 %v3834, 7
        %v3836 = vsub.s32 2, %v3835
        %v3837 = vrot.slane %v2513, %v3836
        %v3838 = vlaneseq
        %v3839 = vshrl.u32 %v3838, 7
        %v3840 = vsub.s32 3, %v3839
        %v3841 = vrot.slane %v2513, %v3840
        %v3842 = vlaneseq
        %v3843 = vshrl.u32 %v3842, 7
        %v3844 = vsub.s32 4, %v3843
        %v3845 = vrot.slane %v2513, %v3844
        %v3846 = vlaneseq
        %v3847 = vshrl.u32 %v3846, 7
        %v3848 = vsub.s32 5, %v3847
        %v3849 = vrot.slane %v2513, %v3848
        %v3850 = vlaneseq
        %v3851 = vshrl.u32 %v3850, 7
        %v3852 = vsub.s32 6, %v3851
        %v3853 = vrot.slane %v2513, %v3852
        %v3854 = vlaneseq
        %v3855 = vshrl.u32 %v3854, 7
        %v3856 = vsub.s32 7, %v3855
        %v3857 = vrot.slane %v2513, %v3856
        %v3858 = vlaneseq
        %v3859 = vshrl.u32 %v3858, 7
        %v3860 = vsub.s32 0, %v3859
        %v3861 = vrot.slane %v2518, %v3860
        %v3862 = vlaneseq
        %v3863 = vshrl.u32 %v3862, 7
        %v3864 = vsub.s32 1, %v3863
        %v3865 = vrot.slane %v2518, %v3864
        %v3866 = vlaneseq
        %v3867 = vshrl.u32 %v3866, 7
        %v3868 = vsub.s32 2, %v3867
        %v3869 = vrot.slane %v2518, %v3868
        %v3870 = vlaneseq
        %v3871 = vshrl.u32 %v3870, 7
        %v3872 = vsub.s32 3, %v3871
        %v3873 = vrot.slane %v2518, %v3872
        %v3874 = vlaneseq
        %v3875 = vshrl.u32 %v3874, 7
        %v3876 = vsub.s32 4, %v3875
        %v3877 = vrot.slane %v2518, %v3876
        %v3878 = vlaneseq
        %v3879 = vshrl.u32 %v3878, 7
        %v3880 = vsub.s32 5, %v3879
        %v3881 = vrot.slane %v2518, %v3880
        %v3882 = vlaneseq
        %v3883 = vshrl.u32 %v3882, 7
        %v3884 = vsub.s32 6, %v3883
        %v3885 = vrot.slane %v2518, %v3884
        %v3886 = vlaneseq
        %v3887 = vshrl.u32 %v3886, 7
        %v3888 = vsub.s32 7, %v3887
        %v3889 = vrot.slane %v2518, %v3888
        %v3890 = vlaneseq
        %v3891 = vshrl.u32 %v3890, 7
        %v3892 = vsub.s32 0, %v3891
        %v3893 = vrot.slane %v2523, %v3892
        %v3894 = vlaneseq
        %v3895 = vshrl.u32 %v3894, 7
        %v3896 = vsub.s32 1, %v3895
        %v3897 = vrot.slane %v2523, %v3896
        %v3898 = vlaneseq
        %v3899 = vshrl.u32 %v3898, 7
        %v3900 = vsub.s32 2, %v3899
        %v3901 = vrot.slane %v2523, %v3900
        %v3902 = vlaneseq
        %v3903 = vshrl.u32 %v3902, 7
        %v3904 = vsub.s32 3, %v3903
        %v3905 = vrot.slane %v2523, %v3904
        %v3906 = vlaneseq
        %v3907 = vshrl.u32 %v3906, 7
        %v3908 = vsub.s32 4, %v3907
        %v3909 = vrot.slane %v2523, %v3908
        %v3910 = vlaneseq
        %v3911 = vshrl.u32 %v3910, 7
        %v3912 = vsub.s32 5, %v3911
        %v3913 = vrot.slane %v2523, %v3912
        %v3914 = vlaneseq
        %v3915 = vshrl.u32 %v3914, 7
        %v3916 = vsub.s32 6, %v3915
        %v3917 = vrot.slane %v2523, %v3916
        %v3918 = vlaneseq
        %v3919 = vshrl.u32 %v3918, 7
        %v3920 = vsub.s32 7, %v3919
        %v3921 = vrot.slane %v2523, %v3920
        %v3922 = vlaneseq
        %v3923 = vshrl.u32 %v3922, 7
        %v3924 = vsub.s32 0, %v3923
        %v3925 = vrot.slane %v2528, %v3924
        %v3926 = vlaneseq
        %v3927 = vshrl.u32 %v3926, 7
        %v3928 = vsub.s32 1, %v3927
        %v3929 = vrot.slane %v2528, %v3928
        %v3930 = vlaneseq
        %v3931 = vshrl.u32 %v3930, 7
        %v3932 = vsub.s32 2, %v3931
        %v3933 = vrot.slane %v2528, %v3932
        %v3934 = vlaneseq
        %v3935 = vshrl.u32 %v3934, 7
        %v3936 = vsub.s32 3, %v3935
        %v3937 = vrot.slane %v2528, %v3936
        %v3938 = vlaneseq
        %v3939 = vshrl.u32 %v3938, 7
        %v3940 = vsub.s32 4, %v3939
        %v3941 = vrot.slane %v2528, %v3940
        %v3942 = vlaneseq
        %v3943 = vshrl.u32 %v3942, 7
        %v3944 = vsub.s32 5, %v3943
        %v3945 = vrot.slane %v2528, %v3944
        %v3946 = vlaneseq
        %v3947 = vshrl.u32 %v3946, 7
        %v3948 = vsub.s32 6, %v3947
        %v3949 = vrot.slane %v2528, %v3948
        %v3950 = vlaneseq
        %v3951 = vshrl.u32 %v3950, 7
        %v3952 = vsub.s32 7, %v3951
        %v3953 = vrot.slane %v2528, %v3952
        %v3954 = vlaneseq
        %v3955 = vshrl.u32 %v3954, 7
        %v3956 = vsub.s32 0, %v3955
        %v3957 = vrot.slane %v2533, %v3956
        %v3958 = vlaneseq
        %v3959 = vshrl.u32 %v3958, 7
        %v3960 = vsub.s32 1, %v3959
        %v3961 = vrot.slane %v2533, %v3960
        %v3962 = vlaneseq
        %v3963 = vshrl.u32 %v3962, 7
        %v3964 = vsub.s32 2, %v3963
        %v3965 = vrot.slane %v2533, %v3964
        %v3966 = vlaneseq
        %v3967 = vshrl.u32 %v3966, 7
        %v3968 = vsub.s32 3, %v3967
        %v3969 = vrot.slane %v2533, %v3968
        %v3970 = vlaneseq
        %v3971 = vshrl.u32 %v3970, 7
        %v3972 = vsub.s32 4, %v3971
        %v3973 = vrot.slane %v2533, %v3972
        %v3974 = vlaneseq
        %v3975 = vshrl.u32 %v3974, 7
        %v3976 = vsub.s32 5, %v3975
        %v3977 = vrot.slane %v2533, %v3976
        %v3978 = vlaneseq
        %v3979 = vshrl.u32 %v3978, 7
        %v3980 = vsub.s32 6, %v3979
        %v3981 = vrot.slane %v2533, %v3980
        %v3982 = vlaneseq
        %v3983 = vshrl.u32 %v3982, 7
        %v3984 = vsub.s32 7, %v3983
        %v3985 = vrot.slane %v2533, %v3984
        %v3986 = vlaneseq
        %v3987 = vshrl.u32 %v3986, 7
        %v3988 = vsub.s32 0, %v3987
        %v3989 = vrot.slane %v2538, %v3988
        %v3990 = vlaneseq
        %v3991 = vshrl.u32 %v3990, 7
        %v3992 = vsub.s32 1, %v3991
        %v3993 = vrot.slane %v2538, %v3992
        %v3994 = vlaneseq
        %v3995 = vshrl.u32 %v3994, 7
        %v3996 = vsub.s32 2, %v3995
        %v3997 = vrot.slane %v2538, %v3996
        %v3998 = vlaneseq
        %v3999 = vshrl.u32 %v3998, 7
        %v4000 = vsub.s32 3, %v3999
        %v4001 = vrot.slane %v2538, %v4000
        %v4002 = vlaneseq
        %v4003 = vshrl.u32 %v4002, 7
        %v4004 = vsub.s32 4, %v4003
        %v4005 = vrot.slane %v2538, %v4004
        %v4006 = vlaneseq
        %v4007 = vshrl.u32 %v4006, 7
        %v4008 = vsub.s32 5, %v4007
        %v4009 = vrot.slane %v2538, %v4008
        %v4010 = vlaneseq
        %v4011 = vshrl.u32 %v4010, 7
        %v4012 = vsub.s32 6, %v4011
        %v4013 = vrot.slane %v2538, %v4012
        %v4014 = vlaneseq
        %v4015 = vshrl.u32 %v4014, 7
        %v4016 = vsub.s32 7, %v4015
        %v4017 = vrot.slane %v2538, %v4016
        %v4018 = vlaneseq
        %v4019 = vshrl.u32 %v4018, 7
        %v4020 = vsub.s32 0, %v4019
        %v4021 = vrot.slane %v2543, %v4020
        %v4022 = vlaneseq
        %v4023 = vshrl.u32 %v4022, 7
        %v4024 = vsub.s32 1, %v4023
        %v4025 = vrot.slane %v2543, %v4024
        %v4026 = vlaneseq
        %v4027 = vshrl.u32 %v4026, 7
        %v4028 = vsub.s32 2, %v4027
        %v4029 = vrot.slane %v2543, %v4028
        %v4030 = vlaneseq
        %v4031 = vshrl.u32 %v4030, 7
        %v4032 = vsub.s32 3, %v4031
        %v4033 = vrot.slane %v2543, %v4032
        %v4034 = vlaneseq
        %v4035 = vshrl.u32 %v4034, 7
        %v4036 = vsub.s32 4, %v4035
        %v4037 = vrot.slane %v2543, %v4036
        %v4038 = vlaneseq
        %v4039 = vshrl.u32 %v4038, 7
        %v4040 = vsub.s32 5, %v4039
        %v4041 = vrot.slane %v2543, %v4040
        %v4042 = vlaneseq
        %v4043 = vshrl.u32 %v4042, 7
        %v4044 = vsub.s32 6, %v4043
        %v4045 = vrot.slane %v2543, %v4044
        %v4046 = vlaneseq
        %v4047 = vshrl.u32 %v4046, 7
        %v4048 = vsub.s32 7, %v4047
        %v4049 = vrot.slane %v2543, %v4048
        %v4050 = vlaneseq
        %v4051 = vshrl.u32 %v4050, 7
        %v4052 = vsub.s32 0, %v4051
        %v4053 = vrot.slane %v2548, %v4052
        %v4054 = vlaneseq
        %v4055 = vshrl.u32 %v4054, 7
        %v4056 = vsub.s32 1, %v4055
        %v4057 = vrot.slane %v2548, %v4056
        %v4058 = vlaneseq
        %v4059 = vshrl.u32 %v4058, 7
        %v4060 = vsub.s32 2, %v4059
        %v4061 = vrot.slane %v2548, %v4060
        %v4062 = vlaneseq
        %v4063 = vshrl.u32 %v4062, 7
        %v4064 = vsub.s32 3, %v4063
        %v4065 = vrot.slane %v2548, %v4064
        %v4066 = vlaneseq
        %v4067 = vshrl.u32 %v4066, 7
        %v4068 = vsub.s32 4, %v4067
        %v4069 = vrot.slane %v2548, %v4068
        %v4070 = vlaneseq
        %v4071 = vshrl.u32 %v4070, 7
        %v4072 = vsub.s32 5, %v4071
        %v4073 = vrot.slane %v2548, %v4072
        %v4074 = vlaneseq
        %v4075 = vshrl.u32 %v4074, 7
        %v4076 = vsub.s32 6, %v4075
        %v4077 = vrot.slane %v2548, %v4076
        %v4078 = vlaneseq
        %v4079 = vshrl.u32 %v4078, 7
        %v4080 = vsub.s32 7, %v4079
        %v4081 = vrot.slane %v2548, %v4080
        %v4082 = vlaneseq
        %v4083 = vshrl.u32 %v4082, 7
        %v4084 = vsub.s32 0, %v4083
        %v4085 = vrot.slane %v2553, %v4084
        %v4086 = vlaneseq
        %v4087 = vshrl.u32 %v4086, 7
        %v4088 = vsub.s32 1, %v4087
        %v4089 = vrot.slane %v2553, %v4088
        %v4090 = vlaneseq
        %v4091 = vshrl.u32 %v4090, 7
        %v4092 = vsub.s32 2, %v4091
        %v4093 = vrot.slane %v2553, %v4092
        %v4094 = vlaneseq
        %v4095 = vshrl.u32 %v4094, 7
        %v4096 = vsub.s32 3, %v4095
        %v4097 = vrot.slane %v2553, %v4096
        %v4098 = vlaneseq
        %v4099 = vshrl.u32 %v4098, 7
        %v4100 = vsub.s32 4, %v4099
        %v4101 = vrot.slane %v2553, %v4100
        %v4102 = vlaneseq
        %v4103 = vshrl.u32 %v4102, 7
        %v4104 = vsub.s32 5, %v4103
        %v4105 = vrot.slane %v2553, %v4104
        %v4106 = vlaneseq
        %v4107 = vshrl.u32 %v4106, 7
        %v4108 = vsub.s32 6, %v4107
        %v4109 = vrot.slane %v2553, %v4108
        %v4110 = vlaneseq
        %v4111 = vshrl.u32 %v4110, 7
        %v4112 = vsub.s32 7, %v4111
        %v4113 = vrot.slane %v2553, %v4112
        %v4114 = vlaneseq
        %v4115 = vshrl.u32 %v4114, 7
        %v4116 = vsub.s32 0, %v4115
        %v4117 = vrot.slane %v2558, %v4116
        %v4118 = vlaneseq
        %v4119 = vshrl.u32 %v4118, 7
        %v4120 = vsub.s32 1, %v4119
        %v4121 = vrot.slane %v2558, %v4120
        %v4122 = vlaneseq
        %v4123 = vshrl.u32 %v4122, 7
        %v4124 = vsub.s32 2, %v4123
        %v4125 = vrot.slane %v2558, %v4124
        %v4126 = vlaneseq
        %v4127 = vshrl.u32 %v4126, 7
        %v4128 = vsub.s32 3, %v4127
        %v4129 = vrot.slane %v2558, %v4128
        %v4130 = vlaneseq
        %v4131 = vshrl.u32 %v4130, 7
        %v4132 = vsub.s32 4, %v4131
        %v4133 = vrot.slane %v2558, %v4132
        %v4134 = vlaneseq
        %v4135 = vshrl.u32 %v4134, 7
        %v4136 = vsub.s32 5, %v4135
        %v4137 = vrot.slane %v2558, %v4136
        %v4138 = vlaneseq
        %v4139 = vshrl.u32 %v4138, 7
        %v4140 = vsub.s32 6, %v4139
        %v4141 = vrot.slane %v2558, %v4140
        %v4142 = vlaneseq
        %v4143 = vshrl.u32 %v4142, 7
        %v4144 = vsub.s32 7, %v4143
        %v4145 = vrot.slane %v2558, %v4144
        %v4146 = vlaneseq
        %v4147 = vshrl.u32 %v4146, 7
        %v4148 = vsub.s32 0, %v4147
        %v4149 = vrot.slane %v2563, %v4148
        %v4150 = vlaneseq
        %v4151 = vshrl.u32 %v4150, 7
        %v4152 = vsub.s32 1, %v4151
        %v4153 = vrot.slane %v2563, %v4152
        %v4154 = vlaneseq
        %v4155 = vshrl.u32 %v4154, 7
        %v4156 = vsub.s32 2, %v4155
        %v4157 = vrot.slane %v2563, %v4156
        %v4158 = vlaneseq
        %v4159 = vshrl.u32 %v4158, 7
        %v4160 = vsub.s32 3, %v4159
        %v4161 = vrot.slane %v2563, %v4160
        %v4162 = vlaneseq
        %v4163 = vshrl.u32 %v4162, 7
        %v4164 = vsub.s32 4, %v4163
        %v4165 = vrot.slane %v2563, %v4164
        %v4166 = vlaneseq
        %v4167 = vshrl.u32 %v4166, 7
        %v4168 = vsub.s32 5, %v4167
        %v4169 = vrot.slane %v2563, %v4168
        %v4170 = vlaneseq
        %v4171 = vshrl.u32 %v4170, 7
        %v4172 = vsub.s32 6, %v4171
        %v4173 = vrot.slane %v2563, %v4172
        %v4174 = vlaneseq
        %v4175 = vshrl.u32 %v4174, 7
        %v4176 = vsub.s32 7, %v4175
        %v4177 = vrot.slane %v2563, %v4176
        %v4178 = vlaneseq
        %v4179 = vshrl.u32 %v4178, 7
        %v4180 = vsub.s32 0, %v4179
        %v4181 = vrot.slane %v2568, %v4180
        %v4182 = vlaneseq
        %v4183 = vshrl.u32 %v4182, 7
        %v4184 = vsub.s32 1, %v4183
        %v4185 = vrot.slane %v2568, %v4184
        %v4186 = vlaneseq
        %v4187 = vshrl.u32 %v4186, 7
        %v4188 = vsub.s32 2, %v4187
        %v4189 = vrot.slane %v2568, %v4188
        %v4190 = vlaneseq
        %v4191 = vshrl.u32 %v4190, 7
        %v4192 = vsub.s32 3, %v4191
        %v4193 = vrot.slane %v2568, %v4192
        %v4194 = vlaneseq
        %v4195 = vshrl.u32 %v4194, 7
        %v4196 = vsub.s32 4, %v4195
        %v4197 = vrot.slane %v2568, %v4196
        %v4198 = vlaneseq
        %v4199 = vshrl.u32 %v4198, 7
        %v4200 = vsub.s32 5, %v4199
        %v4201 = vrot.slane %v2568, %v4200
        %v4202 = vlaneseq
        %v4203 = vshrl.u32 %v4202, 7
        %v4204 = vsub.s32 6, %v4203
        %v4205 = vrot.slane %v2568, %v4204
        %v4206 = vlaneseq
        %v4207 = vshrl.u32 %v4206, 7
        %v4208 = vsub.s32 7, %v4207
        %v4209 = vrot.slane %v2568, %v4208
        %v4210 = vlaneseq
        %v4211 = vshrl.u32 %v4210, 7
        %v4212 = vsub.s32 0, %v4211
        %v4213 = vrot.slane %v2573, %v4212
        %v4214 = vlaneseq
        %v4215 = vshrl.u32 %v4214, 7
        %v4216 = vsub.s32 1, %v4215
        %v4217 = vrot.slane %v2573, %v4216
        %v4218 = vlaneseq
        %v4219 = vshrl.u32 %v4218, 7
        %v4220 = vsub.s32 2, %v4219
        %v4221 = vrot.slane %v2573, %v4220
        %v4222 = vlaneseq
        %v4223 = vshrl.u32 %v4222, 7
        %v4224 = vsub.s32 3, %v4223
        %v4225 = vrot.slane %v2573, %v4224
        %v4226 = vlaneseq
        %v4227 = vshrl.u32 %v4226, 7
        %v4228 = vsub.s32 4, %v4227
        %v4229 = vrot.slane %v2573, %v4228
        %v4230 = vlaneseq
        %v4231 = vshrl.u32 %v4230, 7
        %v4232 = vsub.s32 5, %v4231
        %v4233 = vrot.slane %v2573, %v4232
        %v4234 = vlaneseq
        %v4235 = vshrl.u32 %v4234, 7
        %v4236 = vsub.s32 6, %v4235
        %v4237 = vrot.slane %v2573, %v4236
        %v4238 = vlaneseq
        %v4239 = vshrl.u32 %v4238, 7
        %v4240 = vsub.s32 7, %v4239
        %v4241 = vrot.slane %v2573, %v4240
        %v4242 = vlaneseq
        %v4243 = vshrl.u32 %v4242, 7
        %v4244 = vsub.s32 0, %v4243
        %v4245 = vrot.slane %v2578, %v4244
        %v4246 = vlaneseq
        %v4247 = vshrl.u32 %v4246, 7
        %v4248 = vsub.s32 1, %v4247
        %v4249 = vrot.slane %v2578, %v4248
        %v4250 = vlaneseq
        %v4251 = vshrl.u32 %v4250, 7
        %v4252 = vsub.s32 2, %v4251
        %v4253 = vrot.slane %v2578, %v4252
        %v4254 = vlaneseq
        %v4255 = vshrl.u32 %v4254, 7
        %v4256 = vsub.s32 3, %v4255
        %v4257 = vrot.slane %v2578, %v4256
        %v4258 = vlaneseq
        %v4259 = vshrl.u32 %v4258, 7
        %v4260 = vsub.s32 4, %v4259
        %v4261 = vrot.slane %v2578, %v4260
        %v4262 = vlaneseq
        %v4263 = vshrl.u32 %v4262, 7
        %v4264 = vsub.s32 5, %v4263
        %v4265 = vrot.slane %v2578, %v4264
        %v4266 = vlaneseq
        %v4267 = vshrl.u32 %v4266, 7
        %v4268 = vsub.s32 6, %v4267
        %v4269 = vrot.slane %v2578, %v4268
        %v4270 = vlaneseq
        %v4271 = vshrl.u32 %v4270, 7
        %v4272 = vsub.s32 7, %v4271
        %v4273 = vrot.slane %v2578, %v4272
        %v4274 = vlaneseq
        %v4275 = vshrl.u32 %v4274, 7
        %v4276 = vsub.s32 0, %v4275
        %v4277 = vrot.slane %v2583, %v4276
        %v4278 = vlaneseq
        %v4279 = vshrl.u32 %v4278, 7
        %v4280 = vsub.s32 1, %v4279
        %v4281 = vrot.slane %v2583, %v4280
        %v4282 = vlaneseq
        %v4283 = vshrl.u32 %v4282, 7
        %v4284 = vsub.s32 2, %v4283
        %v4285 = vrot.slane %v2583, %v4284
        %v4286 = vlaneseq
        %v4287 = vshrl.u32 %v4286, 7
        %v4288 = vsub.s32 3, %v4287
        %v4289 = vrot.slane %v2583, %v4288
        %v4290 = vlaneseq
        %v4291 = vshrl.u32 %v4290, 7
        %v4292 = vsub.s32 4, %v4291
        %v4293 = vrot.slane %v2583, %v4292
        %v4294 = vlaneseq
        %v4295 = vshrl.u32 %v4294, 7
        %v4296 = vsub.s32 5, %v4295
        %v4297 = vrot.slane %v2583, %v4296
        %v4298 = vlaneseq
        %v4299 = vshrl.u32 %v4298, 7
        %v4300 = vsub.s32 6, %v4299
        %v4301 = vrot.slane %v2583, %v4300
        %v4302 = vlaneseq
        %v4303 = vshrl.u32 %v4302, 7
        %v4304 = vsub.s32 7, %v4303
        %v4305 = vrot.slane %v2583, %v4304
        %v4306 = vlaneseq
        %v4307 = vshrl.u32 %v4306, 7
        %v4308 = vsub.s32 0, %v4307
        %v4309 = vrot.slane %v2588, %v4308
        %v4310 = vlaneseq
        %v4311 = vshrl.u32 %v4310, 7
        %v4312 = vsub.s32 1, %v4311
        %v4313 = vrot.slane %v2588, %v4312
        %v4314 = vlaneseq
        %v4315 = vshrl.u32 %v4314, 7
        %v4316 = vsub.s32 2, %v4315
        %v4317 = vrot.slane %v2588, %v4316
        %v4318 = vlaneseq
        %v4319 = vshrl.u32 %v4318, 7
        %v4320 = vsub.s32 3, %v4319
        %v4321 = vrot.slane %v2588, %v4320
        %v4322 = vlaneseq
        %v4323 = vshrl.u32 %v4322, 7
        %v4324 = vsub.s32 4, %v4323
        %v4325 = vrot.slane %v2588, %v4324
        %v4326 = vlaneseq
        %v4327 = vshrl.u32 %v4326, 7
        %v4328 = vsub.s32 5, %v4327
        %v4329 = vrot.slane %v2588, %v4328
        %v4330 = vlaneseq
        %v4331 = vshrl.u32 %v4330, 7
        %v4332 = vsub.s32 6, %v4331
        %v4333 = vrot.slane %v2588, %v4332
        %v4334 = vlaneseq
        %v4335 = vshrl.u32 %v4334, 7
        %v4336 = vsub.s32 7, %v4335
        %v4337 = vrot.slane %v2588, %v4336
        %v4338 = vlaneseq
        %v4339 = vshrl.u32 %v4338, 7
        %v4340 = vsub.s32 0, %v4339
        %v4341 = vrot.slane %v2593, %v4340
        %v4342 = vlaneseq
        %v4343 = vshrl.u32 %v4342, 7
        %v4344 = vsub.s32 1, %v4343
        %v4345 = vrot.slane %v2593, %v4344
        %v4346 = vlaneseq
        %v4347 = vshrl.u32 %v4346, 7
        %v4348 = vsub.s32 2, %v4347
        %v4349 = vrot.slane %v2593, %v4348
        %v4350 = vlaneseq
        %v4351 = vshrl.u32 %v4350, 7
        %v4352 = vsub.s32 3, %v4351
        %v4353 = vrot.slane %v2593, %v4352
        %v4354 = vlaneseq
        %v4355 = vshrl.u32 %v4354, 7
        %v4356 = vsub.s32 4, %v4355
        %v4357 = vrot.slane %v2593, %v4356
        %v4358 = vlaneseq
        %v4359 = vshrl.u32 %v4358, 7
        %v4360 = vsub.s32 5, %v4359
        %v4361 = vrot.slane %v2593, %v4360
        %v4362 = vlaneseq
        %v4363 = vshrl.u32 %v4362, 7
        %v4364 = vsub.s32 6, %v4363
        %v4365 = vrot.slane %v2593, %v4364
        %v4366 = vlaneseq
        %v4367 = vshrl.u32 %v4366, 7
        %v4368 = vsub.s32 7, %v4367
        %v4369 = vrot.slane %v2593, %v4368
        %v4370 = vlaneseq
        %v4371 = vshrl.u32 %v4370, 7
        %v4372 = vsub.s32 0, %v4371
        %v4373 = vrot.slane %v2598, %v4372
        %v4374 = vlaneseq
        %v4375 = vshrl.u32 %v4374, 7
        %v4376 = vsub.s32 1, %v4375
        %v4377 = vrot.slane %v2598, %v4376
        %v4378 = vlaneseq
        %v4379 = vshrl.u32 %v4378, 7
        %v4380 = vsub.s32 2, %v4379
        %v4381 = vrot.slane %v2598, %v4380
        %v4382 = vlaneseq
        %v4383 = vshrl.u32 %v4382, 7
        %v4384 = vsub.s32 3, %v4383
        %v4385 = vrot.slane %v2598, %v4384
        %v4386 = vlaneseq
        %v4387 = vshrl.u32 %v4386, 7
        %v4388 = vsub.s32 4, %v4387
        %v4389 = vrot.slane %v2598, %v4388
        %v4390 = vlaneseq
        %v4391 = vshrl.u32 %v4390, 7
        %v4392 = vsub.s32 5, %v4391
        %v4393 = vrot.slane %v2598, %v4392
        %v4394 = vlaneseq
        %v4395 = vshrl.u32 %v4394, 7
        %v4396 = vsub.s32 6, %v4395
        %v4397 = vrot.slane %v2598, %v4396
        %v4398 = vlaneseq
        %v4399 = vshrl.u32 %v4398, 7
        %v4400 = vsub.s32 7, %v4399
        %v4401 = vrot.slane %v2598, %v4400
        %v4402 = vlaneseq
        %v4403 = vshrl.u32 %v4402, 7
        %v4404 = vsub.s32 0, %v4403
        %v4405 = vrot.slane %v2603, %v4404
        %v4406 = vlaneseq
        %v4407 = vshrl.u32 %v4406, 7
        %v4408 = vsub.s32 1, %v4407
        %v4409 = vrot.slane %v2603, %v4408
        %v4410 = vlaneseq
        %v4411 = vshrl.u32 %v4410, 7
        %v4412 = vsub.s32 2, %v4411
        %v4413 = vrot.slane %v2603, %v4412
        %v4414 = vlaneseq
        %v4415 = vshrl.u32 %v4414, 7
        %v4416 = vsub.s32 3, %v4415
        %v4417 = vrot.slane %v2603, %v4416
        %v4418 = vlaneseq
        %v4419 = vshrl.u32 %v4418, 7
        %v4420 = vsub.s32 4, %v4419
        %v4421 = vrot.slane %v2603, %v4420
        %v4422 = vlaneseq
        %v4423 = vshrl.u32 %v4422, 7
        %v4424 = vsub.s32 5, %v4423
        %v4425 = vrot.slane %v2603, %v4424
        %v4426 = vlaneseq
        %v4427 = vshrl.u32 %v4426, 7
        %v4428 = vsub.s32 6, %v4427
        %v4429 = vrot.slane %v2603, %v4428
        %v4430 = vlaneseq
        %v4431 = vshrl.u32 %v4430, 7
        %v4432 = vsub.s32 7, %v4431
        %v4433 = vrot.slane %v2603, %v4432
        %v4434 = vlaneseq
        %v4435 = vshrl.u32 %v4434, 7
        %v4436 = vsub.s32 0, %v4435
        %v4437 = vrot.slane %v2608, %v4436
        %v4438 = vlaneseq
        %v4439 = vshrl.u32 %v4438, 7
        %v4440 = vsub.s32 1, %v4439
        %v4441 = vrot.slane %v2608, %v4440
        %v4442 = vlaneseq
        %v4443 = vshrl.u32 %v4442, 7
        %v4444 = vsub.s32 2, %v4443
        %v4445 = vrot.slane %v2608, %v4444
        %v4446 = vlaneseq
        %v4447 = vshrl.u32 %v4446, 7
        %v4448 = vsub.s32 3, %v4447
        %v4449 = vrot.slane %v2608, %v4448
        %v4450 = vlaneseq
        %v4451 = vshrl.u32 %v4450, 7
        %v4452 = vsub.s32 4, %v4451
        %v4453 = vrot.slane %v2608, %v4452
        %v4454 = vlaneseq
        %v4455 = vshrl.u32 %v4454, 7
        %v4456 = vsub.s32 5, %v4455
        %v4457 = vrot.slane %v2608, %v4456
        %v4458 = vlaneseq
        %v4459 = vshrl.u32 %v4458, 7
        %v4460 = vsub.s32 6, %v4459
        %v4461 = vrot.slane %v2608, %v4460
        %v4462 = vlaneseq
        %v4463 = vshrl.u32 %v4462, 7
        %v4464 = vsub.s32 7, %v4463
        %v4465 = vrot.slane %v2608, %v4464
        %v4466 = vlaneseq
        %v4467 = vshrl.u32 %v4466, 7
        %v4468 = vsub.s32 0, %v4467
        %v4469 = vrot.slane %v2613, %v4468
        %v4470 = vlaneseq
        %v4471 = vshrl.u32 %v4470, 7
        %v4472 = vsub.s32 1, %v4471
        %v4473 = vrot.slane %v2613, %v4472
        %v4474 = vlaneseq
        %v4475 = vshrl.u32 %v4474, 7
        %v4476 = vsub.s32 2, %v4475
        %v4477 = vrot.slane %v2613, %v4476
        %v4478 = vlaneseq
        %v4479 = vshrl.u32 %v4478, 7
        %v4480 = vsub.s32 3, %v4479
        %v4481 = vrot.slane %v2613, %v4480
        %v4482 = vlaneseq
        %v4483 = vshrl.u32 %v4482, 7
        %v4484 = vsub.s32 4, %v4483
        %v4485 = vrot.slane %v2613, %v4484
        %v4486 = vlaneseq
        %v4487 = vshrl.u32 %v4486, 7
        %v4488 = vsub.s32 5, %v4487
        %v4489 = vrot.slane %v2613, %v4488
        %v4490 = vlaneseq
        %v4491 = vshrl.u32 %v4490, 7
        %v4492 = vsub.s32 6, %v4491
        %v4493 = vrot.slane %v2613, %v4492
        %v4494 = vlaneseq
        %v4495 = vshrl.u32 %v4494, 7
        %v4496 = vsub.s32 7, %v4495
        %v4497 = vrot.slane %v2613, %v4496
        %v4498 = vlaneseq
        %v4499 = vshrl.u32 %v4498, 7
        %v4500 = vsub.s32 0, %v4499
        %v4501 = vrot.slane %v2618, %v4500
        %v4502 = vlaneseq
        %v4503 = vshrl.u32 %v4502, 7
        %v4504 = vsub.s32 1, %v4503
        %v4505 = vrot.slane %v2618, %v4504
        %v4506 = vlaneseq
        %v4507 = vshrl.u32 %v4506, 7
        %v4508 = vsub.s32 2, %v4507
        %v4509 = vrot.slane %v2618, %v4508
        %v4510 = vlaneseq
        %v4511 = vshrl.u32 %v4510, 7
        %v4512 = vsub.s32 3, %v4511
        %v4513 = vrot.slane %v2618, %v4512
        %v4514 = vlaneseq
        %v4515 = vshrl.u32 %v4514, 7
        %v4516 = vsub.s32 4, %v4515
        %v4517 = vrot.slane %v2618, %v4516
        %v4518 = vlaneseq
        %v4519 = vshrl.u32 %v4518, 7
        %v4520 = vsub.s32 5, %v4519
        %v4521 = vrot.slane %v2618, %v4520
        %v4522 = vlaneseq
        %v4523 = vshrl.u32 %v4522, 7
        %v4524 = vsub.s32 6, %v4523
        %v4525 = vrot.slane %v2618, %v4524
        %v4526 = vlaneseq
        %v4527 = vshrl.u32 %v4526, 7
        %v4528 = vsub.s32 7, %v4527
        %v4529 = vrot.slane %v2618, %v4528
        %v4530 = vlaneseq
        %v4531 = vshrl.u32 %v4530, 7
        %v4532 = vsub.s32 0, %v4531
        %v4533 = vrot.slane %v2623, %v4532
        %v4534 = vlaneseq
        %v4535 = vshrl.u32 %v4534, 7
        %v4536 = vsub.s32 1, %v4535
        %v4537 = vrot.slane %v2623, %v4536
        %v4538 = vlaneseq
        %v4539 = vshrl.u32 %v4538, 7
        %v4540 = vsub.s32 2, %v4539
        %v4541 = vrot.slane %v2623, %v4540
        %v4542 = vlaneseq
        %v4543 = vshrl.u32 %v4542, 7
        %v4544 = vsub.s32 3, %v4543
        %v4545 = vrot.slane %v2623, %v4544
        %v4546 = vlaneseq
        %v4547 = vshrl.u32 %v4546, 7
        %v4548 = vsub.s32 4, %v4547
        %v4549 = vrot.slane %v2623, %v4548
        %v4550 = vlaneseq
        %v4551 = vshrl.u32 %v4550, 7
        %v4552 = vsub.s32 5, %v4551
        %v4553 = vrot.slane %v2623, %v4552
        %v4554 = vlaneseq
        %v4555 = vshrl.u32 %v4554, 7
        %v4556 = vsub.s32 6, %v4555
        %v4557 = vrot.slane %v2623, %v4556
        %v4558 = vlaneseq
        %v4559 = vshrl.u32 %v4558, 7
        %v4560 = vsub.s32 7, %v4559
        %v4561 = vrot.slane %v2623, %v4560
        %v4562 = vlaneseq
        %v4563 = vshrl.u32 %v4562, 7
        %v4564 = vsub.s32 0, %v4563
        %v4565 = vrot.slane %v2628, %v4564
        %v4566 = vlaneseq
        %v4567 = vshrl.u32 %v4566, 7
        %v4568 = vsub.s32 1, %v4567
        %v4569 = vrot.slane %v2628, %v4568
        %v4570 = vlaneseq
        %v4571 = vshrl.u32 %v4570, 7
        %v4572 = vsub.s32 2, %v4571
        %v4573 = vrot.slane %v2628, %v4572
        %v4574 = vlaneseq
        %v4575 = vshrl.u32 %v4574, 7
        %v4576 = vsub.s32 3, %v4575
        %v4577 = vrot.slane %v2628, %v4576
        %v4578 = vlaneseq
        %v4579 = vshrl.u32 %v4578, 7
        %v4580 = vsub.s32 4, %v4579
        %v4581 = vrot.slane %v2628, %v4580
        %v4582 = vlaneseq
        %v4583 = vshrl.u32 %v4582, 7
        %v4584 = vsub.s32 5, %v4583
        %v4585 = vrot.slane %v2628, %v4584
        %v4586 = vlaneseq
        %v4587 = vshrl.u32 %v4586, 7
        %v4588 = vsub.s32 6, %v4587
        %v4589 = vrot.slane %v2628, %v4588
        %v4590 = vlaneseq
        %v4591 = vshrl.u32 %v4590, 7
        %v4592 = vsub.s32 7, %v4591
        %v4593 = vrot.slane %v2628, %v4592
        %v4594 = vlaneseq
        %v4595 = vshrl.u32 %v4594, 7
        %v4596 = vsub.s32 0, %v4595
        %v4597 = vrot.slane %v2633, %v4596
        %v4598 = vlaneseq
        %v4599 = vshrl.u32 %v4598, 7
        %v4600 = vsub.s32 1, %v4599
        %v4601 = vrot.slane %v2633, %v4600
        %v4602 = vlaneseq
        %v4603 = vshrl.u32 %v4602, 7
        %v4604 = vsub.s32 2, %v4603
        %v4605 = vrot.slane %v2633, %v4604
        %v4606 = vlaneseq
        %v4607 = vshrl.u32 %v4606, 7
        %v4608 = vsub.s32 3, %v4607
        %v4609 = vrot.slane %v2633, %v4608
        %v4610 = vlaneseq
        %v4611 = vshrl.u32 %v4610, 7
        %v4612 = vsub.s32 4, %v4611
        %v4613 = vrot.slane %v2633, %v4612
        %v4614 = vlaneseq
        %v4615 = vshrl.u32 %v4614, 7
        %v4616 = vsub.s32 5, %v4615
        %v4617 = vrot.slane %v2633, %v4616
        %v4618 = vlaneseq
        %v4619 = vshrl.u32 %v4618, 7
        %v4620 = vsub.s32 6, %v4619
        %v4621 = vrot.slane %v2633, %v4620
        %v4622 = vlaneseq
        %v4623 = vshrl.u32 %v4622, 7
        %v4624 = vsub.s32 7, %v4623
        %v4625 = vrot.slane %v2633, %v4624
        %v4626 = vlaneseq
        %v4627 = vshrl.u32 %v4626, 7
        %v4628 = vsub.s32 0, %v4627
        %v4629 = vrot.slane %v2638, %v4628
        %v4630 = vlaneseq
        %v4631 = vshrl.u32 %v4630, 7
        %v4632 = vsub.s32 1, %v4631
        %v4633 = vrot.slane %v2638, %v4632
        %v4634 = vlaneseq
        %v4635 = vshrl.u32 %v4634, 7
        %v4636 = vsub.s32 2, %v4635
        %v4637 = vrot.slane %v2638, %v4636
        %v4638 = vlaneseq
        %v4639 = vshrl.u32 %v4638, 7
        %v4640 = vsub.s32 3, %v4639
        %v4641 = vrot.slane %v2638, %v4640
        %v4642 = vlaneseq
        %v4643 = vshrl.u32 %v4642, 7
        %v4644 = vsub.s32 4, %v4643
        %v4645 = vrot.slane %v2638, %v4644
        %v4646 = vlaneseq
        %v4647 = vshrl.u32 %v4646, 7
        %v4648 = vsub.s32 5, %v4647
        %v4649 = vrot.slane %v2638, %v4648
        %v4650 = vlaneseq
        %v4651 = vshrl.u32 %v4650, 7
        %v4652 = vsub.s32 6, %v4651
        %v4653 = vrot.slane %v2638, %v4652
        %v4654 = vlaneseq
        %v4655 = vshrl.u32 %v4654, 7
        %v4656 = vsub.s32 7, %v4655
        %v4657 = vrot.slane %v2638, %v4656
        %v4658 = vlaneseq
        %v4659 = vshrl.u32 %v4658, 7
        %v4660 = vsub.s32 0, %v4659
        %v4661 = vrot.slane %v2643, %v4660
        %v4662 = vlaneseq
        %v4663 = vshrl.u32 %v4662, 7
        %v4664 = vsub.s32 1, %v4663
        %v4665 = vrot.slane %v2643, %v4664
        %v4666 = vlaneseq
        %v4667 = vshrl.u32 %v4666, 7
        %v4668 = vsub.s32 2, %v4667
        %v4669 = vrot.slane %v2643, %v4668
        %v4670 = vlaneseq
        %v4671 = vshrl.u32 %v4670, 7
        %v4672 = vsub.s32 3, %v4671
        %v4673 = vrot.slane %v2643, %v4672
        %v4674 = vlaneseq
        %v4675 = vshrl.u32 %v4674, 7
        %v4676 = vsub.s32 4, %v4675
        %v4677 = vrot.slane %v2643, %v4676
        %v4678 = vlaneseq
        %v4679 = vshrl.u32 %v4678, 7
        %v4680 = vsub.s32 5, %v4679
        %v4681 = vrot.slane %v2643, %v4680
        %v4682 = vlaneseq
        %v4683 = vshrl.u32 %v4682, 7
        %v4684 = vsub.s32 6, %v4683
        %v4685 = vrot.slane %v2643, %v4684
        %v4686 = vlaneseq
        %v4687 = vshrl.u32 %v4686, 7
        %v4688 = vsub.s32 7, %v4687
        %v4689 = vrot.slane %v2643, %v4688
        %v4690 = vlaneseq
        %v4691 = vshrl.u32 %v4690, 7
        %v4692 = vsub.s32 0, %v4691
        %v4693 = vrot.slane %v2648, %v4692
        %v4694 = vlaneseq
        %v4695 = vshrl.u32 %v4694, 7
        %v4696 = vsub.s32 1, %v4695
        %v4697 = vrot.slane %v2648, %v4696
        %v4698 = vlaneseq
        %v4699 = vshrl.u32 %v4698, 7
        %v4700 = vsub.s32 2, %v4699
        %v4701 = vrot.slane %v2648, %v4700
        %v4702 = vlaneseq
        %v4703 = vshrl.u32 %v4702, 7
        %v4704 = vsub.s32 3, %v4703
        %v4705 = vrot.slane %v2648, %v4704
        %v4706 = vlaneseq
        %v4707 = vshrl.u32 %v4706, 7
        %v4708 = vsub.s32 4, %v4707
        %v4709 = vrot.slane %v2648, %v4708
        %v4710 = vlaneseq
        %v4711 = vshrl.u32 %v4710, 7
        %v4712 = vsub.s32 5, %v4711
        %v4713 = vrot.slane %v2648, %v4712
        %v4714 = vlaneseq
        %v4715 = vshrl.u32 %v4714, 7
        %v4716 = vsub.s32 6, %v4715
        %v4717 = vrot.slane %v2648, %v4716
        %v4718 = vlaneseq
        %v4719 = vshrl.u32 %v4718, 7
        %v4720 = vsub.s32 7, %v4719
        %v4721 = vrot.slane %v2648, %v4720
        %v4722 = vlaneseq
        %v4723 = vshrl.u32 %v4722, 7
        %v4724 = vsub.s32 0, %v4723
        %v4725 = vrot.slane %v2653, %v4724
        %v4726 = vlaneseq
        %v4727 = vshrl.u32 %v4726, 7
        %v4728 = vsub.s32 1, %v4727
        %v4729 = vrot.slane %v2653, %v4728
        %v4730 = vlaneseq
        %v4731 = vshrl.u32 %v4730, 7
        %v4732 = vsub.s32 2, %v4731
        %v4733 = vrot.slane %v2653, %v4732
        %v4734 = vlaneseq
        %v4735 = vshrl.u32 %v4734, 7
        %v4736 = vsub.s32 3, %v4735
        %v4737 = vrot.slane %v2653, %v4736
        %v4738 = vlaneseq
        %v4739 = vshrl.u32 %v4738, 7
        %v4740 = vsub.s32 4, %v4739
        %v4741 = vrot.slane %v2653, %v4740
        %v4742 = vlaneseq
        %v4743 = vshrl.u32 %v4742, 7
        %v4744 = vsub.s32 5, %v4743
        %v4745 = vrot.slane %v2653, %v4744
        %v4746 = vlaneseq
        %v4747 = vshrl.u32 %v4746, 7
        %v4748 = vsub.s32 6, %v4747
        %v4749 = vrot.slane %v2653, %v4748
        %v4750 = vlaneseq
        %v4751 = vshrl.u32 %v4750, 7
        %v4752 = vsub.s32 7, %v4751
        %v4753 = vrot.slane %v2653, %v4752
        %v4754 = vlaneseq
        %v4755 = vshrl.u32 %v4754, 7
        %v4756 = vsub.s32 0, %v4755
        %v4757 = vrot.slane %v2658, %v4756
        %v4758 = vlaneseq
        %v4759 = vshrl.u32 %v4758, 7
        %v4760 = vsub.s32 1, %v4759
        %v4761 = vrot.slane %v2658, %v4760
        %v4762 = vlaneseq
        %v4763 = vshrl.u32 %v4762, 7
        %v4764 = vsub.s32 2, %v4763
        %v4765 = vrot.slane %v2658, %v4764
        %v4766 = vlaneseq
        %v4767 = vshrl.u32 %v4766, 7
        %v4768 = vsub.s32 3, %v4767
        %v4769 = vrot.slane %v2658, %v4768
        %v4770 = vlaneseq
        %v4771 = vshrl.u32 %v4770, 7
        %v4772 = vsub.s32 4, %v4771
        %v4773 = vrot.slane %v2658, %v4772
        %v4774 = vlaneseq
        %v4775 = vshrl.u32 %v4774, 7
        %v4776 = vsub.s32 5, %v4775
        %v4777 = vrot.slane %v2658, %v4776
        %v4778 = vlaneseq
        %v4779 = vshrl.u32 %v4778, 7
        %v4780 = vsub.s32 6, %v4779
        %v4781 = vrot.slane %v2658, %v4780
        %v4782 = vlaneseq
        %v4783 = vshrl.u32 %v4782, 7
        %v4784 = vsub.s32 7, %v4783
        %v4785 = vrot.slane %v2658, %v4784
        %v4786 = vlaneseq
        %v4787 = vshrl.u32 %v4786, 7
        %v4788 = vsub.s32 0, %v4787
        %v4789 = vrot.slane %v2663, %v4788
        %v4790 = vlaneseq
        %v4791 = vshrl.u32 %v4790, 7
        %v4792 = vsub.s32 1, %v4791
        %v4793 = vrot.slane %v2663, %v4792
        %v4794 = vlaneseq
        %v4795 = vshrl.u32 %v4794, 7
        %v4796 = vsub.s32 2, %v4795
        %v4797 = vrot.slane %v2663, %v4796
        %v4798 = vlaneseq
        %v4799 = vshrl.u32 %v4798, 7
        %v4800 = vsub.s32 3, %v4799
        %v4801 = vrot.slane %v2663, %v4800
        %v4802 = vlaneseq
        %v4803 = vshrl.u32 %v4802, 7
        %v4804 = vsub.s32 4, %v4803
        %v4805 = vrot.slane %v2663, %v4804
        %v4806 = vlaneseq
        %v4807 = vshrl.u32 %v4806, 7
        %v4808 = vsub.s32 5, %v4807
        %v4809 = vrot.slane %v2663, %v4808
        %v4810 = vlaneseq
        %v4811 = vshrl.u32 %v4810, 7
        %v4812 = vsub.s32 6, %v4811
        %v4813 = vrot.slane %v2663, %v4812
        %v4814 = vlaneseq
        %v4815 = vshrl.u32 %v4814, 7
        %v4816 = vsub.s32 7, %v4815
        %v4817 = vrot.slane %v2663, %v4816
        %v4818 = vlaneseq
        %v4819 = vshrl.u32 %v4818, 7
        %v4820 = vsub.s32 0, %v4819
        %v4821 = vrot.slane %v2668, %v4820
        %v4822 = vlaneseq
        %v4823 = vshrl.u32 %v4822, 7
        %v4824 = vsub.s32 1, %v4823
        %v4825 = vrot.slane %v2668, %v4824
        %v4826 = vlaneseq
        %v4827 = vshrl.u32 %v4826, 7
        %v4828 = vsub.s32 2, %v4827
        %v4829 = vrot.slane %v2668, %v4828
        %v4830 = vlaneseq
        %v4831 = vshrl.u32 %v4830, 7
        %v4832 = vsub.s32 3, %v4831
        %v4833 = vrot.slane %v2668, %v4832
        %v4834 = vlaneseq
        %v4835 = vshrl.u32 %v4834, 7
        %v4836 = vsub.s32 4, %v4835
        %v4837 = vrot.slane %v2668, %v4836
        %v4838 = vlaneseq
        %v4839 = vshrl.u32 %v4838, 7
        %v4840 = vsub.s32 5, %v4839
        %v4841 = vrot.slane %v2668, %v4840
        %v4842 = vlaneseq
        %v4843 = vshrl.u32 %v4842, 7
        %v4844 = vsub.s32 6, %v4843
        %v4845 = vrot.slane %v2668, %v4844
        %v4846 = vlaneseq
        %v4847 = vshrl.u32 %v4846, 7
        %v4848 = vsub.s32 7, %v4847
        %v4849 = vrot.slane %v2668, %v4848
        %v4850 = vlaneseq
        %v4851 = vshrl.u32 %v4850, 7
        %v4852 = vsub.s32 0, %v4851
        %v4853 = vrot.slane %v2673, %v4852
        %v4854 = vlaneseq
        %v4855 = vshrl.u32 %v4854, 7
        %v4856 = vsub.s32 1, %v4855
        %v4857 = vrot.slane %v2673, %v4856
        %v4858 = vlaneseq
        %v4859 = vshrl.u32 %v4858, 7
        %v4860 = vsub.s32 2, %v4859
        %v4861 = vrot.slane %v2673, %v4860
        %v4862 = vlaneseq
        %v4863 = vshrl.u32 %v4862, 7
        %v4864 = vsub.s32 3, %v4863
        %v4865 = vrot.slane %v2673, %v4864
        %v4866 = vlaneseq
        %v4867 = vshrl.u32 %v4866, 7
        %v4868 = vsub.s32 4, %v4867
        %v4869 = vrot.slane %v2673, %v4868
        %v4870 = vlaneseq
        %v4871 = vshrl.u32 %v4870, 7
        %v4872 = vsub.s32 5, %v4871
        %v4873 = vrot.slane %v2673, %v4872
        %v4874 = vlaneseq
        %v4875 = vshrl.u32 %v4874, 7
        %v4876 = vsub.s32 6, %v4875
        %v4877 = vrot.slane %v2673, %v4876
        %v4878 = vlaneseq
        %v4879 = vshrl.u32 %v4878, 7
        %v4880 = vsub.s32 7, %v4879
        %v4881 = vrot.slane %v2673, %v4880
        %v4882 = vlaneseq
        %v4883 = vshrl.u32 %v4882, 7
        %v4884 = vsub.s32 0, %v4883
        %v4885 = vrot.slane %v2678, %v4884
        %v4886 = vlaneseq
        %v4887 = vshrl.u32 %v4886, 7
        %v4888 = vsub.s32 1, %v4887
        %v4889 = vrot.slane %v2678, %v4888
        %v4890 = vlaneseq
        %v4891 = vshrl.u32 %v4890, 7
        %v4892 = vsub.s32 2, %v4891
        %v4893 = vrot.slane %v2678, %v4892
        %v4894 = vlaneseq
        %v4895 = vshrl.u32 %v4894, 7
        %v4896 = vsub.s32 3, %v4895
        %v4897 = vrot.slane %v2678, %v4896
        %v4898 = vlaneseq
        %v4899 = vshrl.u32 %v4898, 7
        %v4900 = vsub.s32 4, %v4899
        %v4901 = vrot.slane %v2678, %v4900
        %v4902 = vlaneseq
        %v4903 = vshrl.u32 %v4902, 7
        %v4904 = vsub.s32 5, %v4903
        %v4905 = vrot.slane %v2678, %v4904
        %v4906 = vlaneseq
        %v4907 = vshrl.u32 %v4906, 7
        %v4908 = vsub.s32 6, %v4907
        %v4909 = vrot.slane %v2678, %v4908
        %v4910 = vlaneseq
        %v4911 = vshrl.u32 %v4910, 7
        %v4912 = vsub.s32 7, %v4911
        %v4913 = vrot.slane %v2678, %v4912
        %v4914 = vlaneseq
        %v4915 = vshrl.u32 %v4914, 7
        %v4916 = vsub.s32 0, %v4915
        %v4917 = vrot.slane %v2683, %v4916
        %v4918 = vlaneseq
        %v4919 = vshrl.u32 %v4918, 7
        %v4920 = vsub.s32 1, %v4919
        %v4921 = vrot.slane %v2683, %v4920
        %v4922 = vlaneseq
        %v4923 = vshrl.u32 %v4922, 7
        %v4924 = vsub.s32 2, %v4923
        %v4925 = vrot.slane %v2683, %v4924
        %v4926 = vlaneseq
        %v4927 = vshrl.u32 %v4926, 7
        %v4928 = vsub.s32 3, %v4927
        %v4929 = vrot.slane %v2683, %v4928
        %v4930 = vlaneseq
        %v4931 = vshrl.u32 %v4930, 7
        %v4932 = vsub.s32 4, %v4931
        %v4933 = vrot.slane %v2683, %v4932
        %v4934 = vlaneseq
        %v4935 = vshrl.u32 %v4934, 7
        %v4936 = vsub.s32 5, %v4935
        %v4937 = vrot.slane %v2683, %v4936
        %v4938 = vlaneseq
        %v4939 = vshrl.u32 %v4938, 7
        %v4940 = vsub.s32 6, %v4939
        %v4941 = vrot.slane %v2683, %v4940
        %v4942 = vlaneseq
        %v4943 = vshrl.u32 %v4942, 7
        %v4944 = vsub.s32 7, %v4943
        %v4945 = vrot.slane %v2683, %v4944
        %v4946 = vlaneseq
        %v4947 = vshrl.u32 %v4946, 7
        %v4948 = vsub.s32 0, %v4947
        %v4949 = vrot.slane %v2688, %v4948
        %v4950 = vlaneseq
        %v4951 = vshrl.u32 %v4950, 7
        %v4952 = vsub.s32 1, %v4951
        %v4953 = vrot.slane %v2688, %v4952
        %v4954 = vlaneseq
        %v4955 = vshrl.u32 %v4954, 7
        %v4956 = vsub.s32 2, %v4955
        %v4957 = vrot.slane %v2688, %v4956
        %v4958 = vlaneseq
        %v4959 = vshrl.u32 %v4958, 7
        %v4960 = vsub.s32 3, %v4959
        %v4961 = vrot.slane %v2688, %v4960
        %v4962 = vlaneseq
        %v4963 = vshrl.u32 %v4962, 7
        %v4964 = vsub.s32 4, %v4963
        %v4965 = vrot.slane %v2688, %v4964
        %v4966 = vlaneseq
        %v4967 = vshrl.u32 %v4966, 7
        %v4968 = vsub.s32 5, %v4967
        %v4969 = vrot.slane %v2688, %v4968
        %v4970 = vlaneseq
        %v4971 = vshrl.u32 %v4970, 7
        %v4972 = vsub.s32 6, %v4971
        %v4973 = vrot.slane %v2688, %v4972
        %v4974 = vlaneseq
        %v4975 = vshrl.u32 %v4974, 7
        %v4976 = vsub.s32 7, %v4975
        %v4977 = vrot.slane %v2688, %v4976
        %v4978 = vlaneseq
        %v4979 = vshrl.u32 %v4978, 7
        %v4980 = vsub.s32 0, %v4979
        %v4981 = vrot.slane %v2693, %v4980
        %v4982 = vlaneseq
        %v4983 = vshrl.u32 %v4982, 7
        %v4984 = vsub.s32 1, %v4983
        %v4985 = vrot.slane %v2693, %v4984
        %v4986 = vlaneseq
        %v4987 = vshrl.u32 %v4986, 7
        %v4988 = vsub.s32 2, %v4987
        %v4989 = vrot.slane %v2693, %v4988
        %v4990 = vlaneseq
        %v4991 = vshrl.u32 %v4990, 7
        %v4992 = vsub.s32 3, %v4991
        %v4993 = vrot.slane %v2693, %v4992
        %v4994 = vlaneseq
        %v4995 = vshrl.u32 %v4994, 7
        %v4996 = vsub.s32 4, %v4995
        %v4997 = vrot.slane %v2693, %v4996
        %v4998 = vlaneseq
        %v4999 = vshrl.u32 %v4998, 7
        %v5000 = vsub.s32 5, %v4999
        %v5001 = vrot.slane %v2693, %v5000
        %v5002 = vlaneseq
        %v5003 = vshrl.u32 %v5002, 7
        %v5004 = vsub.s32 6, %v5003
        %v5005 = vrot.slane %v2693, %v5004
        %v5006 = vlaneseq
        %v5007 = vshrl.u32 %v5006, 7
        %v5008 = vsub.s32 7, %v5007
        %v5009 = vrot.slane %v2693, %v5008
        %v5010 = vlaneseq
        %v5011 = vshrl.u32 %v5010, 7
        %v5012 = vsub.s32 0, %v5011
        %v5013 = vrot.slane %v2698, %v5012
        %v5014 = vlaneseq
        %v5015 = vshrl.u32 %v5014, 7
        %v5016 = vsub.s32 1, %v5015
        %v5017 = vrot.slane %v2698, %v5016
        %v5018 = vlaneseq
        %v5019 = vshrl.u32 %v5018, 7
        %v5020 = vsub.s32 2, %v5019
        %v5021 = vrot.slane %v2698, %v5020
        %v5022 = vlaneseq
        %v5023 = vshrl.u32 %v5022, 7
        %v5024 = vsub.s32 3, %v5023
        %v5025 = vrot.slane %v2698, %v5024
        %v5026 = vlaneseq
        %v5027 = vshrl.u32 %v5026, 7
        %v5028 = vsub.s32 4, %v5027
        %v5029 = vrot.slane %v2698, %v5028
        %v5030 = vlaneseq
        %v5031 = vshrl.u32 %v5030, 7
        %v5032 = vsub.s32 5, %v5031
        %v5033 = vrot.slane %v2698, %v5032
        %v5034 = vlaneseq
        %v5035 = vshrl.u32 %v5034, 7
        %v5036 = vsub.s32 6, %v5035
        %v5037 = vrot.slane %v2698, %v5036
        %v5038 = vlaneseq
        %v5039 = vshrl.u32 %v5038, 7
        %v5040 = vsub.s32 7, %v5039
        %v5041 = vrot.slane %v2698, %v5040
        %v5042 = vlaneseq
        %v5043 = vshrl.u32 %v5042, 7
        %v5044 = vsub.s32 0, %v5043
        %v5045 = vrot.slane %v2703, %v5044
        %v5046 = vlaneseq
        %v5047 = vshrl.u32 %v5046, 7
        %v5048 = vsub.s32 1, %v5047
        %v5049 = vrot.slane %v2703, %v5048
        %v5050 = vlaneseq
        %v5051 = vshrl.u32 %v5050, 7
        %v5052 = vsub.s32 2, %v5051
        %v5053 = vrot.slane %v2703, %v5052
        %v5054 = vlaneseq
        %v5055 = vshrl.u32 %v5054, 7
        %v5056 = vsub.s32 3, %v5055
        %v5057 = vrot.slane %v2703, %v5056
        %v5058 = vlaneseq
        %v5059 = vshrl.u32 %v5058, 7
        %v5060 = vsub.s32 4, %v5059
        %v5061 = vrot.slane %v2703, %v5060
        %v5062 = vlaneseq
        %v5063 = vshrl.u32 %v5062, 7
        %v5064 = vsub.s32 5, %v5063
        %v5065 = vrot.slane %v2703, %v5064
        %v5066 = vlaneseq
        %v5067 = vshrl.u32 %v5066, 7
        %v5068 = vsub.s32 6, %v5067
        %v5069 = vrot.slane %v2703, %v5068
        %v5070 = vlaneseq
        %v5071 = vshrl.u32 %v5070, 7
        %v5072 = vsub.s32 7, %v5071
        %v5073 = vrot.slane %v2703, %v5072
        %v5074 = vlaneseq
        %v5075 = vshrl.u32 %v5074, 7
        %v5076 = vsub.s32 0, %v5075
        %v5077 = vrot.slane %v2708, %v5076
        %v5078 = vlaneseq
        %v5079 = vshrl.u32 %v5078, 7
        %v5080 = vsub.s32 1, %v5079
        %v5081 = vrot.slane %v2708, %v5080
        %v5082 = vlaneseq
        %v5083 = vshrl.u32 %v5082, 7
        %v5084 = vsub.s32 2, %v5083
        %v5085 = vrot.slane %v2708, %v5084
        %v5086 = vlaneseq
        %v5087 = vshrl.u32 %v5086, 7
        %v5088 = vsub.s32 3, %v5087
        %v5089 = vrot.slane %v2708, %v5088
        %v5090 = vlaneseq
        %v5091 = vshrl.u32 %v5090, 7
        %v5092 = vsub.s32 4, %v5091
        %v5093 = vrot.slane %v2708, %v5092
        %v5094 = vlaneseq
        %v5095 = vshrl.u32 %v5094, 7
        %v5096 = vsub.s32 5, %v5095
        %v5097 = vrot.slane %v2708, %v5096
        %v5098 = vlaneseq
        %v5099 = vshrl.u32 %v5098, 7
        %v5100 = vsub.s32 6, %v5099
        %v5101 = vrot.slane %v2708, %v5100
        %v5102 = vlaneseq
        %v5103 = vshrl.u32 %v5102, 7
        %v5104 = vsub.s32 7, %v5103
        %v5105 = vrot.slane %v2708, %v5104
        %v5106 = vcombine.low %v3061, %v3065
        %v5107 = vcombine.low %v3069, %v3073
        %v5108 = vcombine.low %v3077, %v3081
        %v5109 = vcombine.low %v3085, %v3089
        %v5111 = vunpack.c.l.s4 1966171168
        %v5112 = vunpack.c.0.s8 %v5111
        %v5113 = vlaneseq
        %v5114 = vshrl.u32 %v5113, 7
        %v5115 = vsub.s32 %v5112, %v5114
        %v5116 = vrot.slane %v5106, %v5115
        %v5118 = vunpack.c.l.s4 1966171168
        %v5119 = vunpack.c.0.s8 %v5118
        %v5120 = vlaneseq
        %v5121 = vshrl.u32 %v5120, 7
        %v5122 = vsub.s32 %v5119, %v5121
        %v5123 = vrot.slane %v5107, %v5122
        %v5125 = vunpack.c.l.s4 1966171168
        %v5126 = vunpack.c.0.s8 %v5125
        %v5127 = vlaneseq
        %v5128 = vshrl.u32 %v5127, 7
        %v5129 = vsub.s32 %v5126, %v5128
        %v5130 = vrot.slane %v5108, %v5129
        %v5132 = vunpack.c.l.s4 1966171168
        %v5133 = vunpack.c.0.s8 %v5132
        %v5134 = vlaneseq
        %v5135 = vshrl.u32 %v5134, 7
        %v5136 = vsub.s32 %v5133, %v5135
        %v5137 = vrot.slane %v5109, %v5136
        %v5138 = vcombine.low %v5116, %v5123
        %v5139 = vcombine.low %v5130, %v5137
        %v5141 = vunpack.c.l.s4 1966171168
        %v5142 = vunpack.c.0.s8 %v5141
        %v5143 = vlaneseq
        %v5144 = vshrl.u32 %v5143, 7
        %v5145 = vsub.s32 %v5142, %v5144
        %v5146 = vrot.slane %v5138, %v5145
        %v5148 = vunpack.c.l.s4 1966171168
        %v5149 = vunpack.c.0.s8 %v5148
        %v5150 = vlaneseq
        %v5151 = vshrl.u32 %v5150, 7
        %v5152 = vsub.s32 %v5149, %v5151
        %v5153 = vrot.slane %v5139, %v5152
        %v5154 = vcombine.low %v5146, %v5153
        %v5155 = vcombine.low %v3093, %v3097
        %v5156 = vcombine.low %v3101, %v3105
        %v5157 = vcombine.low %v3109, %v3113
        %v5158 = vcombine.low %v3117, %v3121
        %v5160 = vunpack.c.l.s4 1966171168
        %v5161 = vunpack.c.0.s8 %v5160
        %v5162 = vlaneseq
        %v5163 = vshrl.u32 %v5162, 7
        %v5164 = vsub.s32 %v5161, %v5163
        %v5165 = vrot.slane %v5155, %v5164
        %v5167 = vunpack.c.l.s4 1966171168
        %v5168 = vunpack.c.0.s8 %v5167
        %v5169 = vlaneseq
        %v5170 = vshrl.u32 %v5169, 7
        %v5171 = vsub.s32 %v5168, %v5170
        %v5172 = vrot.slane %v5156, %v5171
        %v5174 = vunpack.c.l.s4 1966171168
        %v5175 = vunpack.c.0.s8 %v5174
        %v5176 = vlaneseq
        %v5177 = vshrl.u32 %v5176, 7
        %v5178 = vsub.s32 %v5175, %v5177
        %v5179 = vrot.slane %v5157, %v5178
        %v5181 = vunpack.c.l.s4 1966171168
        %v5182 = vunpack.c.0.s8 %v5181
        %v5183 = vlaneseq
        %v5184 = vshrl.u32 %v5183, 7
        %v5185 = vsub.s32 %v5182, %v5184
        %v5186 = vrot.slane %v5158, %v5185
        %v5187 = vcombine.low %v5165, %v5172
        %v5188 = vcombine.low %v5179, %v5186
        %v5190 = vunpack.c.l.s4 1966171168
        %v5191 = vunpack.c.0.s8 %v5190
        %v5192 = vlaneseq
        %v5193 = vshrl.u32 %v5192, 7
        %v5194 = vsub.s32 %v5191, %v5193
        %v5195 = vrot.slane %v5187, %v5194
        %v5197 = vunpack.c.l.s4 1966171168
        %v5198 = vunpack.c.0.s8 %v5197
        %v5199 = vlaneseq
        %v5200 = vshrl.u32 %v5199, 7
        %v5201 = vsub.s32 %v5198, %v5200
        %v5202 = vrot.slane %v5188, %v5201
        %v5203 = vcombine.low %v5195, %v5202
        %v5204 = vcombine.low %v3125, %v3129
        %v5205 = vcombine.low %v3133, %v3137
        %v5206 = vcombine.low %v3141, %v3145
        %v5207 = vcombine.low %v3149, %v3153
        %v5209 = vunpack.c.l.s4 1966171168
        %v5210 = vunpack.c.0.s8 %v5209
        %v5211 = vlaneseq
        %v5212 = vshrl.u32 %v5211, 7
        %v5213 = vsub.s32 %v5210, %v5212
        %v5214 = vrot.slane %v5204, %v5213
        %v5216 = vunpack.c.l.s4 1966171168
        %v5217 = vunpack.c.0.s8 %v5216
        %v5218 = vlaneseq
        %v5219 = vshrl.u32 %v5218, 7
        %v5220 = vsub.s32 %v5217, %v5219
        %v5221 = vrot.slane %v5205, %v5220
        %v5223 = vunpack.c.l.s4 1966171168
        %v5224 = vunpack.c.0.s8 %v5223
        %v5225 = vlaneseq
        %v5226 = vshrl.u32 %v5225, 7
        %v5227 = vsub.s32 %v5224, %v5226
        %v5228 = vrot.slane %v5206, %v5227
        %v5230 = vunpack.c.l.s4 1966171168
        %v5231 = vunpack.c.0.s8 %v5230
        %v5232 = vlaneseq
        %v5233 = vshrl.u32 %v5232, 7
        %v5234 = vsub.s32 %v5231, %v5233
        %v5235 = vrot.slane %v5207, %v5234
        %v5236 = vcombine.low %v5214, %v5221
        %v5237 = vcombine.low %v5228, %v5235
        %v5239 = vunpack.c.l.s4 1966171168
        %v5240 = vunpack.c.0.s8 %v5239
        %v5241 = vlaneseq
        %v5242 = vshrl.u32 %v5241, 7
        %v5243 = vsub.s32 %v5240, %v5242
        %v5244 = vrot.slane %v5236, %v5243
        %v5246 = vunpack.c.l.s4 1966171168
        %v5247 = vunpack.c.0.s8 %v5246
        %v5248 = vlaneseq
        %v5249 = vshrl.u32 %v5248, 7
        %v5250 = vsub.s32 %v5247, %v5249
        %v5251 = vrot.slane %v5237, %v5250
        %v5252 = vcombine.low %v5244, %v5251
        %v5253 = vcombine.low %v3157, %v3161
        %v5254 = vcombine.low %v3165, %v3169
        %v5255 = vcombine.low %v3173, %v3177
        %v5256 = vcombine.low %v3181, %v3185
        %v5258 = vunpack.c.l.s4 1966171168
        %v5259 = vunpack.c.0.s8 %v5258
        %v5260 = vlaneseq
        %v5261 = vshrl.u32 %v5260, 7
        %v5262 = vsub.s32 %v5259, %v5261
        %v5263 = vrot.slane %v5253, %v5262
        %v5265 = vunpack.c.l.s4 1966171168
        %v5266 = vunpack.c.0.s8 %v5265
        %v5267 = vlaneseq
        %v5268 = vshrl.u32 %v5267, 7
        %v5269 = vsub.s32 %v5266, %v5268
        %v5270 = vrot.slane %v5254, %v5269
        %v5272 = vunpack.c.l.s4 1966171168
        %v5273 = vunpack.c.0.s8 %v5272
        %v5274 = vlaneseq
        %v5275 = vshrl.u32 %v5274, 7
        %v5276 = vsub.s32 %v5273, %v5275
        %v5277 = vrot.slane %v5255, %v5276
        %v5279 = vunpack.c.l.s4 1966171168
        %v5280 = vunpack.c.0.s8 %v5279
        %v5281 = vlaneseq
        %v5282 = vshrl.u32 %v5281, 7
        %v5283 = vsub.s32 %v5280, %v5282
        %v5284 = vrot.slane %v5256, %v5283
        %v5285 = vcombine.low %v5263, %v5270
        %v5286 = vcombine.low %v5277, %v5284
        %v5288 = vunpack.c.l.s4 1966171168
        %v5289 = vunpack.c.0.s8 %v5288
        %v5290 = vlaneseq
        %v5291 = vshrl.u32 %v5290, 7
        %v5292 = vsub.s32 %v5289, %v5291
        %v5293 = vrot.slane %v5285, %v5292
        %v5295 = vunpack.c.l.s4 1966171168
        %v5296 = vunpack.c.0.s8 %v5295
        %v5297 = vlaneseq
        %v5298 = vshrl.u32 %v5297, 7
        %v5299 = vsub.s32 %v5296, %v5298
        %v5300 = vrot.slane %v5286, %v5299
        %v5301 = vcombine.low %v5293, %v5300
        %v5302 = vcombine.low %v3189, %v3193
        %v5303 = vcombine.low %v3197, %v3201
        %v5304 = vcombine.low %v3205, %v3209
        %v5305 = vcombine.low %v3213, %v3217
        %v5307 = vunpack.c.l.s4 1966171168
        %v5308 = vunpack.c.0.s8 %v5307
        %v5309 = vlaneseq
        %v5310 = vshrl.u32 %v5309, 7
        %v5311 = vsub.s32 %v5308, %v5310
        %v5312 = vrot.slane %v5302, %v5311
        %v5314 = vunpack.c.l.s4 1966171168
        %v5315 = vunpack.c.0.s8 %v5314
        %v5316 = vlaneseq
        %v5317 = vshrl.u32 %v5316, 7
        %v5318 = vsub.s32 %v5315, %v5317
        %v5319 = vrot.slane %v5303, %v5318
        %v5321 = vunpack.c.l.s4 1966171168
        %v5322 = vunpack.c.0.s8 %v5321
        %v5323 = vlaneseq
        %v5324 = vshrl.u32 %v5323, 7
        %v5325 = vsub.s32 %v5322, %v5324
        %v5326 = vrot.slane %v5304, %v5325
        %v5328 = vunpack.c.l.s4 1966171168
        %v5329 = vunpack.c.0.s8 %v5328
        %v5330 = vlaneseq
        %v5331 = vshrl.u32 %v5330, 7
        %v5332 = vsub.s32 %v5329, %v5331
        %v5333 = vrot.slane %v5305, %v5332
        %v5334 = vcombine.low %v5312, %v5319
        %v5335 = vcombine.low %v5326, %v5333
        %v5337 = vunpack.c.l.s4 1966171168
        %v5338 = vunpack.c.0.s8 %v5337
        %v5339 = vlaneseq
        %v5340 = vshrl.u32 %v5339, 7
        %v5341 = vsub.s32 %v5338, %v5340
        %v5342 = vrot.slane %v5334, %v5341
        %v5344 = vunpack.c.l.s4 1966171168
        %v5345 = vunpack.c.0.s8 %v5344
        %v5346 = vlaneseq
        %v5347 = vshrl.u32 %v5346, 7
        %v5348 = vsub.s32 %v5345, %v5347
        %v5349 = vrot.slane %v5335, %v5348
        %v5350 = vcombine.low %v5342, %v5349
        %v5351 = vcombine.low %v3221, %v3225
        %v5352 = vcombine.low %v3229, %v3233
        %v5353 = vcombine.low %v3237, %v3241
        %v5354 = vcombine.low %v3245, %v3249
        %v5356 = vunpack.c.l.s4 1966171168
        %v5357 = vunpack.c.0.s8 %v5356
        %v5358 = vlaneseq
        %v5359 = vshrl.u32 %v5358, 7
        %v5360 = vsub.s32 %v5357, %v5359
        %v5361 = vrot.slane %v5351, %v5360
        %v5363 = vunpack.c.l.s4 1966171168
        %v5364 = vunpack.c.0.s8 %v5363
        %v5365 = vlaneseq
        %v5366 = vshrl.u32 %v5365, 7
        %v5367 = vsub.s32 %v5364, %v5366
        %v5368 = vrot.slane %v5352, %v5367
        %v5370 = vunpack.c.l.s4 1966171168
        %v5371 = vunpack.c.0.s8 %v5370
        %v5372 = vlaneseq
        %v5373 = vshrl.u32 %v5372, 7
        %v5374 = vsub.s32 %v5371, %v5373
        %v5375 = vrot.slane %v5353, %v5374
        %v5377 = vunpack.c.l.s4 1966171168
        %v5378 = vunpack.c.0.s8 %v5377
        %v5379 = vlaneseq
        %v5380 = vshrl.u32 %v5379, 7
        %v5381 = vsub.s32 %v5378, %v5380
        %v5382 = vrot.slane %v5354, %v5381
        %v5383 = vcombine.low %v5361, %v5368
        %v5384 = vcombine.low %v5375, %v5382
        %v5386 = vunpack.c.l.s4 1966171168
        %v5387 = vunpack.c.0.s8 %v5386
        %v5388 = vlaneseq
        %v5389 = vshrl.u32 %v5388, 7
        %v5390 = vsub.s32 %v5387, %v5389
        %v5391 = vrot.slane %v5383, %v5390
        %v5393 = vunpack.c.l.s4 1966171168
        %v5394 = vunpack.c.0.s8 %v5393
        %v5395 = vlaneseq
        %v5396 = vshrl.u32 %v5395, 7
        %v5397 = vsub.s32 %v5394, %v5396
        %v5398 = vrot.slane %v5384, %v5397
        %v5399 = vcombine.low %v5391, %v5398
        %v5400 = vcombine.low %v3253, %v3257
        %v5401 = vcombine.low %v3261, %v3265
        %v5402 = vcombine.low %v3269, %v3273
        %v5403 = vcombine.low %v3277, %v3281
        %v5405 = vunpack.c.l.s4 1966171168
        %v5406 = vunpack.c.0.s8 %v5405
        %v5407 = vlaneseq
        %v5408 = vshrl.u32 %v5407, 7
        %v5409 = vsub.s32 %v5406, %v5408
        %v5410 = vrot.slane %v5400, %v5409
        %v5412 = vunpack.c.l.s4 1966171168
        %v5413 = vunpack.c.0.s8 %v5412
        %v5414 = vlaneseq
        %v5415 = vshrl.u32 %v5414, 7
        %v5416 = vsub.s32 %v5413, %v5415
        %v5417 = vrot.slane %v5401, %v5416
        %v5419 = vunpack.c.l.s4 1966171168
        %v5420 = vunpack.c.0.s8 %v5419
        %v5421 = vlaneseq
        %v5422 = vshrl.u32 %v5421, 7
        %v5423 = vsub.s32 %v5420, %v5422
        %v5424 = vrot.slane %v5402, %v5423
        %v5426 = vunpack.c.l.s4 1966171168
        %v5427 = vunpack.c.0.s8 %v5426
        %v5428 = vlaneseq
        %v5429 = vshrl.u32 %v5428, 7
        %v5430 = vsub.s32 %v5427, %v5429
        %v5431 = vrot.slane %v5403, %v5430
        %v5432 = vcombine.low %v5410, %v5417
        %v5433 = vcombine.low %v5424, %v5431
        %v5435 = vunpack.c.l.s4 1966171168
        %v5436 = vunpack.c.0.s8 %v5435
        %v5437 = vlaneseq
        %v5438 = vshrl.u32 %v5437, 7
        %v5439 = vsub.s32 %v5436, %v5438
        %v5440 = vrot.slane %v5432, %v5439
        %v5442 = vunpack.c.l.s4 1966171168
        %v5443 = vunpack.c.0.s8 %v5442
        %v5444 = vlaneseq
        %v5445 = vshrl.u32 %v5444, 7
        %v5446 = vsub.s32 %v5443, %v5445
        %v5447 = vrot.slane %v5433, %v5446
        %v5448 = vcombine.low %v5440, %v5447
        %v5449 = vcombine.low %v3285, %v3289
        %v5450 = vcombine.low %v3293, %v3297
        %v5451 = vcombine.low %v3301, %v3305
        %v5452 = vcombine.low %v3309, %v3313
        %v5454 = vunpack.c.l.s4 1966171168
        %v5455 = vunpack.c.0.s8 %v5454
        %v5456 = vlaneseq
        %v5457 = vshrl.u32 %v5456, 7
        %v5458 = vsub.s32 %v5455, %v5457
        %v5459 = vrot.slane %v5449, %v5458
        %v5461 = vunpack.c.l.s4 1966171168
        %v5462 = vunpack.c.0.s8 %v5461
        %v5463 = vlaneseq
        %v5464 = vshrl.u32 %v5463, 7
        %v5465 = vsub.s32 %v5462, %v5464
        %v5466 = vrot.slane %v5450, %v5465
        %v5468 = vunpack.c.l.s4 1966171168
        %v5469 = vunpack.c.0.s8 %v5468
        %v5470 = vlaneseq
        %v5471 = vshrl.u32 %v5470, 7
        %v5472 = vsub.s32 %v5469, %v5471
        %v5473 = vrot.slane %v5451, %v5472
        %v5475 = vunpack.c.l.s4 1966171168
        %v5476 = vunpack.c.0.s8 %v5475
        %v5477 = vlaneseq
        %v5478 = vshrl.u32 %v5477, 7
        %v5479 = vsub.s32 %v5476, %v5478
        %v5480 = vrot.slane %v5452, %v5479
        %v5481 = vcombine.low %v5459, %v5466
        %v5482 = vcombine.low %v5473, %v5480
        %v5484 = vunpack.c.l.s4 1966171168
        %v5485 = vunpack.c.0.s8 %v5484
        %v5486 = vlaneseq
        %v5487 = vshrl.u32 %v5486, 7
        %v5488 = vsub.s32 %v5485, %v5487
        %v5489 = vrot.slane %v5481, %v5488
        %v5491 = vunpack.c.l.s4 1966171168
        %v5492 = vunpack.c.0.s8 %v5491
        %v5493 = vlaneseq
        %v5494 = vshrl.u32 %v5493, 7
        %v5495 = vsub.s32 %v5492, %v5494
        %v5496 = vrot.slane %v5482, %v5495
        %v5497 = vcombine.low %v5489, %v5496
        %v5498 = vcombine.low %v3317, %v3321
        %v5499 = vcombine.low %v3325, %v3329
        %v5500 = vcombine.low %v3333, %v3337
        %v5501 = vcombine.low %v3341, %v3345
        %v5503 = vunpack.c.l.s4 1966171168
        %v5504 = vunpack.c.0.s8 %v5503
        %v5505 = vlaneseq
        %v5506 = vshrl.u32 %v5505, 7
        %v5507 = vsub.s32 %v5504, %v5506
        %v5508 = vrot.slane %v5498, %v5507
        %v5510 = vunpack.c.l.s4 1966171168
        %v5511 = vunpack.c.0.s8 %v5510
        %v5512 = vlaneseq
        %v5513 = vshrl.u32 %v5512, 7
        %v5514 = vsub.s32 %v5511, %v5513
        %v5515 = vrot.slane %v5499, %v5514
        %v5517 = vunpack.c.l.s4 1966171168
        %v5518 = vunpack.c.0.s8 %v5517
        %v5519 = vlaneseq
        %v5520 = vshrl.u32 %v5519, 7
        %v5521 = vsub.s32 %v5518, %v5520
        %v5522 = vrot.slane %v5500, %v5521
        %v5524 = vunpack.c.l.s4 1966171168
        %v5525 = vunpack.c.0.s8 %v5524
        %v5526 = vlaneseq
        %v5527 = vshrl.u32 %v5526, 7
        %v5528 = vsub.s32 %v5525, %v5527
        %v5529 = vrot.slane %v5501, %v5528
        %v5530 = vcombine.low %v5508, %v5515
        %v5531 = vcombine.low %v5522, %v5529
        %v5533 = vunpack.c.l.s4 1966171168
        %v5534 = vunpack.c.0.s8 %v5533
        %v5535 = vlaneseq
        %v5536 = vshrl.u32 %v5535, 7
        %v5537 = vsub.s32 %v5534, %v5536
        %v5538 = vrot.slane %v5530, %v5537
        %v5540 = vunpack.c.l.s4 1966171168
        %v5541 = vunpack.c.0.s8 %v5540
        %v5542 = vlaneseq
        %v5543 = vshrl.u32 %v5542, 7
        %v5544 = vsub.s32 %v5541, %v5543
        %v5545 = vrot.slane %v5531, %v5544
        %v5546 = vcombine.low %v5538, %v5545
        %v5547 = vcombine.low %v3349, %v3353
        %v5548 = vcombine.low %v3357, %v3361
        %v5549 = vcombine.low %v3365, %v3369
        %v5550 = vcombine.low %v3373, %v3377
        %v5552 = vunpack.c.l.s4 1966171168
        %v5553 = vunpack.c.0.s8 %v5552
        %v5554 = vlaneseq
        %v5555 = vshrl.u32 %v5554, 7
        %v5556 = vsub.s32 %v5553, %v5555
        %v5557 = vrot.slane %v5547, %v5556
        %v5559 = vunpack.c.l.s4 1966171168
        %v5560 = vunpack.c.0.s8 %v5559
        %v5561 = vlaneseq
        %v5562 = vshrl.u32 %v5561, 7
        %v5563 = vsub.s32 %v5560, %v5562
        %v5564 = vrot.slane %v5548, %v5563
        %v5566 = vunpack.c.l.s4 1966171168
        %v5567 = vunpack.c.0.s8 %v5566
        %v5568 = vlaneseq
        %v5569 = vshrl.u32 %v5568, 7
        %v5570 = vsub.s32 %v5567, %v5569
        %v5571 = vrot.slane %v5549, %v5570
        %v5573 = vunpack.c.l.s4 1966171168
        %v5574 = vunpack.c.0.s8 %v5573
        %v5575 = vlaneseq
        %v5576 = vshrl.u32 %v5575, 7
        %v5577 = vsub.s32 %v5574, %v5576
        %v5578 = vrot.slane %v5550, %v5577
        %v5579 = vcombine.low %v5557, %v5564
        %v5580 = vcombine.low %v5571, %v5578
        %v5582 = vunpack.c.l.s4 1966171168
        %v5583 = vunpack.c.0.s8 %v5582
        %v5584 = vlaneseq
        %v5585 = vshrl.u32 %v5584, 7
        %v5586 = vsub.s32 %v5583, %v5585
        %v5587 = vrot.slane %v5579, %v5586
        %v5589 = vunpack.c.l.s4 1966171168
        %v5590 = vunpack.c.0.s8 %v5589
        %v5591 = vlaneseq
        %v5592 = vshrl.u32 %v5591, 7
        %v5593 = vsub.s32 %v5590, %v5592
        %v5594 = vrot.slane %v5580, %v5593
        %v5595 = vcombine.low %v5587, %v5594
        %v5596 = vcombine.low %v3381, %v3385
        %v5597 = vcombine.low %v3389, %v3393
        %v5598 = vcombine.low %v3397, %v3401
        %v5599 = vcombine.low %v3405, %v3409
        %v5601 = vunpack.c.l.s4 1966171168
        %v5602 = vunpack.c.0.s8 %v5601
        %v5603 = vlaneseq
        %v5604 = vshrl.u32 %v5603, 7
        %v5605 = vsub.s32 %v5602, %v5604
        %v5606 = vrot.slane %v5596, %v5605
        %v5608 = vunpack.c.l.s4 1966171168
        %v5609 = vunpack.c.0.s8 %v5608
        %v5610 = vlaneseq
        %v5611 = vshrl.u32 %v5610, 7
        %v5612 = vsub.s32 %v5609, %v5611
        %v5613 = vrot.slane %v5597, %v5612
        %v5615 = vunpack.c.l.s4 1966171168
        %v5616 = vunpack.c.0.s8 %v5615
        %v5617 = vlaneseq
        %v5618 = vshrl.u32 %v5617, 7
        %v5619 = vsub.s32 %v5616, %v5618
        %v5620 = vrot.slane %v5598, %v5619
        %v5622 = vunpack.c.l.s4 1966171168
        %v5623 = vunpack.c.0.s8 %v5622
        %v5624 = vlaneseq
        %v5625 = vshrl.u32 %v5624, 7
        %v5626 = vsub.s32 %v5623, %v5625
        %v5627 = vrot.slane %v5599, %v5626
        %v5628 = vcombine.low %v5606, %v5613
        %v5629 = vcombine.low %v5620, %v5627
        %v5631 = vunpack.c.l.s4 1966171168
        %v5632 = vunpack.c.0.s8 %v5631
        %v5633 = vlaneseq
        %v5634 = vshrl.u32 %v5633, 7
        %v5635 = vsub.s32 %v5632, %v5634
        %v5636 = vrot.slane %v5628, %v5635
        %v5638 = vunpack.c.l.s4 1966171168
        %v5639 = vunpack.c.0.s8 %v5638
        %v5640 = vlaneseq
        %v5641 = vshrl.u32 %v5640, 7
        %v5642 = vsub.s32 %v5639, %v5641
        %v5643 = vrot.slane %v5629, %v5642
        %v5644 = vcombine.low %v5636, %v5643
        %v5645 = vcombine.low %v3413, %v3417
        %v5646 = vcombine.low %v3421, %v3425
        %v5647 = vcombine.low %v3429, %v3433
        %v5648 = vcombine.low %v3437, %v3441
        %v5650 = vunpack.c.l.s4 1966171168
        %v5651 = vunpack.c.0.s8 %v5650
        %v5652 = vlaneseq
        %v5653 = vshrl.u32 %v5652, 7
        %v5654 = vsub.s32 %v5651, %v5653
        %v5655 = vrot.slane %v5645, %v5654
        %v5657 = vunpack.c.l.s4 1966171168
        %v5658 = vunpack.c.0.s8 %v5657
        %v5659 = vlaneseq
        %v5660 = vshrl.u32 %v5659, 7
        %v5661 = vsub.s32 %v5658, %v5660
        %v5662 = vrot.slane %v5646, %v5661
        %v5664 = vunpack.c.l.s4 1966171168
        %v5665 = vunpack.c.0.s8 %v5664
        %v5666 = vlaneseq
        %v5667 = vshrl.u32 %v5666, 7
        %v5668 = vsub.s32 %v5665, %v5667
        %v5669 = vrot.slane %v5647, %v5668
        %v5671 = vunpack.c.l.s4 1966171168
        %v5672 = vunpack.c.0.s8 %v5671
        %v5673 = vlaneseq
        %v5674 = vshrl.u32 %v5673, 7
        %v5675 = vsub.s32 %v5672, %v5674
        %v5676 = vrot.slane %v5648, %v5675
        %v5677 = vcombine.low %v5655, %v5662
        %v5678 = vcombine.low %v5669, %v5676
        %v5680 = vunpack.c.l.s4 1966171168
        %v5681 = vunpack.c.0.s8 %v5680
        %v5682 = vlaneseq
        %v5683 = vshrl.u32 %v5682, 7
        %v5684 = vsub.s32 %v5681, %v5683
        %v5685 = vrot.slane %v5677, %v5684
        %v5687 = vunpack.c.l.s4 1966171168
        %v5688 = vunpack.c.0.s8 %v5687
        %v5689 = vlaneseq
        %v5690 = vshrl.u32 %v5689, 7
        %v5691 = vsub.s32 %v5688, %v5690
        %v5692 = vrot.slane %v5678, %v5691
        %v5693 = vcombine.low %v5685, %v5692
        %v5694 = vcombine.low %v3445, %v3449
        %v5695 = vcombine.low %v3453, %v3457
        %v5696 = vcombine.low %v3461, %v3465
        %v5697 = vcombine.low %v3469, %v3473
        %v5699 = vunpack.c.l.s4 1966171168
        %v5700 = vunpack.c.0.s8 %v5699
        %v5701 = vlaneseq
        %v5702 = vshrl.u32 %v5701, 7
        %v5703 = vsub.s32 %v5700, %v5702
        %v5704 = vrot.slane %v5694, %v5703
        %v5706 = vunpack.c.l.s4 1966171168
        %v5707 = vunpack.c.0.s8 %v5706
        %v5708 = vlaneseq
        %v5709 = vshrl.u32 %v5708, 7
        %v5710 = vsub.s32 %v5707, %v5709
        %v5711 = vrot.slane %v5695, %v5710
        %v5713 = vunpack.c.l.s4 1966171168
        %v5714 = vunpack.c.0.s8 %v5713
        %v5715 = vlaneseq
        %v5716 = vshrl.u32 %v5715, 7
        %v5717 = vsub.s32 %v5714, %v5716
        %v5718 = vrot.slane %v5696, %v5717
        %v5720 = vunpack.c.l.s4 1966171168
        %v5721 = vunpack.c.0.s8 %v5720
        %v5722 = vlaneseq
        %v5723 = vshrl.u32 %v5722, 7
        %v5724 = vsub.s32 %v5721, %v5723
        %v5725 = vrot.slane %v5697, %v5724
        %v5726 = vcombine.low %v5704, %v5711
        %v5727 = vcombine.low %v5718, %v5725
        %v5729 = vunpack.c.l.s4 1966171168
        %v5730 = vunpack.c.0.s8 %v5729
        %v5731 = vlaneseq
        %v5732 = vshrl.u32 %v5731, 7
        %v5733 = vsub.s32 %v5730, %v5732
        %v5734 = vrot.slane %v5726, %v5733
        %v5736 = vunpack.c.l.s4 1966171168
        %v5737 = vunpack.c.0.s8 %v5736
        %v5738 = vlaneseq
        %v5739 = vshrl.u32 %v5738, 7
        %v5740 = vsub.s32 %v5737, %v5739
        %v5741 = vrot.slane %v5727, %v5740
        %v5742 = vcombine.low %v5734, %v5741
        %v5743 = vcombine.low %v3477, %v3481
        %v5744 = vcombine.low %v3485, %v3489
        %v5745 = vcombine.low %v3493, %v3497
        %v5746 = vcombine.low %v3501, %v3505
        %v5748 = vunpack.c.l.s4 1966171168
        %v5749 = vunpack.c.0.s8 %v5748
        %v5750 = vlaneseq
        %v5751 = vshrl.u32 %v5750, 7
        %v5752 = vsub.s32 %v5749, %v5751
        %v5753 = vrot.slane %v5743, %v5752
        %v5755 = vunpack.c.l.s4 1966171168
        %v5756 = vunpack.c.0.s8 %v5755
        %v5757 = vlaneseq
        %v5758 = vshrl.u32 %v5757, 7
        %v5759 = vsub.s32 %v5756, %v5758
        %v5760 = vrot.slane %v5744, %v5759
        %v5762 = vunpack.c.l.s4 1966171168
        %v5763 = vunpack.c.0.s8 %v5762
        %v5764 = vlaneseq
        %v5765 = vshrl.u32 %v5764, 7
        %v5766 = vsub.s32 %v5763, %v5765
        %v5767 = vrot.slane %v5745, %v5766
        %v5769 = vunpack.c.l.s4 1966171168
        %v5770 = vunpack.c.0.s8 %v5769
        %v5771 = vlaneseq
        %v5772 = vshrl.u32 %v5771, 7
        %v5773 = vsub.s32 %v5770, %v5772
        %v5774 = vrot.slane %v5746, %v5773
        %v5775 = vcombine.low %v5753, %v5760
        %v5776 = vcombine.low %v5767, %v5774
        %v5778 = vunpack.c.l.s4 1966171168
        %v5779 = vunpack.c.0.s8 %v5778
        %v5780 = vlaneseq
        %v5781 = vshrl.u32 %v5780, 7
        %v5782 = vsub.s32 %v5779, %v5781
        %v5783 = vrot.slane %v5775, %v5782
        %v5785 = vunpack.c.l.s4 1966171168
        %v5786 = vunpack.c.0.s8 %v5785
        %v5787 = vlaneseq
        %v5788 = vshrl.u32 %v5787, 7
        %v5789 = vsub.s32 %v5786, %v5788
        %v5790 = vrot.slane %v5776, %v5789
        %v5791 = vcombine.low %v5783, %v5790
        %v5792 = vcombine.low %v3509, %v3513
        %v5793 = vcombine.low %v3517, %v3521
        %v5794 = vcombine.low %v3525, %v3529
        %v5795 = vcombine.low %v3533, %v3537
        %v5797 = vunpack.c.l.s4 1966171168
        %v5798 = vunpack.c.0.s8 %v5797
        %v5799 = vlaneseq
        %v5800 = vshrl.u32 %v5799, 7
        %v5801 = vsub.s32 %v5798, %v5800
        %v5802 = vrot.slane %v5792, %v5801
        %v5804 = vunpack.c.l.s4 1966171168
        %v5805 = vunpack.c.0.s8 %v5804
        %v5806 = vlaneseq
        %v5807 = vshrl.u32 %v5806, 7
        %v5808 = vsub.s32 %v5805, %v5807
        %v5809 = vrot.slane %v5793, %v5808
        %v5811 = vunpack.c.l.s4 1966171168
        %v5812 = vunpack.c.0.s8 %v5811
        %v5813 = vlaneseq
        %v5814 = vshrl.u32 %v5813, 7
        %v5815 = vsub.s32 %v5812, %v5814
        %v5816 = vrot.slane %v5794, %v5815
        %v5818 = vunpack.c.l.s4 1966171168
        %v5819 = vunpack.c.0.s8 %v5818
        %v5820 = vlaneseq
        %v5821 = vshrl.u32 %v5820, 7
        %v5822 = vsub.s32 %v5819, %v5821
        %v5823 = vrot.slane %v5795, %v5822
        %v5824 = vcombine.low %v5802, %v5809
        %v5825 = vcombine.low %v5816, %v5823
        %v5827 = vunpack.c.l.s4 1966171168
        %v5828 = vunpack.c.0.s8 %v5827
        %v5829 = vlaneseq
        %v5830 = vshrl.u32 %v5829, 7
        %v5831 = vsub.s32 %v5828, %v5830
        %v5832 = vrot.slane %v5824, %v5831
        %v5834 = vunpack.c.l.s4 1966171168
        %v5835 = vunpack.c.0.s8 %v5834
        %v5836 = vlaneseq
        %v5837 = vshrl.u32 %v5836, 7
        %v5838 = vsub.s32 %v5835, %v5837
        %v5839 = vrot.slane %v5825, %v5838
        %v5840 = vcombine.low %v5832, %v5839
        %v5841 = vcombine.low %v3541, %v3545
        %v5842 = vcombine.low %v3549, %v3553
        %v5843 = vcombine.low %v3557, %v3561
        %v5844 = vcombine.low %v3565, %v3569
        %v5846 = vunpack.c.l.s4 1966171168
        %v5847 = vunpack.c.0.s8 %v5846
        %v5848 = vlaneseq
        %v5849 = vshrl.u32 %v5848, 7
        %v5850 = vsub.s32 %v5847, %v5849
        %v5851 = vrot.slane %v5841, %v5850
        %v5853 = vunpack.c.l.s4 1966171168
        %v5854 = vunpack.c.0.s8 %v5853
        %v5855 = vlaneseq
        %v5856 = vshrl.u32 %v5855, 7
        %v5857 = vsub.s32 %v5854, %v5856
        %v5858 = vrot.slane %v5842, %v5857
        %v5860 = vunpack.c.l.s4 1966171168
        %v5861 = vunpack.c.0.s8 %v5860
        %v5862 = vlaneseq
        %v5863 = vshrl.u32 %v5862, 7
        %v5864 = vsub.s32 %v5861, %v5863
        %v5865 = vrot.slane %v5843, %v5864
        %v5867 = vunpack.c.l.s4 1966171168
        %v5868 = vunpack.c.0.s8 %v5867
        %v5869 = vlaneseq
        %v5870 = vshrl.u32 %v5869, 7
        %v5871 = vsub.s32 %v5868, %v5870
        %v5872 = vrot.slane %v5844, %v5871
        %v5873 = vcombine.low %v5851, %v5858
        %v5874 = vcombine.low %v5865, %v5872
        %v5876 = vunpack.c.l.s4 1966171168
        %v5877 = vunpack.c.0.s8 %v5876
        %v5878 = vlaneseq
        %v5879 = vshrl.u32 %v5878, 7
        %v5880 = vsub.s32 %v5877, %v5879
        %v5881 = vrot.slane %v5873, %v5880
        %v5883 = vunpack.c.l.s4 1966171168
        %v5884 = vunpack.c.0.s8 %v5883
        %v5885 = vlaneseq
        %v5886 = vshrl.u32 %v5885, 7
        %v5887 = vsub.s32 %v5884, %v5886
        %v5888 = vrot.slane %v5874, %v5887
        %v5889 = vcombine.low %v5881, %v5888
        %v5890 = vcombine.low %v3573, %v3577
        %v5891 = vcombine.low %v3581, %v3585
        %v5892 = vcombine.low %v3589, %v3593
        %v5893 = vcombine.low %v3597, %v3601
        %v5895 = vunpack.c.l.s4 1966171168
        %v5896 = vunpack.c.0.s8 %v5895
        %v5897 = vlaneseq
        %v5898 = vshrl.u32 %v5897, 7
        %v5899 = vsub.s32 %v5896, %v5898
        %v5900 = vrot.slane %v5890, %v5899
        %v5902 = vunpack.c.l.s4 1966171168
        %v5903 = vunpack.c.0.s8 %v5902
        %v5904 = vlaneseq
        %v5905 = vshrl.u32 %v5904, 7
        %v5906 = vsub.s32 %v5903, %v5905
        %v5907 = vrot.slane %v5891, %v5906
        %v5909 = vunpack.c.l.s4 1966171168
        %v5910 = vunpack.c.0.s8 %v5909
        %v5911 = vlaneseq
        %v5912 = vshrl.u32 %v5911, 7
        %v5913 = vsub.s32 %v5910, %v5912
        %v5914 = vrot.slane %v5892, %v5913
        %v5916 = vunpack.c.l.s4 1966171168
        %v5917 = vunpack.c.0.s8 %v5916
        %v5918 = vlaneseq
        %v5919 = vshrl.u32 %v5918, 7
        %v5920 = vsub.s32 %v5917, %v5919
        %v5921 = vrot.slane %v5893, %v5920
        %v5922 = vcombine.low %v5900, %v5907
        %v5923 = vcombine.low %v5914, %v5921
        %v5925 = vunpack.c.l.s4 1966171168
        %v5926 = vunpack.c.0.s8 %v5925
        %v5927 = vlaneseq
        %v5928 = vshrl.u32 %v5927, 7
        %v5929 = vsub.s32 %v5926, %v5928
        %v5930 = vrot.slane %v5922, %v5929
        %v5932 = vunpack.c.l.s4 1966171168
        %v5933 = vunpack.c.0.s8 %v5932
        %v5934 = vlaneseq
        %v5935 = vshrl.u32 %v5934, 7
        %v5936 = vsub.s32 %v5933, %v5935
        %v5937 = vrot.slane %v5923, %v5936
        %v5938 = vcombine.low %v5930, %v5937
        %v5939 = vcombine.low %v3605, %v3609
        %v5940 = vcombine.low %v3613, %v3617
        %v5941 = vcombine.low %v3621, %v3625
        %v5942 = vcombine.low %v3629, %v3633
        %v5944 = vunpack.c.l.s4 1966171168
        %v5945 = vunpack.c.0.s8 %v5944
        %v5946 = vlaneseq
        %v5947 = vshrl.u32 %v5946, 7
        %v5948 = vsub.s32 %v5945, %v5947
        %v5949 = vrot.slane %v5939, %v5948
        %v5951 = vunpack.c.l.s4 1966171168
        %v5952 = vunpack.c.0.s8 %v5951
        %v5953 = vlaneseq
        %v5954 = vshrl.u32 %v5953, 7
        %v5955 = vsub.s32 %v5952, %v5954
        %v5956 = vrot.slane %v5940, %v5955
        %v5958 = vunpack.c.l.s4 1966171168
        %v5959 = vunpack.c.0.s8 %v5958
        %v5960 = vlaneseq
        %v5961 = vshrl.u32 %v5960, 7
        %v5962 = vsub.s32 %v5959, %v5961
        %v5963 = vrot.slane %v5941, %v5962
        %v5965 = vunpack.c.l.s4 1966171168
        %v5966 = vunpack.c.0.s8 %v5965
        %v5967 = vlaneseq
        %v5968 = vshrl.u32 %v5967, 7
        %v5969 = vsub.s32 %v5966, %v5968
        %v5970 = vrot.slane %v5942, %v5969
        %v5971 = vcombine.low %v5949, %v5956
        %v5972 = vcombine.low %v5963, %v5970
        %v5974 = vunpack.c.l.s4 1966171168
        %v5975 = vunpack.c.0.s8 %v5974
        %v5976 = vlaneseq
        %v5977 = vshrl.u32 %v5976, 7
        %v5978 = vsub.s32 %v5975, %v5977
        %v5979 = vrot.slane %v5971, %v5978
        %v5981 = vunpack.c.l.s4 1966171168
        %v5982 = vunpack.c.0.s8 %v5981
        %v5983 = vlaneseq
        %v5984 = vshrl.u32 %v5983, 7
        %v5985 = vsub.s32 %v5982, %v5984
        %v5986 = vrot.slane %v5972, %v5985
        %v5987 = vcombine.low %v5979, %v5986
        %v5988 = vcombine.low %v3637, %v3641
        %v5989 = vcombine.low %v3645, %v3649
        %v5990 = vcombine.low %v3653, %v3657
        %v5991 = vcombine.low %v3661, %v3665
        %v5993 = vunpack.c.l.s4 1966171168
        %v5994 = vunpack.c.0.s8 %v5993
        %v5995 = vlaneseq
        %v5996 = vshrl.u32 %v5995, 7
        %v5997 = vsub.s32 %v5994, %v5996
        %v5998 = vrot.slane %v5988, %v5997
        %v6000 = vunpack.c.l.s4 1966171168
        %v6001 = vunpack.c.0.s8 %v6000
        %v6002 = vlaneseq
        %v6003 = vshrl.u32 %v6002, 7
        %v6004 = vsub.s32 %v6001, %v6003
        %v6005 = vrot.slane %v5989, %v6004
        %v6007 = vunpack.c.l.s4 1966171168
        %v6008 = vunpack.c.0.s8 %v6007
        %v6009 = vlaneseq
        %v6010 = vshrl.u32 %v6009, 7
        %v6011 = vsub.s32 %v6008, %v6010
        %v6012 = vrot.slane %v5990, %v6011
        %v6014 = vunpack.c.l.s4 1966171168
        %v6015 = vunpack.c.0.s8 %v6014
        %v6016 = vlaneseq
        %v6017 = vshrl.u32 %v6016, 7
        %v6018 = vsub.s32 %v6015, %v6017
        %v6019 = vrot.slane %v5991, %v6018
        %v6020 = vcombine.low %v5998, %v6005
        %v6021 = vcombine.low %v6012, %v6019
        %v6023 = vunpack.c.l.s4 1966171168
        %v6024 = vunpack.c.0.s8 %v6023
        %v6025 = vlaneseq
        %v6026 = vshrl.u32 %v6025, 7
        %v6027 = vsub.s32 %v6024, %v6026
        %v6028 = vrot.slane %v6020, %v6027
        %v6030 = vunpack.c.l.s4 1966171168
        %v6031 = vunpack.c.0.s8 %v6030
        %v6032 = vlaneseq
        %v6033 = vshrl.u32 %v6032, 7
        %v6034 = vsub.s32 %v6031, %v6033
        %v6035 = vrot.slane %v6021, %v6034
        %v6036 = vcombine.low %v6028, %v6035
        %v6037 = vcombine.low %v3669, %v3673
        %v6038 = vcombine.low %v3677, %v3681
        %v6039 = vcombine.low %v3685, %v3689
        %v6040 = vcombine.low %v3693, %v3697
        %v6042 = vunpack.c.l.s4 1966171168
        %v6043 = vunpack.c.0.s8 %v6042
        %v6044 = vlaneseq
        %v6045 = vshrl.u32 %v6044, 7
        %v6046 = vsub.s32 %v6043, %v6045
        %v6047 = vrot.slane %v6037, %v6046
        %v6049 = vunpack.c.l.s4 1966171168
        %v6050 = vunpack.c.0.s8 %v6049
        %v6051 = vlaneseq
        %v6052 = vshrl.u32 %v6051, 7
        %v6053 = vsub.s32 %v6050, %v6052
        %v6054 = vrot.slane %v6038, %v6053
        %v6056 = vunpack.c.l.s4 1966171168
        %v6057 = vunpack.c.0.s8 %v6056
        %v6058 = vlaneseq
        %v6059 = vshrl.u32 %v6058, 7
        %v6060 = vsub.s32 %v6057, %v6059
        %v6061 = vrot.slane %v6039, %v6060
        %v6063 = vunpack.c.l.s4 1966171168
        %v6064 = vunpack.c.0.s8 %v6063
        %v6065 = vlaneseq
        %v6066 = vshrl.u32 %v6065, 7
        %v6067 = vsub.s32 %v6064, %v6066
        %v6068 = vrot.slane %v6040, %v6067
        %v6069 = vcombine.low %v6047, %v6054
        %v6070 = vcombine.low %v6061, %v6068
        %v6072 = vunpack.c.l.s4 1966171168
        %v6073 = vunpack.c.0.s8 %v6072
        %v6074 = vlaneseq
        %v6075 = vshrl.u32 %v6074, 7
        %v6076 = vsub.s32 %v6073, %v6075
        %v6077 = vrot.slane %v6069, %v6076
        %v6079 = vunpack.c.l.s4 1966171168
        %v6080 = vunpack.c.0.s8 %v6079
        %v6081 = vlaneseq
        %v6082 = vshrl.u32 %v6081, 7
        %v6083 = vsub.s32 %v6080, %v6082
        %v6084 = vrot.slane %v6070, %v6083
        %v6085 = vcombine.low %v6077, %v6084
        %v6086 = vcombine.low %v3701, %v3705
        %v6087 = vcombine.low %v3709, %v3713
        %v6088 = vcombine.low %v3717, %v3721
        %v6089 = vcombine.low %v3725, %v3729
        %v6091 = vunpack.c.l.s4 1966171168
        %v6092 = vunpack.c.0.s8 %v6091
        %v6093 = vlaneseq
        %v6094 = vshrl.u32 %v6093, 7
        %v6095 = vsub.s32 %v6092, %v6094
        %v6096 = vrot.slane %v6086, %v6095
        %v6098 = vunpack.c.l.s4 1966171168
        %v6099 = vunpack.c.0.s8 %v6098
        %v6100 = vlaneseq
        %v6101 = vshrl.u32 %v6100, 7
        %v6102 = vsub.s32 %v6099, %v6101
        %v6103 = vrot.slane %v6087, %v6102
        %v6105 = vunpack.c.l.s4 1966171168
        %v6106 = vunpack.c.0.s8 %v6105
        %v6107 = vlaneseq
        %v6108 = vshrl.u32 %v6107, 7
        %v6109 = vsub.s32 %v6106, %v6108
        %v6110 = vrot.slane %v6088, %v6109
        %v6112 = vunpack.c.l.s4 1966171168
        %v6113 = vunpack.c.0.s8 %v6112
        %v6114 = vlaneseq
        %v6115 = vshrl.u32 %v6114, 7
        %v6116 = vsub.s32 %v6113, %v6115
        %v6117 = vrot.slane %v6089, %v6116
        %v6118 = vcombine.low %v6096, %v6103
        %v6119 = vcombine.low %v6110, %v6117
        %v6121 = vunpack.c.l.s4 1966171168
        %v6122 = vunpack.c.0.s8 %v6121
        %v6123 = vlaneseq
        %v6124 = vshrl.u32 %v6123, 7
        %v6125 = vsub.s32 %v6122, %v6124
        %v6126 = vrot.slane %v6118, %v6125
        %v6128 = vunpack.c.l.s4 1966171168
        %v6129 = vunpack.c.0.s8 %v6128
        %v6130 = vlaneseq
        %v6131 = vshrl.u32 %v6130, 7
        %v6132 = vsub.s32 %v6129, %v6131
        %v6133 = vrot.slane %v6119, %v6132
        %v6134 = vcombine.low %v6126, %v6133
        %v6135 = vcombine.low %v3733, %v3737
        %v6136 = vcombine.low %v3741, %v3745
        %v6137 = vcombine.low %v3749, %v3753
        %v6138 = vcombine.low %v3757, %v3761
        %v6140 = vunpack.c.l.s4 1966171168
        %v6141 = vunpack.c.0.s8 %v6140
        %v6142 = vlaneseq
        %v6143 = vshrl.u32 %v6142, 7
        %v6144 = vsub.s32 %v6141, %v6143
        %v6145 = vrot.slane %v6135, %v6144
        %v6147 = vunpack.c.l.s4 1966171168
        %v6148 = vunpack.c.0.s8 %v6147
        %v6149 = vlaneseq
        %v6150 = vshrl.u32 %v6149, 7
        %v6151 = vsub.s32 %v6148, %v6150
        %v6152 = vrot.slane %v6136, %v6151
        %v6154 = vunpack.c.l.s4 1966171168
        %v6155 = vunpack.c.0.s8 %v6154
        %v6156 = vlaneseq
        %v6157 = vshrl.u32 %v6156, 7
        %v6158 = vsub.s32 %v6155, %v6157
        %v6159 = vrot.slane %v6137, %v6158
        %v6161 = vunpack.c.l.s4 1966171168
        %v6162 = vunpack.c.0.s8 %v6161
        %v6163 = vlaneseq
        %v6164 = vshrl.u32 %v6163, 7
        %v6165 = vsub.s32 %v6162, %v6164
        %v6166 = vrot.slane %v6138, %v6165
        %v6167 = vcombine.low %v6145, %v6152
        %v6168 = vcombine.low %v6159, %v6166
        %v6170 = vunpack.c.l.s4 1966171168
        %v6171 = vunpack.c.0.s8 %v6170
        %v6172 = vlaneseq
        %v6173 = vshrl.u32 %v6172, 7
        %v6174 = vsub.s32 %v6171, %v6173
        %v6175 = vrot.slane %v6167, %v6174
        %v6177 = vunpack.c.l.s4 1966171168
        %v6178 = vunpack.c.0.s8 %v6177
        %v6179 = vlaneseq
        %v6180 = vshrl.u32 %v6179, 7
        %v6181 = vsub.s32 %v6178, %v6180
        %v6182 = vrot.slane %v6168, %v6181
        %v6183 = vcombine.low %v6175, %v6182
        %v6184 = vcombine.low %v3765, %v3769
        %v6185 = vcombine.low %v3773, %v3777
        %v6186 = vcombine.low %v3781, %v3785
        %v6187 = vcombine.low %v3789, %v3793
        %v6189 = vunpack.c.l.s4 1966171168
        %v6190 = vunpack.c.0.s8 %v6189
        %v6191 = vlaneseq
        %v6192 = vshrl.u32 %v6191, 7
        %v6193 = vsub.s32 %v6190, %v6192
        %v6194 = vrot.slane %v6184, %v6193
        %v6196 = vunpack.c.l.s4 1966171168
        %v6197 = vunpack.c.0.s8 %v6196
        %v6198 = vlaneseq
        %v6199 = vshrl.u32 %v6198, 7
        %v6200 = vsub.s32 %v6197, %v6199
        %v6201 = vrot.slane %v6185, %v6200
        %v6203 = vunpack.c.l.s4 1966171168
        %v6204 = vunpack.c.0.s8 %v6203
        %v6205 = vlaneseq
        %v6206 = vshrl.u32 %v6205, 7
        %v6207 = vsub.s32 %v6204, %v6206
        %v6208 = vrot.slane %v6186, %v6207
        %v6210 = vunpack.c.l.s4 1966171168
        %v6211 = vunpack.c.0.s8 %v6210
        %v6212 = vlaneseq
        %v6213 = vshrl.u32 %v6212, 7
        %v6214 = vsub.s32 %v6211, %v6213
        %v6215 = vrot.slane %v6187, %v6214
        %v6216 = vcombine.low %v6194, %v6201
        %v6217 = vcombine.low %v6208, %v6215
        %v6219 = vunpack.c.l.s4 1966171168
        %v6220 = vunpack.c.0.s8 %v6219
        %v6221 = vlaneseq
        %v6222 = vshrl.u32 %v6221, 7
        %v6223 = vsub.s32 %v6220, %v6222
        %v6224 = vrot.slane %v6216, %v6223
        %v6226 = vunpack.c.l.s4 1966171168
        %v6227 = vunpack.c.0.s8 %v6226
        %v6228 = vlaneseq
        %v6229 = vshrl.u32 %v6228, 7
        %v6230 = vsub.s32 %v6227, %v6229
        %v6231 = vrot.slane %v6217, %v6230
        %v6232 = vcombine.low %v6224, %v6231
        %v6233 = vcombine.low %v3797, %v3801
        %v6234 = vcombine.low %v3805, %v3809
        %v6235 = vcombine.low %v3813, %v3817
        %v6236 = vcombine.low %v3821, %v3825
        %v6238 = vunpack.c.l.s4 1966171168
        %v6239 = vunpack.c.0.s8 %v6238
        %v6240 = vlaneseq
        %v6241 = vshrl.u32 %v6240, 7
        %v6242 = vsub.s32 %v6239, %v6241
        %v6243 = vrot.slane %v6233, %v6242
        %v6245 = vunpack.c.l.s4 1966171168
        %v6246 = vunpack.c.0.s8 %v6245
        %v6247 = vlaneseq
        %v6248 = vshrl.u32 %v6247, 7
        %v6249 = vsub.s32 %v6246, %v6248
        %v6250 = vrot.slane %v6234, %v6249
        %v6252 = vunpack.c.l.s4 1966171168
        %v6253 = vunpack.c.0.s8 %v6252
        %v6254 = vlaneseq
        %v6255 = vshrl.u32 %v6254, 7
        %v6256 = vsub.s32 %v6253, %v6255
        %v6257 = vrot.slane %v6235, %v6256
        %v6259 = vunpack.c.l.s4 1966171168
        %v6260 = vunpack.c.0.s8 %v6259
        %v6261 = vlaneseq
        %v6262 = vshrl.u32 %v6261, 7
        %v6263 = vsub.s32 %v6260, %v6262
        %v6264 = vrot.slane %v6236, %v6263
        %v6265 = vcombine.low %v6243, %v6250
        %v6266 = vcombine.low %v6257, %v6264
        %v6268 = vunpack.c.l.s4 1966171168
        %v6269 = vunpack.c.0.s8 %v6268
        %v6270 = vlaneseq
        %v6271 = vshrl.u32 %v6270, 7
        %v6272 = vsub.s32 %v6269, %v6271
        %v6273 = vrot.slane %v6265, %v6272
        %v6275 = vunpack.c.l.s4 1966171168
        %v6276 = vunpack.c.0.s8 %v6275
        %v6277 = vlaneseq
        %v6278 = vshrl.u32 %v6277, 7
        %v6279 = vsub.s32 %v6276, %v6278
        %v6280 = vrot.slane %v6266, %v6279
        %v6281 = vcombine.low %v6273, %v6280
        %v6282 = vcombine.low %v3829, %v3833
        %v6283 = vcombine.low %v3837, %v3841
        %v6284 = vcombine.low %v3845, %v3849
        %v6285 = vcombine.low %v3853, %v3857
        %v6287 = vunpack.c.l.s4 1966171168
        %v6288 = vunpack.c.0.s8 %v6287
        %v6289 = vlaneseq
        %v6290 = vshrl.u32 %v6289, 7
        %v6291 = vsub.s32 %v6288, %v6290
        %v6292 = vrot.slane %v6282, %v6291
        %v6294 = vunpack.c.l.s4 1966171168
        %v6295 = vunpack.c.0.s8 %v6294
        %v6296 = vlaneseq
        %v6297 = vshrl.u32 %v6296, 7
        %v6298 = vsub.s32 %v6295, %v6297
        %v6299 = vrot.slane %v6283, %v6298
        %v6301 = vunpack.c.l.s4 1966171168
        %v6302 = vunpack.c.0.s8 %v6301
        %v6303 = vlaneseq
        %v6304 = vshrl.u32 %v6303, 7
        %v6305 = vsub.s32 %v6302, %v6304
        %v6306 = vrot.slane %v6284, %v6305
        %v6308 = vunpack.c.l.s4 1966171168
        %v6309 = vunpack.c.0.s8 %v6308
        %v6310 = vlaneseq
        %v6311 = vshrl.u32 %v6310, 7
        %v6312 = vsub.s32 %v6309, %v6311
        %v6313 = vrot.slane %v6285, %v6312
        %v6314 = vcombine.low %v6292, %v6299
        %v6315 = vcombine.low %v6306, %v6313
        %v6317 = vunpack.c.l.s4 1966171168
        %v6318 = vunpack.c.0.s8 %v6317
        %v6319 = vlaneseq
        %v6320 = vshrl.u32 %v6319, 7
        %v6321 = vsub.s32 %v6318, %v6320
        %v6322 = vrot.slane %v6314, %v6321
        %v6324 = vunpack.c.l.s4 1966171168
        %v6325 = vunpack.c.0.s8 %v6324
        %v6326 = vlaneseq
        %v6327 = vshrl.u32 %v6326, 7
        %v6328 = vsub.s32 %v6325, %v6327
        %v6329 = vrot.slane %v6315, %v6328
        %v6330 = vcombine.low %v6322, %v6329
        %v6331 = vcombine.low %v3861, %v3865
        %v6332 = vcombine.low %v3869, %v3873
        %v6333 = vcombine.low %v3877, %v3881
        %v6334 = vcombine.low %v3885, %v3889
        %v6336 = vunpack.c.l.s4 1966171168
        %v6337 = vunpack.c.0.s8 %v6336
        %v6338 = vlaneseq
        %v6339 = vshrl.u32 %v6338, 7
        %v6340 = vsub.s32 %v6337, %v6339
        %v6341 = vrot.slane %v6331, %v6340
        %v6343 = vunpack.c.l.s4 1966171168
        %v6344 = vunpack.c.0.s8 %v6343
        %v6345 = vlaneseq
        %v6346 = vshrl.u32 %v6345, 7
        %v6347 = vsub.s32 %v6344, %v6346
        %v6348 = vrot.slane %v6332, %v6347
        %v6350 = vunpack.c.l.s4 1966171168
        %v6351 = vunpack.c.0.s8 %v6350
        %v6352 = vlaneseq
        %v6353 = vshrl.u32 %v6352, 7
        %v6354 = vsub.s32 %v6351, %v6353
        %v6355 = vrot.slane %v6333, %v6354
        %v6357 = vunpack.c.l.s4 1966171168
        %v6358 = vunpack.c.0.s8 %v6357
        %v6359 = vlaneseq
        %v6360 = vshrl.u32 %v6359, 7
        %v6361 = vsub.s32 %v6358, %v6360
        %v6362 = vrot.slane %v6334, %v6361
        %v6363 = vcombine.low %v6341, %v6348
        %v6364 = vcombine.low %v6355, %v6362
        %v6366 = vunpack.c.l.s4 1966171168
        %v6367 = vunpack.c.0.s8 %v6366
        %v6368 = vlaneseq
        %v6369 = vshrl.u32 %v6368, 7
        %v6370 = vsub.s32 %v6367, %v6369
        %v6371 = vrot.slane %v6363, %v6370
        %v6373 = vunpack.c.l.s4 1966171168
        %v6374 = vunpack.c.0.s8 %v6373
        %v6375 = vlaneseq
        %v6376 = vshrl.u32 %v6375, 7
        %v6377 = vsub.s32 %v6374, %v6376
        %v6378 = vrot.slane %v6364, %v6377
        %v6379 = vcombine.low %v6371, %v6378
        %v6380 = vcombine.low %v3893, %v3897
        %v6381 = vcombine.low %v3901, %v3905
        %v6382 = vcombine.low %v3909, %v3913
        %v6383 = vcombine.low %v3917, %v3921
        %v6385 = vunpack.c.l.s4 1966171168
        %v6386 = vunpack.c.0.s8 %v6385
        %v6387 = vlaneseq
        %v6388 = vshrl.u32 %v6387, 7
        %v6389 = vsub.s32 %v6386, %v6388
        %v6390 = vrot.slane %v6380, %v6389
        %v6392 = vunpack.c.l.s4 1966171168
        %v6393 = vunpack.c.0.s8 %v6392
        %v6394 = vlaneseq
        %v6395 = vshrl.u32 %v6394, 7
        %v6396 = vsub.s32 %v6393, %v6395
        %v6397 = vrot.slane %v6381, %v6396
        %v6399 = vunpack.c.l.s4 1966171168
        %v6400 = vunpack.c.0.s8 %v6399
        %v6401 = vlaneseq
        %v6402 = vshrl.u32 %v6401, 7
        %v6403 = vsub.s32 %v6400, %v6402
        %v6404 = vrot.slane %v6382, %v6403
        %v6406 = vunpack.c.l.s4 1966171168
        %v6407 = vunpack.c.0.s8 %v6406
        %v6408 = vlaneseq
        %v6409 = vshrl.u32 %v6408, 7
        %v6410 = vsub.s32 %v6407, %v6409
        %v6411 = vrot.slane %v6383, %v6410
        %v6412 = vcombine.low %v6390, %v6397
        %v6413 = vcombine.low %v6404, %v6411
        %v6415 = vunpack.c.l.s4 1966171168
        %v6416 = vunpack.c.0.s8 %v6415
        %v6417 = vlaneseq
        %v6418 = vshrl.u32 %v6417, 7
        %v6419 = vsub.s32 %v6416, %v6418
        %v6420 = vrot.slane %v6412, %v6419
        %v6422 = vunpack.c.l.s4 1966171168
        %v6423 = vunpack.c.0.s8 %v6422
        %v6424 = vlaneseq
        %v6425 = vshrl.u32 %v6424, 7
        %v6426 = vsub.s32 %v6423, %v6425
        %v6427 = vrot.slane %v6413, %v6426
        %v6428 = vcombine.low %v6420, %v6427
        %v6429 = vcombine.low %v3925, %v3929
        %v6430 = vcombine.low %v3933, %v3937
        %v6431 = vcombine.low %v3941, %v3945
        %v6432 = vcombine.low %v3949, %v3953
        %v6434 = vunpack.c.l.s4 1966171168
        %v6435 = vunpack.c.0.s8 %v6434
        %v6436 = vlaneseq
        %v6437 = vshrl.u32 %v6436, 7
        %v6438 = vsub.s32 %v6435, %v6437
        %v6439 = vrot.slane %v6429, %v6438
        %v6441 = vunpack.c.l.s4 1966171168
        %v6442 = vunpack.c.0.s8 %v6441
        %v6443 = vlaneseq
        %v6444 = vshrl.u32 %v6443, 7
        %v6445 = vsub.s32 %v6442, %v6444
        %v6446 = vrot.slane %v6430, %v6445
        %v6448 = vunpack.c.l.s4 1966171168
        %v6449 = vunpack.c.0.s8 %v6448
        %v6450 = vlaneseq
        %v6451 = vshrl.u32 %v6450, 7
        %v6452 = vsub.s32 %v6449, %v6451
        %v6453 = vrot.slane %v6431, %v6452
        %v6455 = vunpack.c.l.s4 1966171168
        %v6456 = vunpack.c.0.s8 %v6455
        %v6457 = vlaneseq
        %v6458 = vshrl.u32 %v6457, 7
        %v6459 = vsub.s32 %v6456, %v6458
        %v6460 = vrot.slane %v6432, %v6459
        %v6461 = vcombine.low %v6439, %v6446
        %v6462 = vcombine.low %v6453, %v6460
        %v6464 = vunpack.c.l.s4 1966171168
        %v6465 = vunpack.c.0.s8 %v6464
        %v6466 = vlaneseq
        %v6467 = vshrl.u32 %v6466, 7
        %v6468 = vsub.s32 %v6465, %v6467
        %v6469 = vrot.slane %v6461, %v6468
        %v6471 = vunpack.c.l.s4 1966171168
        %v6472 = vunpack.c.0.s8 %v6471
        %v6473 = vlaneseq
        %v6474 = vshrl.u32 %v6473, 7
        %v6475 = vsub.s32 %v6472, %v6474
        %v6476 = vrot.slane %v6462, %v6475
        %v6477 = vcombine.low %v6469, %v6476
        %v6478 = vcombine.low %v3957, %v3961
        %v6479 = vcombine.low %v3965, %v3969
        %v6480 = vcombine.low %v3973, %v3977
        %v6481 = vcombine.low %v3981, %v3985
        %v6483 = vunpack.c.l.s4 1966171168
        %v6484 = vunpack.c.0.s8 %v6483
        %v6485 = vlaneseq
        %v6486 = vshrl.u32 %v6485, 7
        %v6487 = vsub.s32 %v6484, %v6486
        %v6488 = vrot.slane %v6478, %v6487
        %v6490 = vunpack.c.l.s4 1966171168
        %v6491 = vunpack.c.0.s8 %v6490
        %v6492 = vlaneseq
        %v6493 = vshrl.u32 %v6492, 7
        %v6494 = vsub.s32 %v6491, %v6493
        %v6495 = vrot.slane %v6479, %v6494
        %v6497 = vunpack.c.l.s4 1966171168
        %v6498 = vunpack.c.0.s8 %v6497
        %v6499 = vlaneseq
        %v6500 = vshrl.u32 %v6499, 7
        %v6501 = vsub.s32 %v6498, %v6500
        %v6502 = vrot.slane %v6480, %v6501
        %v6504 = vunpack.c.l.s4 1966171168
        %v6505 = vunpack.c.0.s8 %v6504
        %v6506 = vlaneseq
        %v6507 = vshrl.u32 %v6506, 7
        %v6508 = vsub.s32 %v6505, %v6507
        %v6509 = vrot.slane %v6481, %v6508
        %v6510 = vcombine.low %v6488, %v6495
        %v6511 = vcombine.low %v6502, %v6509
        %v6513 = vunpack.c.l.s4 1966171168
        %v6514 = vunpack.c.0.s8 %v6513
        %v6515 = vlaneseq
        %v6516 = vshrl.u32 %v6515, 7
        %v6517 = vsub.s32 %v6514, %v6516
        %v6518 = vrot.slane %v6510, %v6517
        %v6520 = vunpack.c.l.s4 1966171168
        %v6521 = vunpack.c.0.s8 %v6520
        %v6522 = vlaneseq
        %v6523 = vshrl.u32 %v6522, 7
        %v6524 = vsub.s32 %v6521, %v6523
        %v6525 = vrot.slane %v6511, %v6524
        %v6526 = vcombine.low %v6518, %v6525
        %v6527 = vcombine.low %v3989, %v3993
        %v6528 = vcombine.low %v3997, %v4001
        %v6529 = vcombine.low %v4005, %v4009
        %v6530 = vcombine.low %v4013, %v4017
        %v6532 = vunpack.c.l.s4 1966171168
        %v6533 = vunpack.c.0.s8 %v6532
        %v6534 = vlaneseq
        %v6535 = vshrl.u32 %v6534, 7
        %v6536 = vsub.s32 %v6533, %v6535
        %v6537 = vrot.slane %v6527, %v6536
        %v6539 = vunpack.c.l.s4 1966171168
        %v6540 = vunpack.c.0.s8 %v6539
        %v6541 = vlaneseq
        %v6542 = vshrl.u32 %v6541, 7
        %v6543 = vsub.s32 %v6540, %v6542
        %v6544 = vrot.slane %v6528, %v6543
        %v6546 = vunpack.c.l.s4 1966171168
        %v6547 = vunpack.c.0.s8 %v6546
        %v6548 = vlaneseq
        %v6549 = vshrl.u32 %v6548, 7
        %v6550 = vsub.s32 %v6547, %v6549
        %v6551 = vrot.slane %v6529, %v6550
        %v6553 = vunpack.c.l.s4 1966171168
        %v6554 = vunpack.c.0.s8 %v6553
        %v6555 = vlaneseq
        %v6556 = vshrl.u32 %v6555, 7
        %v6557 = vsub.s32 %v6554, %v6556
        %v6558 = vrot.slane %v6530, %v6557
        %v6559 = vcombine.low %v6537, %v6544
        %v6560 = vcombine.low %v6551, %v6558
        %v6562 = vunpack.c.l.s4 1966171168
        %v6563 = vunpack.c.0.s8 %v6562
        %v6564 = vlaneseq
        %v6565 = vshrl.u32 %v6564, 7
        %v6566 = vsub.s32 %v6563, %v6565
        %v6567 = vrot.slane %v6559, %v6566
        %v6569 = vunpack.c.l.s4 1966171168
        %v6570 = vunpack.c.0.s8 %v6569
        %v6571 = vlaneseq
        %v6572 = vshrl.u32 %v6571, 7
        %v6573 = vsub.s32 %v6570, %v6572
        %v6574 = vrot.slane %v6560, %v6573
        %v6575 = vcombine.low %v6567, %v6574
        %v6576 = vcombine.low %v4021, %v4025
        %v6577 = vcombine.low %v4029, %v4033
        %v6578 = vcombine.low %v4037, %v4041
        %v6579 = vcombine.low %v4045, %v4049
        %v6581 = vunpack.c.l.s4 1966171168
        %v6582 = vunpack.c.0.s8 %v6581
        %v6583 = vlaneseq
        %v6584 = vshrl.u32 %v6583, 7
        %v6585 = vsub.s32 %v6582, %v6584
        %v6586 = vrot.slane %v6576, %v6585
        %v6588 = vunpack.c.l.s4 1966171168
        %v6589 = vunpack.c.0.s8 %v6588
        %v6590 = vlaneseq
        %v6591 = vshrl.u32 %v6590, 7
        %v6592 = vsub.s32 %v6589, %v6591
        %v6593 = vrot.slane %v6577, %v6592
        %v6595 = vunpack.c.l.s4 1966171168
        %v6596 = vunpack.c.0.s8 %v6595
        %v6597 = vlaneseq
        %v6598 = vshrl.u32 %v6597, 7
        %v6599 = vsub.s32 %v6596, %v6598
        %v6600 = vrot.slane %v6578, %v6599
        %v6602 = vunpack.c.l.s4 1966171168
        %v6603 = vunpack.c.0.s8 %v6602
        %v6604 = vlaneseq
        %v6605 = vshrl.u32 %v6604, 7
        %v6606 = vsub.s32 %v6603, %v6605
        %v6607 = vrot.slane %v6579, %v6606
        %v6608 = vcombine.low %v6586, %v6593
        %v6609 = vcombine.low %v6600, %v6607
        %v6611 = vunpack.c.l.s4 1966171168
        %v6612 = vunpack.c.0.s8 %v6611
        %v6613 = vlaneseq
        %v6614 = vshrl.u32 %v6613, 7
        %v6615 = vsub.s32 %v6612, %v6614
        %v6616 = vrot.slane %v6608, %v6615
        %v6618 = vunpack.c.l.s4 1966171168
        %v6619 = vunpack.c.0.s8 %v6618
        %v6620 = vlaneseq
        %v6621 = vshrl.u32 %v6620, 7
        %v6622 = vsub.s32 %v6619, %v6621
        %v6623 = vrot.slane %v6609, %v6622
        %v6624 = vcombine.low %v6616, %v6623
        %v6625 = vcombine.low %v4053, %v4057
        %v6626 = vcombine.low %v4061, %v4065
        %v6627 = vcombine.low %v4069, %v4073
        %v6628 = vcombine.low %v4077, %v4081
        %v6630 = vunpack.c.l.s4 1966171168
        %v6631 = vunpack.c.0.s8 %v6630
        %v6632 = vlaneseq
        %v6633 = vshrl.u32 %v6632, 7
        %v6634 = vsub.s32 %v6631, %v6633
        %v6635 = vrot.slane %v6625, %v6634
        %v6637 = vunpack.c.l.s4 1966171168
        %v6638 = vunpack.c.0.s8 %v6637
        %v6639 = vlaneseq
        %v6640 = vshrl.u32 %v6639, 7
        %v6641 = vsub.s32 %v6638, %v6640
        %v6642 = vrot.slane %v6626, %v6641
        %v6644 = vunpack.c.l.s4 1966171168
        %v6645 = vunpack.c.0.s8 %v6644
        %v6646 = vlaneseq
        %v6647 = vshrl.u32 %v6646, 7
        %v6648 = vsub.s32 %v6645, %v6647
        %v6649 = vrot.slane %v6627, %v6648
        %v6651 = vunpack.c.l.s4 1966171168
        %v6652 = vunpack.c.0.s8 %v6651
        %v6653 = vlaneseq
        %v6654 = vshrl.u32 %v6653, 7
        %v6655 = vsub.s32 %v6652, %v6654
        %v6656 = vrot.slane %v6628, %v6655
        %v6657 = vcombine.low %v6635, %v6642
        %v6658 = vcombine.low %v6649, %v6656
        %v6660 = vunpack.c.l.s4 1966171168
        %v6661 = vunpack.c.0.s8 %v6660
        %v6662 = vlaneseq
        %v6663 = vshrl.u32 %v6662, 7
        %v6664 = vsub.s32 %v6661, %v6663
        %v6665 = vrot.slane %v6657, %v6664
        %v6667 = vunpack.c.l.s4 1966171168
        %v6668 = vunpack.c.0.s8 %v6667
        %v6669 = vlaneseq
        %v6670 = vshrl.u32 %v6669, 7
        %v6671 = vsub.s32 %v6668, %v6670
        %v6672 = vrot.slane %v6658, %v6671
        %v6673 = vcombine.low %v6665, %v6672
        %v6674 = vcombine.low %v4085, %v4089
        %v6675 = vcombine.low %v4093, %v4097
        %v6676 = vcombine.low %v4101, %v4105
        %v6677 = vcombine.low %v4109, %v4113
        %v6679 = vunpack.c.l.s4 1966171168
        %v6680 = vunpack.c.0.s8 %v6679
        %v6681 = vlaneseq
        %v6682 = vshrl.u32 %v6681, 7
        %v6683 = vsub.s32 %v6680, %v6682
        %v6684 = vrot.slane %v6674, %v6683
        %v6686 = vunpack.c.l.s4 1966171168
        %v6687 = vunpack.c.0.s8 %v6686
        %v6688 = vlaneseq
        %v6689 = vshrl.u32 %v6688, 7
        %v6690 = vsub.s32 %v6687, %v6689
        %v6691 = vrot.slane %v6675, %v6690
        %v6693 = vunpack.c.l.s4 1966171168
        %v6694 = vunpack.c.0.s8 %v6693
        %v6695 = vlaneseq
        %v6696 = vshrl.u32 %v6695, 7
        %v6697 = vsub.s32 %v6694, %v6696
        %v6698 = vrot.slane %v6676, %v6697
        %v6700 = vunpack.c.l.s4 1966171168
        %v6701 = vunpack.c.0.s8 %v6700
        %v6702 = vlaneseq
        %v6703 = vshrl.u32 %v6702, 7
        %v6704 = vsub.s32 %v6701, %v6703
        %v6705 = vrot.slane %v6677, %v6704
        %v6706 = vcombine.low %v6684, %v6691
        %v6707 = vcombine.low %v6698, %v6705
        %v6709 = vunpack.c.l.s4 1966171168
        %v6710 = vunpack.c.0.s8 %v6709
        %v6711 = vlaneseq
        %v6712 = vshrl.u32 %v6711, 7
        %v6713 = vsub.s32 %v6710, %v6712
        %v6714 = vrot.slane %v6706, %v6713
        %v6716 = vunpack.c.l.s4 1966171168
        %v6717 = vunpack.c.0.s8 %v6716
        %v6718 = vlaneseq
        %v6719 = vshrl.u32 %v6718, 7
        %v6720 = vsub.s32 %v6717, %v6719
        %v6721 = vrot.slane %v6707, %v6720
        %v6722 = vcombine.low %v6714, %v6721
        %v6723 = vcombine.low %v4117, %v4121
        %v6724 = vcombine.low %v4125, %v4129
        %v6725 = vcombine.low %v4133, %v4137
        %v6726 = vcombine.low %v4141, %v4145
        %v6728 = vunpack.c.l.s4 1966171168
        %v6729 = vunpack.c.0.s8 %v6728
        %v6730 = vlaneseq
        %v6731 = vshrl.u32 %v6730, 7
        %v6732 = vsub.s32 %v6729, %v6731
        %v6733 = vrot.slane %v6723, %v6732
        %v6735 = vunpack.c.l.s4 1966171168
        %v6736 = vunpack.c.0.s8 %v6735
        %v6737 = vlaneseq
        %v6738 = vshrl.u32 %v6737, 7
        %v6739 = vsub.s32 %v6736, %v6738
        %v6740 = vrot.slane %v6724, %v6739
        %v6742 = vunpack.c.l.s4 1966171168
        %v6743 = vunpack.c.0.s8 %v6742
        %v6744 = vlaneseq
        %v6745 = vshrl.u32 %v6744, 7
        %v6746 = vsub.s32 %v6743, %v6745
        %v6747 = vrot.slane %v6725, %v6746
        %v6749 = vunpack.c.l.s4 1966171168
        %v6750 = vunpack.c.0.s8 %v6749
        %v6751 = vlaneseq
        %v6752 = vshrl.u32 %v6751, 7
        %v6753 = vsub.s32 %v6750, %v6752
        %v6754 = vrot.slane %v6726, %v6753
        %v6755 = vcombine.low %v6733, %v6740
        %v6756 = vcombine.low %v6747, %v6754
        %v6758 = vunpack.c.l.s4 1966171168
        %v6759 = vunpack.c.0.s8 %v6758
        %v6760 = vlaneseq
        %v6761 = vshrl.u32 %v6760, 7
        %v6762 = vsub.s32 %v6759, %v6761
        %v6763 = vrot.slane %v6755, %v6762
        %v6765 = vunpack.c.l.s4 1966171168
        %v6766 = vunpack.c.0.s8 %v6765
        %v6767 = vlaneseq
        %v6768 = vshrl.u32 %v6767, 7
        %v6769 = vsub.s32 %v6766, %v6768
        %v6770 = vrot.slane %v6756, %v6769
        %v6771 = vcombine.low %v6763, %v6770
        %v6772 = vcombine.low %v4149, %v4153
        %v6773 = vcombine.low %v4157, %v4161
        %v6774 = vcombine.low %v4165, %v4169
        %v6775 = vcombine.low %v4173, %v4177
        %v6777 = vunpack.c.l.s4 1966171168
        %v6778 = vunpack.c.0.s8 %v6777
        %v6779 = vlaneseq
        %v6780 = vshrl.u32 %v6779, 7
        %v6781 = vsub.s32 %v6778, %v6780
        %v6782 = vrot.slane %v6772, %v6781
        %v6784 = vunpack.c.l.s4 1966171168
        %v6785 = vunpack.c.0.s8 %v6784
        %v6786 = vlaneseq
        %v6787 = vshrl.u32 %v6786, 7
        %v6788 = vsub.s32 %v6785, %v6787
        %v6789 = vrot.slane %v6773, %v6788
        %v6791 = vunpack.c.l.s4 1966171168
        %v6792 = vunpack.c.0.s8 %v6791
        %v6793 = vlaneseq
        %v6794 = vshrl.u32 %v6793, 7
        %v6795 = vsub.s32 %v6792, %v6794
        %v6796 = vrot.slane %v6774, %v6795
        %v6798 = vunpack.c.l.s4 1966171168
        %v6799 = vunpack.c.0.s8 %v6798
        %v6800 = vlaneseq
        %v6801 = vshrl.u32 %v6800, 7
        %v6802 = vsub.s32 %v6799, %v6801
        %v6803 = vrot.slane %v6775, %v6802
        %v6804 = vcombine.low %v6782, %v6789
        %v6805 = vcombine.low %v6796, %v6803
        %v6807 = vunpack.c.l.s4 1966171168
        %v6808 = vunpack.c.0.s8 %v6807
        %v6809 = vlaneseq
        %v6810 = vshrl.u32 %v6809, 7
        %v6811 = vsub.s32 %v6808, %v6810
        %v6812 = vrot.slane %v6804, %v6811
        %v6814 = vunpack.c.l.s4 1966171168
        %v6815 = vunpack.c.0.s8 %v6814
        %v6816 = vlaneseq
        %v6817 = vshrl.u32 %v6816, 7
        %v6818 = vsub.s32 %v6815, %v6817
        %v6819 = vrot.slane %v6805, %v6818
        %v6820 = vcombine.low %v6812, %v6819
        %v6821 = vcombine.low %v4181, %v4185
        %v6822 = vcombine.low %v4189, %v4193
        %v6823 = vcombine.low %v4197, %v4201
        %v6824 = vcombine.low %v4205, %v4209
        %v6826 = vunpack.c.l.s4 1966171168
        %v6827 = vunpack.c.0.s8 %v6826
        %v6828 = vlaneseq
        %v6829 = vshrl.u32 %v6828, 7
        %v6830 = vsub.s32 %v6827, %v6829
        %v6831 = vrot.slane %v6821, %v6830
        %v6833 = vunpack.c.l.s4 1966171168
        %v6834 = vunpack.c.0.s8 %v6833
        %v6835 = vlaneseq
        %v6836 = vshrl.u32 %v6835, 7
        %v6837 = vsub.s32 %v6834, %v6836
        %v6838 = vrot.slane %v6822, %v6837
        %v6840 = vunpack.c.l.s4 1966171168
        %v6841 = vunpack.c.0.s8 %v6840
        %v6842 = vlaneseq
        %v6843 = vshrl.u32 %v6842, 7
        %v6844 = vsub.s32 %v6841, %v6843
        %v6845 = vrot.slane %v6823, %v6844
        %v6847 = vunpack.c.l.s4 1966171168
        %v6848 = vunpack.c.0.s8 %v6847
        %v6849 = vlaneseq
        %v6850 = vshrl.u32 %v6849, 7
        %v6851 = vsub.s32 %v6848, %v6850
        %v6852 = vrot.slane %v6824, %v6851
        %v6853 = vcombine.low %v6831, %v6838
        %v6854 = vcombine.low %v6845, %v6852
        %v6856 = vunpack.c.l.s4 1966171168
        %v6857 = vunpack.c.0.s8 %v6856
        %v6858 = vlaneseq
        %v6859 = vshrl.u32 %v6858, 7
        %v6860 = vsub.s32 %v6857, %v6859
        %v6861 = vrot.slane %v6853, %v6860
        %v6863 = vunpack.c.l.s4 1966171168
        %v6864 = vunpack.c.0.s8 %v6863
        %v6865 = vlaneseq
        %v6866 = vshrl.u32 %v6865, 7
        %v6867 = vsub.s32 %v6864, %v6866
        %v6868 = vrot.slane %v6854, %v6867
        %v6869 = vcombine.low %v6861, %v6868
        %v6870 = vcombine.low %v4213, %v4217
        %v6871 = vcombine.low %v4221, %v4225
        %v6872 = vcombine.low %v4229, %v4233
        %v6873 = vcombine.low %v4237, %v4241
        %v6875 = vunpack.c.l.s4 1966171168
        %v6876 = vunpack.c.0.s8 %v6875
        %v6877 = vlaneseq
        %v6878 = vshrl.u32 %v6877, 7
        %v6879 = vsub.s32 %v6876, %v6878
        %v6880 = vrot.slane %v6870, %v6879
        %v6882 = vunpack.c.l.s4 1966171168
        %v6883 = vunpack.c.0.s8 %v6882
        %v6884 = vlaneseq
        %v6885 = vshrl.u32 %v6884, 7
        %v6886 = vsub.s32 %v6883, %v6885
        %v6887 = vrot.slane %v6871, %v6886
        %v6889 = vunpack.c.l.s4 1966171168
        %v6890 = vunpack.c.0.s8 %v6889
        %v6891 = vlaneseq
        %v6892 = vshrl.u32 %v6891, 7
        %v6893 = vsub.s32 %v6890, %v6892
        %v6894 = vrot.slane %v6872, %v6893
        %v6896 = vunpack.c.l.s4 1966171168
        %v6897 = vunpack.c.0.s8 %v6896
        %v6898 = vlaneseq
        %v6899 = vshrl.u32 %v6898, 7
        %v6900 = vsub.s32 %v6897, %v6899
        %v6901 = vrot.slane %v6873, %v6900
        %v6902 = vcombine.low %v6880, %v6887
        %v6903 = vcombine.low %v6894, %v6901
        %v6905 = vunpack.c.l.s4 1966171168
        %v6906 = vunpack.c.0.s8 %v6905
        %v6907 = vlaneseq
        %v6908 = vshrl.u32 %v6907, 7
        %v6909 = vsub.s32 %v6906, %v6908
        %v6910 = vrot.slane %v6902, %v6909
        %v6912 = vunpack.c.l.s4 1966171168
        %v6913 = vunpack.c.0.s8 %v6912
        %v6914 = vlaneseq
        %v6915 = vshrl.u32 %v6914, 7
        %v6916 = vsub.s32 %v6913, %v6915
        %v6917 = vrot.slane %v6903, %v6916
        %v6918 = vcombine.low %v6910, %v6917
        %v6919 = vcombine.low %v4245, %v4249
        %v6920 = vcombine.low %v4253, %v4257
        %v6921 = vcombine.low %v4261, %v4265
        %v6922 = vcombine.low %v4269, %v4273
        %v6924 = vunpack.c.l.s4 1966171168
        %v6925 = vunpack.c.0.s8 %v6924
        %v6926 = vlaneseq
        %v6927 = vshrl.u32 %v6926, 7
        %v6928 = vsub.s32 %v6925, %v6927
        %v6929 = vrot.slane %v6919, %v6928
        %v6931 = vunpack.c.l.s4 1966171168
        %v6932 = vunpack.c.0.s8 %v6931
        %v6933 = vlaneseq
        %v6934 = vshrl.u32 %v6933, 7
        %v6935 = vsub.s32 %v6932, %v6934
        %v6936 = vrot.slane %v6920, %v6935
        %v6938 = vunpack.c.l.s4 1966171168
        %v6939 = vunpack.c.0.s8 %v6938
        %v6940 = vlaneseq
        %v6941 = vshrl.u32 %v6940, 7
        %v6942 = vsub.s32 %v6939, %v6941
        %v6943 = vrot.slane %v6921, %v6942
        %v6945 = vunpack.c.l.s4 1966171168
        %v6946 = vunpack.c.0.s8 %v6945
        %v6947 = vlaneseq
        %v6948 = vshrl.u32 %v6947, 7
        %v6949 = vsub.s32 %v6946, %v6948
        %v6950 = vrot.slane %v6922, %v6949
        %v6951 = vcombine.low %v6929, %v6936
        %v6952 = vcombine.low %v6943, %v6950
        %v6954 = vunpack.c.l.s4 1966171168
        %v6955 = vunpack.c.0.s8 %v6954
        %v6956 = vlaneseq
        %v6957 = vshrl.u32 %v6956, 7
        %v6958 = vsub.s32 %v6955, %v6957
        %v6959 = vrot.slane %v6951, %v6958
        %v6961 = vunpack.c.l.s4 1966171168
        %v6962 = vunpack.c.0.s8 %v6961
        %v6963 = vlaneseq
        %v6964 = vshrl.u32 %v6963, 7
        %v6965 = vsub.s32 %v6962, %v6964
        %v6966 = vrot.slane %v6952, %v6965
        %v6967 = vcombine.low %v6959, %v6966
        %v6968 = vcombine.low %v4277, %v4281
        %v6969 = vcombine.low %v4285, %v4289
        %v6970 = vcombine.low %v4293, %v4297
        %v6971 = vcombine.low %v4301, %v4305
        %v6973 = vunpack.c.l.s4 1966171168
        %v6974 = vunpack.c.0.s8 %v6973
        %v6975 = vlaneseq
        %v6976 = vshrl.u32 %v6975, 7
        %v6977 = vsub.s32 %v6974, %v6976
        %v6978 = vrot.slane %v6968, %v6977
        %v6980 = vunpack.c.l.s4 1966171168
        %v6981 = vunpack.c.0.s8 %v6980
        %v6982 = vlaneseq
        %v6983 = vshrl.u32 %v6982, 7
        %v6984 = vsub.s32 %v6981, %v6983
        %v6985 = vrot.slane %v6969, %v6984
        %v6987 = vunpack.c.l.s4 1966171168
        %v6988 = vunpack.c.0.s8 %v6987
        %v6989 = vlaneseq
        %v6990 = vshrl.u32 %v6989, 7
        %v6991 = vsub.s32 %v6988, %v6990
        %v6992 = vrot.slane %v6970, %v6991
        %v6994 = vunpack.c.l.s4 1966171168
        %v6995 = vunpack.c.0.s8 %v6994
        %v6996 = vlaneseq
        %v6997 = vshrl.u32 %v6996, 7
        %v6998 = vsub.s32 %v6995, %v6997
        %v6999 = vrot.slane %v6971, %v6998
        %v7000 = vcombine.low %v6978, %v6985
        %v7001 = vcombine.low %v6992, %v6999
        %v7003 = vunpack.c.l.s4 1966171168
        %v7004 = vunpack.c.0.s8 %v7003
        %v7005 = vlaneseq
        %v7006 = vshrl.u32 %v7005, 7
        %v7007 = vsub.s32 %v7004, %v7006
        %v7008 = vrot.slane %v7000, %v7007
        %v7010 = vunpack.c.l.s4 1966171168
        %v7011 = vunpack.c.0.s8 %v7010
        %v7012 = vlaneseq
        %v7013 = vshrl.u32 %v7012, 7
        %v7014 = vsub.s32 %v7011, %v7013
        %v7015 = vrot.slane %v7001, %v7014
        %v7016 = vcombine.low %v7008, %v7015
        %v7017 = vcombine.low %v4309, %v4313
        %v7018 = vcombine.low %v4317, %v4321
        %v7019 = vcombine.low %v4325, %v4329
        %v7020 = vcombine.low %v4333, %v4337
        %v7022 = vunpack.c.l.s4 1966171168
        %v7023 = vunpack.c.0.s8 %v7022
        %v7024 = vlaneseq
        %v7025 = vshrl.u32 %v7024, 7
        %v7026 = vsub.s32 %v7023, %v7025
        %v7027 = vrot.slane %v7017, %v7026
        %v7029 = vunpack.c.l.s4 1966171168
        %v7030 = vunpack.c.0.s8 %v7029
        %v7031 = vlaneseq
        %v7032 = vshrl.u32 %v7031, 7
        %v7033 = vsub.s32 %v7030, %v7032
        %v7034 = vrot.slane %v7018, %v7033
        %v7036 = vunpack.c.l.s4 1966171168
        %v7037 = vunpack.c.0.s8 %v7036
        %v7038 = vlaneseq
        %v7039 = vshrl.u32 %v7038, 7
        %v7040 = vsub.s32 %v7037, %v7039
        %v7041 = vrot.slane %v7019, %v7040
        %v7043 = vunpack.c.l.s4 1966171168
        %v7044 = vunpack.c.0.s8 %v7043
        %v7045 = vlaneseq
        %v7046 = vshrl.u32 %v7045, 7
        %v7047 = vsub.s32 %v7044, %v7046
        %v7048 = vrot.slane %v7020, %v7047
        %v7049 = vcombine.low %v7027, %v7034
        %v7050 = vcombine.low %v7041, %v7048
        %v7052 = vunpack.c.l.s4 1966171168
        %v7053 = vunpack.c.0.s8 %v7052
        %v7054 = vlaneseq
        %v7055 = vshrl.u32 %v7054, 7
        %v7056 = vsub.s32 %v7053, %v7055
        %v7057 = vrot.slane %v7049, %v7056
        %v7059 = vunpack.c.l.s4 1966171168
        %v7060 = vunpack.c.0.s8 %v7059
        %v7061 = vlaneseq
        %v7062 = vshrl.u32 %v7061, 7
        %v7063 = vsub.s32 %v7060, %v7062
        %v7064 = vrot.slane %v7050, %v7063
        %v7065 = vcombine.low %v7057, %v7064
        %v7066 = vcombine.low %v4341, %v4345
        %v7067 = vcombine.low %v4349, %v4353
        %v7068 = vcombine.low %v4357, %v4361
        %v7069 = vcombine.low %v4365, %v4369
        %v7071 = vunpack.c.l.s4 1966171168
        %v7072 = vunpack.c.0.s8 %v7071
        %v7073 = vlaneseq
        %v7074 = vshrl.u32 %v7073, 7
        %v7075 = vsub.s32 %v7072, %v7074
        %v7076 = vrot.slane %v7066, %v7075
        %v7078 = vunpack.c.l.s4 1966171168
        %v7079 = vunpack.c.0.s8 %v7078
        %v7080 = vlaneseq
        %v7081 = vshrl.u32 %v7080, 7
        %v7082 = vsub.s32 %v7079, %v7081
        %v7083 = vrot.slane %v7067, %v7082
        %v7085 = vunpack.c.l.s4 1966171168
        %v7086 = vunpack.c.0.s8 %v7085
        %v7087 = vlaneseq
        %v7088 = vshrl.u32 %v7087, 7
        %v7089 = vsub.s32 %v7086, %v7088
        %v7090 = vrot.slane %v7068, %v7089
        %v7092 = vunpack.c.l.s4 1966171168
        %v7093 = vunpack.c.0.s8 %v7092
        %v7094 = vlaneseq
        %v7095 = vshrl.u32 %v7094, 7
        %v7096 = vsub.s32 %v7093, %v7095
        %v7097 = vrot.slane %v7069, %v7096
        %v7098 = vcombine.low %v7076, %v7083
        %v7099 = vcombine.low %v7090, %v7097
        %v7101 = vunpack.c.l.s4 1966171168
        %v7102 = vunpack.c.0.s8 %v7101
        %v7103 = vlaneseq
        %v7104 = vshrl.u32 %v7103, 7
        %v7105 = vsub.s32 %v7102, %v7104
        %v7106 = vrot.slane %v7098, %v7105
        %v7108 = vunpack.c.l.s4 1966171168
        %v7109 = vunpack.c.0.s8 %v7108
        %v7110 = vlaneseq
        %v7111 = vshrl.u32 %v7110, 7
        %v7112 = vsub.s32 %v7109, %v7111
        %v7113 = vrot.slane %v7099, %v7112
        %v7114 = vcombine.low %v7106, %v7113
        %v7115 = vcombine.low %v4373, %v4377
        %v7116 = vcombine.low %v4381, %v4385
        %v7117 = vcombine.low %v4389, %v4393
        %v7118 = vcombine.low %v4397, %v4401
        %v7120 = vunpack.c.l.s4 1966171168
        %v7121 = vunpack.c.0.s8 %v7120
        %v7122 = vlaneseq
        %v7123 = vshrl.u32 %v7122, 7
        %v7124 = vsub.s32 %v7121, %v7123
        %v7125 = vrot.slane %v7115, %v7124
        %v7127 = vunpack.c.l.s4 1966171168
        %v7128 = vunpack.c.0.s8 %v7127
        %v7129 = vlaneseq
        %v7130 = vshrl.u32 %v7129, 7
        %v7131 = vsub.s32 %v7128, %v7130
        %v7132 = vrot.slane %v7116, %v7131
        %v7134 = vunpack.c.l.s4 1966171168
        %v7135 = vunpack.c.0.s8 %v7134
        %v7136 = vlaneseq
        %v7137 = vshrl.u32 %v7136, 7
        %v7138 = vsub.s32 %v7135, %v7137
        %v7139 = vrot.slane %v7117, %v7138
        %v7141 = vunpack.c.l.s4 1966171168
        %v7142 = vunpack.c.0.s8 %v7141
        %v7143 = vlaneseq
        %v7144 = vshrl.u32 %v7143, 7
        %v7145 = vsub.s32 %v7142, %v7144
        %v7146 = vrot.slane %v7118, %v7145
        %v7147 = vcombine.low %v7125, %v7132
        %v7148 = vcombine.low %v7139, %v7146
        %v7150 = vunpack.c.l.s4 1966171168
        %v7151 = vunpack.c.0.s8 %v7150
        %v7152 = vlaneseq
        %v7153 = vshrl.u32 %v7152, 7
        %v7154 = vsub.s32 %v7151, %v7153
        %v7155 = vrot.slane %v7147, %v7154
        %v7157 = vunpack.c.l.s4 1966171168
        %v7158 = vunpack.c.0.s8 %v7157
        %v7159 = vlaneseq
        %v7160 = vshrl.u32 %v7159, 7
        %v7161 = vsub.s32 %v7158, %v7160
        %v7162 = vrot.slane %v7148, %v7161
        %v7163 = vcombine.low %v7155, %v7162
        %v7164 = vcombine.low %v4405, %v4409
        %v7165 = vcombine.low %v4413, %v4417
        %v7166 = vcombine.low %v4421, %v4425
        %v7167 = vcombine.low %v4429, %v4433
        %v7169 = vunpack.c.l.s4 1966171168
        %v7170 = vunpack.c.0.s8 %v7169
        %v7171 = vlaneseq
        %v7172 = vshrl.u32 %v7171, 7
        %v7173 = vsub.s32 %v7170, %v7172
        %v7174 = vrot.slane %v7164, %v7173
        %v7176 = vunpack.c.l.s4 1966171168
        %v7177 = vunpack.c.0.s8 %v7176
        %v7178 = vlaneseq
        %v7179 = vshrl.u32 %v7178, 7
        %v7180 = vsub.s32 %v7177, %v7179
        %v7181 = vrot.slane %v7165, %v7180
        %v7183 = vunpack.c.l.s4 1966171168
        %v7184 = vunpack.c.0.s8 %v7183
        %v7185 = vlaneseq
        %v7186 = vshrl.u32 %v7185, 7
        %v7187 = vsub.s32 %v7184, %v7186
        %v7188 = vrot.slane %v7166, %v7187
        %v7190 = vunpack.c.l.s4 1966171168
        %v7191 = vunpack.c.0.s8 %v7190
        %v7192 = vlaneseq
        %v7193 = vshrl.u32 %v7192, 7
        %v7194 = vsub.s32 %v7191, %v7193
        %v7195 = vrot.slane %v7167, %v7194
        %v7196 = vcombine.low %v7174, %v7181
        %v7197 = vcombine.low %v7188, %v7195
        %v7199 = vunpack.c.l.s4 1966171168
        %v7200 = vunpack.c.0.s8 %v7199
        %v7201 = vlaneseq
        %v7202 = vshrl.u32 %v7201, 7
        %v7203 = vsub.s32 %v7200, %v7202
        %v7204 = vrot.slane %v7196, %v7203
        %v7206 = vunpack.c.l.s4 1966171168
        %v7207 = vunpack.c.0.s8 %v7206
        %v7208 = vlaneseq
        %v7209 = vshrl.u32 %v7208, 7
        %v7210 = vsub.s32 %v7207, %v7209
        %v7211 = vrot.slane %v7197, %v7210
        %v7212 = vcombine.low %v7204, %v7211
        %v7213 = vcombine.low %v4437, %v4441
        %v7214 = vcombine.low %v4445, %v4449
        %v7215 = vcombine.low %v4453, %v4457
        %v7216 = vcombine.low %v4461, %v4465
        %v7218 = vunpack.c.l.s4 1966171168
        %v7219 = vunpack.c.0.s8 %v7218
        %v7220 = vlaneseq
        %v7221 = vshrl.u32 %v7220, 7
        %v7222 = vsub.s32 %v7219, %v7221
        %v7223 = vrot.slane %v7213, %v7222
        %v7225 = vunpack.c.l.s4 1966171168
        %v7226 = vunpack.c.0.s8 %v7225
        %v7227 = vlaneseq
        %v7228 = vshrl.u32 %v7227, 7
        %v7229 = vsub.s32 %v7226, %v7228
        %v7230 = vrot.slane %v7214, %v7229
        %v7232 = vunpack.c.l.s4 1966171168
        %v7233 = vunpack.c.0.s8 %v7232
        %v7234 = vlaneseq
        %v7235 = vshrl.u32 %v7234, 7
        %v7236 = vsub.s32 %v7233, %v7235
        %v7237 = vrot.slane %v7215, %v7236
        %v7239 = vunpack.c.l.s4 1966171168
        %v7240 = vunpack.c.0.s8 %v7239
        %v7241 = vlaneseq
        %v7242 = vshrl.u32 %v7241, 7
        %v7243 = vsub.s32 %v7240, %v7242
        %v7244 = vrot.slane %v7216, %v7243
        %v7245 = vcombine.low %v7223, %v7230
        %v7246 = vcombine.low %v7237, %v7244
        %v7248 = vunpack.c.l.s4 1966171168
        %v7249 = vunpack.c.0.s8 %v7248
        %v7250 = vlaneseq
        %v7251 = vshrl.u32 %v7250, 7
        %v7252 = vsub.s32 %v7249, %v7251
        %v7253 = vrot.slane %v7245, %v7252
        %v7255 = vunpack.c.l.s4 1966171168
        %v7256 = vunpack.c.0.s8 %v7255
        %v7257 = vlaneseq
        %v7258 = vshrl.u32 %v7257, 7
        %v7259 = vsub.s32 %v7256, %v7258
        %v7260 = vrot.slane %v7246, %v7259
        %v7261 = vcombine.low %v7253, %v7260
        %v7262 = vcombine.low %v4469, %v4473
        %v7263 = vcombine.low %v4477, %v4481
        %v7264 = vcombine.low %v4485, %v4489
        %v7265 = vcombine.low %v4493, %v4497
        %v7267 = vunpack.c.l.s4 1966171168
        %v7268 = vunpack.c.0.s8 %v7267
        %v7269 = vlaneseq
        %v7270 = vshrl.u32 %v7269, 7
        %v7271 = vsub.s32 %v7268, %v7270
        %v7272 = vrot.slane %v7262, %v7271
        %v7274 = vunpack.c.l.s4 1966171168
        %v7275 = vunpack.c.0.s8 %v7274
        %v7276 = vlaneseq
        %v7277 = vshrl.u32 %v7276, 7
        %v7278 = vsub.s32 %v7275, %v7277
        %v7279 = vrot.slane %v7263, %v7278
        %v7281 = vunpack.c.l.s4 1966171168
        %v7282 = vunpack.c.0.s8 %v7281
        %v7283 = vlaneseq
        %v7284 = vshrl.u32 %v7283, 7
        %v7285 = vsub.s32 %v7282, %v7284
        %v7286 = vrot.slane %v7264, %v7285
        %v7288 = vunpack.c.l.s4 1966171168
        %v7289 = vunpack.c.0.s8 %v7288
        %v7290 = vlaneseq
        %v7291 = vshrl.u32 %v7290, 7
        %v7292 = vsub.s32 %v7289, %v7291
        %v7293 = vrot.slane %v7265, %v7292
        %v7294 = vcombine.low %v7272, %v7279
        %v7295 = vcombine.low %v7286, %v7293
        %v7297 = vunpack.c.l.s4 1966171168
        %v7298 = vunpack.c.0.s8 %v7297
        %v7299 = vlaneseq
        %v7300 = vshrl.u32 %v7299, 7
        %v7301 = vsub.s32 %v7298, %v7300
        %v7302 = vrot.slane %v7294, %v7301
        %v7304 = vunpack.c.l.s4 1966171168
        %v7305 = vunpack.c.0.s8 %v7304
        %v7306 = vlaneseq
        %v7307 = vshrl.u32 %v7306, 7
        %v7308 = vsub.s32 %v7305, %v7307
        %v7309 = vrot.slane %v7295, %v7308
        %v7310 = vcombine.low %v7302, %v7309
        %v7311 = vcombine.low %v4501, %v4505
        %v7312 = vcombine.low %v4509, %v4513
        %v7313 = vcombine.low %v4517, %v4521
        %v7314 = vcombine.low %v4525, %v4529
        %v7316 = vunpack.c.l.s4 1966171168
        %v7317 = vunpack.c.0.s8 %v7316
        %v7318 = vlaneseq
        %v7319 = vshrl.u32 %v7318, 7
        %v7320 = vsub.s32 %v7317, %v7319
        %v7321 = vrot.slane %v7311, %v7320
        %v7323 = vunpack.c.l.s4 1966171168
        %v7324 = vunpack.c.0.s8 %v7323
        %v7325 = vlaneseq
        %v7326 = vshrl.u32 %v7325, 7
        %v7327 = vsub.s32 %v7324, %v7326
        %v7328 = vrot.slane %v7312, %v7327
        %v7330 = vunpack.c.l.s4 1966171168
        %v7331 = vunpack.c.0.s8 %v7330
        %v7332 = vlaneseq
        %v7333 = vshrl.u32 %v7332, 7
        %v7334 = vsub.s32 %v7331, %v7333
        %v7335 = vrot.slane %v7313, %v7334
        %v7337 = vunpack.c.l.s4 1966171168
        %v7338 = vunpack.c.0.s8 %v7337
        %v7339 = vlaneseq
        %v7340 = vshrl.u32 %v7339, 7
        %v7341 = vsub.s32 %v7338, %v7340
        %v7342 = vrot.slane %v7314, %v7341
        %v7343 = vcombine.low %v7321, %v7328
        %v7344 = vcombine.low %v7335, %v7342
        %v7346 = vunpack.c.l.s4 1966171168
        %v7347 = vunpack.c.0.s8 %v7346
        %v7348 = vlaneseq
        %v7349 = vshrl.u32 %v7348, 7
        %v7350 = vsub.s32 %v7347, %v7349
        %v7351 = vrot.slane %v7343, %v7350
        %v7353 = vunpack.c.l.s4 1966171168
        %v7354 = vunpack.c.0.s8 %v7353
        %v7355 = vlaneseq
        %v7356 = vshrl.u32 %v7355, 7
        %v7357 = vsub.s32 %v7354, %v7356
        %v7358 = vrot.slane %v7344, %v7357
        %v7359 = vcombine.low %v7351, %v7358
        %v7360 = vcombine.low %v4533, %v4537
        %v7361 = vcombine.low %v4541, %v4545
        %v7362 = vcombine.low %v4549, %v4553
        %v7363 = vcombine.low %v4557, %v4561
        %v7365 = vunpack.c.l.s4 1966171168
        %v7366 = vunpack.c.0.s8 %v7365
        %v7367 = vlaneseq
        %v7368 = vshrl.u32 %v7367, 7
        %v7369 = vsub.s32 %v7366, %v7368
        %v7370 = vrot.slane %v7360, %v7369
        %v7372 = vunpack.c.l.s4 1966171168
        %v7373 = vunpack.c.0.s8 %v7372
        %v7374 = vlaneseq
        %v7375 = vshrl.u32 %v7374, 7
        %v7376 = vsub.s32 %v7373, %v7375
        %v7377 = vrot.slane %v7361, %v7376
        %v7379 = vunpack.c.l.s4 1966171168
        %v7380 = vunpack.c.0.s8 %v7379
        %v7381 = vlaneseq
        %v7382 = vshrl.u32 %v7381, 7
        %v7383 = vsub.s32 %v7380, %v7382
        %v7384 = vrot.slane %v7362, %v7383
        %v7386 = vunpack.c.l.s4 1966171168
        %v7387 = vunpack.c.0.s8 %v7386
        %v7388 = vlaneseq
        %v7389 = vshrl.u32 %v7388, 7
        %v7390 = vsub.s32 %v7387, %v7389
        %v7391 = vrot.slane %v7363, %v7390
        %v7392 = vcombine.low %v7370, %v7377
        %v7393 = vcombine.low %v7384, %v7391
        %v7395 = vunpack.c.l.s4 1966171168
        %v7396 = vunpack.c.0.s8 %v7395
        %v7397 = vlaneseq
        %v7398 = vshrl.u32 %v7397, 7
        %v7399 = vsub.s32 %v7396, %v7398
        %v7400 = vrot.slane %v7392, %v7399
        %v7402 = vunpack.c.l.s4 1966171168
        %v7403 = vunpack.c.0.s8 %v7402
        %v7404 = vlaneseq
        %v7405 = vshrl.u32 %v7404, 7
        %v7406 = vsub.s32 %v7403, %v7405
        %v7407 = vrot.slane %v7393, %v7406
        %v7408 = vcombine.low %v7400, %v7407
        %v7409 = vcombine.low %v4565, %v4569
        %v7410 = vcombine.low %v4573, %v4577
        %v7411 = vcombine.low %v4581, %v4585
        %v7412 = vcombine.low %v4589, %v4593
        %v7414 = vunpack.c.l.s4 1966171168
        %v7415 = vunpack.c.0.s8 %v7414
        %v7416 = vlaneseq
        %v7417 = vshrl.u32 %v7416, 7
        %v7418 = vsub.s32 %v7415, %v7417
        %v7419 = vrot.slane %v7409, %v7418
        %v7421 = vunpack.c.l.s4 1966171168
        %v7422 = vunpack.c.0.s8 %v7421
        %v7423 = vlaneseq
        %v7424 = vshrl.u32 %v7423, 7
        %v7425 = vsub.s32 %v7422, %v7424
        %v7426 = vrot.slane %v7410, %v7425
        %v7428 = vunpack.c.l.s4 1966171168
        %v7429 = vunpack.c.0.s8 %v7428
        %v7430 = vlaneseq
        %v7431 = vshrl.u32 %v7430, 7
        %v7432 = vsub.s32 %v7429, %v7431
        %v7433 = vrot.slane %v7411, %v7432
        %v7435 = vunpack.c.l.s4 1966171168
        %v7436 = vunpack.c.0.s8 %v7435
        %v7437 = vlaneseq
        %v7438 = vshrl.u32 %v7437, 7
        %v7439 = vsub.s32 %v7436, %v7438
        %v7440 = vrot.slane %v7412, %v7439
        %v7441 = vcombine.low %v7419, %v7426
        %v7442 = vcombine.low %v7433, %v7440
        %v7444 = vunpack.c.l.s4 1966171168
        %v7445 = vunpack.c.0.s8 %v7444
        %v7446 = vlaneseq
        %v7447 = vshrl.u32 %v7446, 7
        %v7448 = vsub.s32 %v7445, %v7447
        %v7449 = vrot.slane %v7441, %v7448
        %v7451 = vunpack.c.l.s4 1966171168
        %v7452 = vunpack.c.0.s8 %v7451
        %v7453 = vlaneseq
        %v7454 = vshrl.u32 %v7453, 7
        %v7455 = vsub.s32 %v7452, %v7454
        %v7456 = vrot.slane %v7442, %v7455
        %v7457 = vcombine.low %v7449, %v7456
        %v7458 = vcombine.low %v4597, %v4601
        %v7459 = vcombine.low %v4605, %v4609
        %v7460 = vcombine.low %v4613, %v4617
        %v7461 = vcombine.low %v4621, %v4625
        %v7463 = vunpack.c.l.s4 1966171168
        %v7464 = vunpack.c.0.s8 %v7463
        %v7465 = vlaneseq
        %v7466 = vshrl.u32 %v7465, 7
        %v7467 = vsub.s32 %v7464, %v7466
        %v7468 = vrot.slane %v7458, %v7467
        %v7470 = vunpack.c.l.s4 1966171168
        %v7471 = vunpack.c.0.s8 %v7470
        %v7472 = vlaneseq
        %v7473 = vshrl.u32 %v7472, 7
        %v7474 = vsub.s32 %v7471, %v7473
        %v7475 = vrot.slane %v7459, %v7474
        %v7477 = vunpack.c.l.s4 1966171168
        %v7478 = vunpack.c.0.s8 %v7477
        %v7479 = vlaneseq
        %v7480 = vshrl.u32 %v7479, 7
        %v7481 = vsub.s32 %v7478, %v7480
        %v7482 = vrot.slane %v7460, %v7481
        %v7484 = vunpack.c.l.s4 1966171168
        %v7485 = vunpack.c.0.s8 %v7484
        %v7486 = vlaneseq
        %v7487 = vshrl.u32 %v7486, 7
        %v7488 = vsub.s32 %v7485, %v7487
        %v7489 = vrot.slane %v7461, %v7488
        %v7490 = vcombine.low %v7468, %v7475
        %v7491 = vcombine.low %v7482, %v7489
        %v7493 = vunpack.c.l.s4 1966171168
        %v7494 = vunpack.c.0.s8 %v7493
        %v7495 = vlaneseq
        %v7496 = vshrl.u32 %v7495, 7
        %v7497 = vsub.s32 %v7494, %v7496
        %v7498 = vrot.slane %v7490, %v7497
        %v7500 = vunpack.c.l.s4 1966171168
        %v7501 = vunpack.c.0.s8 %v7500
        %v7502 = vlaneseq
        %v7503 = vshrl.u32 %v7502, 7
        %v7504 = vsub.s32 %v7501, %v7503
        %v7505 = vrot.slane %v7491, %v7504
        %v7506 = vcombine.low %v7498, %v7505
        %v7507 = vcombine.low %v4629, %v4633
        %v7508 = vcombine.low %v4637, %v4641
        %v7509 = vcombine.low %v4645, %v4649
        %v7510 = vcombine.low %v4653, %v4657
        %v7512 = vunpack.c.l.s4 1966171168
        %v7513 = vunpack.c.0.s8 %v7512
        %v7514 = vlaneseq
        %v7515 = vshrl.u32 %v7514, 7
        %v7516 = vsub.s32 %v7513, %v7515
        %v7517 = vrot.slane %v7507, %v7516
        %v7519 = vunpack.c.l.s4 1966171168
        %v7520 = vunpack.c.0.s8 %v7519
        %v7521 = vlaneseq
        %v7522 = vshrl.u32 %v7521, 7
        %v7523 = vsub.s32 %v7520, %v7522
        %v7524 = vrot.slane %v7508, %v7523
        %v7526 = vunpack.c.l.s4 1966171168
        %v7527 = vunpack.c.0.s8 %v7526
        %v7528 = vlaneseq
        %v7529 = vshrl.u32 %v7528, 7
        %v7530 = vsub.s32 %v7527, %v7529
        %v7531 = vrot.slane %v7509, %v7530
        %v7533 = vunpack.c.l.s4 1966171168
        %v7534 = vunpack.c.0.s8 %v7533
        %v7535 = vlaneseq
        %v7536 = vshrl.u32 %v7535, 7
        %v7537 = vsub.s32 %v7534, %v7536
        %v7538 = vrot.slane %v7510, %v7537
        %v7539 = vcombine.low %v7517, %v7524
        %v7540 = vcombine.low %v7531, %v7538
        %v7542 = vunpack.c.l.s4 1966171168
        %v7543 = vunpack.c.0.s8 %v7542
        %v7544 = vlaneseq
        %v7545 = vshrl.u32 %v7544, 7
        %v7546 = vsub.s32 %v7543, %v7545
        %v7547 = vrot.slane %v7539, %v7546
        %v7549 = vunpack.c.l.s4 1966171168
        %v7550 = vunpack.c.0.s8 %v7549
        %v7551 = vlaneseq
        %v7552 = vshrl.u32 %v7551, 7
        %v7553 = vsub.s32 %v7550, %v7552
        %v7554 = vrot.slane %v7540, %v7553
        %v7555 = vcombine.low %v7547, %v7554
        %v7556 = vcombine.low %v4661, %v4665
        %v7557 = vcombine.low %v4669, %v4673
        %v7558 = vcombine.low %v4677, %v4681
        %v7559 = vcombine.low %v4685, %v4689
        %v7561 = vunpack.c.l.s4 1966171168
        %v7562 = vunpack.c.0.s8 %v7561
        %v7563 = vlaneseq
        %v7564 = vshrl.u32 %v7563, 7
        %v7565 = vsub.s32 %v7562, %v7564
        %v7566 = vrot.slane %v7556, %v7565
        %v7568 = vunpack.c.l.s4 1966171168
        %v7569 = vunpack.c.0.s8 %v7568
        %v7570 = vlaneseq
        %v7571 = vshrl.u32 %v7570, 7
        %v7572 = vsub.s32 %v7569, %v7571
        %v7573 = vrot.slane %v7557, %v7572
        %v7575 = vunpack.c.l.s4 1966171168
        %v7576 = vunpack.c.0.s8 %v7575
        %v7577 = vlaneseq
        %v7578 = vshrl.u32 %v7577, 7
        %v7579 = vsub.s32 %v7576, %v7578
        %v7580 = vrot.slane %v7558, %v7579
        %v7582 = vunpack.c.l.s4 1966171168
        %v7583 = vunpack.c.0.s8 %v7582
        %v7584 = vlaneseq
        %v7585 = vshrl.u32 %v7584, 7
        %v7586 = vsub.s32 %v7583, %v7585
        %v7587 = vrot.slane %v7559, %v7586
        %v7588 = vcombine.low %v7566, %v7573
        %v7589 = vcombine.low %v7580, %v7587
        %v7591 = vunpack.c.l.s4 1966171168
        %v7592 = vunpack.c.0.s8 %v7591
        %v7593 = vlaneseq
        %v7594 = vshrl.u32 %v7593, 7
        %v7595 = vsub.s32 %v7592, %v7594
        %v7596 = vrot.slane %v7588, %v7595
        %v7598 = vunpack.c.l.s4 1966171168
        %v7599 = vunpack.c.0.s8 %v7598
        %v7600 = vlaneseq
        %v7601 = vshrl.u32 %v7600, 7
        %v7602 = vsub.s32 %v7599, %v7601
        %v7603 = vrot.slane %v7589, %v7602
        %v7604 = vcombine.low %v7596, %v7603
        %v7605 = vcombine.low %v4693, %v4697
        %v7606 = vcombine.low %v4701, %v4705
        %v7607 = vcombine.low %v4709, %v4713
        %v7608 = vcombine.low %v4717, %v4721
        %v7610 = vunpack.c.l.s4 1966171168
        %v7611 = vunpack.c.0.s8 %v7610
        %v7612 = vlaneseq
        %v7613 = vshrl.u32 %v7612, 7
        %v7614 = vsub.s32 %v7611, %v7613
        %v7615 = vrot.slane %v7605, %v7614
        %v7617 = vunpack.c.l.s4 1966171168
        %v7618 = vunpack.c.0.s8 %v7617
        %v7619 = vlaneseq
        %v7620 = vshrl.u32 %v7619, 7
        %v7621 = vsub.s32 %v7618, %v7620
        %v7622 = vrot.slane %v7606, %v7621
        %v7624 = vunpack.c.l.s4 1966171168
        %v7625 = vunpack.c.0.s8 %v7624
        %v7626 = vlaneseq
        %v7627 = vshrl.u32 %v7626, 7
        %v7628 = vsub.s32 %v7625, %v7627
        %v7629 = vrot.slane %v7607, %v7628
        %v7631 = vunpack.c.l.s4 1966171168
        %v7632 = vunpack.c.0.s8 %v7631
        %v7633 = vlaneseq
        %v7634 = vshrl.u32 %v7633, 7
        %v7635 = vsub.s32 %v7632, %v7634
        %v7636 = vrot.slane %v7608, %v7635
        %v7637 = vcombine.low %v7615, %v7622
        %v7638 = vcombine.low %v7629, %v7636
        %v7640 = vunpack.c.l.s4 1966171168
        %v7641 = vunpack.c.0.s8 %v7640
        %v7642 = vlaneseq
        %v7643 = vshrl.u32 %v7642, 7
        %v7644 = vsub.s32 %v7641, %v7643
        %v7645 = vrot.slane %v7637, %v7644
        %v7647 = vunpack.c.l.s4 1966171168
        %v7648 = vunpack.c.0.s8 %v7647
        %v7649 = vlaneseq
        %v7650 = vshrl.u32 %v7649, 7
        %v7651 = vsub.s32 %v7648, %v7650
        %v7652 = vrot.slane %v7638, %v7651
        %v7653 = vcombine.low %v7645, %v7652
        %v7654 = vcombine.low %v4725, %v4729
        %v7655 = vcombine.low %v4733, %v4737
        %v7656 = vcombine.low %v4741, %v4745
        %v7657 = vcombine.low %v4749, %v4753
        %v7659 = vunpack.c.l.s4 1966171168
        %v7660 = vunpack.c.0.s8 %v7659
        %v7661 = vlaneseq
        %v7662 = vshrl.u32 %v7661, 7
        %v7663 = vsub.s32 %v7660, %v7662
        %v7664 = vrot.slane %v7654, %v7663
        %v7666 = vunpack.c.l.s4 1966171168
        %v7667 = vunpack.c.0.s8 %v7666
        %v7668 = vlaneseq
        %v7669 = vshrl.u32 %v7668, 7
        %v7670 = vsub.s32 %v7667, %v7669
        %v7671 = vrot.slane %v7655, %v7670
        %v7673 = vunpack.c.l.s4 1966171168
        %v7674 = vunpack.c.0.s8 %v7673
        %v7675 = vlaneseq
        %v7676 = vshrl.u32 %v7675, 7
        %v7677 = vsub.s32 %v7674, %v7676
        %v7678 = vrot.slane %v7656, %v7677
        %v7680 = vunpack.c.l.s4 1966171168
        %v7681 = vunpack.c.0.s8 %v7680
        %v7682 = vlaneseq
        %v7683 = vshrl.u32 %v7682, 7
        %v7684 = vsub.s32 %v7681, %v7683
        %v7685 = vrot.slane %v7657, %v7684
        %v7686 = vcombine.low %v7664, %v7671
        %v7687 = vcombine.low %v7678, %v7685
        %v7689 = vunpack.c.l.s4 1966171168
        %v7690 = vunpack.c.0.s8 %v7689
        %v7691 = vlaneseq
        %v7692 = vshrl.u32 %v7691, 7
        %v7693 = vsub.s32 %v7690, %v7692
        %v7694 = vrot.slane %v7686, %v7693
        %v7696 = vunpack.c.l.s4 1966171168
        %v7697 = vunpack.c.0.s8 %v7696
        %v7698 = vlaneseq
        %v7699 = vshrl.u32 %v7698, 7
        %v7700 = vsub.s32 %v7697, %v7699
        %v7701 = vrot.slane %v7687, %v7700
        %v7702 = vcombine.low %v7694, %v7701
        %v7703 = vcombine.low %v4757, %v4761
        %v7704 = vcombine.low %v4765, %v4769
        %v7705 = vcombine.low %v4773, %v4777
        %v7706 = vcombine.low %v4781, %v4785
        %v7708 = vunpack.c.l.s4 1966171168
        %v7709 = vunpack.c.0.s8 %v7708
        %v7710 = vlaneseq
        %v7711 = vshrl.u32 %v7710, 7
        %v7712 = vsub.s32 %v7709, %v7711
        %v7713 = vrot.slane %v7703, %v7712
        %v7715 = vunpack.c.l.s4 1966171168
        %v7716 = vunpack.c.0.s8 %v7715
        %v7717 = vlaneseq
        %v7718 = vshrl.u32 %v7717, 7
        %v7719 = vsub.s32 %v7716, %v7718
        %v7720 = vrot.slane %v7704, %v7719
        %v7722 = vunpack.c.l.s4 1966171168
        %v7723 = vunpack.c.0.s8 %v7722
        %v7724 = vlaneseq
        %v7725 = vshrl.u32 %v7724, 7
        %v7726 = vsub.s32 %v7723, %v7725
        %v7727 = vrot.slane %v7705, %v7726
        %v7729 = vunpack.c.l.s4 1966171168
        %v7730 = vunpack.c.0.s8 %v7729
        %v7731 = vlaneseq
        %v7732 = vshrl.u32 %v7731, 7
        %v7733 = vsub.s32 %v7730, %v7732
        %v7734 = vrot.slane %v7706, %v7733
        %v7735 = vcombine.low %v7713, %v7720
        %v7736 = vcombine.low %v7727, %v7734
        %v7738 = vunpack.c.l.s4 1966171168
        %v7739 = vunpack.c.0.s8 %v7738
        %v7740 = vlaneseq
        %v7741 = vshrl.u32 %v7740, 7
        %v7742 = vsub.s32 %v7739, %v7741
        %v7743 = vrot.slane %v7735, %v7742
        %v7745 = vunpack.c.l.s4 1966171168
        %v7746 = vunpack.c.0.s8 %v7745
        %v7747 = vlaneseq
        %v7748 = vshrl.u32 %v7747, 7
        %v7749 = vsub.s32 %v7746, %v7748
        %v7750 = vrot.slane %v7736, %v7749
        %v7751 = vcombine.low %v7743, %v7750
        %v7752 = vcombine.low %v4789, %v4793
        %v7753 = vcombine.low %v4797, %v4801
        %v7754 = vcombine.low %v4805, %v4809
        %v7755 = vcombine.low %v4813, %v4817
        %v7757 = vunpack.c.l.s4 1966171168
        %v7758 = vunpack.c.0.s8 %v7757
        %v7759 = vlaneseq
        %v7760 = vshrl.u32 %v7759, 7
        %v7761 = vsub.s32 %v7758, %v7760
        %v7762 = vrot.slane %v7752, %v7761
        %v7764 = vunpack.c.l.s4 1966171168
        %v7765 = vunpack.c.0.s8 %v7764
        %v7766 = vlaneseq
        %v7767 = vshrl.u32 %v7766, 7
        %v7768 = vsub.s32 %v7765, %v7767
        %v7769 = vrot.slane %v7753, %v7768
        %v7771 = vunpack.c.l.s4 1966171168
        %v7772 = vunpack.c.0.s8 %v7771
        %v7773 = vlaneseq
        %v7774 = vshrl.u32 %v7773, 7
        %v7775 = vsub.s32 %v7772, %v7774
        %v7776 = vrot.slane %v7754, %v7775
        %v7778 = vunpack.c.l.s4 1966171168
        %v7779 = vunpack.c.0.s8 %v7778
        %v7780 = vlaneseq
        %v7781 = vshrl.u32 %v7780, 7
        %v7782 = vsub.s32 %v7779, %v7781
        %v7783 = vrot.slane %v7755, %v7782
        %v7784 = vcombine.low %v7762, %v7769
        %v7785 = vcombine.low %v7776, %v7783
        %v7787 = vunpack.c.l.s4 1966171168
        %v7788 = vunpack.c.0.s8 %v7787
        %v7789 = vlaneseq
        %v7790 = vshrl.u32 %v7789, 7
        %v7791 = vsub.s32 %v7788, %v7790
        %v7792 = vrot.slane %v7784, %v7791
        %v7794 = vunpack.c.l.s4 1966171168
        %v7795 = vunpack.c.0.s8 %v7794
        %v7796 = vlaneseq
        %v7797 = vshrl.u32 %v7796, 7
        %v7798 = vsub.s32 %v7795, %v7797
        %v7799 = vrot.slane %v7785, %v7798
        %v7800 = vcombine.low %v7792, %v7799
        %v7801 = vcombine.low %v4821, %v4825
        %v7802 = vcombine.low %v4829, %v4833
        %v7803 = vcombine.low %v4837, %v4841
        %v7804 = vcombine.low %v4845, %v4849
        %v7806 = vunpack.c.l.s4 1966171168
        %v7807 = vunpack.c.0.s8 %v7806
        %v7808 = vlaneseq
        %v7809 = vshrl.u32 %v7808, 7
        %v7810 = vsub.s32 %v7807, %v7809
        %v7811 = vrot.slane %v7801, %v7810
        %v7813 = vunpack.c.l.s4 1966171168
        %v7814 = vunpack.c.0.s8 %v7813
        %v7815 = vlaneseq
        %v7816 = vshrl.u32 %v7815, 7
        %v7817 = vsub.s32 %v7814, %v7816
        %v7818 = vrot.slane %v7802, %v7817
        %v7820 = vunpack.c.l.s4 1966171168
        %v7821 = vunpack.c.0.s8 %v7820
        %v7822 = vlaneseq
        %v7823 = vshrl.u32 %v7822, 7
        %v7824 = vsub.s32 %v7821, %v7823
        %v7825 = vrot.slane %v7803, %v7824
        %v7827 = vunpack.c.l.s4 1966171168
        %v7828 = vunpack.c.0.s8 %v7827
        %v7829 = vlaneseq
        %v7830 = vshrl.u32 %v7829, 7
        %v7831 = vsub.s32 %v7828, %v7830
        %v7832 = vrot.slane %v7804, %v7831
        %v7833 = vcombine.low %v7811, %v7818
        %v7834 = vcombine.low %v7825, %v7832
        %v7836 = vunpack.c.l.s4 1966171168
        %v7837 = vunpack.c.0.s8 %v7836
        %v7838 = vlaneseq
        %v7839 = vshrl.u32 %v7838, 7
        %v7840 = vsub.s32 %v7837, %v7839
        %v7841 = vrot.slane %v7833, %v7840
        %v7843 = vunpack.c.l.s4 1966171168
        %v7844 = vunpack.c.0.s8 %v7843
        %v7845 = vlaneseq
        %v7846 = vshrl.u32 %v7845, 7
        %v7847 = vsub.s32 %v7844, %v7846
        %v7848 = vrot.slane %v7834, %v7847
        %v7849 = vcombine.low %v7841, %v7848
        %v7850 = vcombine.low %v4853, %v4857
        %v7851 = vcombine.low %v4861, %v4865
        %v7852 = vcombine.low %v4869, %v4873
        %v7853 = vcombine.low %v4877, %v4881
        %v7855 = vunpack.c.l.s4 1966171168
        %v7856 = vunpack.c.0.s8 %v7855
        %v7857 = vlaneseq
        %v7858 = vshrl.u32 %v7857, 7
        %v7859 = vsub.s32 %v7856, %v7858
        %v7860 = vrot.slane %v7850, %v7859
        %v7862 = vunpack.c.l.s4 1966171168
        %v7863 = vunpack.c.0.s8 %v7862
        %v7864 = vlaneseq
        %v7865 = vshrl.u32 %v7864, 7
        %v7866 = vsub.s32 %v7863, %v7865
        %v7867 = vrot.slane %v7851, %v7866
        %v7869 = vunpack.c.l.s4 1966171168
        %v7870 = vunpack.c.0.s8 %v7869
        %v7871 = vlaneseq
        %v7872 = vshrl.u32 %v7871, 7
        %v7873 = vsub.s32 %v7870, %v7872
        %v7874 = vrot.slane %v7852, %v7873
        %v7876 = vunpack.c.l.s4 1966171168
        %v7877 = vunpack.c.0.s8 %v7876
        %v7878 = vlaneseq
        %v7879 = vshrl.u32 %v7878, 7
        %v7880 = vsub.s32 %v7877, %v7879
        %v7881 = vrot.slane %v7853, %v7880
        %v7882 = vcombine.low %v7860, %v7867
        %v7883 = vcombine.low %v7874, %v7881
        %v7885 = vunpack.c.l.s4 1966171168
        %v7886 = vunpack.c.0.s8 %v7885
        %v7887 = vlaneseq
        %v7888 = vshrl.u32 %v7887, 7
        %v7889 = vsub.s32 %v7886, %v7888
        %v7890 = vrot.slane %v7882, %v7889
        %v7892 = vunpack.c.l.s4 1966171168
        %v7893 = vunpack.c.0.s8 %v7892
        %v7894 = vlaneseq
        %v7895 = vshrl.u32 %v7894, 7
        %v7896 = vsub.s32 %v7893, %v7895
        %v7897 = vrot.slane %v7883, %v7896
        %v7898 = vcombine.low %v7890, %v7897
        %v7899 = vcombine.low %v4885, %v4889
        %v7900 = vcombine.low %v4893, %v4897
        %v7901 = vcombine.low %v4901, %v4905
        %v7902 = vcombine.low %v4909, %v4913
        %v7904 = vunpack.c.l.s4 1966171168
        %v7905 = vunpack.c.0.s8 %v7904
        %v7906 = vlaneseq
        %v7907 = vshrl.u32 %v7906, 7
        %v7908 = vsub.s32 %v7905, %v7907
        %v7909 = vrot.slane %v7899, %v7908
        %v7911 = vunpack.c.l.s4 1966171168
        %v7912 = vunpack.c.0.s8 %v7911
        %v7913 = vlaneseq
        %v7914 = vshrl.u32 %v7913, 7
        %v7915 = vsub.s32 %v7912, %v7914
        %v7916 = vrot.slane %v7900, %v7915
        %v7918 = vunpack.c.l.s4 1966171168
        %v7919 = vunpack.c.0.s8 %v7918
        %v7920 = vlaneseq
        %v7921 = vshrl.u32 %v7920, 7
        %v7922 = vsub.s32 %v7919, %v7921
        %v7923 = vrot.slane %v7901, %v7922
        %v7925 = vunpack.c.l.s4 1966171168
        %v7926 = vunpack.c.0.s8 %v7925
        %v7927 = vlaneseq
        %v7928 = vshrl.u32 %v7927, 7
        %v7929 = vsub.s32 %v7926, %v7928
        %v7930 = vrot.slane %v7902, %v7929
        %v7931 = vcombine.low %v7909, %v7916
        %v7932 = vcombine.low %v7923, %v7930
        %v7934 = vunpack.c.l.s4 1966171168
        %v7935 = vunpack.c.0.s8 %v7934
        %v7936 = vlaneseq
        %v7937 = vshrl.u32 %v7936, 7
        %v7938 = vsub.s32 %v7935, %v7937
        %v7939 = vrot.slane %v7931, %v7938
        %v7941 = vunpack.c.l.s4 1966171168
        %v7942 = vunpack.c.0.s8 %v7941
        %v7943 = vlaneseq
        %v7944 = vshrl.u32 %v7943, 7
        %v7945 = vsub.s32 %v7942, %v7944
        %v7946 = vrot.slane %v7932, %v7945
        %v7947 = vcombine.low %v7939, %v7946
        %v7948 = vcombine.low %v4917, %v4921
        %v7949 = vcombine.low %v4925, %v4929
        %v7950 = vcombine.low %v4933, %v4937
        %v7951 = vcombine.low %v4941, %v4945
        %v7953 = vunpack.c.l.s4 1966171168
        %v7954 = vunpack.c.0.s8 %v7953
        %v7955 = vlaneseq
        %v7956 = vshrl.u32 %v7955, 7
        %v7957 = vsub.s32 %v7954, %v7956
        %v7958 = vrot.slane %v7948, %v7957
        %v7960 = vunpack.c.l.s4 1966171168
        %v7961 = vunpack.c.0.s8 %v7960
        %v7962 = vlaneseq
        %v7963 = vshrl.u32 %v7962, 7
        %v7964 = vsub.s32 %v7961, %v7963
        %v7965 = vrot.slane %v7949, %v7964
        %v7967 = vunpack.c.l.s4 1966171168
        %v7968 = vunpack.c.0.s8 %v7967
        %v7969 = vlaneseq
        %v7970 = vshrl.u32 %v7969, 7
        %v7971 = vsub.s32 %v7968, %v7970
        %v7972 = vrot.slane %v7950, %v7971
        %v7974 = vunpack.c.l.s4 1966171168
        %v7975 = vunpack.c.0.s8 %v7974
        %v7976 = vlaneseq
        %v7977 = vshrl.u32 %v7976, 7
        %v7978 = vsub.s32 %v7975, %v7977
        %v7979 = vrot.slane %v7951, %v7978
        %v7980 = vcombine.low %v7958, %v7965
        %v7981 = vcombine.low %v7972, %v7979
        %v7983 = vunpack.c.l.s4 1966171168
        %v7984 = vunpack.c.0.s8 %v7983
        %v7985 = vlaneseq
        %v7986 = vshrl.u32 %v7985, 7
        %v7987 = vsub.s32 %v7984, %v7986
        %v7988 = vrot.slane %v7980, %v7987
        %v7990 = vunpack.c.l.s4 1966171168
        %v7991 = vunpack.c.0.s8 %v7990
        %v7992 = vlaneseq
        %v7993 = vshrl.u32 %v7992, 7
        %v7994 = vsub.s32 %v7991, %v7993
        %v7995 = vrot.slane %v7981, %v7994
        %v7996 = vcombine.low %v7988, %v7995
        %v7997 = vcombine.low %v4949, %v4953
        %v7998 = vcombine.low %v4957, %v4961
        %v7999 = vcombine.low %v4965, %v4969
        %v8000 = vcombine.low %v4973, %v4977
        %v8002 = vunpack.c.l.s4 1966171168
        %v8003 = vunpack.c.0.s8 %v8002
        %v8004 = vlaneseq
        %v8005 = vshrl.u32 %v8004, 7
        %v8006 = vsub.s32 %v8003, %v8005
        %v8007 = vrot.slane %v7997, %v8006
        %v8009 = vunpack.c.l.s4 1966171168
        %v8010 = vunpack.c.0.s8 %v8009
        %v8011 = vlaneseq
        %v8012 = vshrl.u32 %v8011, 7
        %v8013 = vsub.s32 %v8010, %v8012
        %v8014 = vrot.slane %v7998, %v8013
        %v8016 = vunpack.c.l.s4 1966171168
        %v8017 = vunpack.c.0.s8 %v8016
        %v8018 = vlaneseq
        %v8019 = vshrl.u32 %v8018, 7
        %v8020 = vsub.s32 %v8017, %v8019
        %v8021 = vrot.slane %v7999, %v8020
        %v8023 = vunpack.c.l.s4 1966171168
        %v8024 = vunpack.c.0.s8 %v8023
        %v8025 = vlaneseq
        %v8026 = vshrl.u32 %v8025, 7
        %v8027 = vsub.s32 %v8024, %v8026
        %v8028 = vrot.slane %v8000, %v8027
        %v8029 = vcombine.low %v8007, %v8014
        %v8030 = vcombine.low %v8021, %v8028
        %v8032 = vunpack.c.l.s4 1966171168
        %v8033 = vunpack.c.0.s8 %v8032
        %v8034 = vlaneseq
        %v8035 = vshrl.u32 %v8034, 7
        %v8036 = vsub.s32 %v8033, %v8035
        %v8037 = vrot.slane %v8029, %v8036
        %v8039 = vunpack.c.l.s4 1966171168
        %v8040 = vunpack.c.0.s8 %v8039
        %v8041 = vlaneseq
        %v8042 = vshrl.u32 %v8041, 7
        %v8043 = vsub.s32 %v8040, %v8042
        %v8044 = vrot.slane %v8030, %v8043
        %v8045 = vcombine.low %v8037, %v8044
        %v8046 = vcombine.low %v4981, %v4985
        %v8047 = vcombine.low %v4989, %v4993
        %v8048 = vcombine.low %v4997, %v5001
        %v8049 = vcombine.low %v5005, %v5009
        %v8051 = vunpack.c.l.s4 1966171168
        %v8052 = vunpack.c.0.s8 %v8051
        %v8053 = vlaneseq
        %v8054 = vshrl.u32 %v8053, 7
        %v8055 = vsub.s32 %v8052, %v8054
        %v8056 = vrot.slane %v8046, %v8055
        %v8058 = vunpack.c.l.s4 1966171168
        %v8059 = vunpack.c.0.s8 %v8058
        %v8060 = vlaneseq
        %v8061 = vshrl.u32 %v8060, 7
        %v8062 = vsub.s32 %v8059, %v8061
        %v8063 = vrot.slane %v8047, %v8062
        %v8065 = vunpack.c.l.s4 1966171168
        %v8066 = vunpack.c.0.s8 %v8065
        %v8067 = vlaneseq
        %v8068 = vshrl.u32 %v8067, 7
        %v8069 = vsub.s32 %v8066, %v8068
        %v8070 = vrot.slane %v8048, %v8069
        %v8072 = vunpack.c.l.s4 1966171168
        %v8073 = vunpack.c.0.s8 %v8072
        %v8074 = vlaneseq
        %v8075 = vshrl.u32 %v8074, 7
        %v8076 = vsub.s32 %v8073, %v8075
        %v8077 = vrot.slane %v8049, %v8076
        %v8078 = vcombine.low %v8056, %v8063
        %v8079 = vcombine.low %v8070, %v8077
        %v8081 = vunpack.c.l.s4 1966171168
        %v8082 = vunpack.c.0.s8 %v8081
        %v8083 = vlaneseq
        %v8084 = vshrl.u32 %v8083, 7
        %v8085 = vsub.s32 %v8082, %v8084
        %v8086 = vrot.slane %v8078, %v8085
        %v8088 = vunpack.c.l.s4 1966171168
        %v8089 = vunpack.c.0.s8 %v8088
        %v8090 = vlaneseq
        %v8091 = vshrl.u32 %v8090, 7
        %v8092 = vsub.s32 %v8089, %v8091
        %v8093 = vrot.slane %v8079, %v8092
        %v8094 = vcombine.low %v8086, %v8093
        %v8095 = vcombine.low %v5013, %v5017
        %v8096 = vcombine.low %v5021, %v5025
        %v8097 = vcombine.low %v5029, %v5033
        %v8098 = vcombine.low %v5037, %v5041
        %v8100 = vunpack.c.l.s4 1966171168
        %v8101 = vunpack.c.0.s8 %v8100
        %v8102 = vlaneseq
        %v8103 = vshrl.u32 %v8102, 7
        %v8104 = vsub.s32 %v8101, %v8103
        %v8105 = vrot.slane %v8095, %v8104
        %v8107 = vunpack.c.l.s4 1966171168
        %v8108 = vunpack.c.0.s8 %v8107
        %v8109 = vlaneseq
        %v8110 = vshrl.u32 %v8109, 7
        %v8111 = vsub.s32 %v8108, %v8110
        %v8112 = vrot.slane %v8096, %v8111
        %v8114 = vunpack.c.l.s4 1966171168
        %v8115 = vunpack.c.0.s8 %v8114
        %v8116 = vlaneseq
        %v8117 = vshrl.u32 %v8116, 7
        %v8118 = vsub.s32 %v8115, %v8117
        %v8119 = vrot.slane %v8097, %v8118
        %v8121 = vunpack.c.l.s4 1966171168
        %v8122 = vunpack.c.0.s8 %v8121
        %v8123 = vlaneseq
        %v8124 = vshrl.u32 %v8123, 7
        %v8125 = vsub.s32 %v8122, %v8124
        %v8126 = vrot.slane %v8098, %v8125
        %v8127 = vcombine.low %v8105, %v8112
        %v8128 = vcombine.low %v8119, %v8126
        %v8130 = vunpack.c.l.s4 1966171168
        %v8131 = vunpack.c.0.s8 %v8130
        %v8132 = vlaneseq
        %v8133 = vshrl.u32 %v8132, 7
        %v8134 = vsub.s32 %v8131, %v8133
        %v8135 = vrot.slane %v8127, %v8134
        %v8137 = vunpack.c.l.s4 1966171168
        %v8138 = vunpack.c.0.s8 %v8137
        %v8139 = vlaneseq
        %v8140 = vshrl.u32 %v8139, 7
        %v8141 = vsub.s32 %v8138, %v8140
        %v8142 = vrot.slane %v8128, %v8141
        %v8143 = vcombine.low %v8135, %v8142
        %v8144 = vcombine.low %v5045, %v5049
        %v8145 = vcombine.low %v5053, %v5057
        %v8146 = vcombine.low %v5061, %v5065
        %v8147 = vcombine.low %v5069, %v5073
        %v8149 = vunpack.c.l.s4 1966171168
        %v8150 = vunpack.c.0.s8 %v8149
        %v8151 = vlaneseq
        %v8152 = vshrl.u32 %v8151, 7
        %v8153 = vsub.s32 %v8150, %v8152
        %v8154 = vrot.slane %v8144, %v8153
        %v8156 = vunpack.c.l.s4 1966171168
        %v8157 = vunpack.c.0.s8 %v8156
        %v8158 = vlaneseq
        %v8159 = vshrl.u32 %v8158, 7
        %v8160 = vsub.s32 %v8157, %v8159
        %v8161 = vrot.slane %v8145, %v8160
        %v8163 = vunpack.c.l.s4 1966171168
        %v8164 = vunpack.c.0.s8 %v8163
        %v8165 = vlaneseq
        %v8166 = vshrl.u32 %v8165, 7
        %v8167 = vsub.s32 %v8164, %v8166
        %v8168 = vrot.slane %v8146, %v8167
        %v8170 = vunpack.c.l.s4 1966171168
        %v8171 = vunpack.c.0.s8 %v8170
        %v8172 = vlaneseq
        %v8173 = vshrl.u32 %v8172, 7
        %v8174 = vsub.s32 %v8171, %v8173
        %v8175 = vrot.slane %v8147, %v8174
        %v8176 = vcombine.low %v8154, %v8161
        %v8177 = vcombine.low %v8168, %v8175
        %v8179 = vunpack.c.l.s4 1966171168
        %v8180 = vunpack.c.0.s8 %v8179
        %v8181 = vlaneseq
        %v8182 = vshrl.u32 %v8181, 7
        %v8183 = vsub.s32 %v8180, %v8182
        %v8184 = vrot.slane %v8176, %v8183
        %v8186 = vunpack.c.l.s4 1966171168
        %v8187 = vunpack.c.0.s8 %v8186
        %v8188 = vlaneseq
        %v8189 = vshrl.u32 %v8188, 7
        %v8190 = vsub.s32 %v8187, %v8189
        %v8191 = vrot.slane %v8177, %v8190
        %v8192 = vcombine.low %v8184, %v8191
        %v8193 = vcombine.low %v5077, %v5081
        %v8194 = vcombine.low %v5085, %v5089
        %v8195 = vcombine.low %v5093, %v5097
        %v8196 = vcombine.low %v5101, %v5105
        %v8198 = vunpack.c.l.s4 1966171168
        %v8199 = vunpack.c.0.s8 %v8198
        %v8200 = vlaneseq
        %v8201 = vshrl.u32 %v8200, 7
        %v8202 = vsub.s32 %v8199, %v8201
        %v8203 = vrot.slane %v8193, %v8202
        %v8205 = vunpack.c.l.s4 1966171168
        %v8206 = vunpack.c.0.s8 %v8205
        %v8207 = vlaneseq
        %v8208 = vshrl.u32 %v8207, 7
        %v8209 = vsub.s32 %v8206, %v8208
        %v8210 = vrot.slane %v8194, %v8209
        %v8212 = vunpack.c.l.s4 1966171168
        %v8213 = vunpack.c.0.s8 %v8212
        %v8214 = vlaneseq
        %v8215 = vshrl.u32 %v8214, 7
        %v8216 = vsub.s32 %v8213, %v8215
        %v8217 = vrot.slane %v8195, %v8216
        %v8219 = vunpack.c.l.s4 1966171168
        %v8220 = vunpack.c.0.s8 %v8219
        %v8221 = vlaneseq
        %v8222 = vshrl.u32 %v8221, 7
        %v8223 = vsub.s32 %v8220, %v8222
        %v8224 = vrot.slane %v8196, %v8223
        %v8225 = vcombine.low %v8203, %v8210
        %v8226 = vcombine.low %v8217, %v8224
        %v8228 = vunpack.c.l.s4 1966171168
        %v8229 = vunpack.c.0.s8 %v8228
        %v8230 = vlaneseq
        %v8231 = vshrl.u32 %v8230, 7
        %v8232 = vsub.s32 %v8229, %v8231
        %v8233 = vrot.slane %v8225, %v8232
        %v8235 = vunpack.c.l.s4 1966171168
        %v8236 = vunpack.c.0.s8 %v8235
        %v8237 = vlaneseq
        %v8238 = vshrl.u32 %v8237, 7
        %v8239 = vsub.s32 %v8236, %v8238
        %v8240 = vrot.slane %v8226, %v8239
        %v8241 = vcombine.low %v8233, %v8240
        %8242 = vset.pattern.permute.xlu0 0
        %8243 = vperm.xlu0 %8242, %v5154
        %v8244 = vpop.permute.xlu0 %8243
        %8245 = vset.pattern.permute.xlu0 0
        %8246 = vperm.xlu0 %8245, %v5203
        %v8247 = vpop.permute.xlu0 %8246
        %8248 = vset.pattern.permute.xlu0 0
        %8249 = vperm.xlu0 %8248, %v5252
        %v8250 = vpop.permute.xlu0 %8249
        %8251 = vset.pattern.permute.xlu0 0
        %8252 = vperm.xlu0 %8251, %v5301
        %v8253 = vpop.permute.xlu0 %8252
        %8254 = vset.pattern.permute.xlu0 0
        %8255 = vperm.xlu0 %8254, %v5350
        %v8256 = vpop.permute.xlu0 %8255
        %8257 = vset.pattern.permute.xlu0 0
        %8258 = vperm.xlu0 %8257, %v5399
        %v8259 = vpop.permute.xlu0 %8258
        %8260 = vset.pattern.permute.xlu0 0
        %8261 = vperm.xlu0 %8260, %v5448
        %v8262 = vpop.permute.xlu0 %8261
        %8263 = vset.pattern.permute.xlu0 0
        %8264 = vperm.xlu0 %8263, %v5497
        %v8265 = vpop.permute.xlu0 %8264
        %8266 = vset.pattern.permute.xlu0 0
        %8267 = vperm.xlu0 %8266, %v5546
        %v8268 = vpop.permute.xlu0 %8267
        %8269 = vset.pattern.permute.xlu0 0
        %8270 = vperm.xlu0 %8269, %v5595
        %v8271 = vpop.permute.xlu0 %8270
        %8272 = vset.pattern.permute.xlu0 0
        %8273 = vperm.xlu0 %8272, %v5644
        %v8274 = vpop.permute.xlu0 %8273
        %8275 = vset.pattern.permute.xlu0 0
        %8276 = vperm.xlu0 %8275, %v5693
        %v8277 = vpop.permute.xlu0 %8276
        %8278 = vset.pattern.permute.xlu0 0
        %8279 = vperm.xlu0 %8278, %v5742
        %v8280 = vpop.permute.xlu0 %8279
        %8281 = vset.pattern.permute.xlu0 0
        %8282 = vperm.xlu0 %8281, %v5791
        %v8283 = vpop.permute.xlu0 %8282
        %8284 = vset.pattern.permute.xlu0 0
        %8285 = vperm.xlu0 %8284, %v5840
        %v8286 = vpop.permute.xlu0 %8285
        %8287 = vset.pattern.permute.xlu0 0
        %8288 = vperm.xlu0 %8287, %v5889
        %v8289 = vpop.permute.xlu0 %8288
        %8290 = vset.pattern.permute.xlu0 0
        %8291 = vperm.xlu0 %8290, %v5938
        %v8292 = vpop.permute.xlu0 %8291
        %8293 = vset.pattern.permute.xlu0 0
        %8294 = vperm.xlu0 %8293, %v5987
        %v8295 = vpop.permute.xlu0 %8294
        %8296 = vset.pattern.permute.xlu0 0
        %8297 = vperm.xlu0 %8296, %v6036
        %v8298 = vpop.permute.xlu0 %8297
        %8299 = vset.pattern.permute.xlu0 0
        %8300 = vperm.xlu0 %8299, %v6085
        %v8301 = vpop.permute.xlu0 %8300
        %8302 = vset.pattern.permute.xlu0 0
        %8303 = vperm.xlu0 %8302, %v6134
        %v8304 = vpop.permute.xlu0 %8303
        %8305 = vset.pattern.permute.xlu0 0
        %8306 = vperm.xlu0 %8305, %v6183
        %v8307 = vpop.permute.xlu0 %8306
        %8308 = vset.pattern.permute.xlu0 0
        %8309 = vperm.xlu0 %8308, %v6232
        %v8310 = vpop.permute.xlu0 %8309
        %8311 = vset.pattern.permute.xlu0 0
        %8312 = vperm.xlu0 %8311, %v6281
        %v8313 = vpop.permute.xlu0 %8312
        %8314 = vset.pattern.permute.xlu0 0
        %8315 = vperm.xlu0 %8314, %v6330
        %v8316 = vpop.permute.xlu0 %8315
        %8317 = vset.pattern.permute.xlu0 0
        %8318 = vperm.xlu0 %8317, %v6379
        %v8319 = vpop.permute.xlu0 %8318
        %8320 = vset.pattern.permute.xlu0 0
        %8321 = vperm.xlu0 %8320, %v6428
        %v8322 = vpop.permute.xlu0 %8321
        %8323 = vset.pattern.permute.xlu0 0
        %8324 = vperm.xlu0 %8323, %v6477
        %v8325 = vpop.permute.xlu0 %8324
        %8326 = vset.pattern.permute.xlu0 0
        %8327 = vperm.xlu0 %8326, %v6526
        %v8328 = vpop.permute.xlu0 %8327
        %8329 = vset.pattern.permute.xlu0 0
        %8330 = vperm.xlu0 %8329, %v6575
        %v8331 = vpop.permute.xlu0 %8330
        %8332 = vset.pattern.permute.xlu0 0
        %8333 = vperm.xlu0 %8332, %v6624
        %v8334 = vpop.permute.xlu0 %8333
        %8335 = vset.pattern.permute.xlu0 0
        %8336 = vperm.xlu0 %8335, %v6673
        %v8337 = vpop.permute.xlu0 %8336
        %8338 = vset.pattern.permute.xlu0 0
        %8339 = vperm.xlu0 %8338, %v6722
        %v8340 = vpop.permute.xlu0 %8339
        %8341 = vset.pattern.permute.xlu0 0
        %8342 = vperm.xlu0 %8341, %v6771
        %v8343 = vpop.permute.xlu0 %8342
        %8344 = vset.pattern.permute.xlu0 0
        %8345 = vperm.xlu0 %8344, %v6820
        %v8346 = vpop.permute.xlu0 %8345
        %8347 = vset.pattern.permute.xlu0 0
        %8348 = vperm.xlu0 %8347, %v6869
        %v8349 = vpop.permute.xlu0 %8348
        %8350 = vset.pattern.permute.xlu0 0
        %8351 = vperm.xlu0 %8350, %v6918
        %v8352 = vpop.permute.xlu0 %8351
        %8353 = vset.pattern.permute.xlu0 0
        %8354 = vperm.xlu0 %8353, %v6967
        %v8355 = vpop.permute.xlu0 %8354
        %8356 = vset.pattern.permute.xlu0 0
        %8357 = vperm.xlu0 %8356, %v7016
        %v8358 = vpop.permute.xlu0 %8357
        %8359 = vset.pattern.permute.xlu0 0
        %8360 = vperm.xlu0 %8359, %v7065
        %v8361 = vpop.permute.xlu0 %8360
        %8362 = vset.pattern.permute.xlu0 0
        %8363 = vperm.xlu0 %8362, %v7114
        %v8364 = vpop.permute.xlu0 %8363
        %8365 = vset.pattern.permute.xlu0 0
        %8366 = vperm.xlu0 %8365, %v7163
        %v8367 = vpop.permute.xlu0 %8366
        %8368 = vset.pattern.permute.xlu0 0
        %8369 = vperm.xlu0 %8368, %v7212
        %v8370 = vpop.permute.xlu0 %8369
        %8371 = vset.pattern.permute.xlu0 0
        %8372 = vperm.xlu0 %8371, %v7261
        %v8373 = vpop.permute.xlu0 %8372
        %8374 = vset.pattern.permute.xlu0 0
        %8375 = vperm.xlu0 %8374, %v7310
        %v8376 = vpop.permute.xlu0 %8375
        %8377 = vset.pattern.permute.xlu0 0
        %8378 = vperm.xlu0 %8377, %v7359
        %v8379 = vpop.permute.xlu0 %8378
        %8380 = vset.pattern.permute.xlu0 0
        %8381 = vperm.xlu0 %8380, %v7408
        %v8382 = vpop.permute.xlu0 %8381
        %8383 = vset.pattern.permute.xlu0 0
        %8384 = vperm.xlu0 %8383, %v7457
        %v8385 = vpop.permute.xlu0 %8384
        %8386 = vset.pattern.permute.xlu0 0
        %8387 = vperm.xlu0 %8386, %v7506
        %v8388 = vpop.permute.xlu0 %8387
        %8389 = vset.pattern.permute.xlu0 0
        %8390 = vperm.xlu0 %8389, %v7555
        %v8391 = vpop.permute.xlu0 %8390
        %8392 = vset.pattern.permute.xlu0 0
        %8393 = vperm.xlu0 %8392, %v7604
        %v8394 = vpop.permute.xlu0 %8393
        %8395 = vset.pattern.permute.xlu0 0
        %8396 = vperm.xlu0 %8395, %v7653
        %v8397 = vpop.permute.xlu0 %8396
        %8398 = vset.pattern.permute.xlu0 0
        %8399 = vperm.xlu0 %8398, %v7702
        %v8400 = vpop.permute.xlu0 %8399
        %8401 = vset.pattern.permute.xlu0 0
        %8402 = vperm.xlu0 %8401, %v7751
        %v8403 = vpop.permute.xlu0 %8402
        %8404 = vset.pattern.permute.xlu0 0
        %8405 = vperm.xlu0 %8404, %v7800
        %v8406 = vpop.permute.xlu0 %8405
        %8407 = vset.pattern.permute.xlu0 0
        %8408 = vperm.xlu0 %8407, %v7849
        %v8409 = vpop.permute.xlu0 %8408
        %8410 = vset.pattern.permute.xlu0 0
        %8411 = vperm.xlu0 %8410, %v7898
        %v8412 = vpop.permute.xlu0 %8411
        %8413 = vset.pattern.permute.xlu0 0
        %8414 = vperm.xlu0 %8413, %v7947
        %v8415 = vpop.permute.xlu0 %8414
        %8416 = vset.pattern.permute.xlu0 0
        %8417 = vperm.xlu0 %8416, %v7996
        %v8418 = vpop.permute.xlu0 %8417
        %8419 = vset.pattern.permute.xlu0 0
        %8420 = vperm.xlu0 %8419, %v8045
        %v8421 = vpop.permute.xlu0 %8420
        %8422 = vset.pattern.permute.xlu0 0
        %8423 = vperm.xlu0 %8422, %v8094
        %v8424 = vpop.permute.xlu0 %8423
        %8425 = vset.pattern.permute.xlu0 0
        %8426 = vperm.xlu0 %8425, %v8143
        %v8427 = vpop.permute.xlu0 %8426
        %8428 = vset.pattern.permute.xlu0 0
        %8429 = vperm.xlu0 %8428, %v8192
        %v8430 = vpop.permute.xlu0 %8429
        %8431 = vset.pattern.permute.xlu0 0
        %8432 = vperm.xlu0 %8431, %v8241
        %v8433 = vpop.permute.xlu0 %8432
        %v8434 = vlaneseq
        %v8435 = vand.u32 %v8434, 127
        %v8436 = vlaneseq
        %v8437 = vshrl.u32 %v8436, 7
        %v8438 = vsub.s32 %v8435, %v8437
        %v8439 = vrot.slane %v8244, %v8438
        %v8440 = vadd.s32 %v8435, 4294967288
        %v8441 = vlaneseq
        %v8442 = vshrl.u32 %v8441, 7
        %v8443 = vsub.s32 %v8440, %v8442
        %v8444 = vrot.slane %v8247, %v8443
        %vm8445 = vcmask 130112
        %v8446 = vsel %vm8445, %v8444, %v8439
        %v8447 = vadd.s32 %v8435, 4294967280
        %v8448 = vlaneseq
        %v8449 = vshrl.u32 %v8448, 7
        %v8450 = vsub.s32 %v8447, %v8449
        %v8451 = vrot.slane %v8250, %v8450
        %vm8452 = vcmask 195712
        %v8453 = vsel %vm8452, %v8451, %v8446
        %v8454 = vadd.s32 %v8435, 4294967272
        %v8455 = vlaneseq
        %v8456 = vshrl.u32 %v8455, 7
        %v8457 = vsub.s32 %v8454, %v8456
        %v8458 = vrot.slane %v8253, %v8457
        %vm8459 = vcmask 261312
        %v8460 = vsel %vm8459, %v8458, %v8453
        %v8461 = vadd.s32 %v8435, 4294967264
        %v8462 = vlaneseq
        %v8463 = vshrl.u32 %v8462, 7
        %v8464 = vsub.s32 %v8461, %v8463
        %v8465 = vrot.slane %v8256, %v8464
        %vm8466 = vcmask 326912
        %v8467 = vsel %vm8466, %v8465, %v8460
        %v8468 = vadd.s32 %v8435, 4294967256
        %v8469 = vlaneseq
        %v8470 = vshrl.u32 %v8469, 7
        %v8471 = vsub.s32 %v8468, %v8470
        %v8472 = vrot.slane %v8259, %v8471
        %vm8473 = vcmask 392512
        %v8474 = vsel %vm8473, %v8472, %v8467
        %v8475 = vadd.s32 %v8435, 4294967248
        %v8476 = vlaneseq
        %v8477 = vshrl.u32 %v8476, 7
        %v8478 = vsub.s32 %v8475, %v8477
        %v8479 = vrot.slane %v8262, %v8478
        %vm8480 = vcmask 458112
        %v8481 = vsel %vm8480, %v8479, %v8474
        %v8482 = vadd.s32 %v8435, 4294967240
        %v8483 = vlaneseq
        %v8484 = vshrl.u32 %v8483, 7
        %v8485 = vsub.s32 %v8482, %v8484
        %v8486 = vrot.slane %v8265, %v8485
        %vm8487 = vcmask 523712
        %v8488 = vsel %vm8487, %v8486, %v8481
        %v8489 = vadd.s32 %v8435, 4294967232
        %v8490 = vlaneseq
        %v8491 = vshrl.u32 %v8490, 7
        %v8492 = vsub.s32 %v8489, %v8491
        %v8493 = vrot.slane %v8268, %v8492
        %vm8494 = vcmask 589312
        %v8495 = vsel %vm8494, %v8493, %v8488
        %v8496 = vadd.s32 %v8435, 4294967224
        %v8497 = vlaneseq
        %v8498 = vshrl.u32 %v8497, 7
        %v8499 = vsub.s32 %v8496, %v8498
        %v8500 = vrot.slane %v8271, %v8499
        %vm8501 = vcmask 654912
        %v8502 = vsel %vm8501, %v8500, %v8495
        %v8503 = vadd.s32 %v8435, 4294967216
        %v8504 = vlaneseq
        %v8505 = vshrl.u32 %v8504, 7
        %v8506 = vsub.s32 %v8503, %v8505
        %v8507 = vrot.slane %v8274, %v8506
        %vm8508 = vcmask 720512
        %v8509 = vsel %vm8508, %v8507, %v8502
        %v8510 = vadd.s32 %v8435, 4294967208
        %v8511 = vlaneseq
        %v8512 = vshrl.u32 %v8511, 7
        %v8513 = vsub.s32 %v8510, %v8512
        %v8514 = vrot.slane %v8277, %v8513
        %vm8515 = vcmask 786112
        %v8516 = vsel %vm8515, %v8514, %v8509
        %v8517 = vadd.s32 %v8435, 4294967200
        %v8518 = vlaneseq
        %v8519 = vshrl.u32 %v8518, 7
        %v8520 = vsub.s32 %v8517, %v8519
        %v8521 = vrot.slane %v8280, %v8520
        %vm8522 = vcmask 851712
        %v8523 = vsel %vm8522, %v8521, %v8516
        %v8524 = vadd.s32 %v8435, 4294967192
        %v8525 = vlaneseq
        %v8526 = vshrl.u32 %v8525, 7
        %v8527 = vsub.s32 %v8524, %v8526
        %v8528 = vrot.slane %v8283, %v8527
        %vm8529 = vcmask 917312
        %v8530 = vsel %vm8529, %v8528, %v8523
        %v8531 = vadd.s32 %v8435, 4294967184
        %v8532 = vlaneseq
        %v8533 = vshrl.u32 %v8532, 7
        %v8534 = vsub.s32 %v8531, %v8533
        %v8535 = vrot.slane %v8286, %v8534
        %vm8536 = vcmask 982912
        %v8537 = vsel %vm8536, %v8535, %v8530
        %v8538 = vadd.s32 %v8435, 4294967176
        %v8539 = vlaneseq
        %v8540 = vshrl.u32 %v8539, 7
        %v8541 = vsub.s32 %v8538, %v8540
        %v8542 = vrot.slane %v8289, %v8541
        %vm8543 = vcmask 1048512
        %v8544 = vsel %vm8543, %v8542, %v8537
        %v8545 = vlaneseq
        %v8546 = vshrl.u32 %v8545, 7
        %v8547 = vsub.s32 %v8435, %v8546
        %v8548 = vrot.slane %v8292, %v8547
        %v8549 = vlaneseq
        %v8550 = vshrl.u32 %v8549, 7
        %v8551 = vsub.s32 %v8440, %v8550
        %v8552 = vrot.slane %v8295, %v8551
        %v8553 = vsel %vm8445, %v8552, %v8548
        %v8554 = vlaneseq
        %v8555 = vshrl.u32 %v8554, 7
        %v8556 = vsub.s32 %v8447, %v8555
        %v8557 = vrot.slane %v8298, %v8556
        %v8558 = vsel %vm8452, %v8557, %v8553
        %v8559 = vlaneseq
        %v8560 = vshrl.u32 %v8559, 7
        %v8561 = vsub.s32 %v8454, %v8560
        %v8562 = vrot.slane %v8301, %v8561
        %v8563 = vsel %vm8459, %v8562, %v8558
        %v8564 = vlaneseq
        %v8565 = vshrl.u32 %v8564, 7
        %v8566 = vsub.s32 %v8461, %v8565
        %v8567 = vrot.slane %v8304, %v8566
        %v8568 = vsel %vm8466, %v8567, %v8563
        %v8569 = vlaneseq
        %v8570 = vshrl.u32 %v8569, 7
        %v8571 = vsub.s32 %v8468, %v8570
        %v8572 = vrot.slane %v8307, %v8571
        %v8573 = vsel %vm8473, %v8572, %v8568
        %v8574 = vlaneseq
        %v8575 = vshrl.u32 %v8574, 7
        %v8576 = vsub.s32 %v8475, %v8575
        %v8577 = vrot.slane %v8310, %v8576
        %v8578 = vsel %vm8480, %v8577, %v8573
        %v8579 = vlaneseq
        %v8580 = vshrl.u32 %v8579, 7
        %v8581 = vsub.s32 %v8482, %v8580
        %v8582 = vrot.slane %v8313, %v8581
        %v8583 = vsel %vm8487, %v8582, %v8578
        %v8584 = vlaneseq
        %v8585 = vshrl.u32 %v8584, 7
        %v8586 = vsub.s32 %v8489, %v8585
        %v8587 = vrot.slane %v8316, %v8586
        %v8588 = vsel %vm8494, %v8587, %v8583
        %v8589 = vlaneseq
        %v8590 = vshrl.u32 %v8589, 7
        %v8591 = vsub.s32 %v8496, %v8590
        %v8592 = vrot.slane %v8319, %v8591
        %v8593 = vsel %vm8501, %v8592, %v8588
        %v8594 = vlaneseq
        %v8595 = vshrl.u32 %v8594, 7
        %v8596 = vsub.s32 %v8503, %v8595
        %v8597 = vrot.slane %v8322, %v8596
        %v8598 = vsel %vm8508, %v8597, %v8593
        %v8599 = vlaneseq
        %v8600 = vshrl.u32 %v8599, 7
        %v8601 = vsub.s32 %v8510, %v8600
        %v8602 = vrot.slane %v8325, %v8601
        %v8603 = vsel %vm8515, %v8602, %v8598
        %v8604 = vlaneseq
        %v8605 = vshrl.u32 %v8604, 7
        %v8606 = vsub.s32 %v8517, %v8605
        %v8607 = vrot.slane %v8328, %v8606
        %v8608 = vsel %vm8522, %v8607, %v8603
        %v8609 = vlaneseq
        %v8610 = vshrl.u32 %v8609, 7
        %v8611 = vsub.s32 %v8524, %v8610
        %v8612 = vrot.slane %v8331, %v8611
        %v8613 = vsel %vm8529, %v8612, %v8608
        %v8614 = vlaneseq
        %v8615 = vshrl.u32 %v8614, 7
        %v8616 = vsub.s32 %v8531, %v8615
        %v8617 = vrot.slane %v8334, %v8616
        %v8618 = vsel %vm8536, %v8617, %v8613
        %v8619 = vlaneseq
        %v8620 = vshrl.u32 %v8619, 7
        %v8621 = vsub.s32 %v8538, %v8620
        %v8622 = vrot.slane %v8337, %v8621
        %v8623 = vsel %vm8543, %v8622, %v8618
        %v8624 = vlaneseq
        %v8625 = vshrl.u32 %v8624, 7
        %v8626 = vsub.s32 %v8435, %v8625
        %v8627 = vrot.slane %v8340, %v8626
        %v8628 = vlaneseq
        %v8629 = vshrl.u32 %v8628, 7
        %v8630 = vsub.s32 %v8440, %v8629
        %v8631 = vrot.slane %v8343, %v8630
        %v8632 = vsel %vm8445, %v8631, %v8627
        %v8633 = vlaneseq
        %v8634 = vshrl.u32 %v8633, 7
        %v8635 = vsub.s32 %v8447, %v8634
        %v8636 = vrot.slane %v8346, %v8635
        %v8637 = vsel %vm8452, %v8636, %v8632
        %v8638 = vlaneseq
        %v8639 = vshrl.u32 %v8638, 7
        %v8640 = vsub.s32 %v8454, %v8639
        %v8641 = vrot.slane %v8349, %v8640
        %v8642 = vsel %vm8459, %v8641, %v8637
        %v8643 = vlaneseq
        %v8644 = vshrl.u32 %v8643, 7
        %v8645 = vsub.s32 %v8461, %v8644
        %v8646 = vrot.slane %v8352, %v8645
        %v8647 = vsel %vm8466, %v8646, %v8642
        %v8648 = vlaneseq
        %v8649 = vshrl.u32 %v8648, 7
        %v8650 = vsub.s32 %v8468, %v8649
        %v8651 = vrot.slane %v8355, %v8650
        %v8652 = vsel %vm8473, %v8651, %v8647
        %v8653 = vlaneseq
        %v8654 = vshrl.u32 %v8653, 7
        %v8655 = vsub.s32 %v8475, %v8654
        %v8656 = vrot.slane %v8358, %v8655
        %v8657 = vsel %vm8480, %v8656, %v8652
        %v8658 = vlaneseq
        %v8659 = vshrl.u32 %v8658, 7
        %v8660 = vsub.s32 %v8482, %v8659
        %v8661 = vrot.slane %v8361, %v8660
        %v8662 = vsel %vm8487, %v8661, %v8657
        %v8663 = vlaneseq
        %v8664 = vshrl.u32 %v8663, 7
        %v8665 = vsub.s32 %v8489, %v8664
        %v8666 = vrot.slane %v8364, %v8665
        %v8667 = vsel %vm8494, %v8666, %v8662
        %v8668 = vlaneseq
        %v8669 = vshrl.u32 %v8668, 7
        %v8670 = vsub.s32 %v8496, %v8669
        %v8671 = vrot.slane %v8367, %v8670
        %v8672 = vsel %vm8501, %v8671, %v8667
        %v8673 = vlaneseq
        %v8674 = vshrl.u32 %v8673, 7
        %v8675 = vsub.s32 %v8503, %v8674
        %v8676 = vrot.slane %v8370, %v8675
        %v8677 = vsel %vm8508, %v8676, %v8672
        %v8678 = vlaneseq
        %v8679 = vshrl.u32 %v8678, 7
        %v8680 = vsub.s32 %v8510, %v8679
        %v8681 = vrot.slane %v8373, %v8680
        %v8682 = vsel %vm8515, %v8681, %v8677
        %v8683 = vlaneseq
        %v8684 = vshrl.u32 %v8683, 7
        %v8685 = vsub.s32 %v8517, %v8684
        %v8686 = vrot.slane %v8376, %v8685
        %v8687 = vsel %vm8522, %v8686, %v8682
        %v8688 = vlaneseq
        %v8689 = vshrl.u32 %v8688, 7
        %v8690 = vsub.s32 %v8524, %v8689
        %v8691 = vrot.slane %v8379, %v8690
        %v8692 = vsel %vm8529, %v8691, %v8687
        %v8693 = vlaneseq
        %v8694 = vshrl.u32 %v8693, 7
        %v8695 = vsub.s32 %v8531, %v8694
        %v8696 = vrot.slane %v8382, %v8695
        %v8697 = vsel %vm8536, %v8696, %v8692
        %v8698 = vlaneseq
        %v8699 = vshrl.u32 %v8698, 7
        %v8700 = vsub.s32 %v8538, %v8699
        %v8701 = vrot.slane %v8385, %v8700
        %v8702 = vsel %vm8543, %v8701, %v8697
        %v8703 = vlaneseq
        %v8704 = vshrl.u32 %v8703, 7
        %v8705 = vsub.s32 %v8435, %v8704
        %v8706 = vrot.slane %v8388, %v8705
        %v8707 = vlaneseq
        %v8708 = vshrl.u32 %v8707, 7
        %v8709 = vsub.s32 %v8440, %v8708
        %v8710 = vrot.slane %v8391, %v8709
        %v8711 = vsel %vm8445, %v8710, %v8706
        %v8712 = vlaneseq
        %v8713 = vshrl.u32 %v8712, 7
        %v8714 = vsub.s32 %v8447, %v8713
        %v8715 = vrot.slane %v8394, %v8714
        %v8716 = vsel %vm8452, %v8715, %v8711
        %v8717 = vlaneseq
        %v8718 = vshrl.u32 %v8717, 7
        %v8719 = vsub.s32 %v8454, %v8718
        %v8720 = vrot.slane %v8397, %v8719
        %v8721 = vsel %vm8459, %v8720, %v8716
        %v8722 = vlaneseq
        %v8723 = vshrl.u32 %v8722, 7
        %v8724 = vsub.s32 %v8461, %v8723
        %v8725 = vrot.slane %v8400, %v8724
        %v8726 = vsel %vm8466, %v8725, %v8721
        %v8727 = vlaneseq
        %v8728 = vshrl.u32 %v8727, 7
        %v8729 = vsub.s32 %v8468, %v8728
        %v8730 = vrot.slane %v8403, %v8729
        %v8731 = vsel %vm8473, %v8730, %v8726
        %v8732 = vlaneseq
        %v8733 = vshrl.u32 %v8732, 7
        %v8734 = vsub.s32 %v8475, %v8733
        %v8735 = vrot.slane %v8406, %v8734
        %v8736 = vsel %vm8480, %v8735, %v8731
        %v8737 = vlaneseq
        %v8738 = vshrl.u32 %v8737, 7
        %v8739 = vsub.s32 %v8482, %v8738
        %v8740 = vrot.slane %v8409, %v8739
        %v8741 = vsel %vm8487, %v8740, %v8736
        %v8742 = vlaneseq
        %v8743 = vshrl.u32 %v8742, 7
        %v8744 = vsub.s32 %v8489, %v8743
        %v8745 = vrot.slane %v8412, %v8744
        %v8746 = vsel %vm8494, %v8745, %v8741
        %v8747 = vlaneseq
        %v8748 = vshrl.u32 %v8747, 7
        %v8749 = vsub.s32 %v8496, %v8748
        %v8750 = vrot.slane %v8415, %v8749
        %v8751 = vsel %vm8501, %v8750, %v8746
        %v8752 = vlaneseq
        %v8753 = vshrl.u32 %v8752, 7
        %v8754 = vsub.s32 %v8503, %v8753
        %v8755 = vrot.slane %v8418, %v8754
        %v8756 = vsel %vm8508, %v8755, %v8751
        %v8757 = vlaneseq
        %v8758 = vshrl.u32 %v8757, 7
        %v8759 = vsub.s32 %v8510, %v8758
        %v8760 = vrot.slane %v8421, %v8759
        %v8761 = vsel %vm8515, %v8760, %v8756
        %v8762 = vlaneseq
        %v8763 = vshrl.u32 %v8762, 7
        %v8764 = vsub.s32 %v8517, %v8763
        %v8765 = vrot.slane %v8424, %v8764
        %v8766 = vsel %vm8522, %v8765, %v8761
        %v8767 = vlaneseq
        %v8768 = vshrl.u32 %v8767, 7
        %v8769 = vsub.s32 %v8524, %v8768
        %v8770 = vrot.slane %v8427, %v8769
        %v8771 = vsel %vm8529, %v8770, %v8766
        %v8772 = vlaneseq
        %v8773 = vshrl.u32 %v8772, 7
        %v8774 = vsub.s32 %v8531, %v8773
        %v8775 = vrot.slane %v8430, %v8774
        %v8776 = vsel %vm8536, %v8775, %v8771
        %v8777 = vlaneseq
        %v8778 = vshrl.u32 %v8777, 7
        %v8779 = vsub.s32 %v8538, %v8778
        %v8780 = vrot.slane %v8433, %v8779
        %v8781 = vsel %vm8543, %v8780, %v8776
        %v8782 = vcombine.low %v8544, %v8623
        %v8783 = vcombine.low %v8702, %v8781
        %v8785 = vunpack.c.l.s4 1966171168
        %v8786 = vunpack.c.0.s8 %v8785
        %v8787 = vlaneseq
        %v8788 = vshrl.u32 %v8787, 7
        %v8789 = vsub.s32 %v8786, %v8788
        %v8790 = vrot.slane %v8782, %v8789
        %v8792 = vunpack.c.l.s4 1966171168
        %v8793 = vunpack.c.0.s8 %v8792
        %v8794 = vlaneseq
        %v8795 = vshrl.u32 %v8794, 7
        %v8796 = vsub.s32 %v8793, %v8795
        %v8797 = vrot.slane %v8783, %v8796
        %v8798 = vcombine.low %v8790, %v8797
        %v8800 = vunpack.c.l.s4 1966171168
        %v8801 = vunpack.c.0.s8 %v8800
        %v8802 = vlaneseq
        %v8803 = vshrl.u32 %v8802, 7
        %v8804 = vsub.s32 %v8801, %v8803
        %v8805 = vrot.slane %v8798, %v8804
        %v8807 = vmax.f32 %v2993, %v8805
        %v8808 = vlaneseq
        %vm8809 = vcmp.ge.s32.totalorder %v8808, 0
        %vm8810 = vcmp.lt.s32.totalorder %v8808, 512
        %vm8811 = vmand %vm8809, %vm8810
        %8812 = vst.msk [vmem:[%s2992] ss:$2 sm:$0xf] %vm8811, %v8807
        %s8813 = sshra.s32 %s305, 1
        %s8814 = sand.u32 %s305, 1
        %s8815 = sshra.s32 %s305, 1
        %s8816 = sand.u32 %s305, 1
        %s8817 = smul.u32 %s8813, 4
        %s8818 = smul.u32 %s8817, 2
        %s8819 = sadd.s32 %s8818, %s8816
        %s8820 = scalar_lea.vmem %s5, %s8819
        %v8821 = vld [vmem:[%s8820] ss:$2 sm:$0xf]
        %v8826 = vcombine.low %v2777, %v2846
        %v8827 = vcombine.low %v2915, %v2984
        %v8829 = vunpack.c.l.s4 1966171168
        %v8830 = vunpack.c.0.s8 %v8829
        %v8831 = vlaneseq
        %v8832 = vshrl.u32 %v8831, 7
        %v8833 = vsub.s32 %v8830, %v8832
        %v8834 = vrot.slane %v8826, %v8833
        %v8836 = vunpack.c.l.s4 1966171168
        %v8837 = vunpack.c.0.s8 %v8836
        %v8838 = vlaneseq
        %v8839 = vshrl.u32 %v8838, 7
        %v8840 = vsub.s32 %v8837, %v8839
        %v8841 = vrot.slane %v8827, %v8840
        %v8842 = vcombine.low %v8834, %v8841
        %v8844 = vunpack.c.l.s4 1966171168
        %v8845 = vunpack.c.0.s8 %v8844
        %v8846 = vlaneseq
        %v8847 = vshrl.u32 %v8846, 7
        %v8848 = vsub.s32 %v8845, %v8847
        %v8849 = vrot.slane %v8842, %v8848
        %v8851 = vmax.f32 %v8821, %v8849
        %8852 = vst.msk [vmem:[%s8820] ss:$2 sm:$0xf] %vm8811, %v8851
        %p8853 = scmp.eq.s32.totalorder %s26, 2
        // Predicated region
        $region83: #{adaptive_margin_logits.3} parent=69 // pred_check
          %p8854 = pneg %p8853
        $region84: #{adaptive_margin_logits.3} parent=69 // pred_check_branch
          %8856 = sbr.rel (%p8854) target = $region86
        $region85: #{adaptive_margin_logits.3} parent=69 // pred_region
          %v8857 = vld [vmem:[%s4] sm:$0xff]
          %v8858 = vmax.f32 %v8857, 0.0
          %v8859 = vmin.f32 %v8858, 1.0
          %v8860 = vsub.f32 %v8859, 0.5
          %v8861 = vmul.f32 %v8860, 10.0
          %v8862 = vsub.f32 0.0, %v8861
          %v8863 = vmul.f32 %v8862, 1.442695
          %v8864 = vpow.pop %v8863
          %v8865 = vadd.f32 %v8864, 1.0
          %v8866 = vrcp.pop %v8865
          %v8867 = vmul.f32 1.0, %v8866
          %v8868 = vsub.f32 2.0, %v8867
          %v8869 = vld [vmem:[%s5] sm:$0xff]
          %v8870 = vmul.f32 %v8869, %v8868
          %8871 = vst [vmem:[%s5] sm:$0xff] %v8870
        $region86: #{adaptive_margin_logits.3} parent=69 // pred_fallthru
          _
        // Predicated region
        $region87: #{adaptive_margin_logits.3} parent=69 // pred_check
          %p8872 = pneg %p116
        $region88: #{adaptive_margin_logits.3} parent=69 // pred_check_branch
          %8874 = sbr.rel (%p8872) target = $region90
        $region89: #{adaptive_margin_logits.3} parent=69 // pred_region
          _
        $region90: #{adaptive_margin_logits.3} parent=69 // pred_fallthru
          _
        // Predicated region
        $region91: #{adaptive_margin_logits.3} parent=69 // pred_check
          %p8875 = pneg %p116
        $region92: #{adaptive_margin_logits.3} parent=69 // pred_check_branch
          %8877 = sbr.rel (%p8875) target = $region94
        $region93: #{adaptive_margin_logits.3} parent=69 // pred_region
          _
        $region94: #{adaptive_margin_logits.3} parent=69 // pred_fallthru
          _
      $region70: #{adaptive_margin_logits.3} parent=5 // pred_fallthru
        _
      %p8878 = scmp.le.s32.totalorder 2, %s21
      // Predicated region
      $region95: #{adaptive_margin_logits.3} parent=5 // pred_check
        %p8879 = pneg %p8878
      $region96: #{adaptive_margin_logits.3} parent=5 // pred_check_branch
        %8881 = sbr.rel (%p8879) target = $region98
      $region97: #{adaptive_margin_logits.3} parent=5 // pred_region
        %s8882 = ssub.s32 %s21, 2
      $region98: #{adaptive_margin_logits.3} parent=5 // pred_fallthru
        _
    $region6: #{adaptive_margin_logits.3} parent=1 // loop_footer
      %s25 = sadd.s32 1, %s21
    $region7: #{adaptive_margin_logits.3} parent=1 // loop_footer_branch
      %20 = sbr.rel target = $region3
    $region8: #{adaptive_margin_logits.3} parent=1 // loop_exit
      _

</llo_original>
